<compile_context>
chip_gen: v7x
topology: tpu7x:2x2x1
jax: 0.10.0
libtpu: 0.0.40
codegen_flags: <defaults>
</compile_context>

<pallas_src>
import jax
import jax.numpy as jnp
from jax.experimental import pallas as pl
from jax.experimental.pallas import tpu as pltpu


# ----------------------------- fused Pallas kernel -----------------------------

def _make_block_kernel(Nb, H, W, Cin, Cout, use_shortcut):
    C = Cout
    M = Nb * H * W

    def kernel(*refs):
        (x_ref, s1_ref, t1_ref, w1_ref, b1_ref,
         s2_ref, t2_ref, w2_ref, b2_ref) = refs[:9]
        rest = list(refs[9:])
        if use_shortcut:
            scw_ref, scb_ref = rest[0], rest[1]
            rest = rest[2:]
        fc1_ref, fc2_ref, out_ref, pad1_ref, pad2_ref = rest

        def zero_halo(pad_ref, c):
            # Re-zero only the 1-pixel halo strips every step (interior is fully
            # overwritten).  Per-step (not once) so it is megacore-safe.
            zr = jnp.zeros((Nb, 1, W + 2, c), jnp.bfloat16)
            zc = jnp.zeros((Nb, H + 2, 1, c), jnp.bfloat16)
            pad_ref[:, 0:1, :, :] = zr
            pad_ref[:, H + 1:H + 2, :, :] = zr
            pad_ref[:, :, 0:1, :] = zc
            pad_ref[:, :, W + 1:W + 2, :] = zc

        # ---- bn1 + relu (f32), cast to bf16 ONCE, store interior of padded scratch
        x2 = x_ref[...].reshape(M, Cin)
        a_bf = jnp.maximum(x2 * s1_ref[...] + t1_ref[...], 0.0).astype(jnp.bfloat16)
        zero_halo(pad1_ref, Cin)
        pad1_ref[:, 1:H + 1, 1:W + 1, :] = a_bf.reshape(Nb, H, W, Cin)

        # ---- conv1: nine shifted-window K=Cin matmuls (bf16 x bf16 -> f32 acc)
        w1 = w1_ref[...]                                   # (9*Cin, C) bf16
        acc = jnp.zeros((M, C), jnp.float32)
        for k in range(9):
            ky, kx = k // 3, k % 3
            win = pad1_ref[:, ky:ky + H, kx:kx + W, :].reshape(M, Cin)
            acc = acc + jnp.dot(win, w1[k * Cin:(k + 1) * Cin, :],
                                preferred_element_type=jnp.float32)
        h1 = acc + b1_ref[...]                             # (M, C) f32

        # ---- bn2 + relu, cast to bf16 once, fill padded scratch #2
        h1_bf = jnp.maximum(h1 * s2_ref[...] + t2_ref[...], 0.0).astype(jnp.bfloat16)
        zero_halo(pad2_ref, C)
        pad2_ref[:, 1:H + 1, 1:W + 1, :] = h1_bf.reshape(Nb, H, W, C)

        # ---- conv2: same nine-matmul accumulation
        w2 = w2_ref[...]                                   # (9*C, C) bf16
        acc2 = jnp.zeros((M, C), jnp.float32)
        for k in range(9):
            ky, kx = k // 3, k % 3
            win = pad2_ref[:, ky:ky + H, kx:kx + W, :].reshape(M, C)
            acc2 = acc2 + jnp.dot(win, w2[k * C:(k + 1) * C, :],
                                  preferred_element_type=jnp.float32)
        h = acc2 + b2_ref[...]                             # (M, C) f32

        # ---- MGPooling SE gate (per image): quadrant pools; 1x1 pools derived from
        #      the quadrant results; all 10 features packed by one lane concatenate.
        hr = h.reshape(Nb, H, W, C)
        bh, bw = H // 2, W // 2
        q_avg, q_max = [], []
        for i in range(2):
            for j in range(2):                             # p = 2*i + j
                blk = hr[:, i * bh:(i + 1) * bh, j * bw:(j + 1) * bw, :]
                q_avg.append(jnp.sum(jnp.sum(blk, axis=1), axis=1) * (1.0 / (bh * bw)))
                q_max.append(jnp.max(jnp.max(blk, axis=1), axis=1))
        avg1 = (q_avg[0] + q_avg[1] + q_avg[2] + q_avg[3]) * 0.25
        max1 = jnp.maximum(jnp.maximum(q_max[0], q_max[1]),
                           jnp.maximum(q_max[2], q_max[3]))
        feats = jnp.concatenate([avg1] + q_avg + [max1] + q_max, axis=-1)  # (Nb, 10C)

        z = jnp.maximum(jnp.dot(feats, fc1_ref[...],
                                preferred_element_type=jnp.float32), 0.0)  # (Nb, Cr)
        logits = jnp.dot(z, fc2_ref[...],
                         preferred_element_type=jnp.float32)               # (Nb, C)
        gate = 1.0 / (1.0 + jnp.exp(-logits))                              # exact sigmoid

        # ---- shortcut (deferred to shorten its live range) + fused residual add
        if use_shortcut:
            a_int = pad1_ref[:, 1:H + 1, 1:W + 1, :].reshape(M, Cin)       # bf16
            sc = (jnp.dot(a_int, scw_ref[...],
                          preferred_element_type=jnp.float32) + scb_ref[...])
        else:
            sc = x_ref[...].reshape(M, C)                  # identity (Cin == Cout)

        out_ref[...] = hr * gate[:, None, None, :] + sc.reshape(Nb, H, W, C)

    return kernel


# ----------------------------- JAX wrapper -----------------------------

def _pick_batch_block(n, hw, target_m=256):
    """Largest divisor of n so that Nb*H*W ~ target_m, preferring >= 2 grid steps."""
    cap = max(1, target_m // hw)
    best = 1
    for nb in range(1, min(n, cap) + 1):
        if n % nb == 0:
            best = nb
    while best > 1 and n // best < 2:          # keep >= 2 steps (pipelining / 2 TCs)
        nb = best - 1
        while nb > 1 and n % nb != 0:
            nb -= 1
        best = nb
    return best


def spp_se_preact_block(x_nhwc, p, *, stride=1, use_shortcut=True, batch_block=None):
    if stride != 1:
        # TODO(synk): stride>1 would use strided window reads; not needed for the
        # module default exercised here.
        raise NotImplementedError("fused kernel implements stride=1 (module default)")
    N, H, W, Cin = x_nhwc.shape
    Cout = p["w1"].shape[-1]
    assert p["w1"].shape[0] == 9 * Cin
    assert H % 2 == 0 and W % 2 == 0, "2x2 adaptive pooling assumes even H, W"
    if not use_shortcut:
        assert Cin == Cout

    Nb = batch_block if batch_block is not None else _pick_batch_block(N, H * W)
    assert N % Nb == 0

    def rep(a):  # whole-array operand, same block every grid step (loaded once)
        return pl.BlockSpec(a.shape, lambda n: (0,) * a.ndim)

    args = [x_nhwc, p["bn1_scale"], p["bn1_bias"], p["w1"], p["b1"],
            p["bn2_scale"], p["bn2_bias"], p["w2"], p["b2"]]
    if use_shortcut:
        args += [p["sc_w"], p["sc_b"]]
    args += [p["fc1"], p["fc2"]]

    in_specs = [pl.BlockSpec((Nb, H, W, Cin), lambda n: (n, 0, 0, 0))]
    in_specs += [rep(a) for a in args[1:]]

    kernel = _make_block_kernel(Nb, H, W, Cin, Cout, use_shortcut)

    return pl.pallas_call(
        kernel,
        out_shape=jax.ShapeDtypeStruct((N, H, W, Cout), jnp.float32),
        grid=(N // Nb,),
        in_specs=in_specs,
        out_specs=pl.BlockSpec((Nb, H, W, Cout), lambda n: (n, 0, 0, 0)),
        scratch_shapes=[
            pltpu.VMEM((Nb, H + 2, W + 2, Cin), jnp.bfloat16),   # padded bn1 act (bf16)
            pltpu.VMEM((Nb, H + 2, W + 2, Cout), jnp.bfloat16),  # padded bn2 act (bf16)
        ],
        compiler_params=pltpu.CompilerParams(
            dimension_semantics=("parallel",),
            vmem_limit_bytes=64 * 1024 * 1024,
        ),
    )(*args)


# ----------------------------- parameter setup -----------------------------

def init_params(key, in_planes, planes, reduction):
    Cr = planes // reduction
    assert Cr >= 1
    ks = jax.random.split(key, 16)

    def nrm(k, shape, s=0.1):
        return s * jax.random.normal(k, shape, jnp.float32)

    def uni(k, shape, lo, hi):
        return jax.random.uniform(k, shape, jnp.float32, lo, hi)

    eps = 1e-5
    # TODO(synk): training-mode BatchNorm (batch statistics) is not reproduced;
    # running stats are folded into an inference-mode per-channel affine.
    g1, be1 = uni(ks[0], (in_planes,), 0.5, 1.5), nrm(ks[1], (in_planes,))
    m1, v1 = nrm(ks[2], (in_planes,)), uni(ks[3], (in_planes,), 0.5, 1.5)
    g2, be2 = uni(ks[4], (planes,), 0.5, 1.5), nrm(ks[5], (planes,))
    m2, v2 = nrm(ks[6], (planes,)), uni(ks[7], (planes,), 0.5, 1.5)
    bn1_scale = g1 / jnp.sqrt(v1 + eps); bn1_bias = be1 - m1 * bn1_scale
    bn2_scale = g2 / jnp.sqrt(v2 + eps); bn2_bias = be2 - m2 * bn2_scale

    # conv weights in PyTorch layout (Cout, Cin, kh, kw), fc in (out, in)
    w1_pt = nrm(ks[8], (planes, in_planes, 3, 3))
    w2_pt = nrm(ks[9], (planes, planes, 3, 3))
    b1c = nrm(ks[10], (planes,)); b2c = nrm(ks[11], (planes,))
    sc_pt = nrm(ks[12], (planes, in_planes, 1, 1)); sc_bias = nrm(ks[13], (planes,))
    fc1_pt = nrm(ks[14], (Cr, 10 * planes))
    fc2_pt = nrm(ks[15], (planes, Cr))

    def pack3x3(w_pt):
        # (Cout, Cin, 3, 3) -> (3, 3, Cin, Cout) -> (9*Cin, Cout); row index is
        # (3*ky + kx)*Cin + ci, matching the in-kernel per-window weight slices.
        co, ci = w_pt.shape[0], w_pt.shape[1]
        return jnp.transpose(w_pt, (2, 3, 1, 0)).reshape(9 * ci, co)

    # Repack fc1: PyTorch pooled-feature order is [avg1(C), avg2 channel-major(4C),
    # max1(C), max2 channel-major(4C)]; the kernel packs 10 segment-major blocks of C.
    C = planes
    w1t = fc1_pt.T                                          # (10C, Cr)
    segs = [w1t[0:C]]                                       # avg_pool 1x1
    for pidx in range(4):                                   # avg_pool 2x2, p = 2i + j
        segs.append(w1t[C + 4 * jnp.arange(C) + pidx])
    segs.append(w1t[5 * C:6 * C])                           # max_pool 1x1
    for pidx in range(4):                                   # max_pool 2x2
        segs.append(w1t[6 * C + 4 * jnp.arange(C) + pidx])
    fc1 = jnp.concatenate(segs, axis=0)                     # (10C, Cr)

    row = lambda v: v.reshape(1, -1)
    return dict(
        bn1_scale=row(bn1_scale), bn1_bias=row(bn1_bias),
        bn2_scale=row(bn2_scale), bn2_bias=row(bn2_bias),
        w1=pack3x3(w1_pt).astype(jnp.bfloat16), b1=row(b1c),
        w2=pack3x3(w2_pt).astype(jnp.bfloat16), b2=row(b2c),
        sc_w=sc_pt[:, :, 0, 0].T.astype(jnp.bfloat16), sc_b=row(sc_bias),
        fc1=fc1, fc2=fc2_pt.T,
    )


# ----------------------------- pure-JAX reference -----------------------------

def reference(x, p, *, stride, use_shortcut):
    assert stride == 1
    N, H, W, Cin = x.shape
    Cout = p["w1"].shape[-1]
    bc = lambda v: v.reshape(1, 1, 1, -1)

    a = jnp.maximum(x * bc(p["bn1_scale"]) + bc(p["bn1_bias"]), 0.0)
    a_bf = a.astype(jnp.bfloat16)
    if use_shortcut:
        sc = (jnp.dot(a_bf.reshape(-1, Cin), p["sc_w"],
                      preferred_element_type=jnp.float32).reshape(N, H, W, Cout)
              + bc(p["sc_b"]))
    else:
        sc = x

    def conv3(v_bf, w_flat, b):
        w = w_flat.reshape(3, 3, v_bf.shape[-1], Cout)
        y = jax.lax.conv_general_dilated(
            v_bf, w, (1, 1), ((1, 1), (1, 1)),
            dimension_numbers=("NHWC", "HWIO", "NHWC"),
            preferred_element_type=jnp.float32)
        return y + bc(b)

    h = conv3(a_bf, p["w1"], p["b1"])
    h = jnp.maximum(h * bc(p["bn2_scale"]) + bc(p["bn2_bias"]), 0.0)
    h = conv3(h.astype(jnp.bfloat16), p["w2"], p["b2"])

    avg1 = jnp.mean(h, axis=(1, 2)); max1 = jnp.max(h, axis=(1, 2))
    hb = h.reshape(N, 2, H // 2, 2, W // 2, Cout)
    avg2 = jnp.mean(hb, axis=(2, 4)); max2 = jnp.max(hb, axis=(2, 4))
    feats = jnp.concatenate(
        [avg1] + [avg2[:, i, j] for i in range(2) for j in range(2)]
        + [max1] + [max2[:, i, j] for i in range(2) for j in range(2)], axis=-1)
    z = jnp.maximum(feats @ p["fc1"], 0.0)
    gate = jax.nn.sigmoid(z @ p["fc2"])
    return h * gate[:, None, None, :] + sc


# ----------------------------- demo -----------------------------

if __name__ == "__main__":
    N, H, W = 4, 8, 8
    in_planes, planes, stride, reduction = 8, 16, 1, 4
    use_shortcut = (stride != 1) or (in_planes != planes)   # True: exercises 1x1 shortcut conv

    key = jax.random.PRNGKey(0)
    kx, kp = jax.random.split(key)

    # PyTorch-convention input: NCHW
    x_nchw = jax.random.normal(kx, (N, in_planes, H, W), jnp.float32)
    x = jnp.transpose(x_nchw, (0, 2, 3, 1))                 # NCHW -> NHWC

    params = init_params(kp, in_planes, planes, reduction)

    out = spp_se_preact_block(x, params, stride=stride, use_shortcut=use_shortcut)
    out = jax.block_until_ready(out)
    out_nchw = jnp.transpose(out, (0, 3, 1, 2))             # back to NCHW

    ref = reference(x, params, stride=stride, use_shortcut=use_shortcut)
    err = float(jnp.max(jnp.abs(out - ref)))
    if not (out.shape == ref.shape and err < 2e-3):
        raise AssertionError(
            f"mismatch vs reference: shape {out.shape} vs {ref.shape}, max_abs_err={err}")
    print("KERNEL_OK")
</pallas_src>

<mosaic_0001>
module attributes {stable_mosaic.version = 11 : i64} {
  func.func @kernel(%arg0: i32, %arg1: memref<2x8x8x8xf32, #tpu.memory_space<vmem>>, %arg2: memref<1x8xf32, #tpu.memory_space<vmem>>, %arg3: memref<1x8xf32, #tpu.memory_space<vmem>>, %arg4: memref<72x16xbf16, #tpu.memory_space<vmem>>, %arg5: memref<1x16xf32, #tpu.memory_space<vmem>>, %arg6: memref<1x16xf32, #tpu.memory_space<vmem>>, %arg7: memref<1x16xf32, #tpu.memory_space<vmem>>, %arg8: memref<144x16xbf16, #tpu.memory_space<vmem>>, %arg9: memref<1x16xf32, #tpu.memory_space<vmem>>, %arg10: memref<8x16xbf16, #tpu.memory_space<vmem>>, %arg11: memref<1x16xf32, #tpu.memory_space<vmem>>, %arg12: memref<160x4xf32, #tpu.memory_space<vmem>>, %arg13: memref<4x16xf32, #tpu.memory_space<vmem>>, %arg14: memref<2x8x8x16xf32, #tpu.memory_space<vmem>>, %arg15: memref<2x10x10x8xbf16, #tpu.memory_space<vmem>>, %arg16: memref<2x10x10x16xbf16, #tpu.memory_space<vmem>>) attributes {dimension_semantics = [#tpu.dimension_semantics<parallel>], iteration_bounds = array<i64: 2>, scalar_prefetch = 0 : i64, scratch_operands = 2 : i64, tpu.core_type = #tpu.core_type<tc>, window_params = [{transform_indices = @transform_0, window_bounds = array<i64: 2, 8, 8, 8>}, {pipeline_mode = #tpu.pipeline_mode<synchronous>, transform_indices = @transform_1, window_bounds = array<i64: 1, 8>}, {pipeline_mode = #tpu.pipeline_mode<synchronous>, transform_indices = @transform_2, window_bounds = array<i64: 1, 8>}, {pipeline_mode = #tpu.pipeline_mode<synchronous>, transform_indices = @transform_3, window_bounds = array<i64: 72, 16>}, {pipeline_mode = #tpu.pipeline_mode<synchronous>, transform_indices = @transform_4, window_bounds = array<i64: 1, 16>}, {pipeline_mode = #tpu.pipeline_mode<synchronous>, transform_indices = @transform_5, window_bounds = array<i64: 1, 16>}, {pipeline_mode = #tpu.pipeline_mode<synchronous>, transform_indices = @transform_6, window_bounds = array<i64: 1, 16>}, {pipeline_mode = #tpu.pipeline_mode<synchronous>, transform_indices = @transform_7, window_bounds = array<i64: 144, 16>}, {pipeline_mode = #tpu.pipeline_mode<synchronous>, transform_indices = @transform_8, window_bounds = array<i64: 1, 16>}, {pipeline_mode = #tpu.pipeline_mode<synchronous>, transform_indices = @transform_9, window_bounds = array<i64: 8, 16>}, {pipeline_mode = #tpu.pipeline_mode<synchronous>, transform_indices = @transform_10, window_bounds = array<i64: 1, 16>}, {pipeline_mode = #tpu.pipeline_mode<synchronous>, transform_indices = @transform_11, window_bounds = array<i64: 160, 4>}, {pipeline_mode = #tpu.pipeline_mode<synchronous>, transform_indices = @transform_12, window_bounds = array<i64: 4, 16>}, {transform_indices = @transform_13, window_bounds = array<i64: 2, 8, 8, 16>}]} {
    %c0 = arith.constant 0 : index
    %c0_0 = arith.constant 0 : index
    %c0_1 = arith.constant 0 : index
    %c0_2 = arith.constant 0 : index
    %0 = vector.load %arg1[%c0, %c0_0, %c0_1, %c0_2] : memref<2x8x8x8xf32, #tpu.memory_space<vmem>>, vector<2x8x8x8xf32>
    %1 = vector.shape_cast %0 : vector<2x8x8x8xf32> to vector<128x8xf32>
    %c0_3 = arith.constant 0 : index
    %c0_4 = arith.constant 0 : index
    %2 = vector.load %arg2[%c0_3, %c0_4] : memref<1x8xf32, #tpu.memory_space<vmem>>, vector<1x8xf32>
    %3 = vector.broadcast %2 : vector<1x8xf32> to vector<128x8xf32>
    %4 = arith.mulf %1, %3 : vector<128x8xf32>
    %c0_5 = arith.constant 0 : index
    %c0_6 = arith.constant 0 : index
    %5 = vector.load %arg3[%c0_5, %c0_6] : memref<1x8xf32, #tpu.memory_space<vmem>>, vector<1x8xf32>
    %6 = vector.broadcast %5 : vector<1x8xf32> to vector<128x8xf32>
    %7 = arith.addf %4, %6 : vector<128x8xf32>
    %cst = arith.constant 0.000000e+00 : f32
    %8 = vector.broadcast %cst : f32 to vector<128x8xf32>
    %9 = arith.maximumf %7, %8 : vector<128x8xf32>
    %10 = arith.truncf %9 : vector<128x8xf32> to vector<128x8xbf16>
    %cst_7 = arith.constant 0.000000e+00 : bf16
    %11 = vector.broadcast %cst_7 : bf16 to vector<2x1x10x8xbf16>
    %cst_8 = arith.constant 0.000000e+00 : bf16
    %12 = vector.broadcast %cst_8 : bf16 to vector<2x10x1x8xbf16>
    %c0_9 = arith.constant 0 : index
    %c0_10 = arith.constant 0 : index
    %c0_11 = arith.constant 0 : index
    %c0_12 = arith.constant 0 : index
    %13 = vector.load %arg15[%c0_9, %c0_10, %c0_11, %c0_12] : memref<2x10x10x8xbf16, #tpu.memory_space<vmem>>, vector<2x1x10x8xbf16>
    tpu.vector_store %arg15[%c0_9, %c0_10, %c0_11, %c0_12], %11 {strides = array<i32>} : memref<2x10x10x8xbf16, #tpu.memory_space<vmem>>, vector<2x1x10x8xbf16>,
    %c0_13 = arith.constant 0 : index
    %c9 = arith.constant 9 : index
    %c0_14 = arith.constant 0 : index
    %c0_15 = arith.constant 0 : index
    %14 = vector.load %arg15[%c0_13, %c9, %c0_14, %c0_15] : memref<2x10x10x8xbf16, #tpu.memory_space<vmem>>, vector<2x1x10x8xbf16>
    tpu.vector_store %arg15[%c0_13, %c9, %c0_14, %c0_15], %11 {strides = array<i32>} : memref<2x10x10x8xbf16, #tpu.memory_space<vmem>>, vector<2x1x10x8xbf16>,
    %c0_16 = arith.constant 0 : index
    %c0_17 = arith.constant 0 : index
    %c0_18 = arith.constant 0 : index
    %c0_19 = arith.constant 0 : index
    %15 = vector.load %arg15[%c0_16, %c0_17, %c0_18, %c0_19] : memref<2x10x10x8xbf16, #tpu.memory_space<vmem>>, vector<2x10x1x8xbf16>
    tpu.vector_store %arg15[%c0_16, %c0_17, %c0_18, %c0_19], %12 {strides = array<i32>} : memref<2x10x10x8xbf16, #tpu.memory_space<vmem>>, vector<2x10x1x8xbf16>,
    %c0_20 = arith.constant 0 : index
    %c0_21 = arith.constant 0 : index
    %c9_22 = arith.constant 9 : index
    %c0_23 = arith.constant 0 : index
    %16 = vector.load %arg15[%c0_20, %c0_21, %c9_22, %c0_23] : memref<2x10x10x8xbf16, #tpu.memory_space<vmem>>, vector<2x10x1x8xbf16>
    tpu.vector_store %arg15[%c0_20, %c0_21, %c9_22, %c0_23], %12 {strides = array<i32>} : memref<2x10x10x8xbf16, #tpu.memory_space<vmem>>, vector<2x10x1x8xbf16>,
    %17 = vector.shape_cast %10 : vector<128x8xbf16> to vector<2x8x8x8xbf16>
    %c0_24 = arith.constant 0 : index
    %c1 = arith.constant 1 : index
    %c1_25 = arith.constant 1 : index
    %c0_26 = arith.constant 0 : index
    %18 = vector.load %arg15[%c0_24, %c1, %c1_25, %c0_26] : memref<2x10x10x8xbf16, #tpu.memory_space<vmem>>, vector<2x8x8x8xbf16>
    tpu.vector_store %arg15[%c0_24, %c1, %c1_25, %c0_26], %17 {strides = array<i32>} : memref<2x10x10x8xbf16, #tpu.memory_space<vmem>>, vector<2x8x8x8xbf16>,
    %c0_27 = arith.constant 0 : index
    %c0_28 = arith.constant 0 : index
    %19 = vector.load %arg4[%c0_27, %c0_28] : memref<72x16xbf16, #tpu.memory_space<vmem>>, vector<72x16xbf16>
    %cst_29 = arith.constant 0.000000e+00 : f32
    %20 = vector.broadcast %cst_29 : f32 to vector<128x16xf32>
    %c0_30 = arith.constant 0 : index
    %c0_31 = arith.constant 0 : index
    %c0_32 = arith.constant 0 : index
    %c0_33 = arith.constant 0 : index
    %21 = vector.load %arg15[%c0_30, %c0_31, %c0_32, %c0_33] : memref<2x10x10x8xbf16, #tpu.memory_space<vmem>>, vector<2x8x8x8xbf16>
    %22 = vector.shape_cast %21 : vector<2x8x8x8xbf16> to vector<128x8xbf16>
    %23 = vector.extract_strided_slice %19 {offsets = [0, 0], sizes = [8, 16], strides = [1, 1]} : vector<72x16xbf16> to vector<8x16xbf16>
    %cst_34 = arith.constant dense<0.000000e+00> : vector<128x16xf32>
    %24 = tpu.matmul %22, %23, %cst_34 {dimension_numbers = #tpu.dot_dimension_numbers<[1], [0], [0], [1], [0, 0, 1, 1], [], []>} : vector<128x8xbf16>, vector<8x16xbf16>, vector<128x16xf32> -> vector<128x16xf32>
    %25 = arith.addf %20, %24 : vector<128x16xf32>
    %c0_35 = arith.constant 0 : index
    %c0_36 = arith.constant 0 : index
    %c1_37 = arith.constant 1 : index
    %c0_38 = arith.constant 0 : index
    %26 = vector.load %arg15[%c0_35, %c0_36, %c1_37, %c0_38] : memref<2x10x10x8xbf16, #tpu.memory_space<vmem>>, vector<2x8x8x8xbf16>
    %27 = vector.shape_cast %26 : vector<2x8x8x8xbf16> to vector<128x8xbf16>
    %28 = vector.extract_strided_slice %19 {offsets = [8, 0], sizes = [8, 16], strides = [1, 1]} : vector<72x16xbf16> to vector<8x16xbf16>
    %cst_39 = arith.constant dense<0.000000e+00> : vector<128x16xf32>
    %29 = tpu.matmul %27, %28, %cst_39 {dimension_numbers = #tpu.dot_dimension_numbers<[1], [0], [0], [1], [0, 0, 1, 1], [], []>} : vector<128x8xbf16>, vector<8x16xbf16>, vector<128x16xf32> -> vector<128x16xf32>
    %30 = arith.addf %25, %29 : vector<128x16xf32>
    %c0_40 = arith.constant 0 : index
    %c0_41 = arith.constant 0 : index
    %c2 = arith.constant 2 : index
    %c0_42 = arith.constant 0 : index
    %31 = vector.load %arg15[%c0_40, %c0_41, %c2, %c0_42] : memref<2x10x10x8xbf16, #tpu.memory_space<vmem>>, vector<2x8x8x8xbf16>
    %32 = vector.shape_cast %31 : vector<2x8x8x8xbf16> to vector<128x8xbf16>
    %33 = vector.extract_strided_slice %19 {offsets = [16, 0], sizes = [8, 16], strides = [1, 1]} : vector<72x16xbf16> to vector<8x16xbf16>
    %cst_43 = arith.constant dense<0.000000e+00> : vector<128x16xf32>
    %34 = tpu.matmul %32, %33, %cst_43 {dimension_numbers = #tpu.dot_dimension_numbers<[1], [0], [0], [1], [0, 0, 1, 1], [], []>} : vector<128x8xbf16>, vector<8x16xbf16>, vector<128x16xf32> -> vector<128x16xf32>
    %35 = arith.addf %30, %34 : vector<128x16xf32>
    %c0_44 = arith.constant 0 : index
    %c1_45 = arith.constant 1 : index
    %c0_46 = arith.constant 0 : index
    %c0_47 = arith.constant 0 : index
    %36 = vector.load %arg15[%c0_44, %c1_45, %c0_46, %c0_47] : memref<2x10x10x8xbf16, #tpu.memory_space<vmem>>, vector<2x8x8x8xbf16>
    %37 = vector.shape_cast %36 : vector<2x8x8x8xbf16> to vector<128x8xbf16>
    %38 = vector.extract_strided_slice %19 {offsets = [24, 0], sizes = [8, 16], strides = [1, 1]} : vector<72x16xbf16> to vector<8x16xbf16>
    %cst_48 = arith.constant dense<0.000000e+00> : vector<128x16xf32>
    %39 = tpu.matmul %37, %38, %cst_48 {dimension_numbers = #tpu.dot_dimension_numbers<[1], [0], [0], [1], [0, 0, 1, 1], [], []>} : vector<128x8xbf16>, vector<8x16xbf16>, vector<128x16xf32> -> vector<128x16xf32>
    %40 = arith.addf %35, %39 : vector<128x16xf32>
    %c0_49 = arith.constant 0 : index
    %c1_50 = arith.constant 1 : index
    %c1_51 = arith.constant 1 : index
    %c0_52 = arith.constant 0 : index
    %41 = vector.load %arg15[%c0_49, %c1_50, %c1_51, %c0_52] : memref<2x10x10x8xbf16, #tpu.memory_space<vmem>>, vector<2x8x8x8xbf16>
    %42 = vector.shape_cast %41 : vector<2x8x8x8xbf16> to vector<128x8xbf16>
    %43 = vector.extract_strided_slice %19 {offsets = [32, 0], sizes = [8, 16], strides = [1, 1]} : vector<72x16xbf16> to vector<8x16xbf16>
    %cst_53 = arith.constant dense<0.000000e+00> : vector<128x16xf32>
    %44 = tpu.matmul %42, %43, %cst_53 {dimension_numbers = #tpu.dot_dimension_numbers<[1], [0], [0], [1], [0, 0, 1, 1], [], []>} : vector<128x8xbf16>, vector<8x16xbf16>, vector<128x16xf32> -> vector<128x16xf32>
    %45 = arith.addf %40, %44 : vector<128x16xf32>
    %c0_54 = arith.constant 0 : index
    %c1_55 = arith.constant 1 : index
    %c2_56 = arith.constant 2 : index
    %c0_57 = arith.constant 0 : index
    %46 = vector.load %arg15[%c0_54, %c1_55, %c2_56, %c0_57] : memref<2x10x10x8xbf16, #tpu.memory_space<vmem>>, vector<2x8x8x8xbf16>
    %47 = vector.shape_cast %46 : vector<2x8x8x8xbf16> to vector<128x8xbf16>
    %48 = vector.extract_strided_slice %19 {offsets = [40, 0], sizes = [8, 16], strides = [1, 1]} : vector<72x16xbf16> to vector<8x16xbf16>
    %cst_58 = arith.constant dense<0.000000e+00> : vector<128x16xf32>
    %49 = tpu.matmul %47, %48, %cst_58 {dimension_numbers = #tpu.dot_dimension_numbers<[1], [0], [0], [1], [0, 0, 1, 1], [], []>} : vector<128x8xbf16>, vector<8x16xbf16>, vector<128x16xf32> -> vector<128x16xf32>
    %50 = arith.addf %45, %49 : vector<128x16xf32>
    %c0_59 = arith.constant 0 : index
    %c2_60 = arith.constant 2 : index
    %c0_61 = arith.constant 0 : index
    %c0_62 = arith.constant 0 : index
    %51 = vector.load %arg15[%c0_59, %c2_60, %c0_61, %c0_62] : memref<2x10x10x8xbf16, #tpu.memory_space<vmem>>, vector<2x8x8x8xbf16>
    %52 = vector.shape_cast %51 : vector<2x8x8x8xbf16> to vector<128x8xbf16>
    %53 = vector.extract_strided_slice %19 {offsets = [48, 0], sizes = [8, 16], strides = [1, 1]} : vector<72x16xbf16> to vector<8x16xbf16>
    %cst_63 = arith.constant dense<0.000000e+00> : vector<128x16xf32>
    %54 = tpu.matmul %52, %53, %cst_63 {dimension_numbers = #tpu.dot_dimension_numbers<[1], [0], [0], [1], [0, 0, 1, 1], [], []>} : vector<128x8xbf16>, vector<8x16xbf16>, vector<128x16xf32> -> vector<128x16xf32>
    %55 = arith.addf %50, %54 : vector<128x16xf32>
    %c0_64 = arith.constant 0 : index
    %c2_65 = arith.constant 2 : index
    %c1_66 = arith.constant 1 : index
    %c0_67 = arith.constant 0 : index
    %56 = vector.load %arg15[%c0_64, %c2_65, %c1_66, %c0_67] : memref<2x10x10x8xbf16, #tpu.memory_space<vmem>>, vector<2x8x8x8xbf16>
    %57 = vector.shape_cast %56 : vector<2x8x8x8xbf16> to vector<128x8xbf16>
    %58 = vector.extract_strided_slice %19 {offsets = [56, 0], sizes = [8, 16], strides = [1, 1]} : vector<72x16xbf16> to vector<8x16xbf16>
    %cst_68 = arith.constant dense<0.000000e+00> : vector<128x16xf32>
    %59 = tpu.matmul %57, %58, %cst_68 {dimension_numbers = #tpu.dot_dimension_numbers<[1], [0], [0], [1], [0, 0, 1, 1], [], []>} : vector<128x8xbf16>, vector<8x16xbf16>, vector<128x16xf32> -> vector<128x16xf32>
    %60 = arith.addf %55, %59 : vector<128x16xf32>
    %c0_69 = arith.constant 0 : index
    %c2_70 = arith.constant 2 : index
    %c2_71 = arith.constant 2 : index
    %c0_72 = arith.constant 0 : index
    %61 = vector.load %arg15[%c0_69, %c2_70, %c2_71, %c0_72] : memref<2x10x10x8xbf16, #tpu.memory_space<vmem>>, vector<2x8x8x8xbf16>
    %62 = vector.shape_cast %61 : vector<2x8x8x8xbf16> to vector<128x8xbf16>
    %63 = vector.extract_strided_slice %19 {offsets = [64, 0], sizes = [8, 16], strides = [1, 1]} : vector<72x16xbf16> to vector<8x16xbf16>
    %cst_73 = arith.constant dense<0.000000e+00> : vector<128x16xf32>
    %64 = tpu.matmul %62, %63, %cst_73 {dimension_numbers = #tpu.dot_dimension_numbers<[1], [0], [0], [1], [0, 0, 1, 1], [], []>} : vector<128x8xbf16>, vector<8x16xbf16>, vector<128x16xf32> -> vector<128x16xf32>
    %65 = arith.addf %60, %64 : vector<128x16xf32>
    %c0_74 = arith.constant 0 : index
    %c0_75 = arith.constant 0 : index
    %66 = vector.load %arg5[%c0_74, %c0_75] : memref<1x16xf32, #tpu.memory_space<vmem>>, vector<1x16xf32>
    %67 = vector.broadcast %66 : vector<1x16xf32> to vector<128x16xf32>
    %68 = arith.addf %65, %67 : vector<128x16xf32>
    %c0_76 = arith.constant 0 : index
    %c0_77 = arith.constant 0 : index
    %69 = vector.load %arg6[%c0_76, %c0_77] : memref<1x16xf32, #tpu.memory_space<vmem>>, vector<1x16xf32>
    %70 = vector.broadcast %69 : vector<1x16xf32> to vector<128x16xf32>
    %71 = arith.mulf %68, %70 : vector<128x16xf32>
    %c0_78 = arith.constant 0 : index
    %c0_79 = arith.constant 0 : index
    %72 = vector.load %arg7[%c0_78, %c0_79] : memref<1x16xf32, #tpu.memory_space<vmem>>, vector<1x16xf32>
    %73 = vector.broadcast %72 : vector<1x16xf32> to vector<128x16xf32>
    %74 = arith.addf %71, %73 : vector<128x16xf32>
    %cst_80 = arith.constant 0.000000e+00 : f32
    %75 = vector.broadcast %cst_80 : f32 to vector<128x16xf32>
    %76 = arith.maximumf %74, %75 : vector<128x16xf32>
    %77 = arith.truncf %76 : vector<128x16xf32> to vector<128x16xbf16>
    %cst_81 = arith.constant 0.000000e+00 : bf16
    %78 = vector.broadcast %cst_81 : bf16 to vector<2x1x10x16xbf16>
    %cst_82 = arith.constant 0.000000e+00 : bf16
    %79 = vector.broadcast %cst_82 : bf16 to vector<2x10x1x16xbf16>
    %c0_83 = arith.constant 0 : index
    %c0_84 = arith.constant 0 : index
    %c0_85 = arith.constant 0 : index
    %c0_86 = arith.constant 0 : index
    %80 = vector.load %arg16[%c0_83, %c0_84, %c0_85, %c0_86] : memref<2x10x10x16xbf16, #tpu.memory_space<vmem>>, vector<2x1x10x16xbf16>
    tpu.vector_store %arg16[%c0_83, %c0_84, %c0_85, %c0_86], %78 {strides = array<i32>} : memref<2x10x10x16xbf16, #tpu.memory_space<vmem>>, vector<2x1x10x16xbf16>,
    %c0_87 = arith.constant 0 : index
    %c9_88 = arith.constant 9 : index
    %c0_89 = arith.constant 0 : index
    %c0_90 = arith.constant 0 : index
    %81 = vector.load %arg16[%c0_87, %c9_88, %c0_89, %c0_90] : memref<2x10x10x16xbf16, #tpu.memory_space<vmem>>, vector<2x1x10x16xbf16>
    tpu.vector_store %arg16[%c0_87, %c9_88, %c0_89, %c0_90], %78 {strides = array<i32>} : memref<2x10x10x16xbf16, #tpu.memory_space<vmem>>, vector<2x1x10x16xbf16>,
    %c0_91 = arith.constant 0 : index
    %c0_92 = arith.constant 0 : index
    %c0_93 = arith.constant 0 : index
    %c0_94 = arith.constant 0 : index
    %82 = vector.load %arg16[%c0_91, %c0_92, %c0_93, %c0_94] : memref<2x10x10x16xbf16, #tpu.memory_space<vmem>>, vector<2x10x1x16xbf16>
    tpu.vector_store %arg16[%c0_91, %c0_92, %c0_93, %c0_94], %79 {strides = array<i32>} : memref<2x10x10x16xbf16, #tpu.memory_space<vmem>>, vector<2x10x1x16xbf16>,
    %c0_95 = arith.constant 0 : index
    %c0_96 = arith.constant 0 : index
    %c9_97 = arith.constant 9 : index
    %c0_98 = arith.constant 0 : index
    %83 = vector.load %arg16[%c0_95, %c0_96, %c9_97, %c0_98] : memref<2x10x10x16xbf16, #tpu.memory_space<vmem>>, vector<2x10x1x16xbf16>
    tpu.vector_store %arg16[%c0_95, %c0_96, %c9_97, %c0_98], %79 {strides = array<i32>} : memref<2x10x10x16xbf16, #tpu.memory_space<vmem>>, vector<2x10x1x16xbf16>,
    %84 = vector.shape_cast %77 : vector<128x16xbf16> to vector<2x8x8x16xbf16>
    %c0_99 = arith.constant 0 : index
    %c1_100 = arith.constant 1 : index
    %c1_101 = arith.constant 1 : index
    %c0_102 = arith.constant 0 : index
    %85 = vector.load %arg16[%c0_99, %c1_100, %c1_101, %c0_102] : memref<2x10x10x16xbf16, #tpu.memory_space<vmem>>, vector<2x8x8x16xbf16>
    tpu.vector_store %arg16[%c0_99, %c1_100, %c1_101, %c0_102], %84 {strides = array<i32>} : memref<2x10x10x16xbf16, #tpu.memory_space<vmem>>, vector<2x8x8x16xbf16>,
    %c0_103 = arith.constant 0 : index
    %c0_104 = arith.constant 0 : index
    %86 = vector.load %arg8[%c0_103, %c0_104] : memref<144x16xbf16, #tpu.memory_space<vmem>>, vector<144x16xbf16>
    %cst_105 = arith.constant 0.000000e+00 : f32
    %87 = vector.broadcast %cst_105 : f32 to vector<128x16xf32>
    %c0_106 = arith.constant 0 : index
    %c0_107 = arith.constant 0 : index
    %c0_108 = arith.constant 0 : index
    %c0_109 = arith.constant 0 : index
    %88 = vector.load %arg16[%c0_106, %c0_107, %c0_108, %c0_109] : memref<2x10x10x16xbf16, #tpu.memory_space<vmem>>, vector<2x8x8x16xbf16>
    %89 = vector.shape_cast %88 : vector<2x8x8x16xbf16> to vector<128x16xbf16>
    %90 = vector.extract_strided_slice %86 {offsets = [0, 0], sizes = [16, 16], strides = [1, 1]} : vector<144x16xbf16> to vector<16x16xbf16>
    %cst_110 = arith.constant dense<0.000000e+00> : vector<128x16xf32>
    %91 = tpu.matmul %89, %90, %cst_110 {dimension_numbers = #tpu.dot_dimension_numbers<[1], [0], [0], [1], [0, 0, 1, 1], [], []>} : vector<128x16xbf16>, vector<16x16xbf16>, vector<128x16xf32> -> vector<128x16xf32>
    %92 = arith.addf %87, %91 : vector<128x16xf32>
    %c0_111 = arith.constant 0 : index
    %c0_112 = arith.constant 0 : index
    %c1_113 = arith.constant 1 : index
    %c0_114 = arith.constant 0 : index
    %93 = vector.load %arg16[%c0_111, %c0_112, %c1_113, %c0_114] : memref<2x10x10x16xbf16, #tpu.memory_space<vmem>>, vector<2x8x8x16xbf16>
    %94 = vector.shape_cast %93 : vector<2x8x8x16xbf16> to vector<128x16xbf16>
    %95 = vector.extract_strided_slice %86 {offsets = [16, 0], sizes = [16, 16], strides = [1, 1]} : vector<144x16xbf16> to vector<16x16xbf16>
    %cst_115 = arith.constant dense<0.000000e+00> : vector<128x16xf32>
    %96 = tpu.matmul %94, %95, %cst_115 {dimension_numbers = #tpu.dot_dimension_numbers<[1], [0], [0], [1], [0, 0, 1, 1], [], []>} : vector<128x16xbf16>, vector<16x16xbf16>, vector<128x16xf32> -> vector<128x16xf32>
    %97 = arith.addf %92, %96 : vector<128x16xf32>
    %c0_116 = arith.constant 0 : index
    %c0_117 = arith.constant 0 : index
    %c2_118 = arith.constant 2 : index
    %c0_119 = arith.constant 0 : index
    %98 = vector.load %arg16[%c0_116, %c0_117, %c2_118, %c0_119] : memref<2x10x10x16xbf16, #tpu.memory_space<vmem>>, vector<2x8x8x16xbf16>
    %99 = vector.shape_cast %98 : vector<2x8x8x16xbf16> to vector<128x16xbf16>
    %100 = vector.extract_strided_slice %86 {offsets = [32, 0], sizes = [16, 16], strides = [1, 1]} : vector<144x16xbf16> to vector<16x16xbf16>
    %cst_120 = arith.constant dense<0.000000e+00> : vector<128x16xf32>
    %101 = tpu.matmul %99, %100, %cst_120 {dimension_numbers = #tpu.dot_dimension_numbers<[1], [0], [0], [1], [0, 0, 1, 1], [], []>} : vector<128x16xbf16>, vector<16x16xbf16>, vector<128x16xf32> -> vector<128x16xf32>
    %102 = arith.addf %97, %101 : vector<128x16xf32>
    %c0_121 = arith.constant 0 : index
    %c1_122 = arith.constant 1 : index
    %c0_123 = arith.constant 0 : index
    %c0_124 = arith.constant 0 : index
    %103 = vector.load %arg16[%c0_121, %c1_122, %c0_123, %c0_124] : memref<2x10x10x16xbf16, #tpu.memory_space<vmem>>, vector<2x8x8x16xbf16>
    %104 = vector.shape_cast %103 : vector<2x8x8x16xbf16> to vector<128x16xbf16>
    %105 = vector.extract_strided_slice %86 {offsets = [48, 0], sizes = [16, 16], strides = [1, 1]} : vector<144x16xbf16> to vector<16x16xbf16>
    %cst_125 = arith.constant dense<0.000000e+00> : vector<128x16xf32>
    %106 = tpu.matmul %104, %105, %cst_125 {dimension_numbers = #tpu.dot_dimension_numbers<[1], [0], [0], [1], [0, 0, 1, 1], [], []>} : vector<128x16xbf16>, vector<16x16xbf16>, vector<128x16xf32> -> vector<128x16xf32>
    %107 = arith.addf %102, %106 : vector<128x16xf32>
    %c0_126 = arith.constant 0 : index
    %c1_127 = arith.constant 1 : index
    %c1_128 = arith.constant 1 : index
    %c0_129 = arith.constant 0 : index
    %108 = vector.load %arg16[%c0_126, %c1_127, %c1_128, %c0_129] : memref<2x10x10x16xbf16, #tpu.memory_space<vmem>>, vector<2x8x8x16xbf16>
    %109 = vector.shape_cast %108 : vector<2x8x8x16xbf16> to vector<128x16xbf16>
    %110 = vector.extract_strided_slice %86 {offsets = [64, 0], sizes = [16, 16], strides = [1, 1]} : vector<144x16xbf16> to vector<16x16xbf16>
    %cst_130 = arith.constant dense<0.000000e+00> : vector<128x16xf32>
    %111 = tpu.matmul %109, %110, %cst_130 {dimension_numbers = #tpu.dot_dimension_numbers<[1], [0], [0], [1], [0, 0, 1, 1], [], []>} : vector<128x16xbf16>, vector<16x16xbf16>, vector<128x16xf32> -> vector<128x16xf32>
    %112 = arith.addf %107, %111 : vector<128x16xf32>
    %c0_131 = arith.constant 0 : index
    %c1_132 = arith.constant 1 : index
    %c2_133 = arith.constant 2 : index
    %c0_134 = arith.constant 0 : index
    %113 = vector.load %arg16[%c0_131, %c1_132, %c2_133, %c0_134] : memref<2x10x10x16xbf16, #tpu.memory_space<vmem>>, vector<2x8x8x16xbf16>
    %114 = vector.shape_cast %113 : vector<2x8x8x16xbf16> to vector<128x16xbf16>
    %115 = vector.extract_strided_slice %86 {offsets = [80, 0], sizes = [16, 16], strides = [1, 1]} : vector<144x16xbf16> to vector<16x16xbf16>
    %cst_135 = arith.constant dense<0.000000e+00> : vector<128x16xf32>
    %116 = tpu.matmul %114, %115, %cst_135 {dimension_numbers = #tpu.dot_dimension_numbers<[1], [0], [0], [1], [0, 0, 1, 1], [], []>} : vector<128x16xbf16>, vector<16x16xbf16>, vector<128x16xf32> -> vector<128x16xf32>
    %117 = arith.addf %112, %116 : vector<128x16xf32>
    %c0_136 = arith.constant 0 : index
    %c2_137 = arith.constant 2 : index
    %c0_138 = arith.constant 0 : index
    %c0_139 = arith.constant 0 : index
    %118 = vector.load %arg16[%c0_136, %c2_137, %c0_138, %c0_139] : memref<2x10x10x16xbf16, #tpu.memory_space<vmem>>, vector<2x8x8x16xbf16>
    %119 = vector.shape_cast %118 : vector<2x8x8x16xbf16> to vector<128x16xbf16>
    %120 = vector.extract_strided_slice %86 {offsets = [96, 0], sizes = [16, 16], strides = [1, 1]} : vector<144x16xbf16> to vector<16x16xbf16>
    %cst_140 = arith.constant dense<0.000000e+00> : vector<128x16xf32>
    %121 = tpu.matmul %119, %120, %cst_140 {dimension_numbers = #tpu.dot_dimension_numbers<[1], [0], [0], [1], [0, 0, 1, 1], [], []>} : vector<128x16xbf16>, vector<16x16xbf16>, vector<128x16xf32> -> vector<128x16xf32>
    %122 = arith.addf %117, %121 : vector<128x16xf32>
    %c0_141 = arith.constant 0 : index
    %c2_142 = arith.constant 2 : index
    %c1_143 = arith.constant 1 : index
    %c0_144 = arith.constant 0 : index
    %123 = vector.load %arg16[%c0_141, %c2_142, %c1_143, %c0_144] : memref<2x10x10x16xbf16, #tpu.memory_space<vmem>>, vector<2x8x8x16xbf16>
    %124 = vector.shape_cast %123 : vector<2x8x8x16xbf16> to vector<128x16xbf16>
    %125 = vector.extract_strided_slice %86 {offsets = [112, 0], sizes = [16, 16], strides = [1, 1]} : vector<144x16xbf16> to vector<16x16xbf16>
    %cst_145 = arith.constant dense<0.000000e+00> : vector<128x16xf32>
    %126 = tpu.matmul %124, %125, %cst_145 {dimension_numbers = #tpu.dot_dimension_numbers<[1], [0], [0], [1], [0, 0, 1, 1], [], []>} : vector<128x16xbf16>, vector<16x16xbf16>, vector<128x16xf32> -> vector<128x16xf32>
    %127 = arith.addf %122, %126 : vector<128x16xf32>
    %c0_146 = arith.constant 0 : index
    %c2_147 = arith.constant 2 : index
    %c2_148 = arith.constant 2 : index
    %c0_149 = arith.constant 0 : index
    %128 = vector.load %arg16[%c0_146, %c2_147, %c2_148, %c0_149] : memref<2x10x10x16xbf16, #tpu.memory_space<vmem>>, vector<2x8x8x16xbf16>
    %129 = vector.shape_cast %128 : vector<2x8x8x16xbf16> to vector<128x16xbf16>
    %130 = vector.extract_strided_slice %86 {offsets = [128, 0], sizes = [16, 16], strides = [1, 1]} : vector<144x16xbf16> to vector<16x16xbf16>
    %cst_150 = arith.constant dense<0.000000e+00> : vector<128x16xf32>
    %131 = tpu.matmul %129, %130, %cst_150 {dimension_numbers = #tpu.dot_dimension_numbers<[1], [0], [0], [1], [0, 0, 1, 1], [], []>} : vector<128x16xbf16>, vector<16x16xbf16>, vector<128x16xf32> -> vector<128x16xf32>
    %132 = arith.addf %127, %131 : vector<128x16xf32>
    %c0_151 = arith.constant 0 : index
    %c0_152 = arith.constant 0 : index
    %133 = vector.load %arg9[%c0_151, %c0_152] : memref<1x16xf32, #tpu.memory_space<vmem>>, vector<1x16xf32>
    %134 = vector.broadcast %133 : vector<1x16xf32> to vector<128x16xf32>
    %135 = arith.addf %132, %134 : vector<128x16xf32>
    %136 = vector.shape_cast %135 : vector<128x16xf32> to vector<2x8x8x16xf32>
    %137 = vector.extract_strided_slice %136 {offsets = [0, 0, 0, 0], sizes = [2, 4, 4, 16], strides = [1, 1, 1, 1]} : vector<2x8x8x16xf32> to vector<2x4x4x16xf32>
    %cst_153 = arith.constant dense<0.000000e+00> : vector<2x4x16xf32>
    %138 = vector.multi_reduction <add>, %137, %cst_153 [1] : vector<2x4x4x16xf32> to vector<2x4x16xf32>
    %cst_154 = arith.constant dense<0.000000e+00> : vector<2x16xf32>
    %139 = vector.multi_reduction <add>, %138, %cst_154 [1] : vector<2x4x16xf32> to vector<2x16xf32>
    %cst_155 = arith.constant 6.250000e-02 : f32
    %140 = vector.broadcast %cst_155 : f32 to vector<2x16xf32>
    %141 = arith.mulf %139, %140 : vector<2x16xf32>
    %cst_156 = arith.constant dense<0xFF800000> : vector<2x4x16xf32>
    %142 = vector.multi_reduction <maximumf>, %137, %cst_156 [1] : vector<2x4x4x16xf32> to vector<2x4x16xf32>
    %cst_157 = arith.constant dense<0xFF800000> : vector<2x16xf32>
    %143 = vector.multi_reduction <maximumf>, %142, %cst_157 [1] : vector<2x4x16xf32> to vector<2x16xf32>
    %144 = vector.extract_strided_slice %136 {offsets = [0, 0, 4, 0], sizes = [2, 4, 4, 16], strides = [1, 1, 1, 1]} : vector<2x8x8x16xf32> to vector<2x4x4x16xf32>
    %cst_158 = arith.constant dense<0.000000e+00> : vector<2x4x16xf32>
    %145 = vector.multi_reduction <add>, %144, %cst_158 [1] : vector<2x4x4x16xf32> to vector<2x4x16xf32>
    %cst_159 = arith.constant dense<0.000000e+00> : vector<2x16xf32>
    %146 = vector.multi_reduction <add>, %145, %cst_159 [1] : vector<2x4x16xf32> to vector<2x16xf32>
    %cst_160 = arith.constant 6.250000e-02 : f32
    %147 = vector.broadcast %cst_160 : f32 to vector<2x16xf32>
    %148 = arith.mulf %146, %147 : vector<2x16xf32>
    %cst_161 = arith.constant dense<0xFF800000> : vector<2x4x16xf32>
    %149 = vector.multi_reduction <maximumf>, %144, %cst_161 [1] : vector<2x4x4x16xf32> to vector<2x4x16xf32>
    %cst_162 = arith.constant dense<0xFF800000> : vector<2x16xf32>
    %150 = vector.multi_reduction <maximumf>, %149, %cst_162 [1] : vector<2x4x16xf32> to vector<2x16xf32>
    %151 = vector.extract_strided_slice %136 {offsets = [0, 4, 0, 0], sizes = [2, 4, 4, 16], strides = [1, 1, 1, 1]} : vector<2x8x8x16xf32> to vector<2x4x4x16xf32>
    %cst_163 = arith.constant dense<0.000000e+00> : vector<2x4x16xf32>
    %152 = vector.multi_reduction <add>, %151, %cst_163 [1] : vector<2x4x4x16xf32> to vector<2x4x16xf32>
    %cst_164 = arith.constant dense<0.000000e+00> : vector<2x16xf32>
    %153 = vector.multi_reduction <add>, %152, %cst_164 [1] : vector<2x4x16xf32> to vector<2x16xf32>
    %cst_165 = arith.constant 6.250000e-02 : f32
    %154 = vector.broadcast %cst_165 : f32 to vector<2x16xf32>
    %155 = arith.mulf %153, %154 : vector<2x16xf32>
    %cst_166 = arith.constant dense<0xFF800000> : vector<2x4x16xf32>
    %156 = vector.multi_reduction <maximumf>, %151, %cst_166 [1] : vector<2x4x4x16xf32> to vector<2x4x16xf32>
    %cst_167 = arith.constant dense<0xFF800000> : vector<2x16xf32>
    %157 = vector.multi_reduction <maximumf>, %156, %cst_167 [1] : vector<2x4x16xf32> to vector<2x16xf32>
    %158 = vector.extract_strided_slice %136 {offsets = [0, 4, 4, 0], sizes = [2, 4, 4, 16], strides = [1, 1, 1, 1]} : vector<2x8x8x16xf32> to vector<2x4x4x16xf32>
    %cst_168 = arith.constant dense<0.000000e+00> : vector<2x4x16xf32>
    %159 = vector.multi_reduction <add>, %158, %cst_168 [1] : vector<2x4x4x16xf32> to vector<2x4x16xf32>
    %cst_169 = arith.constant dense<0.000000e+00> : vector<2x16xf32>
    %160 = vector.multi_reduction <add>, %159, %cst_169 [1] : vector<2x4x16xf32> to vector<2x16xf32>
    %cst_170 = arith.constant 6.250000e-02 : f32
    %161 = vector.broadcast %cst_170 : f32 to vector<2x16xf32>
    %162 = arith.mulf %160, %161 : vector<2x16xf32>
    %cst_171 = arith.constant dense<0xFF800000> : vector<2x4x16xf32>
    %163 = vector.multi_reduction <maximumf>, %158, %cst_171 [1] : vector<2x4x4x16xf32> to vector<2x4x16xf32>
    %cst_172 = arith.constant dense<0xFF800000> : vector<2x16xf32>
    %164 = vector.multi_reduction <maximumf>, %163, %cst_172 [1] : vector<2x4x16xf32> to vector<2x16xf32>
    %165 = arith.addf %141, %148 : vector<2x16xf32>
    %166 = arith.addf %165, %155 : vector<2x16xf32>
    %167 = arith.addf %166, %162 : vector<2x16xf32>
    %cst_173 = arith.constant 2.500000e-01 : f32
    %168 = vector.broadcast %cst_173 : f32 to vector<2x16xf32>
    %169 = arith.mulf %167, %168 : vector<2x16xf32>
    %170 = arith.maximumf %143, %150 : vector<2x16xf32>
    %171 = arith.maximumf %157, %164 : vector<2x16xf32>
    %172 = arith.maximumf %170, %171 : vector<2x16xf32>
    %173 = tpu.concatenate %169, %141, %148, %155, %162, %172, %143, %150, %157, %164 in 1 : vector<2x16xf32>, vector<2x16xf32>, vector<2x16xf32>, vector<2x16xf32>, vector<2x16xf32>, vector<2x16xf32>, vector<2x16xf32>, vector<2x16xf32>, vector<2x16xf32>, vector<2x16xf32> -> vector<2x160xf32>
    %c0_174 = arith.constant 0 : index
    %c0_175 = arith.constant 0 : index
    %174 = vector.load %arg12[%c0_174, %c0_175] : memref<160x4xf32, #tpu.memory_space<vmem>>, vector<160x4xf32>
    %cst_176 = arith.constant dense<0.000000e+00> : vector<2x4xf32>
    %175 = tpu.matmul %173, %174, %cst_176 {dimension_numbers = #tpu.dot_dimension_numbers<[1], [0], [0], [1], [0, 0, 1, 1], [], []>} : vector<2x160xf32>, vector<160x4xf32>, vector<2x4xf32> -> vector<2x4xf32>
    %cst_177 = arith.constant 0.000000e+00 : f32
    %176 = vector.broadcast %cst_177 : f32 to vector<2x4xf32>
    %177 = arith.maximumf %175, %176 : vector<2x4xf32>
    %c0_178 = arith.constant 0 : index
    %c0_179 = arith.constant 0 : index
    %178 = vector.load %arg13[%c0_178, %c0_179] : memref<4x16xf32, #tpu.memory_space<vmem>>, vector<4x16xf32>
    %cst_180 = arith.constant dense<0.000000e+00> : vector<2x16xf32>
    %179 = tpu.matmul %177, %178, %cst_180 {dimension_numbers = #tpu.dot_dimension_numbers<[1], [0], [0], [1], [0, 0, 1, 1], [], []>} : vector<2x4xf32>, vector<4x16xf32>, vector<2x16xf32> -> vector<2x16xf32>
    %cst_181 = arith.constant 0.000000e+00 : f32
    %180 = vector.broadcast %cst_181 : f32 to vector<2x16xf32>
    %181 = arith.subf %180, %179 : vector<2x16xf32>
    %182 = math.exp %181 : vector<2x16xf32>
    %cst_182 = arith.constant 1.000000e+00 : f32
    %183 = vector.broadcast %cst_182 : f32 to vector<2x16xf32>
    %184 = arith.addf %183, %182 : vector<2x16xf32>
    %cst_183 = arith.constant 1.000000e+00 : f32
    %185 = vector.broadcast %cst_183 : f32 to vector<2x16xf32>
    %186 = arith.divf %185, %184 : vector<2x16xf32>
    %c0_184 = arith.constant 0 : index
    %c1_185 = arith.constant 1 : index
    %c1_186 = arith.constant 1 : index
    %c0_187 = arith.constant 0 : index
    %187 = vector.load %arg15[%c0_184, %c1_185, %c1_186, %c0_187] : memref<2x10x10x8xbf16, #tpu.memory_space<vmem>>, vector<2x8x8x8xbf16>
    %188 = vector.shape_cast %187 : vector<2x8x8x8xbf16> to vector<128x8xbf16>
    %c0_188 = arith.constant 0 : index
    %c0_189 = arith.constant 0 : index
    %189 = vector.load %arg10[%c0_188, %c0_189] : memref<8x16xbf16, #tpu.memory_space<vmem>>, vector<8x16xbf16>
    %cst_190 = arith.constant dense<0.000000e+00> : vector<128x16xf32>
    %190 = tpu.matmul %188, %189, %cst_190 {dimension_numbers = #tpu.dot_dimension_numbers<[1], [0], [0], [1], [0, 0, 1, 1], [], []>} : vector<128x8xbf16>, vector<8x16xbf16>, vector<128x16xf32> -> vector<128x16xf32>
    %c0_191 = arith.constant 0 : index
    %c0_192 = arith.constant 0 : index
    %191 = vector.load %arg11[%c0_191, %c0_192] : memref<1x16xf32, #tpu.memory_space<vmem>>, vector<1x16xf32>
    %192 = vector.broadcast %191 : vector<1x16xf32> to vector<128x16xf32>
    %193 = arith.addf %190, %192 : vector<128x16xf32>
    %194 = vector.shape_cast %186 : vector<2x16xf32> to vector<2x1x1x16xf32>
    %195 = vector.broadcast %194 : vector<2x1x1x16xf32> to vector<2x8x8x16xf32>
    %196 = arith.mulf %136, %195 : vector<2x8x8x16xf32>
    %197 = vector.shape_cast %193 : vector<128x16xf32> to vector<2x8x8x16xf32>
    %198 = arith.addf %196, %197 : vector<2x8x8x16xf32>
    %c0_193 = arith.constant 0 : index
    %c0_194 = arith.constant 0 : index
    %c0_195 = arith.constant 0 : index
    %c0_196 = arith.constant 0 : index
    %199 = vector.load %arg14[%c0_193, %c0_194, %c0_195, %c0_196] : memref<2x8x8x16xf32, #tpu.memory_space<vmem>>, vector<2x8x8x16xf32>
    tpu.vector_store %arg14[%c0_193, %c0_194, %c0_195, %c0_196], %198 {strides = array<i32>} : memref<2x8x8x16xf32, #tpu.memory_space<vmem>>, vector<2x8x8x16xf32>,
    return
  }
  func.func @transform_0(%arg0: i32) -> (i32, i32, i32, i32) {
    %c0_i32 = arith.constant 0 : i32
    %c0_i32_0 = arith.constant 0 : i32
    %c0_i32_1 = arith.constant 0 : i32
    %c0_i32_2 = arith.constant 0 : i32
    return %arg0, %c0_i32, %c0_i32_0, %c0_i32_1 : i32, i32, i32, i32
  }
  func.func @transform_1(%arg0: i32) -> (i32, i32) {
    %c0_i32 = arith.constant 0 : i32
    %c0_i32_0 = arith.constant 0 : i32
    %c0_i32_1 = arith.constant 0 : i32
    return %c0_i32, %c0_i32_0 : i32, i32
  }
  func.func @transform_2(%arg0: i32) -> (i32, i32) {
    %c0_i32 = arith.constant 0 : i32
    %c0_i32_0 = arith.constant 0 : i32
    %c0_i32_1 = arith.constant 0 : i32
    return %c0_i32, %c0_i32_0 : i32, i32
  }
  func.func @transform_3(%arg0: i32) -> (i32, i32) {
    %c0_i32 = arith.constant 0 : i32
    %c0_i32_0 = arith.constant 0 : i32
    %c0_i32_1 = arith.constant 0 : i32
    return %c0_i32, %c0_i32_0 : i32, i32
  }
  func.func @transform_4(%arg0: i32) -> (i32, i32) {
    %c0_i32 = arith.constant 0 : i32
    %c0_i32_0 = arith.constant 0 : i32
    %c0_i32_1 = arith.constant 0 : i32
    return %c0_i32, %c0_i32_0 : i32, i32
  }
  func.func @transform_5(%arg0: i32) -> (i32, i32) {
    %c0_i32 = arith.constant 0 : i32
    %c0_i32_0 = arith.constant 0 : i32
    %c0_i32_1 = arith.constant 0 : i32
    return %c0_i32, %c0_i32_0 : i32, i32
  }
  func.func @transform_6(%arg0: i32) -> (i32, i32) {
    %c0_i32 = arith.constant 0 : i32
    %c0_i32_0 = arith.constant 0 : i32
    %c0_i32_1 = arith.constant 0 : i32
    return %c0_i32, %c0_i32_0 : i32, i32
  }
  func.func @transform_7(%arg0: i32) -> (i32, i32) {
    %c0_i32 = arith.constant 0 : i32
    %c0_i32_0 = arith.constant 0 : i32
    %c0_i32_1 = arith.constant 0 : i32
    return %c0_i32, %c0_i32_0 : i32, i32
  }
  func.func @transform_8(%arg0: i32) -> (i32, i32) {
    %c0_i32 = arith.constant 0 : i32
    %c0_i32_0 = arith.constant 0 : i32
    %c0_i32_1 = arith.constant 0 : i32
    return %c0_i32, %c0_i32_0 : i32, i32
  }
  func.func @transform_9(%arg0: i32) -> (i32, i32) {
    %c0_i32 = arith.constant 0 : i32
    %c0_i32_0 = arith.constant 0 : i32
    %c0_i32_1 = arith.constant 0 : i32
    return %c0_i32, %c0_i32_0 : i32, i32
  }
  func.func @transform_10(%arg0: i32) -> (i32, i32) {
    %c0_i32 = arith.constant 0 : i32
    %c0_i32_0 = arith.constant 0 : i32
    %c0_i32_1 = arith.constant 0 : i32
    return %c0_i32, %c0_i32_0 : i32, i32
  }
  func.func @transform_11(%arg0: i32) -> (i32, i32) {
    %c0_i32 = arith.constant 0 : i32
    %c0_i32_0 = arith.constant 0 : i32
    %c0_i32_1 = arith.constant 0 : i32
    return %c0_i32, %c0_i32_0 : i32, i32
  }
  func.func @transform_12(%arg0: i32) -> (i32, i32) {
    %c0_i32 = arith.constant 0 : i32
    %c0_i32_0 = arith.constant 0 : i32
    %c0_i32_1 = arith.constant 0 : i32
    return %c0_i32, %c0_i32_0 : i32, i32
  }
  func.func @transform_13(%arg0: i32) -> (i32, i32, i32, i32) {
    %c0_i32 = arith.constant 0 : i32
    %c0_i32_0 = arith.constant 0 : i32
    %c0_i32_1 = arith.constant 0 : i32
    %c0_i32_2 = arith.constant 0 : i32
    return %arg0, %c0_i32, %c0_i32_0, %c0_i32_1 : i32, i32, i32, i32
  }
}

</mosaic_0001>

<llo_original>
// kernel: tpu_custom_call.1
$region0: #{tpu_custom_call.1}
  #allocation0 [shape = 'u32[]', space=smem, size = 0x4, offset = 0x4, fixed_abs, tag = 'smem constant byte address 0x4 - core index']
  #allocation1 [shape = 'u32[144,128]{1,0:T(1,128)}', space=vmem, size = 0x12000, scoped, tag = 'internal scratch']
  #allocation2 [shape = 'bf16[2,10,10,8]{3,2,1,0:T(8,128)(2,1)}', space=vmem, size = 0x14000, scoped, tag = 'scratch operand']
  #allocation3 [shape = 'bf16[2,10,10,16]{3,2,1,0:T(8,128)(2,1)}', space=vmem, size = 0x14000, scoped, tag = 'scratch operand']
  %s0 = inlined_call_operand.hbm [shape: f32[4,8,8,8], index: 0, kind: input, shape index: {}]
  %s1 = inlined_call_operand.hbm [shape: f32[1,8], index: 1, kind: input, shape index: {}]
  %s2 = inlined_call_operand.hbm [shape: f32[1,8], index: 2, kind: input, shape index: {}]
  %s3 = inlined_call_operand.hbm [shape: bf16[72,16], index: 3, kind: input, shape index: {}]
  %s4 = inlined_call_operand.hbm [shape: f32[1,16], index: 4, kind: input, shape index: {}]
  %s5 = inlined_call_operand.hbm [shape: f32[1,16], index: 5, kind: input, shape index: {}]
  %s6 = inlined_call_operand.hbm [shape: f32[1,16], index: 6, kind: input, shape index: {}]
  %s7 = inlined_call_operand.hbm [shape: bf16[144,16], index: 7, kind: input, shape index: {}]
  %s8 = inlined_call_operand.hbm [shape: f32[1,16], index: 8, kind: input, shape index: {}]
  %s9 = inlined_call_operand.hbm [shape: bf16[8,16], index: 9, kind: input, shape index: {}]
  %s10 = inlined_call_operand.hbm [shape: f32[1,16], index: 10, kind: input, shape index: {}]
  %s11 = inlined_call_operand.hbm [shape: f32[160,4], index: 11, kind: input, shape index: {}]
  %s12 = inlined_call_operand.hbm [shape: f32[4,16], index: 12, kind: input, shape index: {}]
  %s13 = inlined_call_operand.hbm [shape: f32[4,8,8,16], index: 13, kind: output, shape index: {}]
  %s14 = sld [smem:[#allocation0]]
  $region137: #{tpu_custom_call.1} parent=0
    _
  %s16 = ssub.s32 1, %s14
  %s17 = scalar_select 0, %s16, %s14
  $region1: #{tpu_custom_call.1} parent=0
    #allocation4 [shape = 'u8[131072]{0}', space=vmem, size = 0x20000, scoped, tag = 'input window, operand 0']
    #allocation5 [shape = 's32[2]{0}', space=sflag, size = 0x8, scoped, tag = 'scoped memory for tpu_custom_call.1']
    #allocation6 [shape = 's32[2]{0}', space=sflag, size = 0x8, scoped, tag = 'scoped memory for tpu_custom_call.1']
    #allocation7 [shape = 'u8[512]{0}', space=vmem, size = 0x400, scoped, tag = 'input window, operand 1, single buffered']
    #allocation8 [shape = 's32[1]{0}', space=sflag, size = 0x4, scoped, tag = 'scoped memory for tpu_custom_call.1']
    #allocation9 [shape = 'u8[512]{0}', space=vmem, size = 0x400, scoped, tag = 'input window, operand 2, single buffered']
    #allocation10 [shape = 'u8[18432]{0}', space=vmem, size = 0x4800, scoped, tag = 'input window, operand 3, single buffered']
    #allocation11 [shape = 's32[1]{0}', space=sflag, size = 0x4, scoped, tag = 'scoped memory for tpu_custom_call.1']
    #allocation12 [shape = 'u8[512]{0}', space=vmem, size = 0x400, scoped, tag = 'input window, operand 4, single buffered']
    #allocation13 [shape = 'u8[512]{0}', space=vmem, size = 0x400, scoped, tag = 'input window, operand 5, single buffered']
    #allocation14 [shape = 's32[1]{0}', space=sflag, size = 0x4, scoped, tag = 'scoped memory for tpu_custom_call.1']
    #allocation15 [shape = 'u8[512]{0}', space=vmem, size = 0x400, scoped, tag = 'input window, operand 6, single buffered']
    #allocation16 [shape = 'u8[36864]{0}', space=vmem, size = 0x9000, scoped, tag = 'input window, operand 7, single buffered']
    #allocation17 [shape = 's32[1]{0}', space=sflag, size = 0x4, scoped, tag = 'scoped memory for tpu_custom_call.1']
    #allocation18 [shape = 'u8[512]{0}', space=vmem, size = 0x400, scoped, tag = 'input window, operand 8, single buffered']
    #allocation19 [shape = 'u8[2048]{0}', space=vmem, size = 0x800, scoped, tag = 'input window, operand 9, single buffered']
    #allocation20 [shape = 's32[1]{0}', space=sflag, size = 0x4, scoped, tag = 'scoped memory for tpu_custom_call.1']
    #allocation21 [shape = 'u8[512]{0}', space=vmem, size = 0x400, scoped, tag = 'input window, operand 10, single buffered']
    #allocation22 [shape = 'u8[81920]{0}', space=vmem, size = 0x14000, scoped, tag = 'input window, operand 11, single buffered']
    #allocation23 [shape = 's32[1]{0}', space=sflag, size = 0x4, scoped, tag = 'scoped memory for tpu_custom_call.1']
    #allocation24 [shape = 'u8[2048]{0}', space=vmem, size = 0x800, scoped, tag = 'input window, operand 12, single buffered']
    #allocation25 [shape = 'u8[131072]{0}', space=vmem, size = 0x20000, scoped, tag = 'output window, operand 0']
    %18 = vsyncpa [#allocation5], 0
    %s19 = scalar_lea.sflag [#allocation5], 1
    %20 = vsyncpa %s19, 0
    %21 = vsyncpa [#allocation8], 0
    %22 = vsyncpa [#allocation11], 0
    %23 = vsyncpa [#allocation14], 0
    %24 = vsyncpa [#allocation17], 0
    %25 = vsyncpa [#allocation20], 0
    %26 = vsyncpa [#allocation23], 0
    %27 = vsyncpa [#allocation6], 0
    %s28 = scalar_lea.sflag [#allocation6], 1
    %29 = vsyncpa %s28, 0
    loop: start=0, step=1, limit=4
    $region2: #{tpu_custom_call.1} parent=1 // loop_pre_header
      _
    $region3: #{tpu_custom_call.1} parent=1 // loop_header
      %s31 = sphi 0, %s35
      %p32 = scmp.ge.s32.totalorder %s31, 4
      %s41 = sphi 0, %s43
      %s44 = sphi 0, %s41
      %s45 = sphi 0, %s44
      %s61 = sphi 0, %s45
      %s65 = sphi 0, %s65
      %s67 = sphi 0, %s65
      %s68 = sphi 0, %s67
      %s82 = sphi 0, %s68
      %s86 = sphi 0, %s86
      %s88 = sphi 0, %s86
      %s89 = sphi 0, %s88
      %s103 = sphi 0, %s89
      %s107 = sphi 0, %s107
      %s109 = sphi 0, %s107
      %s110 = sphi 0, %s109
      %s124 = sphi 0, %s110
      %s128 = sphi 0, %s128
      %s130 = sphi 0, %s128
      %s131 = sphi 0, %s130
      %s145 = sphi 0, %s131
      %s149 = sphi 0, %s149
      %s151 = sphi 0, %s149
      %s152 = sphi 0, %s151
      %s166 = sphi 0, %s152
      %s170 = sphi 0, %s170
      %s172 = sphi 0, %s170
      %s173 = sphi 0, %s172
      %s187 = sphi 0, %s173
      %s191 = sphi 0, %s191
      %s193 = sphi 0, %s191
      %s194 = sphi 0, %s193
      %s208 = sphi 0, %s194
      %s212 = sphi 0, %s212
      %s214 = sphi 0, %s212
      %s215 = sphi 0, %s214
      %s229 = sphi 0, %s215
      %s233 = sphi 0, %s233
      %s235 = sphi 0, %s233
      %s236 = sphi 0, %s235
      %s250 = sphi 0, %s236
      %s254 = sphi 0, %s254
      %s256 = sphi 0, %s254
      %s257 = sphi 0, %s256
      %s271 = sphi 0, %s257
      %s275 = sphi 0, %s275
      %s277 = sphi 0, %s275
      %s278 = sphi 0, %s277
      %s292 = sphi 0, %s278
      %s296 = sphi 0, %s296
      %s298 = sphi 0, %s296
      %s299 = sphi 0, %s298
      %s313 = sphi 0, %s299
      %s319 = sphi 0, %s321
      %s322 = sphi 0, %s319
      %s323 = sphi 0, %s322
      %s339 = sphi 0, %s323
    $region4: #{tpu_custom_call.1} parent=1 // loop_header_branch
      %34 = sbr.rel (%p32) target = $region8
    $region5: #{tpu_custom_call.1} parent=1 // loop_body
      %s36 = ssub.s32 %s31, 1
      %s37 = ssub.s32 %s31, 2
      %s38 = sadd.s32 %s31, 1
      %s39 = ssub.s32 %s31, %s38
      %p40 = scmp.eq.s32.totalorder %s39, 0
      %s42 = sadd.s32 %s41, 1
      %s43 = scalar_select %p40, %s41, %s42
      %p46 = pneg %p40
      %p47 = scmp.eq.s32.totalorder %s31, 1
      %p48 = por %p46, %p47
      %p49 = scmp.ne.s32.totalorder %s41, %s44
      %p50 = scmp.eq.s32.totalorder %s31, 0
      %p51 = por %p49, %p50
      %p52 = scmp.ne.s32.totalorder %s41, %s44
      %p53 = scmp.eq.s32.totalorder %s36, 1
      %p54 = por %p52, %p53
      %p55 = scmp.ne.s32.totalorder %s44, %s45
      %p56 = scmp.eq.s32.totalorder %s36, 0
      %p57 = por %p55, %p56
      %p58 = scmp.ne.s32.totalorder %s44, %s45
      %p59 = scmp.eq.s32.totalorder %s37, 1
      %p60 = por %p58, %p59
      %p62 = scmp.ne.s32.totalorder %s45, %s61
      %p63 = scmp.eq.s32.totalorder %s37, 0
      %p64 = por %p62, %p63
      %s66 = sadd.s32 %s65, 1
      %p69 = scmp.eq.s32.totalorder %s31, 1
      %p70 = scmp.ne.s32.totalorder %s65, %s67
      %p71 = scmp.eq.s32.totalorder %s31, 0
      %p72 = por %p70, %p71
      %p73 = scmp.ne.s32.totalorder %s65, %s67
      %p74 = scmp.eq.s32.totalorder %s36, 1
      %p75 = por %p73, %p74
      %p76 = scmp.ne.s32.totalorder %s67, %s68
      %p77 = scmp.eq.s32.totalorder %s36, 0
      %p78 = por %p76, %p77
      %p79 = scmp.ne.s32.totalorder %s67, %s68
      %p80 = scmp.eq.s32.totalorder %s37, 1
      %p81 = por %p79, %p80
      %p83 = scmp.ne.s32.totalorder %s68, %s82
      %p84 = scmp.eq.s32.totalorder %s37, 0
      %p85 = por %p83, %p84
      %s87 = sadd.s32 %s86, 1
      %p90 = scmp.eq.s32.totalorder %s31, 1
      %p91 = scmp.ne.s32.totalorder %s86, %s88
      %p92 = scmp.eq.s32.totalorder %s31, 0
      %p93 = por %p91, %p92
      %p94 = scmp.ne.s32.totalorder %s86, %s88
      %p95 = scmp.eq.s32.totalorder %s36, 1
      %p96 = por %p94, %p95
      %p97 = scmp.ne.s32.totalorder %s88, %s89
      %p98 = scmp.eq.s32.totalorder %s36, 0
      %p99 = por %p97, %p98
      %p100 = scmp.ne.s32.totalorder %s88, %s89
      %p101 = scmp.eq.s32.totalorder %s37, 1
      %p102 = por %p100, %p101
      %p104 = scmp.ne.s32.totalorder %s89, %s103
      %p105 = scmp.eq.s32.totalorder %s37, 0
      %p106 = por %p104, %p105
      %s108 = sadd.s32 %s107, 1
      %p111 = scmp.eq.s32.totalorder %s31, 1
      %p112 = scmp.ne.s32.totalorder %s107, %s109
      %p113 = scmp.eq.s32.totalorder %s31, 0
      %p114 = por %p112, %p113
      %p115 = scmp.ne.s32.totalorder %s107, %s109
      %p116 = scmp.eq.s32.totalorder %s36, 1
      %p117 = por %p115, %p116
      %p118 = scmp.ne.s32.totalorder %s109, %s110
      %p119 = scmp.eq.s32.totalorder %s36, 0
      %p120 = por %p118, %p119
      %p121 = scmp.ne.s32.totalorder %s109, %s110
      %p122 = scmp.eq.s32.totalorder %s37, 1
      %p123 = por %p121, %p122
      %p125 = scmp.ne.s32.totalorder %s110, %s124
      %p126 = scmp.eq.s32.totalorder %s37, 0
      %p127 = por %p125, %p126
      %s129 = sadd.s32 %s128, 1
      %p132 = scmp.eq.s32.totalorder %s31, 1
      %p133 = scmp.ne.s32.totalorder %s128, %s130
      %p134 = scmp.eq.s32.totalorder %s31, 0
      %p135 = por %p133, %p134
      %p136 = scmp.ne.s32.totalorder %s128, %s130
      %p137 = scmp.eq.s32.totalorder %s36, 1
      %p138 = por %p136, %p137
      %p139 = scmp.ne.s32.totalorder %s130, %s131
      %p140 = scmp.eq.s32.totalorder %s36, 0
      %p141 = por %p139, %p140
      %p142 = scmp.ne.s32.totalorder %s130, %s131
      %p143 = scmp.eq.s32.totalorder %s37, 1
      %p144 = por %p142, %p143
      %p146 = scmp.ne.s32.totalorder %s131, %s145
      %p147 = scmp.eq.s32.totalorder %s37, 0
      %p148 = por %p146, %p147
      %s150 = sadd.s32 %s149, 1
      %p153 = scmp.eq.s32.totalorder %s31, 1
      %p154 = scmp.ne.s32.totalorder %s149, %s151
      %p155 = scmp.eq.s32.totalorder %s31, 0
      %p156 = por %p154, %p155
      %p157 = scmp.ne.s32.totalorder %s149, %s151
      %p158 = scmp.eq.s32.totalorder %s36, 1
      %p159 = por %p157, %p158
      %p160 = scmp.ne.s32.totalorder %s151, %s152
      %p161 = scmp.eq.s32.totalorder %s36, 0
      %p162 = por %p160, %p161
      %p163 = scmp.ne.s32.totalorder %s151, %s152
      %p164 = scmp.eq.s32.totalorder %s37, 1
      %p165 = por %p163, %p164
      %p167 = scmp.ne.s32.totalorder %s152, %s166
      %p168 = scmp.eq.s32.totalorder %s37, 0
      %p169 = por %p167, %p168
      %s171 = sadd.s32 %s170, 1
      %p174 = scmp.eq.s32.totalorder %s31, 1
      %p175 = scmp.ne.s32.totalorder %s170, %s172
      %p176 = scmp.eq.s32.totalorder %s31, 0
      %p177 = por %p175, %p176
      %p178 = scmp.ne.s32.totalorder %s170, %s172
      %p179 = scmp.eq.s32.totalorder %s36, 1
      %p180 = por %p178, %p179
      %p181 = scmp.ne.s32.totalorder %s172, %s173
      %p182 = scmp.eq.s32.totalorder %s36, 0
      %p183 = por %p181, %p182
      %p184 = scmp.ne.s32.totalorder %s172, %s173
      %p185 = scmp.eq.s32.totalorder %s37, 1
      %p186 = por %p184, %p185
      %p188 = scmp.ne.s32.totalorder %s173, %s187
      %p189 = scmp.eq.s32.totalorder %s37, 0
      %p190 = por %p188, %p189
      %s192 = sadd.s32 %s191, 1
      %p195 = scmp.eq.s32.totalorder %s31, 1
      %p196 = scmp.ne.s32.totalorder %s191, %s193
      %p197 = scmp.eq.s32.totalorder %s31, 0
      %p198 = por %p196, %p197
      %p199 = scmp.ne.s32.totalorder %s191, %s193
      %p200 = scmp.eq.s32.totalorder %s36, 1
      %p201 = por %p199, %p200
      %p202 = scmp.ne.s32.totalorder %s193, %s194
      %p203 = scmp.eq.s32.totalorder %s36, 0
      %p204 = por %p202, %p203
      %p205 = scmp.ne.s32.totalorder %s193, %s194
      %p206 = scmp.eq.s32.totalorder %s37, 1
      %p207 = por %p205, %p206
      %p209 = scmp.ne.s32.totalorder %s194, %s208
      %p210 = scmp.eq.s32.totalorder %s37, 0
      %p211 = por %p209, %p210
      %s213 = sadd.s32 %s212, 1
      %p216 = scmp.eq.s32.totalorder %s31, 1
      %p217 = scmp.ne.s32.totalorder %s212, %s214
      %p218 = scmp.eq.s32.totalorder %s31, 0
      %p219 = por %p217, %p218
      %p220 = scmp.ne.s32.totalorder %s212, %s214
      %p221 = scmp.eq.s32.totalorder %s36, 1
      %p222 = por %p220, %p221
      %p223 = scmp.ne.s32.totalorder %s214, %s215
      %p224 = scmp.eq.s32.totalorder %s36, 0
      %p225 = por %p223, %p224
      %p226 = scmp.ne.s32.totalorder %s214, %s215
      %p227 = scmp.eq.s32.totalorder %s37, 1
      %p228 = por %p226, %p227
      %p230 = scmp.ne.s32.totalorder %s215, %s229
      %p231 = scmp.eq.s32.totalorder %s37, 0
      %p232 = por %p230, %p231
      %s234 = sadd.s32 %s233, 1
      %p237 = scmp.eq.s32.totalorder %s31, 1
      %p238 = scmp.ne.s32.totalorder %s233, %s235
      %p239 = scmp.eq.s32.totalorder %s31, 0
      %p240 = por %p238, %p239
      %p241 = scmp.ne.s32.totalorder %s233, %s235
      %p242 = scmp.eq.s32.totalorder %s36, 1
      %p243 = por %p241, %p242
      %p244 = scmp.ne.s32.totalorder %s235, %s236
      %p245 = scmp.eq.s32.totalorder %s36, 0
      %p246 = por %p244, %p245
      %p247 = scmp.ne.s32.totalorder %s235, %s236
      %p248 = scmp.eq.s32.totalorder %s37, 1
      %p249 = por %p247, %p248
      %p251 = scmp.ne.s32.totalorder %s236, %s250
      %p252 = scmp.eq.s32.totalorder %s37, 0
      %p253 = por %p251, %p252
      %s255 = sadd.s32 %s254, 1
      %p258 = scmp.eq.s32.totalorder %s31, 1
      %p259 = scmp.ne.s32.totalorder %s254, %s256
      %p260 = scmp.eq.s32.totalorder %s31, 0
      %p261 = por %p259, %p260
      %p262 = scmp.ne.s32.totalorder %s254, %s256
      %p263 = scmp.eq.s32.totalorder %s36, 1
      %p264 = por %p262, %p263
      %p265 = scmp.ne.s32.totalorder %s256, %s257
      %p266 = scmp.eq.s32.totalorder %s36, 0
      %p267 = por %p265, %p266
      %p268 = scmp.ne.s32.totalorder %s256, %s257
      %p269 = scmp.eq.s32.totalorder %s37, 1
      %p270 = por %p268, %p269
      %p272 = scmp.ne.s32.totalorder %s257, %s271
      %p273 = scmp.eq.s32.totalorder %s37, 0
      %p274 = por %p272, %p273
      %s276 = sadd.s32 %s275, 1
      %p279 = scmp.eq.s32.totalorder %s31, 1
      %p280 = scmp.ne.s32.totalorder %s275, %s277
      %p281 = scmp.eq.s32.totalorder %s31, 0
      %p282 = por %p280, %p281
      %p283 = scmp.ne.s32.totalorder %s275, %s277
      %p284 = scmp.eq.s32.totalorder %s36, 1
      %p285 = por %p283, %p284
      %p286 = scmp.ne.s32.totalorder %s277, %s278
      %p287 = scmp.eq.s32.totalorder %s36, 0
      %p288 = por %p286, %p287
      %p289 = scmp.ne.s32.totalorder %s277, %s278
      %p290 = scmp.eq.s32.totalorder %s37, 1
      %p291 = por %p289, %p290
      %p293 = scmp.ne.s32.totalorder %s278, %s292
      %p294 = scmp.eq.s32.totalorder %s37, 0
      %p295 = por %p293, %p294
      %s297 = sadd.s32 %s296, 1
      %p300 = scmp.eq.s32.totalorder %s31, 1
      %p301 = scmp.ne.s32.totalorder %s296, %s298
      %p302 = scmp.eq.s32.totalorder %s31, 0
      %p303 = por %p301, %p302
      %p304 = scmp.ne.s32.totalorder %s296, %s298
      %p305 = scmp.eq.s32.totalorder %s36, 1
      %p306 = por %p304, %p305
      %p307 = scmp.ne.s32.totalorder %s298, %s299
      %p308 = scmp.eq.s32.totalorder %s36, 0
      %p309 = por %p307, %p308
      %p310 = scmp.ne.s32.totalorder %s298, %s299
      %p311 = scmp.eq.s32.totalorder %s37, 1
      %p312 = por %p310, %p311
      %p314 = scmp.ne.s32.totalorder %s299, %s313
      %p315 = scmp.eq.s32.totalorder %s37, 0
      %p316 = por %p314, %p315
      %s317 = ssub.s32 %s31, %s38
      %p318 = scmp.eq.s32.totalorder %s317, 0
      %s320 = sadd.s32 %s319, 1
      %s321 = scalar_select %p318, %s319, %s320
      %p324 = pneg %p318
      %p325 = scmp.eq.s32.totalorder %s31, 1
      %p326 = por %p324, %p325
      %p327 = scmp.ne.s32.totalorder %s319, %s322
      %p328 = scmp.eq.s32.totalorder %s31, 0
      %p329 = por %p327, %p328
      %p330 = scmp.ne.s32.totalorder %s319, %s322
      %p331 = scmp.eq.s32.totalorder %s36, 1
      %p332 = por %p330, %p331
      %p333 = scmp.ne.s32.totalorder %s322, %s323
      %p334 = scmp.eq.s32.totalorder %s36, 0
      %p335 = por %p333, %p334
      %p336 = scmp.ne.s32.totalorder %s322, %s323
      %p337 = scmp.eq.s32.totalorder %s37, 1
      %p338 = por %p336, %p337
      %p340 = scmp.ne.s32.totalorder %s323, %s339
      %p341 = scmp.eq.s32.totalorder %s37, 0
      %p342 = por %p340, %p341
      %p343 = scmp.le.s32.totalorder 1, %s31
      %p344 = scmp.lt.s32.totalorder %s31, 3
      %p345 = pnand %p343, %p344
      %p346 = pneg %p345
      // Predicated region
      $region9: #{tpu_custom_call.1} parent=5 // pred_check
        _
      $region10: #{tpu_custom_call.1} parent=5 // pred_check_branch
        %348 = sbr.rel (%p345) target = $region12
      $region11: #{tpu_custom_call.1} parent=5 // pred_region
        %s349 = ssub.s32 %s31, 1
        // Predicated region
        $region13: #{tpu_custom_call.1} parent=11 // pred_check
          %p350 = pneg %p78
        $region14: #{tpu_custom_call.1} parent=11 // pred_check_branch
          %352 = sbr.rel (%p350) target = $region16
        $region15: #{tpu_custom_call.1} parent=11 // pred_region
          %s354 = ssub.s32 16, 16
          %355 = vsyncadd [#allocation8], %s354
          %s357 = sshll.u32 [#allocation7], 4
          %s358 = int_to_ptr.vmem [resolvable:$true] %s357
          %360 = dma.hbm_to_vmem [thread:$0]  %s1, 16, %s358, [#allocation8]
        $region16: #{tpu_custom_call.1} parent=11 // pred_fallthru
          _
        // Predicated region
        $region17: #{tpu_custom_call.1} parent=11 // pred_check
          %p361 = pneg %p99
        $region18: #{tpu_custom_call.1} parent=11 // pred_check_branch
          %363 = sbr.rel (%p361) target = $region20
        $region19: #{tpu_custom_call.1} parent=11 // pred_region
          %s365 = ssub.s32 16, 16
          %366 = vsyncadd [#allocation8], %s365
          %s368 = sshll.u32 [#allocation9], 4
          %s369 = int_to_ptr.vmem [resolvable:$true] %s368
          %371 = dma.hbm_to_vmem [thread:$0]  %s2, 16, %s369, [#allocation8]
        $region20: #{tpu_custom_call.1} parent=11 // pred_fallthru
          _
        // Predicated region
        $region21: #{tpu_custom_call.1} parent=11 // pred_check
          %p372 = pneg %p120
        $region22: #{tpu_custom_call.1} parent=11 // pred_check_branch
          %374 = sbr.rel (%p372) target = $region24
        $region23: #{tpu_custom_call.1} parent=11 // pred_region
          %s376 = ssub.s32 576, 576
          %377 = vsyncadd [#allocation11], %s376
          %s378 = sshll.u32 [#allocation10], 4
          %s379 = int_to_ptr.vmem [resolvable:$true] %s378
          %384 = dma.hbm_to_vmem [thread:$0]  %s3, 576, %s379, [#allocation11], 64, 64, 4
        $region24: #{tpu_custom_call.1} parent=11 // pred_fallthru
          _
        // Predicated region
        $region25: #{tpu_custom_call.1} parent=11 // pred_check
          %p385 = pneg %p141
        $region26: #{tpu_custom_call.1} parent=11 // pred_check_branch
          %387 = sbr.rel (%p385) target = $region28
        $region27: #{tpu_custom_call.1} parent=11 // pred_region
          %s389 = ssub.s32 16, 16
          %390 = vsyncadd [#allocation11], %s389
          %s392 = sshll.u32 [#allocation12], 4
          %s393 = int_to_ptr.vmem [resolvable:$true] %s392
          %395 = dma.hbm_to_vmem [thread:$0]  %s4, 16, %s393, [#allocation11]
        $region28: #{tpu_custom_call.1} parent=11 // pred_fallthru
          _
        // Predicated region
        $region29: #{tpu_custom_call.1} parent=11 // pred_check
          %p396 = pneg %p162
        $region30: #{tpu_custom_call.1} parent=11 // pred_check_branch
          %398 = sbr.rel (%p396) target = $region32
        $region31: #{tpu_custom_call.1} parent=11 // pred_region
          %s400 = ssub.s32 16, 16
          %401 = vsyncadd [#allocation14], %s400
          %s403 = sshll.u32 [#allocation13], 4
          %s404 = int_to_ptr.vmem [resolvable:$true] %s403
          %406 = dma.hbm_to_vmem [thread:$0]  %s5, 16, %s404, [#allocation14]
        $region32: #{tpu_custom_call.1} parent=11 // pred_fallthru
          _
        // Predicated region
        $region33: #{tpu_custom_call.1} parent=11 // pred_check
          %p407 = pneg %p183
        $region34: #{tpu_custom_call.1} parent=11 // pred_check_branch
          %409 = sbr.rel (%p407) target = $region36
        $region35: #{tpu_custom_call.1} parent=11 // pred_region
          %s411 = ssub.s32 16, 16
          %412 = vsyncadd [#allocation14], %s411
          %s414 = sshll.u32 [#allocation15], 4
          %s415 = int_to_ptr.vmem [resolvable:$true] %s414
          %417 = dma.hbm_to_vmem [thread:$0]  %s6, 16, %s415, [#allocation14]
        $region36: #{tpu_custom_call.1} parent=11 // pred_fallthru
          _
        // Predicated region
        $region37: #{tpu_custom_call.1} parent=11 // pred_check
          %p418 = pneg %p204
        $region38: #{tpu_custom_call.1} parent=11 // pred_check_branch
          %420 = sbr.rel (%p418) target = $region40
        $region39: #{tpu_custom_call.1} parent=11 // pred_region
          %s422 = ssub.s32 1152, 1152
          %423 = vsyncadd [#allocation17], %s422
          %s424 = sshll.u32 [#allocation16], 4
          %s425 = int_to_ptr.vmem [resolvable:$true] %s424
          %430 = dma.hbm_to_vmem [thread:$0]  %s7, 1152, %s425, [#allocation17], 64, 64, 4
        $region40: #{tpu_custom_call.1} parent=11 // pred_fallthru
          _
        // Predicated region
        $region41: #{tpu_custom_call.1} parent=11 // pred_check
          %p431 = pneg %p225
        $region42: #{tpu_custom_call.1} parent=11 // pred_check_branch
          %433 = sbr.rel (%p431) target = $region44
        $region43: #{tpu_custom_call.1} parent=11 // pred_region
          %s435 = ssub.s32 16, 16
          %436 = vsyncadd [#allocation17], %s435
          %s438 = sshll.u32 [#allocation18], 4
          %s439 = int_to_ptr.vmem [resolvable:$true] %s438
          %441 = dma.hbm_to_vmem [thread:$0]  %s8, 16, %s439, [#allocation17]
        $region44: #{tpu_custom_call.1} parent=11 // pred_fallthru
          _
        // Predicated region
        $region45: #{tpu_custom_call.1} parent=11 // pred_check
          %p442 = pneg %p246
        $region46: #{tpu_custom_call.1} parent=11 // pred_check_branch
          %444 = sbr.rel (%p442) target = $region48
        $region47: #{tpu_custom_call.1} parent=11 // pred_region
          %s446 = ssub.s32 64, 64
          %447 = vsyncadd [#allocation20], %s446
          %s449 = sshll.u32 [#allocation19], 4
          %s450 = int_to_ptr.vmem [resolvable:$true] %s449
          %452 = dma.hbm_to_vmem [thread:$0]  %s9, 64, %s450, [#allocation20]
        $region48: #{tpu_custom_call.1} parent=11 // pred_fallthru
          _
        // Predicated region
        $region49: #{tpu_custom_call.1} parent=11 // pred_check
          %p453 = pneg %p267
        $region50: #{tpu_custom_call.1} parent=11 // pred_check_branch
          %455 = sbr.rel (%p453) target = $region52
        $region51: #{tpu_custom_call.1} parent=11 // pred_region
          %s457 = ssub.s32 16, 16
          %458 = vsyncadd [#allocation20], %s457
          %s460 = sshll.u32 [#allocation21], 4
          %s461 = int_to_ptr.vmem [resolvable:$true] %s460
          %463 = dma.hbm_to_vmem [thread:$0]  %s10, 16, %s461, [#allocation20]
        $region52: #{tpu_custom_call.1} parent=11 // pred_fallthru
          _
        // Predicated region
        $region53: #{tpu_custom_call.1} parent=11 // pred_check
          %p464 = pneg %p288
        $region54: #{tpu_custom_call.1} parent=11 // pred_check_branch
          %466 = sbr.rel (%p464) target = $region56
        $region55: #{tpu_custom_call.1} parent=11 // pred_region
          %s468 = ssub.s32 2560, 2560
          %469 = vsyncadd [#allocation23], %s468
          %s470 = sshll.u32 [#allocation22], 4
          %s471 = int_to_ptr.vmem [resolvable:$true] %s470
          %476 = dma.hbm_to_vmem [thread:$0]  %s11, 2560, %s471, [#allocation23], 128, 128, 8
        $region56: #{tpu_custom_call.1} parent=11 // pred_fallthru
          _
        // Predicated region
        $region57: #{tpu_custom_call.1} parent=11 // pred_check
          %p477 = pneg %p309
        $region58: #{tpu_custom_call.1} parent=11 // pred_check_branch
          %479 = sbr.rel (%p477) target = $region60
        $region59: #{tpu_custom_call.1} parent=11 // pred_region
          %s481 = ssub.s32 64, 64
          %482 = vsyncadd [#allocation23], %s481
          %s484 = sshll.u32 [#allocation24], 4
          %s485 = int_to_ptr.vmem [resolvable:$true] %s484
          %487 = dma.hbm_to_vmem [thread:$0]  %s12, 64, %s485, [#allocation23]
        $region60: #{tpu_custom_call.1} parent=11 // pred_fallthru
          _
      $region12: #{tpu_custom_call.1} parent=5 // pred_fallthru
        _
      %p488 = scmp.lt.s32.totalorder %s31, 2
      // Predicated region
      $region61: #{tpu_custom_call.1} parent=5 // pred_check
        %p489 = pneg %p488
      $region62: #{tpu_custom_call.1} parent=5 // pred_check_branch
        %491 = sbr.rel (%p489) target = $region64
      $region63: #{tpu_custom_call.1} parent=5 // pred_region
        // Predicated region
        $region65: #{tpu_custom_call.1} parent=63 // pred_check
          %p492 = pneg %p51
        $region66: #{tpu_custom_call.1} parent=63 // pred_check_branch
          %494 = sbr.rel (%p492) target = $region68
        $region67: #{tpu_custom_call.1} parent=63 // pred_region
          %s495 = sand.u32 %s41, 1
          %s496 = scalar_lea.sflag [#allocation5], %s495
          %s497 = sand.u32 %s41, 1
          %s498 = smul.addr %s497, 128
          %s499 = scalar_lea.vmem [#allocation4], %s498
          %s500 = smul.u32 2, %s31
          %s502 = ssub.s32 2048, 2048
          %503 = vsyncadd %s496, %s502
          %s504 = smul.addr %s500, 8
          %s505 = smul.addr %s504, 128
          %s506 = scalar_lea.hbm %s0, %s505
          %s507 = sshll.u32 %s499, 4
          %s508 = int_to_ptr.vmem [resolvable:$true] %s507
          %513 = dma.hbm_to_vmem [thread:$0]  %s506, 2048, %s508, %s496, 128, 128, 8
        $region68: #{tpu_custom_call.1} parent=63 // pred_fallthru
          _
      $region64: #{tpu_custom_call.1} parent=5 // pred_fallthru
        _
      %p514 = scmp.le.s32.totalorder 1, %s31
      %p515 = scmp.lt.s32.totalorder %s31, 3
      %p516 = pnand %p514, %p515
      %p517 = pneg %p516
      // Predicated region
      $region69: #{tpu_custom_call.1} parent=5 // pred_check
        _
      $region70: #{tpu_custom_call.1} parent=5 // pred_check_branch
        %519 = sbr.rel (%p516) target = $region72
      $region71: #{tpu_custom_call.1} parent=5 // pred_region
        %s520 = ssub.s32 %s31, 1
        %s521 = sand.u32 %s44, 1
        %s522 = scalar_lea.sflag [#allocation5], %s521
        %s523 = sand.u32 %s44, 1
        %s524 = smul.addr %s523, 128
        %s525 = scalar_lea.vmem [#allocation4], %s524
        // Predicated region
        $region73: #{tpu_custom_call.1} parent=71 // pred_check
          %p526 = pneg %p57
        $region74: #{tpu_custom_call.1} parent=71 // pred_check_branch
          %528 = sbr.rel (%p526) target = $region76
        $region75: #{tpu_custom_call.1} parent=71 // pred_region
          %529 = dma.done %s522, 2048
        $region76: #{tpu_custom_call.1} parent=71 // pred_fallthru
          _
        // Predicated region
        $region77: #{tpu_custom_call.1} parent=71 // pred_check
          %p530 = pneg %p78
        $region78: #{tpu_custom_call.1} parent=71 // pred_check_branch
          %532 = sbr.rel (%p530) target = $region80
        $region79: #{tpu_custom_call.1} parent=71 // pred_region
          %533 = dma.done [#allocation8], 16
        $region80: #{tpu_custom_call.1} parent=71 // pred_fallthru
          _
        // Predicated region
        $region81: #{tpu_custom_call.1} parent=71 // pred_check
          %p534 = pneg %p99
        $region82: #{tpu_custom_call.1} parent=71 // pred_check_branch
          %536 = sbr.rel (%p534) target = $region84
        $region83: #{tpu_custom_call.1} parent=71 // pred_region
          %537 = dma.done [#allocation8], 16
        $region84: #{tpu_custom_call.1} parent=71 // pred_fallthru
          _
        // Predicated region
        $region85: #{tpu_custom_call.1} parent=71 // pred_check
          %p538 = pneg %p120
        $region86: #{tpu_custom_call.1} parent=71 // pred_check_branch
          %540 = sbr.rel (%p538) target = $region88
        $region87: #{tpu_custom_call.1} parent=71 // pred_region
          %541 = dma.done [#allocation11], 576
        $region88: #{tpu_custom_call.1} parent=71 // pred_fallthru
          _
        // Predicated region
        $region89: #{tpu_custom_call.1} parent=71 // pred_check
          %p542 = pneg %p141
        $region90: #{tpu_custom_call.1} parent=71 // pred_check_branch
          %544 = sbr.rel (%p542) target = $region92
        $region91: #{tpu_custom_call.1} parent=71 // pred_region
          %545 = dma.done [#allocation11], 16
        $region92: #{tpu_custom_call.1} parent=71 // pred_fallthru
          _
        // Predicated region
        $region93: #{tpu_custom_call.1} parent=71 // pred_check
          %p546 = pneg %p162
        $region94: #{tpu_custom_call.1} parent=71 // pred_check_branch
          %548 = sbr.rel (%p546) target = $region96
        $region95: #{tpu_custom_call.1} parent=71 // pred_region
          %549 = dma.done [#allocation14], 16
        $region96: #{tpu_custom_call.1} parent=71 // pred_fallthru
          _
        // Predicated region
        $region97: #{tpu_custom_call.1} parent=71 // pred_check
          %p550 = pneg %p183
        $region98: #{tpu_custom_call.1} parent=71 // pred_check_branch
          %552 = sbr.rel (%p550) target = $region100
        $region99: #{tpu_custom_call.1} parent=71 // pred_region
          %553 = dma.done [#allocation14], 16
        $region100: #{tpu_custom_call.1} parent=71 // pred_fallthru
          _
        // Predicated region
        $region101: #{tpu_custom_call.1} parent=71 // pred_check
          %p554 = pneg %p204
        $region102: #{tpu_custom_call.1} parent=71 // pred_check_branch
          %556 = sbr.rel (%p554) target = $region104
        $region103: #{tpu_custom_call.1} parent=71 // pred_region
          %557 = dma.done [#allocation17], 1152
        $region104: #{tpu_custom_call.1} parent=71 // pred_fallthru
          _
        // Predicated region
        $region105: #{tpu_custom_call.1} parent=71 // pred_check
          %p558 = pneg %p225
        $region106: #{tpu_custom_call.1} parent=71 // pred_check_branch
          %560 = sbr.rel (%p558) target = $region108
        $region107: #{tpu_custom_call.1} parent=71 // pred_region
          %561 = dma.done [#allocation17], 16
        $region108: #{tpu_custom_call.1} parent=71 // pred_fallthru
          _
        // Predicated region
        $region109: #{tpu_custom_call.1} parent=71 // pred_check
          %p562 = pneg %p246
        $region110: #{tpu_custom_call.1} parent=71 // pred_check_branch
          %564 = sbr.rel (%p562) target = $region112
        $region111: #{tpu_custom_call.1} parent=71 // pred_region
          %565 = dma.done [#allocation20], 64
        $region112: #{tpu_custom_call.1} parent=71 // pred_fallthru
          _
        // Predicated region
        $region113: #{tpu_custom_call.1} parent=71 // pred_check
          %p566 = pneg %p267
        $region114: #{tpu_custom_call.1} parent=71 // pred_check_branch
          %568 = sbr.rel (%p566) target = $region116
        $region115: #{tpu_custom_call.1} parent=71 // pred_region
          %569 = dma.done [#allocation20], 16
        $region116: #{tpu_custom_call.1} parent=71 // pred_fallthru
          _
        // Predicated region
        $region117: #{tpu_custom_call.1} parent=71 // pred_check
          %p570 = pneg %p288
        $region118: #{tpu_custom_call.1} parent=71 // pred_check_branch
          %572 = sbr.rel (%p570) target = $region120
        $region119: #{tpu_custom_call.1} parent=71 // pred_region
          %573 = dma.done [#allocation23], 2560
        $region120: #{tpu_custom_call.1} parent=71 // pred_fallthru
          _
        // Predicated region
        $region121: #{tpu_custom_call.1} parent=71 // pred_check
          %p574 = pneg %p309
        $region122: #{tpu_custom_call.1} parent=71 // pred_check_branch
          %576 = sbr.rel (%p574) target = $region124
        $region123: #{tpu_custom_call.1} parent=71 // pred_region
          %577 = dma.done [#allocation23], 64
        $region124: #{tpu_custom_call.1} parent=71 // pred_fallthru
          _
        %s578 = sand.u32 %s44, 1
        %s579 = scalar_lea.sflag [#allocation5], %s578
        %s580 = sand.u32 %s44, 1
        %s581 = smul.addr %s580, 128
        %s582 = scalar_lea.vmem [#allocation4], %s581
        %p583 = pneg %p57
        %p584 = pneg %p54
        %p585 = pneg %p78
        %p586 = pneg %p75
        %p587 = pneg %p99
        %p588 = pneg %p96
        %p589 = pneg %p120
        %p590 = pneg %p117
        %p591 = pneg %p141
        %p592 = pneg %p138
        %p593 = pneg %p162
        %p594 = pneg %p159
        %p595 = pneg %p183
        %p596 = pneg %p180
        %p597 = pneg %p204
        %p598 = pneg %p201
        %p599 = pneg %p225
        %p600 = pneg %p222
        %p601 = pneg %p246
        %p602 = pneg %p243
        %p603 = pneg %p267
        %p604 = pneg %p264
        %p605 = pneg %p288
        %p606 = pneg %p285
        %p607 = pneg %p309
        %p608 = pneg %p306
        %p609 = pneg %p335
        %p610 = pneg %p332
        %s611 = sand.u32 %s322, 1
        %s612 = scalar_lea.sflag [#allocation6], %s611
        %s613 = sand.u32 %s322, 1
        %s614 = smul.addr %s613, 128
        %s615 = scalar_lea.vmem [#allocation25], %s614
        %s616 = smul.u32 2, %s36
        %s617 = smul.u32 2, %s36
        %v619 = vld [vmem:[%s525] sm:$0xff]
        %v620 = vld [vmem:[%s525 + $0x8] sm:$0xff]
        %v621 = vld [vmem:[%s525 + $0x10] sm:$0xff]
        %v622 = vld [vmem:[%s525 + $0x18] sm:$0xff]
        %v623 = vld [vmem:[%s525 + $0x20] sm:$0xff]
        %v624 = vld [vmem:[%s525 + $0x28] sm:$0xff]
        %v625 = vld [vmem:[%s525 + $0x30] sm:$0xff]
        %v626 = vld [vmem:[%s525 + $0x38] sm:$0xff]
        %v627 = vld [vmem:[%s525 + $0x40] sm:$0xff]
        %v628 = vld [vmem:[%s525 + $0x48] sm:$0xff]
        %v629 = vld [vmem:[%s525 + $0x50] sm:$0xff]
        %v630 = vld [vmem:[%s525 + $0x58] sm:$0xff]
        %v631 = vld [vmem:[%s525 + $0x60] sm:$0xff]
        %v632 = vld [vmem:[%s525 + $0x68] sm:$0xff]
        %v633 = vld [vmem:[%s525 + $0x70] sm:$0xff]
        %v634 = vld [vmem:[%s525 + $0x78] sm:$0xff]
        %v635 = vld [vmem:[#allocation7] sm:$0x1]
        %v637 = vlaneseq
        %v638 = vshrl.u32 %v637, 7
        %v639 = vsub.s32 0, %v638
        %v640 = vrot.slane %v635, %v639
        %v642 = vmul.f32 %v619, %v640
        %v643 = vmul.f32 %v620, %v640
        %v644 = vmul.f32 %v621, %v640
        %v645 = vmul.f32 %v622, %v640
        %v646 = vmul.f32 %v623, %v640
        %v647 = vmul.f32 %v624, %v640
        %v648 = vmul.f32 %v625, %v640
        %v649 = vmul.f32 %v626, %v640
        %v650 = vmul.f32 %v627, %v640
        %v651 = vmul.f32 %v628, %v640
        %v652 = vmul.f32 %v629, %v640
        %v653 = vmul.f32 %v630, %v640
        %v654 = vmul.f32 %v631, %v640
        %v655 = vmul.f32 %v632, %v640
        %v656 = vmul.f32 %v633, %v640
        %v657 = vmul.f32 %v634, %v640
        %v658 = vld [vmem:[#allocation9] sm:$0x1]
        %v660 = vlaneseq
        %v661 = vshrl.u32 %v660, 7
        %v662 = vsub.s32 0, %v661
        %v663 = vrot.slane %v658, %v662
        %v665 = vadd.f32 %v642, %v663
        %v666 = vadd.f32 %v643, %v663
        %v667 = vadd.f32 %v644, %v663
        %v668 = vadd.f32 %v645, %v663
        %v669 = vadd.f32 %v646, %v663
        %v670 = vadd.f32 %v647, %v663
        %v671 = vadd.f32 %v648, %v663
        %v672 = vadd.f32 %v649, %v663
        %v673 = vadd.f32 %v650, %v663
        %v674 = vadd.f32 %v651, %v663
        %v675 = vadd.f32 %v652, %v663
        %v676 = vadd.f32 %v653, %v663
        %v677 = vadd.f32 %v654, %v663
        %v678 = vadd.f32 %v655, %v663
        %v679 = vadd.f32 %v656, %v663
        %v680 = vadd.f32 %v657, %v663
        %v681 = vmax.f32 %v665, 0.0
        %v682 = vmax.f32 %v666, 0.0
        %v683 = vmax.f32 %v667, 0.0
        %v684 = vmax.f32 %v668, 0.0
        %v685 = vmax.f32 %v669, 0.0
        %v686 = vmax.f32 %v670, 0.0
        %v687 = vmax.f32 %v671, 0.0
        %v688 = vmax.f32 %v672, 0.0
        %v689 = vmax.f32 %v673, 0.0
        %v690 = vmax.f32 %v674, 0.0
        %v691 = vmax.f32 %v675, 0.0
        %v692 = vmax.f32 %v676, 0.0
        %v693 = vmax.f32 %v677, 0.0
        %v694 = vmax.f32 %v678, 0.0
        %v695 = vmax.f32 %v679, 0.0
        %v696 = vmax.f32 %v680, 0.0
        %v697 = vpack.c.bf16 %v682, %v681
        %v698 = vpack.c.bf16 %v684, %v683
        %v699 = vpack.c.bf16 %v686, %v685
        %v700 = vpack.c.bf16 %v688, %v687
        %v701 = vpack.c.bf16 %v690, %v689
        %v702 = vpack.c.bf16 %v692, %v691
        %v703 = vpack.c.bf16 %v694, %v693
        %v704 = vpack.c.bf16 %v696, %v695
        %vm705 = vcmask 60416
        %706 = vst.msk [vmem:[#allocation2] sm:$0xf] %vm705, 0
        %vm707 = vcmask 57344
        %708 = vst.msk [vmem:[#allocation2 + $0x4] sm:$0x1] %vm707, 0
        %709 = vst.msk [vmem:[#allocation2 + $0x50] sm:$0xf] %vm705, 0
        %710 = vst.msk [vmem:[#allocation2 + $0x54] sm:$0x1] %vm707, 0
        %s711 = scalar_lea.vmem [#allocation2], 72
        %712 = vst.msk [vmem:[%s711] sm:$0xf] %vm705, 0
        %713 = vst.msk [vmem:[%s711 + $0x4] sm:$0x1] %vm707, 0
        %714 = vst.msk [vmem:[%s711 + $0x50] sm:$0xf] %vm705, 0
        %715 = vst.msk [vmem:[%s711 + $0x54] sm:$0x1] %vm707, 0
        %vm716 = vcmask 57344
        %vm717 = vsmask.f32 256
        %vm718 = vmand %vm716, %vm717
        %v719 = vld [vmem:[#allocation2] sm:$0x1]
        %v720 = vsel %vm718, 0, %v719
        %721 = vst [vmem:[#allocation2] sm:$0x1] %v720
        %v722 = vld [vmem:[#allocation2 + $0x8] sm:$0x1]
        %v723 = vsel %vm718, 0, %v722
        %724 = vst [vmem:[#allocation2 + $0x8] sm:$0x1] %v723
        %v725 = vld [vmem:[#allocation2 + $0x10] sm:$0x1]
        %v726 = vsel %vm718, 0, %v725
        %727 = vst [vmem:[#allocation2 + $0x10] sm:$0x1] %v726
        %v728 = vld [vmem:[#allocation2 + $0x18] sm:$0x1]
        %v729 = vsel %vm718, 0, %v728
        %730 = vst [vmem:[#allocation2 + $0x18] sm:$0x1] %v729
        %v731 = vld [vmem:[#allocation2 + $0x20] sm:$0x1]
        %v732 = vsel %vm718, 0, %v731
        %733 = vst [vmem:[#allocation2 + $0x20] sm:$0x1] %v732
        %v734 = vld [vmem:[#allocation2 + $0x28] sm:$0x1]
        %v735 = vsel %vm718, 0, %v734
        %736 = vst [vmem:[#allocation2 + $0x28] sm:$0x1] %v735
        %v737 = vld [vmem:[#allocation2 + $0x30] sm:$0x1]
        %v738 = vsel %vm718, 0, %v737
        %739 = vst [vmem:[#allocation2 + $0x30] sm:$0x1] %v738
        %v740 = vld [vmem:[#allocation2 + $0x38] sm:$0x1]
        %v741 = vsel %vm718, 0, %v740
        %742 = vst [vmem:[#allocation2 + $0x38] sm:$0x1] %v741
        %v743 = vld [vmem:[#allocation2 + $0x40] sm:$0x1]
        %v744 = vsel %vm718, 0, %v743
        %745 = vst [vmem:[#allocation2 + $0x40] sm:$0x1] %v744
        %v746 = vld [vmem:[#allocation2 + $0x48] sm:$0x1]
        %v747 = vsel %vm718, 0, %v746
        %748 = vst [vmem:[#allocation2 + $0x48] sm:$0x1] %v747
        %v749 = vld [vmem:[#allocation2 + $0x50] sm:$0x1]
        %v750 = vsel %vm718, 0, %v749
        %751 = vst [vmem:[#allocation2 + $0x50] sm:$0x1] %v750
        %v752 = vld [vmem:[#allocation2 + $0x58] sm:$0x1]
        %v753 = vsel %vm718, 0, %v752
        %754 = vst [vmem:[#allocation2 + $0x58] sm:$0x1] %v753
        %v755 = vld [vmem:[#allocation2 + $0x60] sm:$0x1]
        %v756 = vsel %vm718, 0, %v755
        %757 = vst [vmem:[#allocation2 + $0x60] sm:$0x1] %v756
        %v758 = vld [vmem:[#allocation2 + $0x68] sm:$0x1]
        %v759 = vsel %vm718, 0, %v758
        %760 = vst [vmem:[#allocation2 + $0x68] sm:$0x1] %v759
        %v761 = vld [vmem:[#allocation2 + $0x70] sm:$0x1]
        %v762 = vsel %vm718, 0, %v761
        %763 = vst [vmem:[#allocation2 + $0x70] sm:$0x1] %v762
        %v764 = vld [vmem:[#allocation2 + $0x78] sm:$0x1]
        %v765 = vsel %vm718, 0, %v764
        %766 = vst [vmem:[#allocation2 + $0x78] sm:$0x1] %v765
        %v767 = vld [vmem:[#allocation2 + $0x80] sm:$0x1]
        %v768 = vsel %vm718, 0, %v767
        %769 = vst [vmem:[#allocation2 + $0x80] sm:$0x1] %v768
        %v770 = vld [vmem:[#allocation2 + $0x88] sm:$0x1]
        %v771 = vsel %vm718, 0, %v770
        %772 = vst [vmem:[#allocation2 + $0x88] sm:$0x1] %v771
        %v773 = vld [vmem:[#allocation2 + $0x90] sm:$0x1]
        %v774 = vsel %vm718, 0, %v773
        %775 = vst [vmem:[#allocation2 + $0x90] sm:$0x1] %v774
        %v776 = vld [vmem:[#allocation2 + $0x98] sm:$0x1]
        %v777 = vsel %vm718, 0, %v776
        %778 = vst [vmem:[#allocation2 + $0x98] sm:$0x1] %v777
        %vm779 = vsmask.f32 7938
        %vm780 = vmand %vm716, %vm779
        %v781 = vld [vmem:[#allocation2 + $0x4] sm:$0x1]
        %v782 = vsel %vm780, 0, %v781
        %783 = vst [vmem:[#allocation2 + $0x4] sm:$0x1] %v782
        %v784 = vld [vmem:[#allocation2 + $0xc] sm:$0x1]
        %v785 = vsel %vm780, 0, %v784
        %786 = vst [vmem:[#allocation2 + $0xc] sm:$0x1] %v785
        %v787 = vld [vmem:[#allocation2 + $0x14] sm:$0x1]
        %v788 = vsel %vm780, 0, %v787
        %789 = vst [vmem:[#allocation2 + $0x14] sm:$0x1] %v788
        %v790 = vld [vmem:[#allocation2 + $0x1c] sm:$0x1]
        %v791 = vsel %vm780, 0, %v790
        %792 = vst [vmem:[#allocation2 + $0x1c] sm:$0x1] %v791
        %v793 = vld [vmem:[#allocation2 + $0x24] sm:$0x1]
        %v794 = vsel %vm780, 0, %v793
        %795 = vst [vmem:[#allocation2 + $0x24] sm:$0x1] %v794
        %v796 = vld [vmem:[#allocation2 + $0x2c] sm:$0x1]
        %v797 = vsel %vm780, 0, %v796
        %798 = vst [vmem:[#allocation2 + $0x2c] sm:$0x1] %v797
        %v799 = vld [vmem:[#allocation2 + $0x34] sm:$0x1]
        %v800 = vsel %vm780, 0, %v799
        %801 = vst [vmem:[#allocation2 + $0x34] sm:$0x1] %v800
        %v802 = vld [vmem:[#allocation2 + $0x3c] sm:$0x1]
        %v803 = vsel %vm780, 0, %v802
        %804 = vst [vmem:[#allocation2 + $0x3c] sm:$0x1] %v803
        %v805 = vld [vmem:[#allocation2 + $0x44] sm:$0x1]
        %v806 = vsel %vm780, 0, %v805
        %807 = vst [vmem:[#allocation2 + $0x44] sm:$0x1] %v806
        %v808 = vld [vmem:[#allocation2 + $0x4c] sm:$0x1]
        %v809 = vsel %vm780, 0, %v808
        %810 = vst [vmem:[#allocation2 + $0x4c] sm:$0x1] %v809
        %v811 = vld [vmem:[#allocation2 + $0x54] sm:$0x1]
        %v812 = vsel %vm780, 0, %v811
        %813 = vst [vmem:[#allocation2 + $0x54] sm:$0x1] %v812
        %v814 = vld [vmem:[#allocation2 + $0x5c] sm:$0x1]
        %v815 = vsel %vm780, 0, %v814
        %816 = vst [vmem:[#allocation2 + $0x5c] sm:$0x1] %v815
        %v817 = vld [vmem:[#allocation2 + $0x64] sm:$0x1]
        %v818 = vsel %vm780, 0, %v817
        %819 = vst [vmem:[#allocation2 + $0x64] sm:$0x1] %v818
        %v820 = vld [vmem:[#allocation2 + $0x6c] sm:$0x1]
        %v821 = vsel %vm780, 0, %v820
        %822 = vst [vmem:[#allocation2 + $0x6c] sm:$0x1] %v821
        %v823 = vld [vmem:[#allocation2 + $0x74] sm:$0x1]
        %v824 = vsel %vm780, 0, %v823
        %825 = vst [vmem:[#allocation2 + $0x74] sm:$0x1] %v824
        %v826 = vld [vmem:[#allocation2 + $0x7c] sm:$0x1]
        %v827 = vsel %vm780, 0, %v826
        %828 = vst [vmem:[#allocation2 + $0x7c] sm:$0x1] %v827
        %v829 = vld [vmem:[#allocation2 + $0x84] sm:$0x1]
        %v830 = vsel %vm780, 0, %v829
        %831 = vst [vmem:[#allocation2 + $0x84] sm:$0x1] %v830
        %v832 = vld [vmem:[#allocation2 + $0x8c] sm:$0x1]
        %v833 = vsel %vm780, 0, %v832
        %834 = vst [vmem:[#allocation2 + $0x8c] sm:$0x1] %v833
        %v835 = vld [vmem:[#allocation2 + $0x94] sm:$0x1]
        %v836 = vsel %vm780, 0, %v835
        %837 = vst [vmem:[#allocation2 + $0x94] sm:$0x1] %v836
        %v838 = vld [vmem:[#allocation2 + $0x9c] sm:$0x1]
        %v839 = vsel %vm780, 0, %v838
        %840 = vst [vmem:[#allocation2 + $0x9c] sm:$0x1] %v839
        %v849 = vunpack.c.l.b16 %v697
        %v850 = vunpack.c.h.b16 %v697
        %v851 = vunpack.c.l.b16 %v698
        %v852 = vunpack.c.h.b16 %v698
        %v853 = vunpack.c.l.b16 %v699
        %v854 = vunpack.c.h.b16 %v699
        %v855 = vunpack.c.l.b16 %v700
        %v856 = vunpack.c.h.b16 %v700
        %v857 = vunpack.c.l.b16 %v701
        %v858 = vunpack.c.h.b16 %v701
        %v859 = vunpack.c.l.b16 %v702
        %v860 = vunpack.c.h.b16 %v702
        %v861 = vunpack.c.l.b16 %v703
        %v862 = vunpack.c.h.b16 %v703
        %v863 = vunpack.c.l.b16 %v704
        %v864 = vunpack.c.h.b16 %v704
        %v865 = vpack.c.b16 %v849, %v849
        %v866 = vpack.c.b16 %v850, %v850
        %v867 = vpack.c.b16 %v851, %v851
        %v868 = vpack.c.b16 %v852, %v852
        %v869 = vpack.c.b16 %v853, %v853
        %v870 = vpack.c.b16 %v854, %v854
        %v871 = vpack.c.b16 %v855, %v855
        %v872 = vpack.c.b16 %v856, %v856
        %v873 = vpack.c.b16 %v857, %v857
        %v874 = vpack.c.b16 %v858, %v858
        %v875 = vpack.c.b16 %v859, %v859
        %v876 = vpack.c.b16 %v860, %v860
        %v877 = vpack.c.b16 %v861, %v861
        %v878 = vpack.c.b16 %v862, %v862
        %v879 = vpack.c.b16 %v863, %v863
        %v880 = vpack.c.b16 %v864, %v864
        %v882 = vshrl.u32 %v865, 16
        %v884 = vrot.slane %v882, 7
        %v885 = vshll.u32 %v865, 16
        %v887 = vor.u32 %v884, %v885
        %v888 = vrot.slane %v884, 4
        %v890 = vshrl.u32 %v866, 16
        %v892 = vrot.slane %v890, 7
        %v893 = vshll.u32 %v866, 16
        %v895 = vor.u32 %v892, %v893
        %v896 = vrot.slane %v892, 4
        %v898 = vshrl.u32 %v867, 16
        %v900 = vrot.slane %v898, 7
        %v901 = vshll.u32 %v867, 16
        %v903 = vor.u32 %v900, %v901
        %v904 = vrot.slane %v900, 4
        %v906 = vshrl.u32 %v868, 16
        %v908 = vrot.slane %v906, 7
        %v909 = vshll.u32 %v868, 16
        %v911 = vor.u32 %v908, %v909
        %v912 = vrot.slane %v908, 4
        %v914 = vshrl.u32 %v869, 16
        %v916 = vrot.slane %v914, 7
        %v917 = vshll.u32 %v869, 16
        %v919 = vor.u32 %v916, %v917
        %v920 = vrot.slane %v916, 4
        %v922 = vshrl.u32 %v870, 16
        %v924 = vrot.slane %v922, 7
        %v925 = vshll.u32 %v870, 16
        %v927 = vor.u32 %v924, %v925
        %v928 = vrot.slane %v924, 4
        %v930 = vshrl.u32 %v871, 16
        %v932 = vrot.slane %v930, 7
        %v933 = vshll.u32 %v871, 16
        %v935 = vor.u32 %v932, %v933
        %v936 = vrot.slane %v932, 4
        %v938 = vshrl.u32 %v872, 16
        %v940 = vrot.slane %v938, 7
        %v941 = vshll.u32 %v872, 16
        %v943 = vor.u32 %v940, %v941
        %v944 = vrot.slane %v940, 4
        %v946 = vshrl.u32 %v873, 16
        %v948 = vrot.slane %v946, 7
        %v949 = vshll.u32 %v873, 16
        %v951 = vor.u32 %v948, %v949
        %v952 = vrot.slane %v948, 4
        %v954 = vshrl.u32 %v874, 16
        %v956 = vrot.slane %v954, 7
        %v957 = vshll.u32 %v874, 16
        %v959 = vor.u32 %v956, %v957
        %v960 = vrot.slane %v956, 4
        %v962 = vshrl.u32 %v875, 16
        %v964 = vrot.slane %v962, 7
        %v965 = vshll.u32 %v875, 16
        %v967 = vor.u32 %v964, %v965
        %v968 = vrot.slane %v964, 4
        %v970 = vshrl.u32 %v876, 16
        %v972 = vrot.slane %v970, 7
        %v973 = vshll.u32 %v876, 16
        %v975 = vor.u32 %v972, %v973
        %v976 = vrot.slane %v972, 4
        %v978 = vshrl.u32 %v877, 16
        %v980 = vrot.slane %v978, 7
        %v981 = vshll.u32 %v877, 16
        %v983 = vor.u32 %v980, %v981
        %v984 = vrot.slane %v980, 4
        %v986 = vshrl.u32 %v878, 16
        %v988 = vrot.slane %v986, 7
        %v989 = vshll.u32 %v878, 16
        %v991 = vor.u32 %v988, %v989
        %v992 = vrot.slane %v988, 4
        %v994 = vshrl.u32 %v879, 16
        %v996 = vrot.slane %v994, 7
        %v997 = vshll.u32 %v879, 16
        %v999 = vor.u32 %v996, %v997
        %v1000 = vrot.slane %v996, 4
        %v1002 = vshrl.u32 %v880, 16
        %v1004 = vrot.slane %v1002, 7
        %v1005 = vshll.u32 %v880, 16
        %v1007 = vor.u32 %v1004, %v1005
        %v1008 = vrot.slane %v1004, 4
        %s1041 = scalar_lea.vmem [#allocation2], 8
        %vm1042 = vcmask 60416
        %vm1043 = vmand %vm1042, %vm779
        %v1044 = vld [vmem:[%s1041] sm:$0xf]
        %v1045 = vsel %vm1043, %v887, %v1044
        %1046 = vst [vmem:[%s1041] sm:$0xf] %v1045
        %v1047 = vld [vmem:[%s1041 + $0x4] sm:$0x1]
        %v1048 = vsel %vm718, %v888, %v1047
        %1049 = vst [vmem:[%s1041 + $0x4] sm:$0x1] %v1048
        %v1050 = vld [vmem:[%s1041 + $0x8] sm:$0xf]
        %v1051 = vsel %vm1043, %v895, %v1050
        %1052 = vst [vmem:[%s1041 + $0x8] sm:$0xf] %v1051
        %v1053 = vld [vmem:[%s1041 + $0xc] sm:$0x1]
        %v1054 = vsel %vm718, %v896, %v1053
        %1055 = vst [vmem:[%s1041 + $0xc] sm:$0x1] %v1054
        %v1056 = vld [vmem:[%s1041 + $0x10] sm:$0xf]
        %v1057 = vsel %vm1043, %v903, %v1056
        %1058 = vst [vmem:[%s1041 + $0x10] sm:$0xf] %v1057
        %v1059 = vld [vmem:[%s1041 + $0x14] sm:$0x1]
        %v1060 = vsel %vm718, %v904, %v1059
        %1061 = vst [vmem:[%s1041 + $0x14] sm:$0x1] %v1060
        %v1062 = vld [vmem:[%s1041 + $0x18] sm:$0xf]
        %v1063 = vsel %vm1043, %v911, %v1062
        %1064 = vst [vmem:[%s1041 + $0x18] sm:$0xf] %v1063
        %v1065 = vld [vmem:[%s1041 + $0x1c] sm:$0x1]
        %v1066 = vsel %vm718, %v912, %v1065
        %1067 = vst [vmem:[%s1041 + $0x1c] sm:$0x1] %v1066
        %v1068 = vld [vmem:[%s1041 + $0x20] sm:$0xf]
        %v1069 = vsel %vm1043, %v919, %v1068
        %1070 = vst [vmem:[%s1041 + $0x20] sm:$0xf] %v1069
        %v1071 = vld [vmem:[%s1041 + $0x24] sm:$0x1]
        %v1072 = vsel %vm718, %v920, %v1071
        %1073 = vst [vmem:[%s1041 + $0x24] sm:$0x1] %v1072
        %v1074 = vld [vmem:[%s1041 + $0x28] sm:$0xf]
        %v1075 = vsel %vm1043, %v927, %v1074
        %1076 = vst [vmem:[%s1041 + $0x28] sm:$0xf] %v1075
        %v1077 = vld [vmem:[%s1041 + $0x2c] sm:$0x1]
        %v1078 = vsel %vm718, %v928, %v1077
        %1079 = vst [vmem:[%s1041 + $0x2c] sm:$0x1] %v1078
        %v1080 = vld [vmem:[%s1041 + $0x30] sm:$0xf]
        %v1081 = vsel %vm1043, %v935, %v1080
        %1082 = vst [vmem:[%s1041 + $0x30] sm:$0xf] %v1081
        %v1083 = vld [vmem:[%s1041 + $0x34] sm:$0x1]
        %v1084 = vsel %vm718, %v936, %v1083
        %1085 = vst [vmem:[%s1041 + $0x34] sm:$0x1] %v1084
        %v1086 = vld [vmem:[%s1041 + $0x38] sm:$0xf]
        %v1087 = vsel %vm1043, %v943, %v1086
        %1088 = vst [vmem:[%s1041 + $0x38] sm:$0xf] %v1087
        %v1089 = vld [vmem:[%s1041 + $0x3c] sm:$0x1]
        %v1090 = vsel %vm718, %v944, %v1089
        %1091 = vst [vmem:[%s1041 + $0x3c] sm:$0x1] %v1090
        %v1092 = vld [vmem:[%s1041 + $0x50] sm:$0xf]
        %v1093 = vsel %vm1043, %v951, %v1092
        %1094 = vst [vmem:[%s1041 + $0x50] sm:$0xf] %v1093
        %v1095 = vld [vmem:[%s1041 + $0x54] sm:$0x1]
        %v1096 = vsel %vm718, %v952, %v1095
        %1097 = vst [vmem:[%s1041 + $0x54] sm:$0x1] %v1096
        %v1098 = vld [vmem:[%s1041 + $0x58] sm:$0xf]
        %v1099 = vsel %vm1043, %v959, %v1098
        %1100 = vst [vmem:[%s1041 + $0x58] sm:$0xf] %v1099
        %v1101 = vld [vmem:[%s1041 + $0x5c] sm:$0x1]
        %v1102 = vsel %vm718, %v960, %v1101
        %1103 = vst [vmem:[%s1041 + $0x5c] sm:$0x1] %v1102
        %v1104 = vld [vmem:[%s1041 + $0x60] sm:$0xf]
        %v1105 = vsel %vm1043, %v967, %v1104
        %1106 = vst [vmem:[%s1041 + $0x60] sm:$0xf] %v1105
        %v1107 = vld [vmem:[%s1041 + $0x64] sm:$0x1]
        %v1108 = vsel %vm718, %v968, %v1107
        %1109 = vst [vmem:[%s1041 + $0x64] sm:$0x1] %v1108
        %v1110 = vld [vmem:[%s1041 + $0x68] sm:$0xf]
        %v1111 = vsel %vm1043, %v975, %v1110
        %1112 = vst [vmem:[%s1041 + $0x68] sm:$0xf] %v1111
        %v1113 = vld [vmem:[%s1041 + $0x6c] sm:$0x1]
        %v1114 = vsel %vm718, %v976, %v1113
        %1115 = vst [vmem:[%s1041 + $0x6c] sm:$0x1] %v1114
        %v1116 = vld [vmem:[%s1041 + $0x70] sm:$0xf]
        %v1117 = vsel %vm1043, %v983, %v1116
        %1118 = vst [vmem:[%s1041 + $0x70] sm:$0xf] %v1117
        %v1119 = vld [vmem:[%s1041 + $0x74] sm:$0x1]
        %v1120 = vsel %vm718, %v984, %v1119
        %1121 = vst [vmem:[%s1041 + $0x74] sm:$0x1] %v1120
        %v1122 = vld [vmem:[%s1041 + $0x78] sm:$0xf]
        %v1123 = vsel %vm1043, %v991, %v1122
        %1124 = vst [vmem:[%s1041 + $0x78] sm:$0xf] %v1123
        %v1125 = vld [vmem:[%s1041 + $0x7c] sm:$0x1]
        %v1126 = vsel %vm718, %v992, %v1125
        %1127 = vst [vmem:[%s1041 + $0x7c] sm:$0x1] %v1126
        %v1128 = vld [vmem:[%s1041 + $0x80] sm:$0xf]
        %v1129 = vsel %vm1043, %v999, %v1128
        %1130 = vst [vmem:[%s1041 + $0x80] sm:$0xf] %v1129
        %v1131 = vld [vmem:[%s1041 + $0x84] sm:$0x1]
        %v1132 = vsel %vm718, %v1000, %v1131
        %1133 = vst [vmem:[%s1041 + $0x84] sm:$0x1] %v1132
        %v1134 = vld [vmem:[%s1041 + $0x88] sm:$0xf]
        %v1135 = vsel %vm1043, %v1007, %v1134
        %1136 = vst [vmem:[%s1041 + $0x88] sm:$0xf] %v1135
        %v1137 = vld [vmem:[%s1041 + $0x8c] sm:$0x1]
        %v1138 = vsel %vm718, %v1008, %v1137
        %1139 = vst [vmem:[%s1041 + $0x8c] sm:$0x1] %v1138
        %v1140 = vld [vmem:[#allocation10] sm:$0xf]
        %v1141 = vld [vmem:[#allocation10 + $0x4] sm:$0xf]
        %v1142 = vld [vmem:[#allocation10 + $0x8] sm:$0xf]
        %v1143 = vld [vmem:[#allocation10 + $0xc] sm:$0xf]
        %v1144 = vld [vmem:[#allocation10 + $0x10] sm:$0xf]
        %v1145 = vld [vmem:[#allocation10 + $0x14] sm:$0xf]
        %v1146 = vld [vmem:[#allocation10 + $0x18] sm:$0xf]
        %v1147 = vld [vmem:[#allocation10 + $0x1c] sm:$0xf]
        %v1148 = vld [vmem:[#allocation10 + $0x20] sm:$0xf]
        %v1149 = vld [vmem:[#allocation2] sm:$0xf]
        %v1150 = vld [vmem:[#allocation2 + $0x8] sm:$0xf]
        %v1151 = vld [vmem:[#allocation2 + $0x10] sm:$0xf]
        %v1152 = vld [vmem:[#allocation2 + $0x18] sm:$0xf]
        %v1153 = vld [vmem:[#allocation2 + $0x20] sm:$0xf]
        %v1154 = vld [vmem:[#allocation2 + $0x28] sm:$0xf]
        %v1155 = vld [vmem:[#allocation2 + $0x30] sm:$0xf]
        %v1156 = vld [vmem:[#allocation2 + $0x38] sm:$0xf]
        %v1157 = vld [vmem:[#allocation2 + $0x50] sm:$0xf]
        %v1158 = vld [vmem:[#allocation2 + $0x58] sm:$0xf]
        %v1159 = vld [vmem:[#allocation2 + $0x60] sm:$0xf]
        %v1160 = vld [vmem:[#allocation2 + $0x68] sm:$0xf]
        %v1161 = vld [vmem:[#allocation2 + $0x70] sm:$0xf]
        %v1162 = vld [vmem:[#allocation2 + $0x78] sm:$0xf]
        %v1163 = vld [vmem:[#allocation2 + $0x80] sm:$0xf]
        %v1164 = vld [vmem:[#allocation2 + $0x88] sm:$0xf]
        %v1165 = vld [vmem:[#allocation2 + $0x4] sm:$0x1]
        %v1166 = vld [vmem:[#allocation2 + $0xc] sm:$0x1]
        %v1167 = vld [vmem:[#allocation2 + $0x14] sm:$0x1]
        %v1168 = vld [vmem:[#allocation2 + $0x1c] sm:$0x1]
        %v1169 = vld [vmem:[#allocation2 + $0x24] sm:$0x1]
        %v1170 = vld [vmem:[#allocation2 + $0x2c] sm:$0x1]
        %v1171 = vld [vmem:[#allocation2 + $0x34] sm:$0x1]
        %v1172 = vld [vmem:[#allocation2 + $0x3c] sm:$0x1]
        %v1173 = vld [vmem:[#allocation2 + $0x54] sm:$0x1]
        %v1174 = vld [vmem:[#allocation2 + $0x5c] sm:$0x1]
        %v1175 = vld [vmem:[#allocation2 + $0x64] sm:$0x1]
        %v1176 = vld [vmem:[#allocation2 + $0x6c] sm:$0x1]
        %v1177 = vld [vmem:[#allocation2 + $0x74] sm:$0x1]
        %v1178 = vld [vmem:[#allocation2 + $0x7c] sm:$0x1]
        %v1179 = vld [vmem:[#allocation2 + $0x84] sm:$0x1]
        %v1180 = vld [vmem:[#allocation2 + $0x8c] sm:$0x1]
        %vm1181 = vsmask.f32 3328
        %vm1182 = vsmask.f32 7440
        %vm1183 = vmor %vm1181, %vm1182
        %v1185 = vshrl.u32 %v1149, 16
        %v1187 = vrot.slane %v1185, 4
        %v1188 = vshll.u32 %v1149, 16
        %v1190 = vrot.slane %v1188, 5
        %v1191 = vor.u32 %v1187, %v1190
        %v1192 = vrot.slane %v1191, 4
        %v1194 = vshll.u32 %v1165, 16
        %v1196 = vrot.slane %v1194, 5
        %v1197 = vsel %vm1183, %v1192, %v1196
        %v1199 = vshrl.u32 %v1150, 16
        %v1201 = vrot.slane %v1199, 4
        %v1202 = vshll.u32 %v1150, 16
        %v1204 = vrot.slane %v1202, 5
        %v1205 = vor.u32 %v1201, %v1204
        %v1206 = vrot.slane %v1205, 4
        %v1208 = vshll.u32 %v1166, 16
        %v1210 = vrot.slane %v1208, 5
        %v1211 = vsel %vm1183, %v1206, %v1210
        %v1213 = vshrl.u32 %v1151, 16
        %v1215 = vrot.slane %v1213, 4
        %v1216 = vshll.u32 %v1151, 16
        %v1218 = vrot.slane %v1216, 5
        %v1219 = vor.u32 %v1215, %v1218
        %v1220 = vrot.slane %v1219, 4
        %v1222 = vshll.u32 %v1167, 16
        %v1224 = vrot.slane %v1222, 5
        %v1225 = vsel %vm1183, %v1220, %v1224
        %v1227 = vshrl.u32 %v1152, 16
        %v1229 = vrot.slane %v1227, 4
        %v1230 = vshll.u32 %v1152, 16
        %v1232 = vrot.slane %v1230, 5
        %v1233 = vor.u32 %v1229, %v1232
        %v1234 = vrot.slane %v1233, 4
        %v1236 = vshll.u32 %v1168, 16
        %v1238 = vrot.slane %v1236, 5
        %v1239 = vsel %vm1183, %v1234, %v1238
        %v1241 = vshrl.u32 %v1153, 16
        %v1243 = vrot.slane %v1241, 4
        %v1244 = vshll.u32 %v1153, 16
        %v1246 = vrot.slane %v1244, 5
        %v1247 = vor.u32 %v1243, %v1246
        %v1248 = vrot.slane %v1247, 4
        %v1250 = vshll.u32 %v1169, 16
        %v1252 = vrot.slane %v1250, 5
        %v1253 = vsel %vm1183, %v1248, %v1252
        %v1255 = vshrl.u32 %v1154, 16
        %v1257 = vrot.slane %v1255, 4
        %v1258 = vshll.u32 %v1154, 16
        %v1260 = vrot.slane %v1258, 5
        %v1261 = vor.u32 %v1257, %v1260
        %v1262 = vrot.slane %v1261, 4
        %v1264 = vshll.u32 %v1170, 16
        %v1266 = vrot.slane %v1264, 5
        %v1267 = vsel %vm1183, %v1262, %v1266
        %v1269 = vshrl.u32 %v1155, 16
        %v1271 = vrot.slane %v1269, 4
        %v1272 = vshll.u32 %v1155, 16
        %v1274 = vrot.slane %v1272, 5
        %v1275 = vor.u32 %v1271, %v1274
        %v1276 = vrot.slane %v1275, 4
        %v1278 = vshll.u32 %v1171, 16
        %v1280 = vrot.slane %v1278, 5
        %v1281 = vsel %vm1183, %v1276, %v1280
        %v1283 = vshrl.u32 %v1156, 16
        %v1285 = vrot.slane %v1283, 4
        %v1286 = vshll.u32 %v1156, 16
        %v1288 = vrot.slane %v1286, 5
        %v1289 = vor.u32 %v1285, %v1288
        %v1290 = vrot.slane %v1289, 4
        %v1292 = vshll.u32 %v1172, 16
        %v1294 = vrot.slane %v1292, 5
        %v1295 = vsel %vm1183, %v1290, %v1294
        %v1297 = vshrl.u32 %v1157, 16
        %v1299 = vrot.slane %v1297, 4
        %v1300 = vshll.u32 %v1157, 16
        %v1302 = vrot.slane %v1300, 5
        %v1303 = vor.u32 %v1299, %v1302
        %v1304 = vrot.slane %v1303, 4
        %v1306 = vshll.u32 %v1173, 16
        %v1308 = vrot.slane %v1306, 5
        %v1309 = vsel %vm1183, %v1304, %v1308
        %v1311 = vshrl.u32 %v1158, 16
        %v1313 = vrot.slane %v1311, 4
        %v1314 = vshll.u32 %v1158, 16
        %v1316 = vrot.slane %v1314, 5
        %v1317 = vor.u32 %v1313, %v1316
        %v1318 = vrot.slane %v1317, 4
        %v1320 = vshll.u32 %v1174, 16
        %v1322 = vrot.slane %v1320, 5
        %v1323 = vsel %vm1183, %v1318, %v1322
        %v1325 = vshrl.u32 %v1159, 16
        %v1327 = vrot.slane %v1325, 4
        %v1328 = vshll.u32 %v1159, 16
        %v1330 = vrot.slane %v1328, 5
        %v1331 = vor.u32 %v1327, %v1330
        %v1332 = vrot.slane %v1331, 4
        %v1334 = vshll.u32 %v1175, 16
        %v1336 = vrot.slane %v1334, 5
        %v1337 = vsel %vm1183, %v1332, %v1336
        %v1339 = vshrl.u32 %v1160, 16
        %v1341 = vrot.slane %v1339, 4
        %v1342 = vshll.u32 %v1160, 16
        %v1344 = vrot.slane %v1342, 5
        %v1345 = vor.u32 %v1341, %v1344
        %v1346 = vrot.slane %v1345, 4
        %v1348 = vshll.u32 %v1176, 16
        %v1350 = vrot.slane %v1348, 5
        %v1351 = vsel %vm1183, %v1346, %v1350
        %v1353 = vshrl.u32 %v1161, 16
        %v1355 = vrot.slane %v1353, 4
        %v1356 = vshll.u32 %v1161, 16
        %v1358 = vrot.slane %v1356, 5
        %v1359 = vor.u32 %v1355, %v1358
        %v1360 = vrot.slane %v1359, 4
        %v1362 = vshll.u32 %v1177, 16
        %v1364 = vrot.slane %v1362, 5
        %v1365 = vsel %vm1183, %v1360, %v1364
        %v1367 = vshrl.u32 %v1162, 16
        %v1369 = vrot.slane %v1367, 4
        %v1370 = vshll.u32 %v1162, 16
        %v1372 = vrot.slane %v1370, 5
        %v1373 = vor.u32 %v1369, %v1372
        %v1374 = vrot.slane %v1373, 4
        %v1376 = vshll.u32 %v1178, 16
        %v1378 = vrot.slane %v1376, 5
        %v1379 = vsel %vm1183, %v1374, %v1378
        %v1381 = vshrl.u32 %v1163, 16
        %v1383 = vrot.slane %v1381, 4
        %v1384 = vshll.u32 %v1163, 16
        %v1386 = vrot.slane %v1384, 5
        %v1387 = vor.u32 %v1383, %v1386
        %v1388 = vrot.slane %v1387, 4
        %v1390 = vshll.u32 %v1179, 16
        %v1392 = vrot.slane %v1390, 5
        %v1393 = vsel %vm1183, %v1388, %v1392
        %v1395 = vshrl.u32 %v1164, 16
        %v1397 = vrot.slane %v1395, 4
        %v1398 = vshll.u32 %v1164, 16
        %v1400 = vrot.slane %v1398, 5
        %v1401 = vor.u32 %v1397, %v1400
        %v1402 = vrot.slane %v1401, 4
        %v1404 = vshll.u32 %v1180, 16
        %v1406 = vrot.slane %v1404, 5
        %v1407 = vsel %vm1183, %v1402, %v1406
        %v1408 = vunpack.c.l.b16 %v1197
        %v1409 = vunpack.c.l.b16 %v1211
        %v1410 = vunpack.c.l.b16 %v1225
        %v1411 = vunpack.c.l.b16 %v1239
        %v1412 = vunpack.c.l.b16 %v1253
        %v1413 = vunpack.c.l.b16 %v1267
        %v1414 = vunpack.c.l.b16 %v1281
        %v1415 = vunpack.c.l.b16 %v1295
        %v1416 = vunpack.c.l.b16 %v1309
        %v1417 = vunpack.c.l.b16 %v1323
        %v1418 = vunpack.c.l.b16 %v1337
        %v1419 = vunpack.c.l.b16 %v1351
        %v1420 = vunpack.c.l.b16 %v1365
        %v1421 = vunpack.c.l.b16 %v1379
        %v1422 = vunpack.c.l.b16 %v1393
        %v1423 = vunpack.c.l.b16 %v1407
        %v1424 = vpack.c.b16 %v1409, %v1408
        %v1425 = vpack.c.b16 %v1411, %v1410
        %v1426 = vpack.c.b16 %v1413, %v1412
        %v1427 = vpack.c.b16 %v1415, %v1414
        %v1428 = vpack.c.b16 %v1417, %v1416
        %v1429 = vpack.c.b16 %v1419, %v1418
        %v1430 = vpack.c.b16 %v1421, %v1420
        %v1431 = vpack.c.b16 %v1423, %v1422
        %vm1432 = vcmask 64512
        %v1434 = vsel %vm1432, %v1424, 0
        %v1437 = vsel %vm1432, %v1425, 0
        %v1440 = vsel %vm1432, %v1426, 0
        %v1443 = vsel %vm1432, %v1427, 0
        %v1446 = vsel %vm1432, %v1428, 0
        %v1449 = vsel %vm1432, %v1429, 0
        %v1452 = vsel %vm1432, %v1430, 0
        %v1455 = vsel %vm1432, %v1431, 0
        %vm1457 = vcmask 1043456
        %v1459 = vsel %vm1457, %v1141, 0
        %1461 = vmatprep.subr.bf16.mxu0 0
        %1462 = vmatpush1.bf16.msra.mxu0 %v1459
        %1463 = vmatprep.subr.bf16.mxu0 0
        %1464 = vmatpush1.bf16.msra.mxu0 0
        %1465 = vmatprep.subr.bf16.mxu0 0
        %1466 = vmatpush1.bf16.msra.mxu0 0
        %1467 = vmatprep.subr.bf16.mxu0 0
        %1468 = vmatpush1.bf16.msra.mxu0 0
        %1469 = vmatprep.subr.bf16.mxu0 0
        %1470 = vmatpush1.bf16.msra.mxu0 0
        %1471 = vmatprep.subr.bf16.mxu0 0
        %1472 = vmatpush1.bf16.msra.mxu0 0
        %1473 = vmatprep.subr.bf16.mxu0 0
        %1474 = vmatpush1.bf16.msra.mxu0 0
        %1475 = vmatprep.subr.bf16.mxu0 0
        %1476 = vmatpush1.bf16.msra.mxu0 0
        %1477 = vmatprep.subr.bf16.mxu0 0
        %1478 = vmatpush1.bf16.msra.mxu0 0
        %1479 = vmatprep.subr.bf16.mxu0 0
        %1480 = vmatpush1.bf16.msra.mxu0 0
        %1481 = vmatprep.subr.bf16.mxu0 0
        %1482 = vmatpush1.bf16.msra.mxu0 0
        %1483 = vmatprep.subr.bf16.mxu0 0
        %1484 = vmatpush1.bf16.msra.mxu0 0
        %1485 = vmatprep.subr.bf16.mxu0 0
        %1486 = vmatpush1.bf16.msra.mxu0 0
        %1487 = vmatprep.subr.bf16.mxu0 0
        %1488 = vmatpush1.bf16.msra.mxu0 0
        %1489 = vmatprep.subr.bf16.mxu0 0
        %1490 = vmatpush1.bf16.msra.mxu0 0
        %1491 = vmatprep.subr.bf16.mxu0 0
        %1492 = vmatpush1.bf16.msra.mxu0 0
        %1493 = vmatprep.mubr.bf16.mxu0 0
        %1494 = vmatmul.mubr.bf16.gmra.mrb[0].mxu0 %v1434
        %v1495 = vpop.f32.mrb[0].mxu0
        %v1496 = vadd.f32 0.0, %v1495
        %v1497 = vpop.f32.mrb[0].mxu0
        %v1498 = vpop.f32.mrb[0].mxu0
        %v1499 = vadd.f32 0.0, %v1498
        %v1500 = vpop.f32.mrb[0].mxu0
        %1501 = vmatprep.mubr.bf16.mxu0 0
        %1502 = vmatmul.mubr.bf16.gmra.mrb[0].mxu0 %v1437
        %v1503 = vpop.f32.mrb[0].mxu0
        %v1504 = vadd.f32 0.0, %v1503
        %v1505 = vpop.f32.mrb[0].mxu0
        %v1506 = vpop.f32.mrb[0].mxu0
        %v1507 = vadd.f32 0.0, %v1506
        %v1508 = vpop.f32.mrb[0].mxu0
        %1509 = vmatprep.mubr.bf16.mxu0 0
        %1510 = vmatmul.mubr.bf16.gmra.mrb[0].mxu0 %v1440
        %v1511 = vpop.f32.mrb[0].mxu0
        %v1512 = vadd.f32 0.0, %v1511
        %v1513 = vpop.f32.mrb[0].mxu0
        %v1514 = vpop.f32.mrb[0].mxu0
        %v1515 = vadd.f32 0.0, %v1514
        %v1516 = vpop.f32.mrb[0].mxu0
        %1517 = vmatprep.mubr.bf16.mxu0 0
        %1518 = vmatmul.mubr.bf16.gmra.mrb[0].mxu0 %v1443
        %v1519 = vpop.f32.mrb[0].mxu0
        %v1520 = vadd.f32 0.0, %v1519
        %v1521 = vpop.f32.mrb[0].mxu0
        %v1522 = vpop.f32.mrb[0].mxu0
        %v1523 = vadd.f32 0.0, %v1522
        %v1524 = vpop.f32.mrb[0].mxu0
        %1525 = vmatprep.mubr.bf16.mxu0 0
        %1526 = vmatmul.mubr.bf16.gmra.mrb[0].mxu0 %v1446
        %v1527 = vpop.f32.mrb[0].mxu0
        %v1528 = vadd.f32 0.0, %v1527
        %v1529 = vpop.f32.mrb[0].mxu0
        %v1530 = vpop.f32.mrb[0].mxu0
        %v1531 = vadd.f32 0.0, %v1530
        %v1532 = vpop.f32.mrb[0].mxu0
        %1533 = vmatprep.mubr.bf16.mxu0 0
        %1534 = vmatmul.mubr.bf16.gmra.mrb[0].mxu0 %v1449
        %v1535 = vpop.f32.mrb[0].mxu0
        %v1536 = vadd.f32 0.0, %v1535
        %v1537 = vpop.f32.mrb[0].mxu0
        %v1538 = vpop.f32.mrb[0].mxu0
        %v1539 = vadd.f32 0.0, %v1538
        %v1540 = vpop.f32.mrb[0].mxu0
        %1541 = vmatprep.mubr.bf16.mxu0 0
        %1542 = vmatmul.mubr.bf16.gmra.mrb[0].mxu0 %v1452
        %v1543 = vpop.f32.mrb[0].mxu0
        %v1544 = vadd.f32 0.0, %v1543
        %v1545 = vpop.f32.mrb[0].mxu0
        %v1546 = vpop.f32.mrb[0].mxu0
        %v1547 = vadd.f32 0.0, %v1546
        %v1548 = vpop.f32.mrb[0].mxu0
        %1549 = vmatprep.mubr.bf16.mxu0 0
        %1550 = vmatmul.mubr.bf16.gmra.mrb[0].mxu0 %v1455
        %v1551 = vpop.f32.mrb[0].mxu0
        %v1552 = vadd.f32 0.0, %v1551
        %v1553 = vpop.f32.mrb[0].mxu0
        %v1554 = vpop.f32.mrb[0].mxu0
        %v1555 = vadd.f32 0.0, %v1554
        %v1556 = vpop.f32.mrb[0].mxu0
        %1557 = vdwg.mxu0
        %v1574 = vunpack.c.l.b16 %v1149
        %v1575 = vunpack.c.l.b16 %v1150
        %v1576 = vunpack.c.l.b16 %v1151
        %v1577 = vunpack.c.l.b16 %v1152
        %v1578 = vunpack.c.l.b16 %v1153
        %v1579 = vunpack.c.l.b16 %v1154
        %v1580 = vunpack.c.l.b16 %v1155
        %v1581 = vunpack.c.l.b16 %v1156
        %v1582 = vunpack.c.l.b16 %v1157
        %v1583 = vunpack.c.l.b16 %v1158
        %v1584 = vunpack.c.l.b16 %v1159
        %v1585 = vunpack.c.l.b16 %v1160
        %v1586 = vunpack.c.l.b16 %v1161
        %v1587 = vunpack.c.l.b16 %v1162
        %v1588 = vunpack.c.l.b16 %v1163
        %v1589 = vunpack.c.l.b16 %v1164
        %v1590 = vpack.c.b16 %v1575, %v1574
        %v1591 = vpack.c.b16 %v1577, %v1576
        %v1592 = vpack.c.b16 %v1579, %v1578
        %v1593 = vpack.c.b16 %v1581, %v1580
        %v1594 = vpack.c.b16 %v1583, %v1582
        %v1595 = vpack.c.b16 %v1585, %v1584
        %v1596 = vpack.c.b16 %v1587, %v1586
        %v1597 = vpack.c.b16 %v1589, %v1588
        %v1599 = vsel %vm1432, %v1590, 0
        %v1602 = vsel %vm1432, %v1591, 0
        %v1605 = vsel %vm1432, %v1592, 0
        %v1608 = vsel %vm1432, %v1593, 0
        %v1611 = vsel %vm1432, %v1594, 0
        %v1614 = vsel %vm1432, %v1595, 0
        %v1617 = vsel %vm1432, %v1596, 0
        %v1620 = vsel %vm1432, %v1597, 0
        %v1623 = vsel %vm1457, %v1140, 0
        %1625 = vmatprep.subr.bf16.mxu0 0
        %1626 = vmatpush1.bf16.msra.mxu0 %v1623
        %1627 = vmatprep.subr.bf16.mxu0 0
        %1628 = vmatpush1.bf16.msra.mxu0 0
        %1629 = vmatprep.subr.bf16.mxu0 0
        %1630 = vmatpush1.bf16.msra.mxu0 0
        %1631 = vmatprep.subr.bf16.mxu0 0
        %1632 = vmatpush1.bf16.msra.mxu0 0
        %1633 = vmatprep.subr.bf16.mxu0 0
        %1634 = vmatpush1.bf16.msra.mxu0 0
        %1635 = vmatprep.subr.bf16.mxu0 0
        %1636 = vmatpush1.bf16.msra.mxu0 0
        %1637 = vmatprep.subr.bf16.mxu0 0
        %1638 = vmatpush1.bf16.msra.mxu0 0
        %1639 = vmatprep.subr.bf16.mxu0 0
        %1640 = vmatpush1.bf16.msra.mxu0 0
        %1641 = vmatprep.subr.bf16.mxu0 0
        %1642 = vmatpush1.bf16.msra.mxu0 0
        %1643 = vmatprep.subr.bf16.mxu0 0
        %1644 = vmatpush1.bf16.msra.mxu0 0
        %1645 = vmatprep.subr.bf16.mxu0 0
        %1646 = vmatpush1.bf16.msra.mxu0 0
        %1647 = vmatprep.subr.bf16.mxu0 0
        %1648 = vmatpush1.bf16.msra.mxu0 0
        %1649 = vmatprep.subr.bf16.mxu0 0
        %1650 = vmatpush1.bf16.msra.mxu0 0
        %1651 = vmatprep.subr.bf16.mxu0 0
        %1652 = vmatpush1.bf16.msra.mxu0 0
        %1653 = vmatprep.subr.bf16.mxu0 0
        %1654 = vmatpush1.bf16.msra.mxu0 0
        %1655 = vmatprep.subr.bf16.mxu0 0
        %1656 = vmatpush1.bf16.msra.mxu0 0
        %1657 = vmatprep.mubr.bf16.mxu0 0
        %1658 = vmatmul.mubr.bf16.gmra.mrb[0].mxu0 %v1599
        %v1659 = vpop.f32.mrb[0].mxu0
        %v1660 = vadd.f32 %v1496, %v1659
        %v1661 = vpop.f32.mrb[0].mxu0
        %v1662 = vpop.f32.mrb[0].mxu0
        %v1663 = vadd.f32 %v1499, %v1662
        %v1664 = vpop.f32.mrb[0].mxu0
        %1665 = vmatprep.mubr.bf16.mxu0 0
        %1666 = vmatmul.mubr.bf16.gmra.mrb[0].mxu0 %v1602
        %v1667 = vpop.f32.mrb[0].mxu0
        %v1668 = vadd.f32 %v1504, %v1667
        %v1669 = vpop.f32.mrb[0].mxu0
        %v1670 = vpop.f32.mrb[0].mxu0
        %v1671 = vadd.f32 %v1507, %v1670
        %v1672 = vpop.f32.mrb[0].mxu0
        %1673 = vmatprep.mubr.bf16.mxu0 0
        %1674 = vmatmul.mubr.bf16.gmra.mrb[0].mxu0 %v1605
        %v1675 = vpop.f32.mrb[0].mxu0
        %v1676 = vadd.f32 %v1512, %v1675
        %v1677 = vpop.f32.mrb[0].mxu0
        %v1678 = vpop.f32.mrb[0].mxu0
        %v1679 = vadd.f32 %v1515, %v1678
        %v1680 = vpop.f32.mrb[0].mxu0
        %1681 = vmatprep.mubr.bf16.mxu0 0
        %1682 = vmatmul.mubr.bf16.gmra.mrb[0].mxu0 %v1608
        %v1683 = vpop.f32.mrb[0].mxu0
        %v1684 = vadd.f32 %v1520, %v1683
        %v1685 = vpop.f32.mrb[0].mxu0
        %v1686 = vpop.f32.mrb[0].mxu0
        %v1687 = vadd.f32 %v1523, %v1686
        %v1688 = vpop.f32.mrb[0].mxu0
        %1689 = vmatprep.mubr.bf16.mxu0 0
        %1690 = vmatmul.mubr.bf16.gmra.mrb[0].mxu0 %v1611
        %v1691 = vpop.f32.mrb[0].mxu0
        %v1692 = vadd.f32 %v1528, %v1691
        %v1693 = vpop.f32.mrb[0].mxu0
        %v1694 = vpop.f32.mrb[0].mxu0
        %v1695 = vadd.f32 %v1531, %v1694
        %v1696 = vpop.f32.mrb[0].mxu0
        %1697 = vmatprep.mubr.bf16.mxu0 0
        %1698 = vmatmul.mubr.bf16.gmra.mrb[0].mxu0 %v1614
        %v1699 = vpop.f32.mrb[0].mxu0
        %v1700 = vadd.f32 %v1536, %v1699
        %v1701 = vpop.f32.mrb[0].mxu0
        %v1702 = vpop.f32.mrb[0].mxu0
        %v1703 = vadd.f32 %v1539, %v1702
        %v1704 = vpop.f32.mrb[0].mxu0
        %1705 = vmatprep.mubr.bf16.mxu0 0
        %1706 = vmatmul.mubr.bf16.gmra.mrb[0].mxu0 %v1617
        %v1707 = vpop.f32.mrb[0].mxu0
        %v1708 = vadd.f32 %v1544, %v1707
        %v1709 = vpop.f32.mrb[0].mxu0
        %v1710 = vpop.f32.mrb[0].mxu0
        %v1711 = vadd.f32 %v1547, %v1710
        %v1712 = vpop.f32.mrb[0].mxu0
        %1713 = vmatprep.mubr.bf16.mxu0 0
        %1714 = vmatmul.mubr.bf16.gmra.mrb[0].mxu0 %v1620
        %v1715 = vpop.f32.mrb[0].mxu0
        %v1716 = vadd.f32 %v1552, %v1715
        %v1717 = vpop.f32.mrb[0].mxu0
        %v1718 = vpop.f32.mrb[0].mxu0
        %v1719 = vadd.f32 %v1555, %v1718
        %v1720 = vpop.f32.mrb[0].mxu0
        %1721 = vdwg.mxu0
        %v1722 = vld [vmem:[#allocation2] sm:$0xe]
        %v1723 = vld [vmem:[#allocation2 + $0x8] sm:$0xe]
        %v1724 = vld [vmem:[#allocation2 + $0x10] sm:$0xe]
        %v1725 = vld [vmem:[#allocation2 + $0x18] sm:$0xe]
        %v1726 = vld [vmem:[#allocation2 + $0x20] sm:$0xe]
        %v1727 = vld [vmem:[#allocation2 + $0x28] sm:$0xe]
        %v1728 = vld [vmem:[#allocation2 + $0x30] sm:$0xe]
        %v1729 = vld [vmem:[#allocation2 + $0x38] sm:$0xe]
        %v1730 = vld [vmem:[#allocation2 + $0x50] sm:$0xe]
        %v1731 = vld [vmem:[#allocation2 + $0x58] sm:$0xe]
        %v1732 = vld [vmem:[#allocation2 + $0x60] sm:$0xe]
        %v1733 = vld [vmem:[#allocation2 + $0x68] sm:$0xe]
        %v1734 = vld [vmem:[#allocation2 + $0x70] sm:$0xe]
        %v1735 = vld [vmem:[#allocation2 + $0x78] sm:$0xe]
        %v1736 = vld [vmem:[#allocation2 + $0x80] sm:$0xe]
        %v1737 = vld [vmem:[#allocation2 + $0x88] sm:$0xe]
        %vm1770 = vcmask 1042432
        %vm1771 = vcmask 1046532
        %vm1772 = vmor %vm1770, %vm1771
        %v1773 = vrot.slane %v1722, 5
        %v1774 = vrot.slane %v1773, 4
        %v1775 = vrot.slane %v1165, 5
        %v1776 = vsel %vm1772, %v1774, %v1775
        %v1777 = vrot.slane %v1723, 5
        %v1778 = vrot.slane %v1777, 4
        %v1779 = vrot.slane %v1166, 5
        %v1780 = vsel %vm1772, %v1778, %v1779
        %v1781 = vrot.slane %v1724, 5
        %v1782 = vrot.slane %v1781, 4
        %v1783 = vrot.slane %v1167, 5
        %v1784 = vsel %vm1772, %v1782, %v1783
        %v1785 = vrot.slane %v1725, 5
        %v1786 = vrot.slane %v1785, 4
        %v1787 = vrot.slane %v1168, 5
        %v1788 = vsel %vm1772, %v1786, %v1787
        %v1789 = vrot.slane %v1726, 5
        %v1790 = vrot.slane %v1789, 4
        %v1791 = vrot.slane %v1169, 5
        %v1792 = vsel %vm1772, %v1790, %v1791
        %v1793 = vrot.slane %v1727, 5
        %v1794 = vrot.slane %v1793, 4
        %v1795 = vrot.slane %v1170, 5
        %v1796 = vsel %vm1772, %v1794, %v1795
        %v1797 = vrot.slane %v1728, 5
        %v1798 = vrot.slane %v1797, 4
        %v1799 = vrot.slane %v1171, 5
        %v1800 = vsel %vm1772, %v1798, %v1799
        %v1801 = vrot.slane %v1729, 5
        %v1802 = vrot.slane %v1801, 4
        %v1803 = vrot.slane %v1172, 5
        %v1804 = vsel %vm1772, %v1802, %v1803
        %v1805 = vrot.slane %v1730, 5
        %v1806 = vrot.slane %v1805, 4
        %v1807 = vrot.slane %v1173, 5
        %v1808 = vsel %vm1772, %v1806, %v1807
        %v1809 = vrot.slane %v1731, 5
        %v1810 = vrot.slane %v1809, 4
        %v1811 = vrot.slane %v1174, 5
        %v1812 = vsel %vm1772, %v1810, %v1811
        %v1813 = vrot.slane %v1732, 5
        %v1814 = vrot.slane %v1813, 4
        %v1815 = vrot.slane %v1175, 5
        %v1816 = vsel %vm1772, %v1814, %v1815
        %v1817 = vrot.slane %v1733, 5
        %v1818 = vrot.slane %v1817, 4
        %v1819 = vrot.slane %v1176, 5
        %v1820 = vsel %vm1772, %v1818, %v1819
        %v1821 = vrot.slane %v1734, 5
        %v1822 = vrot.slane %v1821, 4
        %v1823 = vrot.slane %v1177, 5
        %v1824 = vsel %vm1772, %v1822, %v1823
        %v1825 = vrot.slane %v1735, 5
        %v1826 = vrot.slane %v1825, 4
        %v1827 = vrot.slane %v1178, 5
        %v1828 = vsel %vm1772, %v1826, %v1827
        %v1829 = vrot.slane %v1736, 5
        %v1830 = vrot.slane %v1829, 4
        %v1831 = vrot.slane %v1179, 5
        %v1832 = vsel %vm1772, %v1830, %v1831
        %v1833 = vrot.slane %v1737, 5
        %v1834 = vrot.slane %v1833, 4
        %v1835 = vrot.slane %v1180, 5
        %v1836 = vsel %vm1772, %v1834, %v1835
        %v1837 = vunpack.c.l.b16 %v1776
        %v1838 = vunpack.c.l.b16 %v1780
        %v1839 = vunpack.c.l.b16 %v1784
        %v1840 = vunpack.c.l.b16 %v1788
        %v1841 = vunpack.c.l.b16 %v1792
        %v1842 = vunpack.c.l.b16 %v1796
        %v1843 = vunpack.c.l.b16 %v1800
        %v1844 = vunpack.c.l.b16 %v1804
        %v1845 = vunpack.c.l.b16 %v1808
        %v1846 = vunpack.c.l.b16 %v1812
        %v1847 = vunpack.c.l.b16 %v1816
        %v1848 = vunpack.c.l.b16 %v1820
        %v1849 = vunpack.c.l.b16 %v1824
        %v1850 = vunpack.c.l.b16 %v1828
        %v1851 = vunpack.c.l.b16 %v1832
        %v1852 = vunpack.c.l.b16 %v1836
        %v1853 = vpack.c.b16 %v1838, %v1837
        %v1854 = vpack.c.b16 %v1840, %v1839
        %v1855 = vpack.c.b16 %v1842, %v1841
        %v1856 = vpack.c.b16 %v1844, %v1843
        %v1857 = vpack.c.b16 %v1846, %v1845
        %v1858 = vpack.c.b16 %v1848, %v1847
        %v1859 = vpack.c.b16 %v1850, %v1849
        %v1860 = vpack.c.b16 %v1852, %v1851
        %v1862 = vsel %vm1432, %v1853, 0
        %v1865 = vsel %vm1432, %v1854, 0
        %v1868 = vsel %vm1432, %v1855, 0
        %v1871 = vsel %vm1432, %v1856, 0
        %v1874 = vsel %vm1432, %v1857, 0
        %v1877 = vsel %vm1432, %v1858, 0
        %v1880 = vsel %vm1432, %v1859, 0
        %v1883 = vsel %vm1432, %v1860, 0
        %v1886 = vsel %vm1457, %v1142, 0
        %1888 = vmatprep.subr.bf16.mxu0 0
        %1889 = vmatpush1.bf16.msra.mxu0 %v1886
        %1890 = vmatprep.subr.bf16.mxu0 0
        %1891 = vmatpush1.bf16.msra.mxu0 0
        %1892 = vmatprep.subr.bf16.mxu0 0
        %1893 = vmatpush1.bf16.msra.mxu0 0
        %1894 = vmatprep.subr.bf16.mxu0 0
        %1895 = vmatpush1.bf16.msra.mxu0 0
        %1896 = vmatprep.subr.bf16.mxu0 0
        %1897 = vmatpush1.bf16.msra.mxu0 0
        %1898 = vmatprep.subr.bf16.mxu0 0
        %1899 = vmatpush1.bf16.msra.mxu0 0
        %1900 = vmatprep.subr.bf16.mxu0 0
        %1901 = vmatpush1.bf16.msra.mxu0 0
        %1902 = vmatprep.subr.bf16.mxu0 0
        %1903 = vmatpush1.bf16.msra.mxu0 0
        %1904 = vmatprep.subr.bf16.mxu0 0
        %1905 = vmatpush1.bf16.msra.mxu0 0
        %1906 = vmatprep.subr.bf16.mxu0 0
        %1907 = vmatpush1.bf16.msra.mxu0 0
        %1908 = vmatprep.subr.bf16.mxu0 0
        %1909 = vmatpush1.bf16.msra.mxu0 0
        %1910 = vmatprep.subr.bf16.mxu0 0
        %1911 = vmatpush1.bf16.msra.mxu0 0
        %1912 = vmatprep.subr.bf16.mxu0 0
        %1913 = vmatpush1.bf16.msra.mxu0 0
        %1914 = vmatprep.subr.bf16.mxu0 0
        %1915 = vmatpush1.bf16.msra.mxu0 0
        %1916 = vmatprep.subr.bf16.mxu0 0
        %1917 = vmatpush1.bf16.msra.mxu0 0
        %1918 = vmatprep.subr.bf16.mxu0 0
        %1919 = vmatpush1.bf16.msra.mxu0 0
        %1920 = vmatprep.mubr.bf16.mxu0 0
        %1921 = vmatmul.mubr.bf16.gmra.mrb[0].mxu0 %v1862
        %v1922 = vpop.f32.mrb[0].mxu0
        %v1923 = vadd.f32 0.0, %v1922
        %v1924 = vpop.f32.mrb[0].mxu0
        %v1925 = vpop.f32.mrb[0].mxu0
        %v1926 = vadd.f32 0.0, %v1925
        %v1927 = vpop.f32.mrb[0].mxu0
        %1928 = vmatprep.mubr.bf16.mxu0 0
        %1929 = vmatmul.mubr.bf16.gmra.mrb[0].mxu0 %v1865
        %v1930 = vpop.f32.mrb[0].mxu0
        %v1931 = vadd.f32 0.0, %v1930
        %v1932 = vpop.f32.mrb[0].mxu0
        %v1933 = vpop.f32.mrb[0].mxu0
        %v1934 = vadd.f32 0.0, %v1933
        %v1935 = vpop.f32.mrb[0].mxu0
        %1936 = vmatprep.mubr.bf16.mxu0 0
        %1937 = vmatmul.mubr.bf16.gmra.mrb[0].mxu0 %v1868
        %v1938 = vpop.f32.mrb[0].mxu0
        %v1939 = vadd.f32 0.0, %v1938
        %v1940 = vpop.f32.mrb[0].mxu0
        %v1941 = vpop.f32.mrb[0].mxu0
        %v1942 = vadd.f32 0.0, %v1941
        %v1943 = vpop.f32.mrb[0].mxu0
        %1944 = vmatprep.mubr.bf16.mxu0 0
        %1945 = vmatmul.mubr.bf16.gmra.mrb[0].mxu0 %v1871
        %v1946 = vpop.f32.mrb[0].mxu0
        %v1947 = vadd.f32 0.0, %v1946
        %v1948 = vpop.f32.mrb[0].mxu0
        %v1949 = vpop.f32.mrb[0].mxu0
        %v1950 = vadd.f32 0.0, %v1949
        %v1951 = vpop.f32.mrb[0].mxu0
        %1952 = vmatprep.mubr.bf16.mxu0 0
        %1953 = vmatmul.mubr.bf16.gmra.mrb[0].mxu0 %v1874
        %v1954 = vpop.f32.mrb[0].mxu0
        %v1955 = vadd.f32 0.0, %v1954
        %v1956 = vpop.f32.mrb[0].mxu0
        %v1957 = vpop.f32.mrb[0].mxu0
        %v1958 = vadd.f32 0.0, %v1957
        %v1959 = vpop.f32.mrb[0].mxu0
        %1960 = vmatprep.mubr.bf16.mxu0 0
        %1961 = vmatmul.mubr.bf16.gmra.mrb[0].mxu0 %v1877
        %v1962 = vpop.f32.mrb[0].mxu0
        %v1963 = vadd.f32 0.0, %v1962
        %v1964 = vpop.f32.mrb[0].mxu0
        %v1965 = vpop.f32.mrb[0].mxu0
        %v1966 = vadd.f32 0.0, %v1965
        %v1967 = vpop.f32.mrb[0].mxu0
        %1968 = vmatprep.mubr.bf16.mxu0 0
        %1969 = vmatmul.mubr.bf16.gmra.mrb[0].mxu0 %v1880
        %v1970 = vpop.f32.mrb[0].mxu0
        %v1971 = vadd.f32 0.0, %v1970
        %v1972 = vpop.f32.mrb[0].mxu0
        %v1973 = vpop.f32.mrb[0].mxu0
        %v1974 = vadd.f32 0.0, %v1973
        %v1975 = vpop.f32.mrb[0].mxu0
        %1976 = vmatprep.mubr.bf16.mxu0 0
        %1977 = vmatmul.mubr.bf16.gmra.mrb[0].mxu0 %v1883
        %v1978 = vpop.f32.mrb[0].mxu0
        %v1979 = vadd.f32 0.0, %v1978
        %v1980 = vpop.f32.mrb[0].mxu0
        %v1981 = vpop.f32.mrb[0].mxu0
        %v1982 = vadd.f32 0.0, %v1981
        %v1983 = vpop.f32.mrb[0].mxu0
        %1984 = vdwg.mxu0
        %v1985 = vadd.f32 %v1660, %v1923
        %v1986 = vadd.f32 %v1663, %v1926
        %v1987 = vadd.f32 %v1668, %v1931
        %v1988 = vadd.f32 %v1671, %v1934
        %v1989 = vadd.f32 %v1676, %v1939
        %v1990 = vadd.f32 %v1679, %v1942
        %v1991 = vadd.f32 %v1684, %v1947
        %v1992 = vadd.f32 %v1687, %v1950
        %v1993 = vadd.f32 %v1692, %v1955
        %v1994 = vadd.f32 %v1695, %v1958
        %v1995 = vadd.f32 %v1700, %v1963
        %v1996 = vadd.f32 %v1703, %v1966
        %v1997 = vadd.f32 %v1708, %v1971
        %v1998 = vadd.f32 %v1711, %v1974
        %v1999 = vadd.f32 %v1716, %v1979
        %v2000 = vadd.f32 %v1719, %v1982
        %v2001 = vld [vmem:[%s1041] sm:$0xf]
        %v2002 = vld [vmem:[%s1041 + $0x8] sm:$0xf]
        %v2003 = vld [vmem:[%s1041 + $0x10] sm:$0xf]
        %v2004 = vld [vmem:[%s1041 + $0x18] sm:$0xf]
        %v2005 = vld [vmem:[%s1041 + $0x20] sm:$0xf]
        %v2006 = vld [vmem:[%s1041 + $0x28] sm:$0xf]
        %v2007 = vld [vmem:[%s1041 + $0x30] sm:$0xf]
        %v2008 = vld [vmem:[%s1041 + $0x38] sm:$0xf]
        %v2009 = vld [vmem:[%s1041 + $0x50] sm:$0xf]
        %v2010 = vld [vmem:[%s1041 + $0x58] sm:$0xf]
        %v2011 = vld [vmem:[%s1041 + $0x60] sm:$0xf]
        %v2012 = vld [vmem:[%s1041 + $0x68] sm:$0xf]
        %v2013 = vld [vmem:[%s1041 + $0x70] sm:$0xf]
        %v2014 = vld [vmem:[%s1041 + $0x78] sm:$0xf]
        %v2015 = vld [vmem:[%s1041 + $0x80] sm:$0xf]
        %v2016 = vld [vmem:[%s1041 + $0x88] sm:$0xf]
        %v2033 = vunpack.c.l.b16 %v2001
        %v2034 = vunpack.c.l.b16 %v2002
        %v2035 = vunpack.c.l.b16 %v2003
        %v2036 = vunpack.c.l.b16 %v2004
        %v2037 = vunpack.c.l.b16 %v2005
        %v2038 = vunpack.c.l.b16 %v2006
        %v2039 = vunpack.c.l.b16 %v2007
        %v2040 = vunpack.c.l.b16 %v2008
        %v2041 = vunpack.c.l.b16 %v2009
        %v2042 = vunpack.c.l.b16 %v2010
        %v2043 = vunpack.c.l.b16 %v2011
        %v2044 = vunpack.c.l.b16 %v2012
        %v2045 = vunpack.c.l.b16 %v2013
        %v2046 = vunpack.c.l.b16 %v2014
        %v2047 = vunpack.c.l.b16 %v2015
        %v2048 = vunpack.c.l.b16 %v2016
        %v2049 = vpack.c.b16 %v2034, %v2033
        %v2050 = vpack.c.b16 %v2036, %v2035
        %v2051 = vpack.c.b16 %v2038, %v2037
        %v2052 = vpack.c.b16 %v2040, %v2039
        %v2053 = vpack.c.b16 %v2042, %v2041
        %v2054 = vpack.c.b16 %v2044, %v2043
        %v2055 = vpack.c.b16 %v2046, %v2045
        %v2056 = vpack.c.b16 %v2048, %v2047
        %v2058 = vsel %vm1432, %v2049, 0
        %v2061 = vsel %vm1432, %v2050, 0
        %v2064 = vsel %vm1432, %v2051, 0
        %v2067 = vsel %vm1432, %v2052, 0
        %v2070 = vsel %vm1432, %v2053, 0
        %v2073 = vsel %vm1432, %v2054, 0
        %v2076 = vsel %vm1432, %v2055, 0
        %v2079 = vsel %vm1432, %v2056, 0
        %v2082 = vsel %vm1457, %v1143, 0
        %2084 = vmatprep.subr.bf16.mxu0 0
        %2085 = vmatpush1.bf16.msra.mxu0 %v2082
        %2086 = vmatprep.subr.bf16.mxu0 0
        %2087 = vmatpush1.bf16.msra.mxu0 0
        %2088 = vmatprep.subr.bf16.mxu0 0
        %2089 = vmatpush1.bf16.msra.mxu0 0
        %2090 = vmatprep.subr.bf16.mxu0 0
        %2091 = vmatpush1.bf16.msra.mxu0 0
        %2092 = vmatprep.subr.bf16.mxu0 0
        %2093 = vmatpush1.bf16.msra.mxu0 0
        %2094 = vmatprep.subr.bf16.mxu0 0
        %2095 = vmatpush1.bf16.msra.mxu0 0
        %2096 = vmatprep.subr.bf16.mxu0 0
        %2097 = vmatpush1.bf16.msra.mxu0 0
        %2098 = vmatprep.subr.bf16.mxu0 0
        %2099 = vmatpush1.bf16.msra.mxu0 0
        %2100 = vmatprep.subr.bf16.mxu0 0
        %2101 = vmatpush1.bf16.msra.mxu0 0
        %2102 = vmatprep.subr.bf16.mxu0 0
        %2103 = vmatpush1.bf16.msra.mxu0 0
        %2104 = vmatprep.subr.bf16.mxu0 0
        %2105 = vmatpush1.bf16.msra.mxu0 0
        %2106 = vmatprep.subr.bf16.mxu0 0
        %2107 = vmatpush1.bf16.msra.mxu0 0
        %2108 = vmatprep.subr.bf16.mxu0 0
        %2109 = vmatpush1.bf16.msra.mxu0 0
        %2110 = vmatprep.subr.bf16.mxu0 0
        %2111 = vmatpush1.bf16.msra.mxu0 0
        %2112 = vmatprep.subr.bf16.mxu0 0
        %2113 = vmatpush1.bf16.msra.mxu0 0
        %2114 = vmatprep.subr.bf16.mxu0 0
        %2115 = vmatpush1.bf16.msra.mxu0 0
        %2116 = vmatprep.mubr.bf16.mxu0 0
        %2117 = vmatmul.mubr.bf16.gmra.mrb[0].mxu0 %v2058
        %v2118 = vpop.f32.mrb[0].mxu0
        %v2119 = vadd.f32 0.0, %v2118
        %v2120 = vpop.f32.mrb[0].mxu0
        %v2121 = vpop.f32.mrb[0].mxu0
        %v2122 = vadd.f32 0.0, %v2121
        %v2123 = vpop.f32.mrb[0].mxu0
        %2124 = vmatprep.mubr.bf16.mxu0 0
        %2125 = vmatmul.mubr.bf16.gmra.mrb[0].mxu0 %v2061
        %v2126 = vpop.f32.mrb[0].mxu0
        %v2127 = vadd.f32 0.0, %v2126
        %v2128 = vpop.f32.mrb[0].mxu0
        %v2129 = vpop.f32.mrb[0].mxu0
        %v2130 = vadd.f32 0.0, %v2129
        %v2131 = vpop.f32.mrb[0].mxu0
        %2132 = vmatprep.mubr.bf16.mxu0 0
        %2133 = vmatmul.mubr.bf16.gmra.mrb[0].mxu0 %v2064
        %v2134 = vpop.f32.mrb[0].mxu0
        %v2135 = vadd.f32 0.0, %v2134
        %v2136 = vpop.f32.mrb[0].mxu0
        %v2137 = vpop.f32.mrb[0].mxu0
        %v2138 = vadd.f32 0.0, %v2137
        %v2139 = vpop.f32.mrb[0].mxu0
        %2140 = vmatprep.mubr.bf16.mxu0 0
        %2141 = vmatmul.mubr.bf16.gmra.mrb[0].mxu0 %v2067
        %v2142 = vpop.f32.mrb[0].mxu0
        %v2143 = vadd.f32 0.0, %v2142
        %v2144 = vpop.f32.mrb[0].mxu0
        %v2145 = vpop.f32.mrb[0].mxu0
        %v2146 = vadd.f32 0.0, %v2145
        %v2147 = vpop.f32.mrb[0].mxu0
        %2148 = vmatprep.mubr.bf16.mxu0 0
        %2149 = vmatmul.mubr.bf16.gmra.mrb[0].mxu0 %v2070
        %v2150 = vpop.f32.mrb[0].mxu0
        %v2151 = vadd.f32 0.0, %v2150
        %v2152 = vpop.f32.mrb[0].mxu0
        %v2153 = vpop.f32.mrb[0].mxu0
        %v2154 = vadd.f32 0.0, %v2153
        %v2155 = vpop.f32.mrb[0].mxu0
        %2156 = vmatprep.mubr.bf16.mxu0 0
        %2157 = vmatmul.mubr.bf16.gmra.mrb[0].mxu0 %v2073
        %v2158 = vpop.f32.mrb[0].mxu0
        %v2159 = vadd.f32 0.0, %v2158
        %v2160 = vpop.f32.mrb[0].mxu0
        %v2161 = vpop.f32.mrb[0].mxu0
        %v2162 = vadd.f32 0.0, %v2161
        %v2163 = vpop.f32.mrb[0].mxu0
        %2164 = vmatprep.mubr.bf16.mxu0 0
        %2165 = vmatmul.mubr.bf16.gmra.mrb[0].mxu0 %v2076
        %v2166 = vpop.f32.mrb[0].mxu0
        %v2167 = vadd.f32 0.0, %v2166
        %v2168 = vpop.f32.mrb[0].mxu0
        %v2169 = vpop.f32.mrb[0].mxu0
        %v2170 = vadd.f32 0.0, %v2169
        %v2171 = vpop.f32.mrb[0].mxu0
        %2172 = vmatprep.mubr.bf16.mxu0 0
        %2173 = vmatmul.mubr.bf16.gmra.mrb[0].mxu0 %v2079
        %v2174 = vpop.f32.mrb[0].mxu0
        %v2175 = vadd.f32 0.0, %v2174
        %v2176 = vpop.f32.mrb[0].mxu0
        %v2177 = vpop.f32.mrb[0].mxu0
        %v2178 = vadd.f32 0.0, %v2177
        %v2179 = vpop.f32.mrb[0].mxu0
        %2180 = vdwg.mxu0
        %v2181 = vadd.f32 %v1985, %v2119
        %v2182 = vadd.f32 %v1986, %v2122
        %v2183 = vadd.f32 %v1987, %v2127
        %v2184 = vadd.f32 %v1988, %v2130
        %v2185 = vadd.f32 %v1989, %v2135
        %v2186 = vadd.f32 %v1990, %v2138
        %v2187 = vadd.f32 %v1991, %v2143
        %v2188 = vadd.f32 %v1992, %v2146
        %v2189 = vadd.f32 %v1993, %v2151
        %v2190 = vadd.f32 %v1994, %v2154
        %v2191 = vadd.f32 %v1995, %v2159
        %v2192 = vadd.f32 %v1996, %v2162
        %v2193 = vadd.f32 %v1997, %v2167
        %v2194 = vadd.f32 %v1998, %v2170
        %v2195 = vadd.f32 %v1999, %v2175
        %v2196 = vadd.f32 %v2000, %v2178
        %v2197 = vld [vmem:[%s1041] sm:$0xf]
        %v2198 = vld [vmem:[%s1041 + $0x4] sm:$0x1]
        %v2199 = vld [vmem:[%s1041 + $0x8] sm:$0xf]
        %v2200 = vld [vmem:[%s1041 + $0xc] sm:$0x1]
        %v2201 = vld [vmem:[%s1041 + $0x10] sm:$0xf]
        %v2202 = vld [vmem:[%s1041 + $0x14] sm:$0x1]
        %v2203 = vld [vmem:[%s1041 + $0x18] sm:$0xf]
        %v2204 = vld [vmem:[%s1041 + $0x1c] sm:$0x1]
        %v2205 = vld [vmem:[%s1041 + $0x20] sm:$0xf]
        %v2206 = vld [vmem:[%s1041 + $0x24] sm:$0x1]
        %v2207 = vld [vmem:[%s1041 + $0x28] sm:$0xf]
        %v2208 = vld [vmem:[%s1041 + $0x2c] sm:$0x1]
        %v2209 = vld [vmem:[%s1041 + $0x30] sm:$0xf]
        %v2210 = vld [vmem:[%s1041 + $0x34] sm:$0x1]
        %v2211 = vld [vmem:[%s1041 + $0x38] sm:$0xf]
        %v2212 = vld [vmem:[%s1041 + $0x3c] sm:$0x1]
        %v2213 = vld [vmem:[%s1041 + $0x50] sm:$0xf]
        %v2214 = vld [vmem:[%s1041 + $0x54] sm:$0x1]
        %v2215 = vld [vmem:[%s1041 + $0x58] sm:$0xf]
        %v2216 = vld [vmem:[%s1041 + $0x5c] sm:$0x1]
        %v2217 = vld [vmem:[%s1041 + $0x60] sm:$0xf]
        %v2218 = vld [vmem:[%s1041 + $0x64] sm:$0x1]
        %v2219 = vld [vmem:[%s1041 + $0x68] sm:$0xf]
        %v2220 = vld [vmem:[%s1041 + $0x6c] sm:$0x1]
        %v2221 = vld [vmem:[%s1041 + $0x70] sm:$0xf]
        %v2222 = vld [vmem:[%s1041 + $0x74] sm:$0x1]
        %v2223 = vld [vmem:[%s1041 + $0x78] sm:$0xf]
        %v2224 = vld [vmem:[%s1041 + $0x7c] sm:$0x1]
        %v2225 = vld [vmem:[%s1041 + $0x80] sm:$0xf]
        %v2226 = vld [vmem:[%s1041 + $0x84] sm:$0x1]
        %v2227 = vld [vmem:[%s1041 + $0x88] sm:$0xf]
        %v2228 = vld [vmem:[%s1041 + $0x8c] sm:$0x1]
        %v2230 = vshrl.u32 %v2197, 16
        %v2232 = vrot.slane %v2230, 4
        %v2233 = vshll.u32 %v2197, 16
        %v2235 = vrot.slane %v2233, 5
        %v2236 = vor.u32 %v2232, %v2235
        %v2237 = vrot.slane %v2236, 4
        %v2239 = vshll.u32 %v2198, 16
        %v2241 = vrot.slane %v2239, 5
        %v2242 = vsel %vm1183, %v2237, %v2241
        %v2244 = vshrl.u32 %v2199, 16
        %v2246 = vrot.slane %v2244, 4
        %v2247 = vshll.u32 %v2199, 16
        %v2249 = vrot.slane %v2247, 5
        %v2250 = vor.u32 %v2246, %v2249
        %v2251 = vrot.slane %v2250, 4
        %v2253 = vshll.u32 %v2200, 16
        %v2255 = vrot.slane %v2253, 5
        %v2256 = vsel %vm1183, %v2251, %v2255
        %v2258 = vshrl.u32 %v2201, 16
        %v2260 = vrot.slane %v2258, 4
        %v2261 = vshll.u32 %v2201, 16
        %v2263 = vrot.slane %v2261, 5
        %v2264 = vor.u32 %v2260, %v2263
        %v2265 = vrot.slane %v2264, 4
        %v2267 = vshll.u32 %v2202, 16
        %v2269 = vrot.slane %v2267, 5
        %v2270 = vsel %vm1183, %v2265, %v2269
        %v2272 = vshrl.u32 %v2203, 16
        %v2274 = vrot.slane %v2272, 4
        %v2275 = vshll.u32 %v2203, 16
        %v2277 = vrot.slane %v2275, 5
        %v2278 = vor.u32 %v2274, %v2277
        %v2279 = vrot.slane %v2278, 4
        %v2281 = vshll.u32 %v2204, 16
        %v2283 = vrot.slane %v2281, 5
        %v2284 = vsel %vm1183, %v2279, %v2283
        %v2286 = vshrl.u32 %v2205, 16
        %v2288 = vrot.slane %v2286, 4
        %v2289 = vshll.u32 %v2205, 16
        %v2291 = vrot.slane %v2289, 5
        %v2292 = vor.u32 %v2288, %v2291
        %v2293 = vrot.slane %v2292, 4
        %v2295 = vshll.u32 %v2206, 16
        %v2297 = vrot.slane %v2295, 5
        %v2298 = vsel %vm1183, %v2293, %v2297
        %v2300 = vshrl.u32 %v2207, 16
        %v2302 = vrot.slane %v2300, 4
        %v2303 = vshll.u32 %v2207, 16
        %v2305 = vrot.slane %v2303, 5
        %v2306 = vor.u32 %v2302, %v2305
        %v2307 = vrot.slane %v2306, 4
        %v2309 = vshll.u32 %v2208, 16
        %v2311 = vrot.slane %v2309, 5
        %v2312 = vsel %vm1183, %v2307, %v2311
        %v2314 = vshrl.u32 %v2209, 16
        %v2316 = vrot.slane %v2314, 4
        %v2317 = vshll.u32 %v2209, 16
        %v2319 = vrot.slane %v2317, 5
        %v2320 = vor.u32 %v2316, %v2319
        %v2321 = vrot.slane %v2320, 4
        %v2323 = vshll.u32 %v2210, 16
        %v2325 = vrot.slane %v2323, 5
        %v2326 = vsel %vm1183, %v2321, %v2325
        %v2328 = vshrl.u32 %v2211, 16
        %v2330 = vrot.slane %v2328, 4
        %v2331 = vshll.u32 %v2211, 16
        %v2333 = vrot.slane %v2331, 5
        %v2334 = vor.u32 %v2330, %v2333
        %v2335 = vrot.slane %v2334, 4
        %v2337 = vshll.u32 %v2212, 16
        %v2339 = vrot.slane %v2337, 5
        %v2340 = vsel %vm1183, %v2335, %v2339
        %v2342 = vshrl.u32 %v2213, 16
        %v2344 = vrot.slane %v2342, 4
        %v2345 = vshll.u32 %v2213, 16
        %v2347 = vrot.slane %v2345, 5
        %v2348 = vor.u32 %v2344, %v2347
        %v2349 = vrot.slane %v2348, 4
        %v2351 = vshll.u32 %v2214, 16
        %v2353 = vrot.slane %v2351, 5
        %v2354 = vsel %vm1183, %v2349, %v2353
        %v2356 = vshrl.u32 %v2215, 16
        %v2358 = vrot.slane %v2356, 4
        %v2359 = vshll.u32 %v2215, 16
        %v2361 = vrot.slane %v2359, 5
        %v2362 = vor.u32 %v2358, %v2361
        %v2363 = vrot.slane %v2362, 4
        %v2365 = vshll.u32 %v2216, 16
        %v2367 = vrot.slane %v2365, 5
        %v2368 = vsel %vm1183, %v2363, %v2367
        %v2370 = vshrl.u32 %v2217, 16
        %v2372 = vrot.slane %v2370, 4
        %v2373 = vshll.u32 %v2217, 16
        %v2375 = vrot.slane %v2373, 5
        %v2376 = vor.u32 %v2372, %v2375
        %v2377 = vrot.slane %v2376, 4
        %v2379 = vshll.u32 %v2218, 16
        %v2381 = vrot.slane %v2379, 5
        %v2382 = vsel %vm1183, %v2377, %v2381
        %v2384 = vshrl.u32 %v2219, 16
        %v2386 = vrot.slane %v2384, 4
        %v2387 = vshll.u32 %v2219, 16
        %v2389 = vrot.slane %v2387, 5
        %v2390 = vor.u32 %v2386, %v2389
        %v2391 = vrot.slane %v2390, 4
        %v2393 = vshll.u32 %v2220, 16
        %v2395 = vrot.slane %v2393, 5
        %v2396 = vsel %vm1183, %v2391, %v2395
        %v2398 = vshrl.u32 %v2221, 16
        %v2400 = vrot.slane %v2398, 4
        %v2401 = vshll.u32 %v2221, 16
        %v2403 = vrot.slane %v2401, 5
        %v2404 = vor.u32 %v2400, %v2403
        %v2405 = vrot.slane %v2404, 4
        %v2407 = vshll.u32 %v2222, 16
        %v2409 = vrot.slane %v2407, 5
        %v2410 = vsel %vm1183, %v2405, %v2409
        %v2412 = vshrl.u32 %v2223, 16
        %v2414 = vrot.slane %v2412, 4
        %v2415 = vshll.u32 %v2223, 16
        %v2417 = vrot.slane %v2415, 5
        %v2418 = vor.u32 %v2414, %v2417
        %v2419 = vrot.slane %v2418, 4
        %v2421 = vshll.u32 %v2224, 16
        %v2423 = vrot.slane %v2421, 5
        %v2424 = vsel %vm1183, %v2419, %v2423
        %v2426 = vshrl.u32 %v2225, 16
        %v2428 = vrot.slane %v2426, 4
        %v2429 = vshll.u32 %v2225, 16
        %v2431 = vrot.slane %v2429, 5
        %v2432 = vor.u32 %v2428, %v2431
        %v2433 = vrot.slane %v2432, 4
        %v2435 = vshll.u32 %v2226, 16
        %v2437 = vrot.slane %v2435, 5
        %v2438 = vsel %vm1183, %v2433, %v2437
        %v2440 = vshrl.u32 %v2227, 16
        %v2442 = vrot.slane %v2440, 4
        %v2443 = vshll.u32 %v2227, 16
        %v2445 = vrot.slane %v2443, 5
        %v2446 = vor.u32 %v2442, %v2445
        %v2447 = vrot.slane %v2446, 4
        %v2449 = vshll.u32 %v2228, 16
        %v2451 = vrot.slane %v2449, 5
        %v2452 = vsel %vm1183, %v2447, %v2451
        %v2453 = vunpack.c.l.b16 %v2242
        %v2454 = vunpack.c.l.b16 %v2256
        %v2455 = vunpack.c.l.b16 %v2270
        %v2456 = vunpack.c.l.b16 %v2284
        %v2457 = vunpack.c.l.b16 %v2298
        %v2458 = vunpack.c.l.b16 %v2312
        %v2459 = vunpack.c.l.b16 %v2326
        %v2460 = vunpack.c.l.b16 %v2340
        %v2461 = vunpack.c.l.b16 %v2354
        %v2462 = vunpack.c.l.b16 %v2368
        %v2463 = vunpack.c.l.b16 %v2382
        %v2464 = vunpack.c.l.b16 %v2396
        %v2465 = vunpack.c.l.b16 %v2410
        %v2466 = vunpack.c.l.b16 %v2424
        %v2467 = vunpack.c.l.b16 %v2438
        %v2468 = vunpack.c.l.b16 %v2452
        %v2469 = vpack.c.b16 %v2454, %v2453
        %v2470 = vpack.c.b16 %v2456, %v2455
        %v2471 = vpack.c.b16 %v2458, %v2457
        %v2472 = vpack.c.b16 %v2460, %v2459
        %v2473 = vpack.c.b16 %v2462, %v2461
        %v2474 = vpack.c.b16 %v2464, %v2463
        %v2475 = vpack.c.b16 %v2466, %v2465
        %v2476 = vpack.c.b16 %v2468, %v2467
        %v2478 = vsel %vm1432, %v2469, 0
        %v2481 = vsel %vm1432, %v2470, 0
        %v2484 = vsel %vm1432, %v2471, 0
        %v2487 = vsel %vm1432, %v2472, 0
        %v2490 = vsel %vm1432, %v2473, 0
        %v2493 = vsel %vm1432, %v2474, 0
        %v2496 = vsel %vm1432, %v2475, 0
        %v2499 = vsel %vm1432, %v2476, 0
        %v2502 = vsel %vm1457, %v1144, 0
        %2504 = vmatprep.subr.bf16.mxu0 0
        %2505 = vmatpush1.bf16.msra.mxu0 %v2502
        %2506 = vmatprep.subr.bf16.mxu0 0
        %2507 = vmatpush1.bf16.msra.mxu0 0
        %2508 = vmatprep.subr.bf16.mxu0 0
        %2509 = vmatpush1.bf16.msra.mxu0 0
        %2510 = vmatprep.subr.bf16.mxu0 0
        %2511 = vmatpush1.bf16.msra.mxu0 0
        %2512 = vmatprep.subr.bf16.mxu0 0
        %2513 = vmatpush1.bf16.msra.mxu0 0
        %2514 = vmatprep.subr.bf16.mxu0 0
        %2515 = vmatpush1.bf16.msra.mxu0 0
        %2516 = vmatprep.subr.bf16.mxu0 0
        %2517 = vmatpush1.bf16.msra.mxu0 0
        %2518 = vmatprep.subr.bf16.mxu0 0
        %2519 = vmatpush1.bf16.msra.mxu0 0
        %2520 = vmatprep.subr.bf16.mxu0 0
        %2521 = vmatpush1.bf16.msra.mxu0 0
        %2522 = vmatprep.subr.bf16.mxu0 0
        %2523 = vmatpush1.bf16.msra.mxu0 0
        %2524 = vmatprep.subr.bf16.mxu0 0
        %2525 = vmatpush1.bf16.msra.mxu0 0
        %2526 = vmatprep.subr.bf16.mxu0 0
        %2527 = vmatpush1.bf16.msra.mxu0 0
        %2528 = vmatprep.subr.bf16.mxu0 0
        %2529 = vmatpush1.bf16.msra.mxu0 0
        %2530 = vmatprep.subr.bf16.mxu0 0
        %2531 = vmatpush1.bf16.msra.mxu0 0
        %2532 = vmatprep.subr.bf16.mxu0 0
        %2533 = vmatpush1.bf16.msra.mxu0 0
        %2534 = vmatprep.subr.bf16.mxu0 0
        %2535 = vmatpush1.bf16.msra.mxu0 0
        %2536 = vmatprep.mubr.bf16.mxu0 0
        %2537 = vmatmul.mubr.bf16.gmra.mrb[0].mxu0 %v2478
        %v2538 = vpop.f32.mrb[0].mxu0
        %v2539 = vadd.f32 0.0, %v2538
        %v2540 = vpop.f32.mrb[0].mxu0
        %v2541 = vpop.f32.mrb[0].mxu0
        %v2542 = vadd.f32 0.0, %v2541
        %v2543 = vpop.f32.mrb[0].mxu0
        %2544 = vmatprep.mubr.bf16.mxu0 0
        %2545 = vmatmul.mubr.bf16.gmra.mrb[0].mxu0 %v2481
        %v2546 = vpop.f32.mrb[0].mxu0
        %v2547 = vadd.f32 0.0, %v2546
        %v2548 = vpop.f32.mrb[0].mxu0
        %v2549 = vpop.f32.mrb[0].mxu0
        %v2550 = vadd.f32 0.0, %v2549
        %v2551 = vpop.f32.mrb[0].mxu0
        %2552 = vmatprep.mubr.bf16.mxu0 0
        %2553 = vmatmul.mubr.bf16.gmra.mrb[0].mxu0 %v2484
        %v2554 = vpop.f32.mrb[0].mxu0
        %v2555 = vadd.f32 0.0, %v2554
        %v2556 = vpop.f32.mrb[0].mxu0
        %v2557 = vpop.f32.mrb[0].mxu0
        %v2558 = vadd.f32 0.0, %v2557
        %v2559 = vpop.f32.mrb[0].mxu0
        %2560 = vmatprep.mubr.bf16.mxu0 0
        %2561 = vmatmul.mubr.bf16.gmra.mrb[0].mxu0 %v2487
        %v2562 = vpop.f32.mrb[0].mxu0
        %v2563 = vadd.f32 0.0, %v2562
        %v2564 = vpop.f32.mrb[0].mxu0
        %v2565 = vpop.f32.mrb[0].mxu0
        %v2566 = vadd.f32 0.0, %v2565
        %v2567 = vpop.f32.mrb[0].mxu0
        %2568 = vmatprep.mubr.bf16.mxu0 0
        %2569 = vmatmul.mubr.bf16.gmra.mrb[0].mxu0 %v2490
        %v2570 = vpop.f32.mrb[0].mxu0
        %v2571 = vadd.f32 0.0, %v2570
        %v2572 = vpop.f32.mrb[0].mxu0
        %v2573 = vpop.f32.mrb[0].mxu0
        %v2574 = vadd.f32 0.0, %v2573
        %v2575 = vpop.f32.mrb[0].mxu0
        %2576 = vmatprep.mubr.bf16.mxu0 0
        %2577 = vmatmul.mubr.bf16.gmra.mrb[0].mxu0 %v2493
        %v2578 = vpop.f32.mrb[0].mxu0
        %v2579 = vadd.f32 0.0, %v2578
        %v2580 = vpop.f32.mrb[0].mxu0
        %v2581 = vpop.f32.mrb[0].mxu0
        %v2582 = vadd.f32 0.0, %v2581
        %v2583 = vpop.f32.mrb[0].mxu0
        %2584 = vmatprep.mubr.bf16.mxu0 0
        %2585 = vmatmul.mubr.bf16.gmra.mrb[0].mxu0 %v2496
        %v2586 = vpop.f32.mrb[0].mxu0
        %v2587 = vadd.f32 0.0, %v2586
        %v2588 = vpop.f32.mrb[0].mxu0
        %v2589 = vpop.f32.mrb[0].mxu0
        %v2590 = vadd.f32 0.0, %v2589
        %v2591 = vpop.f32.mrb[0].mxu0
        %2592 = vmatprep.mubr.bf16.mxu0 0
        %2593 = vmatmul.mubr.bf16.gmra.mrb[0].mxu0 %v2499
        %v2594 = vpop.f32.mrb[0].mxu0
        %v2595 = vadd.f32 0.0, %v2594
        %v2596 = vpop.f32.mrb[0].mxu0
        %v2597 = vpop.f32.mrb[0].mxu0
        %v2598 = vadd.f32 0.0, %v2597
        %v2599 = vpop.f32.mrb[0].mxu0
        %2600 = vdwg.mxu0
        %v2601 = vadd.f32 %v2181, %v2539
        %v2602 = vadd.f32 %v2182, %v2542
        %v2603 = vadd.f32 %v2183, %v2547
        %v2604 = vadd.f32 %v2184, %v2550
        %v2605 = vadd.f32 %v2185, %v2555
        %v2606 = vadd.f32 %v2186, %v2558
        %v2607 = vadd.f32 %v2187, %v2563
        %v2608 = vadd.f32 %v2188, %v2566
        %v2609 = vadd.f32 %v2189, %v2571
        %v2610 = vadd.f32 %v2190, %v2574
        %v2611 = vadd.f32 %v2191, %v2579
        %v2612 = vadd.f32 %v2192, %v2582
        %v2613 = vadd.f32 %v2193, %v2587
        %v2614 = vadd.f32 %v2194, %v2590
        %v2615 = vadd.f32 %v2195, %v2595
        %v2616 = vadd.f32 %v2196, %v2598
        %v2617 = vld [vmem:[%s1041] sm:$0xe]
        %v2618 = vld [vmem:[%s1041 + $0x8] sm:$0xe]
        %v2619 = vld [vmem:[%s1041 + $0x10] sm:$0xe]
        %v2620 = vld [vmem:[%s1041 + $0x18] sm:$0xe]
        %v2621 = vld [vmem:[%s1041 + $0x20] sm:$0xe]
        %v2622 = vld [vmem:[%s1041 + $0x28] sm:$0xe]
        %v2623 = vld [vmem:[%s1041 + $0x30] sm:$0xe]
        %v2624 = vld [vmem:[%s1041 + $0x38] sm:$0xe]
        %v2625 = vld [vmem:[%s1041 + $0x50] sm:$0xe]
        %v2626 = vld [vmem:[%s1041 + $0x58] sm:$0xe]
        %v2627 = vld [vmem:[%s1041 + $0x60] sm:$0xe]
        %v2628 = vld [vmem:[%s1041 + $0x68] sm:$0xe]
        %v2629 = vld [vmem:[%s1041 + $0x70] sm:$0xe]
        %v2630 = vld [vmem:[%s1041 + $0x78] sm:$0xe]
        %v2631 = vld [vmem:[%s1041 + $0x80] sm:$0xe]
        %v2632 = vld [vmem:[%s1041 + $0x88] sm:$0xe]
        %v2665 = vrot.slane %v2617, 5
        %v2666 = vrot.slane %v2665, 4
        %v2667 = vrot.slane %v2198, 5
        %v2668 = vsel %vm1772, %v2666, %v2667
        %v2669 = vrot.slane %v2618, 5
        %v2670 = vrot.slane %v2669, 4
        %v2671 = vrot.slane %v2200, 5
        %v2672 = vsel %vm1772, %v2670, %v2671
        %v2673 = vrot.slane %v2619, 5
        %v2674 = vrot.slane %v2673, 4
        %v2675 = vrot.slane %v2202, 5
        %v2676 = vsel %vm1772, %v2674, %v2675
        %v2677 = vrot.slane %v2620, 5
        %v2678 = vrot.slane %v2677, 4
        %v2679 = vrot.slane %v2204, 5
        %v2680 = vsel %vm1772, %v2678, %v2679
        %v2681 = vrot.slane %v2621, 5
        %v2682 = vrot.slane %v2681, 4
        %v2683 = vrot.slane %v2206, 5
        %v2684 = vsel %vm1772, %v2682, %v2683
        %v2685 = vrot.slane %v2622, 5
        %v2686 = vrot.slane %v2685, 4
        %v2687 = vrot.slane %v2208, 5
        %v2688 = vsel %vm1772, %v2686, %v2687
        %v2689 = vrot.slane %v2623, 5
        %v2690 = vrot.slane %v2689, 4
        %v2691 = vrot.slane %v2210, 5
        %v2692 = vsel %vm1772, %v2690, %v2691
        %v2693 = vrot.slane %v2624, 5
        %v2694 = vrot.slane %v2693, 4
        %v2695 = vrot.slane %v2212, 5
        %v2696 = vsel %vm1772, %v2694, %v2695
        %v2697 = vrot.slane %v2625, 5
        %v2698 = vrot.slane %v2697, 4
        %v2699 = vrot.slane %v2214, 5
        %v2700 = vsel %vm1772, %v2698, %v2699
        %v2701 = vrot.slane %v2626, 5
        %v2702 = vrot.slane %v2701, 4
        %v2703 = vrot.slane %v2216, 5
        %v2704 = vsel %vm1772, %v2702, %v2703
        %v2705 = vrot.slane %v2627, 5
        %v2706 = vrot.slane %v2705, 4
        %v2707 = vrot.slane %v2218, 5
        %v2708 = vsel %vm1772, %v2706, %v2707
        %v2709 = vrot.slane %v2628, 5
        %v2710 = vrot.slane %v2709, 4
        %v2711 = vrot.slane %v2220, 5
        %v2712 = vsel %vm1772, %v2710, %v2711
        %v2713 = vrot.slane %v2629, 5
        %v2714 = vrot.slane %v2713, 4
        %v2715 = vrot.slane %v2222, 5
        %v2716 = vsel %vm1772, %v2714, %v2715
        %v2717 = vrot.slane %v2630, 5
        %v2718 = vrot.slane %v2717, 4
        %v2719 = vrot.slane %v2224, 5
        %v2720 = vsel %vm1772, %v2718, %v2719
        %v2721 = vrot.slane %v2631, 5
        %v2722 = vrot.slane %v2721, 4
        %v2723 = vrot.slane %v2226, 5
        %v2724 = vsel %vm1772, %v2722, %v2723
        %v2725 = vrot.slane %v2632, 5
        %v2726 = vrot.slane %v2725, 4
        %v2727 = vrot.slane %v2228, 5
        %v2728 = vsel %vm1772, %v2726, %v2727
        %v2729 = vunpack.c.l.b16 %v2668
        %v2730 = vunpack.c.l.b16 %v2672
        %v2731 = vunpack.c.l.b16 %v2676
        %v2732 = vunpack.c.l.b16 %v2680
        %v2733 = vunpack.c.l.b16 %v2684
        %v2734 = vunpack.c.l.b16 %v2688
        %v2735 = vunpack.c.l.b16 %v2692
        %v2736 = vunpack.c.l.b16 %v2696
        %v2737 = vunpack.c.l.b16 %v2700
        %v2738 = vunpack.c.l.b16 %v2704
        %v2739 = vunpack.c.l.b16 %v2708
        %v2740 = vunpack.c.l.b16 %v2712
        %v2741 = vunpack.c.l.b16 %v2716
        %v2742 = vunpack.c.l.b16 %v2720
        %v2743 = vunpack.c.l.b16 %v2724
        %v2744 = vunpack.c.l.b16 %v2728
        %v2745 = vpack.c.b16 %v2730, %v2729
        %v2746 = vpack.c.b16 %v2732, %v2731
        %v2747 = vpack.c.b16 %v2734, %v2733
        %v2748 = vpack.c.b16 %v2736, %v2735
        %v2749 = vpack.c.b16 %v2738, %v2737
        %v2750 = vpack.c.b16 %v2740, %v2739
        %v2751 = vpack.c.b16 %v2742, %v2741
        %v2752 = vpack.c.b16 %v2744, %v2743
        %v2754 = vsel %vm1432, %v2745, 0
        %v2757 = vsel %vm1432, %v2746, 0
        %v2760 = vsel %vm1432, %v2747, 0
        %v2763 = vsel %vm1432, %v2748, 0
        %v2766 = vsel %vm1432, %v2749, 0
        %v2769 = vsel %vm1432, %v2750, 0
        %v2772 = vsel %vm1432, %v2751, 0
        %v2775 = vsel %vm1432, %v2752, 0
        %v2778 = vsel %vm1457, %v1145, 0
        %2780 = vmatprep.subr.bf16.mxu0 0
        %2781 = vmatpush1.bf16.msra.mxu0 %v2778
        %2782 = vmatprep.subr.bf16.mxu0 0
        %2783 = vmatpush1.bf16.msra.mxu0 0
        %2784 = vmatprep.subr.bf16.mxu0 0
        %2785 = vmatpush1.bf16.msra.mxu0 0
        %2786 = vmatprep.subr.bf16.mxu0 0
        %2787 = vmatpush1.bf16.msra.mxu0 0
        %2788 = vmatprep.subr.bf16.mxu0 0
        %2789 = vmatpush1.bf16.msra.mxu0 0
        %2790 = vmatprep.subr.bf16.mxu0 0
        %2791 = vmatpush1.bf16.msra.mxu0 0
        %2792 = vmatprep.subr.bf16.mxu0 0
        %2793 = vmatpush1.bf16.msra.mxu0 0
        %2794 = vmatprep.subr.bf16.mxu0 0
        %2795 = vmatpush1.bf16.msra.mxu0 0
        %2796 = vmatprep.subr.bf16.mxu0 0
        %2797 = vmatpush1.bf16.msra.mxu0 0
        %2798 = vmatprep.subr.bf16.mxu0 0
        %2799 = vmatpush1.bf16.msra.mxu0 0
        %2800 = vmatprep.subr.bf16.mxu0 0
        %2801 = vmatpush1.bf16.msra.mxu0 0
        %2802 = vmatprep.subr.bf16.mxu0 0
        %2803 = vmatpush1.bf16.msra.mxu0 0
        %2804 = vmatprep.subr.bf16.mxu0 0
        %2805 = vmatpush1.bf16.msra.mxu0 0
        %2806 = vmatprep.subr.bf16.mxu0 0
        %2807 = vmatpush1.bf16.msra.mxu0 0
        %2808 = vmatprep.subr.bf16.mxu0 0
        %2809 = vmatpush1.bf16.msra.mxu0 0
        %2810 = vmatprep.subr.bf16.mxu0 0
        %2811 = vmatpush1.bf16.msra.mxu0 0
        %2812 = vmatprep.mubr.bf16.mxu0 0
        %2813 = vmatmul.mubr.bf16.gmra.mrb[0].mxu0 %v2754
        %v2814 = vpop.f32.mrb[0].mxu0
        %v2815 = vadd.f32 0.0, %v2814
        %v2816 = vpop.f32.mrb[0].mxu0
        %v2817 = vpop.f32.mrb[0].mxu0
        %v2818 = vadd.f32 0.0, %v2817
        %v2819 = vpop.f32.mrb[0].mxu0
        %2820 = vmatprep.mubr.bf16.mxu0 0
        %2821 = vmatmul.mubr.bf16.gmra.mrb[0].mxu0 %v2757
        %v2822 = vpop.f32.mrb[0].mxu0
        %v2823 = vadd.f32 0.0, %v2822
        %v2824 = vpop.f32.mrb[0].mxu0
        %v2825 = vpop.f32.mrb[0].mxu0
        %v2826 = vadd.f32 0.0, %v2825
        %v2827 = vpop.f32.mrb[0].mxu0
        %2828 = vmatprep.mubr.bf16.mxu0 0
        %2829 = vmatmul.mubr.bf16.gmra.mrb[0].mxu0 %v2760
        %v2830 = vpop.f32.mrb[0].mxu0
        %v2831 = vadd.f32 0.0, %v2830
        %v2832 = vpop.f32.mrb[0].mxu0
        %v2833 = vpop.f32.mrb[0].mxu0
        %v2834 = vadd.f32 0.0, %v2833
        %v2835 = vpop.f32.mrb[0].mxu0
        %2836 = vmatprep.mubr.bf16.mxu0 0
        %2837 = vmatmul.mubr.bf16.gmra.mrb[0].mxu0 %v2763
        %v2838 = vpop.f32.mrb[0].mxu0
        %v2839 = vadd.f32 0.0, %v2838
        %v2840 = vpop.f32.mrb[0].mxu0
        %v2841 = vpop.f32.mrb[0].mxu0
        %v2842 = vadd.f32 0.0, %v2841
        %v2843 = vpop.f32.mrb[0].mxu0
        %2844 = vmatprep.mubr.bf16.mxu0 0
        %2845 = vmatmul.mubr.bf16.gmra.mrb[0].mxu0 %v2766
        %v2846 = vpop.f32.mrb[0].mxu0
        %v2847 = vadd.f32 0.0, %v2846
        %v2848 = vpop.f32.mrb[0].mxu0
        %v2849 = vpop.f32.mrb[0].mxu0
        %v2850 = vadd.f32 0.0, %v2849
        %v2851 = vpop.f32.mrb[0].mxu0
        %2852 = vmatprep.mubr.bf16.mxu0 0
        %2853 = vmatmul.mubr.bf16.gmra.mrb[0].mxu0 %v2769
        %v2854 = vpop.f32.mrb[0].mxu0
        %v2855 = vadd.f32 0.0, %v2854
        %v2856 = vpop.f32.mrb[0].mxu0
        %v2857 = vpop.f32.mrb[0].mxu0
        %v2858 = vadd.f32 0.0, %v2857
        %v2859 = vpop.f32.mrb[0].mxu0
        %2860 = vmatprep.mubr.bf16.mxu0 0
        %2861 = vmatmul.mubr.bf16.gmra.mrb[0].mxu0 %v2772
        %v2862 = vpop.f32.mrb[0].mxu0
        %v2863 = vadd.f32 0.0, %v2862
        %v2864 = vpop.f32.mrb[0].mxu0
        %v2865 = vpop.f32.mrb[0].mxu0
        %v2866 = vadd.f32 0.0, %v2865
        %v2867 = vpop.f32.mrb[0].mxu0
        %2868 = vmatprep.mubr.bf16.mxu0 0
        %2869 = vmatmul.mubr.bf16.gmra.mrb[0].mxu0 %v2775
        %v2870 = vpop.f32.mrb[0].mxu0
        %v2871 = vadd.f32 0.0, %v2870
        %v2872 = vpop.f32.mrb[0].mxu0
        %v2873 = vpop.f32.mrb[0].mxu0
        %v2874 = vadd.f32 0.0, %v2873
        %v2875 = vpop.f32.mrb[0].mxu0
        %2876 = vdwg.mxu0
        %v2877 = vadd.f32 %v2601, %v2815
        %v2878 = vadd.f32 %v2602, %v2818
        %v2879 = vadd.f32 %v2603, %v2823
        %v2880 = vadd.f32 %v2604, %v2826
        %v2881 = vadd.f32 %v2605, %v2831
        %v2882 = vadd.f32 %v2606, %v2834
        %v2883 = vadd.f32 %v2607, %v2839
        %v2884 = vadd.f32 %v2608, %v2842
        %v2885 = vadd.f32 %v2609, %v2847
        %v2886 = vadd.f32 %v2610, %v2850
        %v2887 = vadd.f32 %v2611, %v2855
        %v2888 = vadd.f32 %v2612, %v2858
        %v2889 = vadd.f32 %v2613, %v2863
        %v2890 = vadd.f32 %v2614, %v2866
        %v2891 = vadd.f32 %v2615, %v2871
        %v2892 = vadd.f32 %v2616, %v2874
        %s2893 = scalar_lea.vmem [#allocation2], 16
        %v2894 = vld [vmem:[%s2893] sm:$0xf]
        %v2895 = vld [vmem:[%s2893 + $0x8] sm:$0xf]
        %v2896 = vld [vmem:[%s2893 + $0x10] sm:$0xf]
        %v2897 = vld [vmem:[%s2893 + $0x18] sm:$0xf]
        %v2898 = vld [vmem:[%s2893 + $0x20] sm:$0xf]
        %v2899 = vld [vmem:[%s2893 + $0x28] sm:$0xf]
        %v2900 = vld [vmem:[%s2893 + $0x30] sm:$0xf]
        %v2901 = vld [vmem:[%s2893 + $0x38] sm:$0xf]
        %v2902 = vld [vmem:[%s2893 + $0x50] sm:$0xf]
        %v2903 = vld [vmem:[%s2893 + $0x58] sm:$0xf]
        %v2904 = vld [vmem:[%s2893 + $0x60] sm:$0xf]
        %v2905 = vld [vmem:[%s2893 + $0x68] sm:$0xf]
        %v2906 = vld [vmem:[%s2893 + $0x70] sm:$0xf]
        %v2907 = vld [vmem:[%s2893 + $0x78] sm:$0xf]
        %v2908 = vld [vmem:[%s2893 + $0x80] sm:$0xf]
        %v2909 = vld [vmem:[%s2893 + $0x88] sm:$0xf]
        %v2926 = vunpack.c.l.b16 %v2894
        %v2927 = vunpack.c.l.b16 %v2895
        %v2928 = vunpack.c.l.b16 %v2896
        %v2929 = vunpack.c.l.b16 %v2897
        %v2930 = vunpack.c.l.b16 %v2898
        %v2931 = vunpack.c.l.b16 %v2899
        %v2932 = vunpack.c.l.b16 %v2900
        %v2933 = vunpack.c.l.b16 %v2901
        %v2934 = vunpack.c.l.b16 %v2902
        %v2935 = vunpack.c.l.b16 %v2903
        %v2936 = vunpack.c.l.b16 %v2904
        %v2937 = vunpack.c.l.b16 %v2905
        %v2938 = vunpack.c.l.b16 %v2906
        %v2939 = vunpack.c.l.b16 %v2907
        %v2940 = vunpack.c.l.b16 %v2908
        %v2941 = vunpack.c.l.b16 %v2909
        %v2942 = vpack.c.b16 %v2927, %v2926
        %v2943 = vpack.c.b16 %v2929, %v2928
        %v2944 = vpack.c.b16 %v2931, %v2930
        %v2945 = vpack.c.b16 %v2933, %v2932
        %v2946 = vpack.c.b16 %v2935, %v2934
        %v2947 = vpack.c.b16 %v2937, %v2936
        %v2948 = vpack.c.b16 %v2939, %v2938
        %v2949 = vpack.c.b16 %v2941, %v2940
        %v2951 = vsel %vm1432, %v2942, 0
        %v2954 = vsel %vm1432, %v2943, 0
        %v2957 = vsel %vm1432, %v2944, 0
        %v2960 = vsel %vm1432, %v2945, 0
        %v2963 = vsel %vm1432, %v2946, 0
        %v2966 = vsel %vm1432, %v2947, 0
        %v2969 = vsel %vm1432, %v2948, 0
        %v2972 = vsel %vm1432, %v2949, 0
        %v2975 = vsel %vm1457, %v1146, 0
        %2977 = vmatprep.subr.bf16.mxu0 0
        %2978 = vmatpush1.bf16.msra.mxu0 %v2975
        %2979 = vmatprep.subr.bf16.mxu0 0
        %2980 = vmatpush1.bf16.msra.mxu0 0
        %2981 = vmatprep.subr.bf16.mxu0 0
        %2982 = vmatpush1.bf16.msra.mxu0 0
        %2983 = vmatprep.subr.bf16.mxu0 0
        %2984 = vmatpush1.bf16.msra.mxu0 0
        %2985 = vmatprep.subr.bf16.mxu0 0
        %2986 = vmatpush1.bf16.msra.mxu0 0
        %2987 = vmatprep.subr.bf16.mxu0 0
        %2988 = vmatpush1.bf16.msra.mxu0 0
        %2989 = vmatprep.subr.bf16.mxu0 0
        %2990 = vmatpush1.bf16.msra.mxu0 0
        %2991 = vmatprep.subr.bf16.mxu0 0
        %2992 = vmatpush1.bf16.msra.mxu0 0
        %2993 = vmatprep.subr.bf16.mxu0 0
        %2994 = vmatpush1.bf16.msra.mxu0 0
        %2995 = vmatprep.subr.bf16.mxu0 0
        %2996 = vmatpush1.bf16.msra.mxu0 0
        %2997 = vmatprep.subr.bf16.mxu0 0
        %2998 = vmatpush1.bf16.msra.mxu0 0
        %2999 = vmatprep.subr.bf16.mxu0 0
        %3000 = vmatpush1.bf16.msra.mxu0 0
        %3001 = vmatprep.subr.bf16.mxu0 0
        %3002 = vmatpush1.bf16.msra.mxu0 0
        %3003 = vmatprep.subr.bf16.mxu0 0
        %3004 = vmatpush1.bf16.msra.mxu0 0
        %3005 = vmatprep.subr.bf16.mxu0 0
        %3006 = vmatpush1.bf16.msra.mxu0 0
        %3007 = vmatprep.subr.bf16.mxu0 0
        %3008 = vmatpush1.bf16.msra.mxu0 0
        %3009 = vmatprep.mubr.bf16.mxu0 0
        %3010 = vmatmul.mubr.bf16.gmra.mrb[0].mxu0 %v2951
        %v3011 = vpop.f32.mrb[0].mxu0
        %v3012 = vadd.f32 0.0, %v3011
        %v3013 = vpop.f32.mrb[0].mxu0
        %v3014 = vpop.f32.mrb[0].mxu0
        %v3015 = vadd.f32 0.0, %v3014
        %v3016 = vpop.f32.mrb[0].mxu0
        %3017 = vmatprep.mubr.bf16.mxu0 0
        %3018 = vmatmul.mubr.bf16.gmra.mrb[0].mxu0 %v2954
        %v3019 = vpop.f32.mrb[0].mxu0
        %v3020 = vadd.f32 0.0, %v3019
        %v3021 = vpop.f32.mrb[0].mxu0
        %v3022 = vpop.f32.mrb[0].mxu0
        %v3023 = vadd.f32 0.0, %v3022
        %v3024 = vpop.f32.mrb[0].mxu0
        %3025 = vmatprep.mubr.bf16.mxu0 0
        %3026 = vmatmul.mubr.bf16.gmra.mrb[0].mxu0 %v2957
        %v3027 = vpop.f32.mrb[0].mxu0
        %v3028 = vadd.f32 0.0, %v3027
        %v3029 = vpop.f32.mrb[0].mxu0
        %v3030 = vpop.f32.mrb[0].mxu0
        %v3031 = vadd.f32 0.0, %v3030
        %v3032 = vpop.f32.mrb[0].mxu0
        %3033 = vmatprep.mubr.bf16.mxu0 0
        %3034 = vmatmul.mubr.bf16.gmra.mrb[0].mxu0 %v2960
        %v3035 = vpop.f32.mrb[0].mxu0
        %v3036 = vadd.f32 0.0, %v3035
        %v3037 = vpop.f32.mrb[0].mxu0
        %v3038 = vpop.f32.mrb[0].mxu0
        %v3039 = vadd.f32 0.0, %v3038
        %v3040 = vpop.f32.mrb[0].mxu0
        %3041 = vmatprep.mubr.bf16.mxu0 0
        %3042 = vmatmul.mubr.bf16.gmra.mrb[0].mxu0 %v2963
        %v3043 = vpop.f32.mrb[0].mxu0
        %v3044 = vadd.f32 0.0, %v3043
        %v3045 = vpop.f32.mrb[0].mxu0
        %v3046 = vpop.f32.mrb[0].mxu0
        %v3047 = vadd.f32 0.0, %v3046
        %v3048 = vpop.f32.mrb[0].mxu0
        %3049 = vmatprep.mubr.bf16.mxu0 0
        %3050 = vmatmul.mubr.bf16.gmra.mrb[0].mxu0 %v2966
        %v3051 = vpop.f32.mrb[0].mxu0
        %v3052 = vadd.f32 0.0, %v3051
        %v3053 = vpop.f32.mrb[0].mxu0
        %v3054 = vpop.f32.mrb[0].mxu0
        %v3055 = vadd.f32 0.0, %v3054
        %v3056 = vpop.f32.mrb[0].mxu0
        %3057 = vmatprep.mubr.bf16.mxu0 0
        %3058 = vmatmul.mubr.bf16.gmra.mrb[0].mxu0 %v2969
        %v3059 = vpop.f32.mrb[0].mxu0
        %v3060 = vadd.f32 0.0, %v3059
        %v3061 = vpop.f32.mrb[0].mxu0
        %v3062 = vpop.f32.mrb[0].mxu0
        %v3063 = vadd.f32 0.0, %v3062
        %v3064 = vpop.f32.mrb[0].mxu0
        %3065 = vmatprep.mubr.bf16.mxu0 0
        %3066 = vmatmul.mubr.bf16.gmra.mrb[0].mxu0 %v2972
        %v3067 = vpop.f32.mrb[0].mxu0
        %v3068 = vadd.f32 0.0, %v3067
        %v3069 = vpop.f32.mrb[0].mxu0
        %v3070 = vpop.f32.mrb[0].mxu0
        %v3071 = vadd.f32 0.0, %v3070
        %v3072 = vpop.f32.mrb[0].mxu0
        %3073 = vdwg.mxu0
        %v3074 = vadd.f32 %v2877, %v3012
        %v3075 = vadd.f32 %v2878, %v3015
        %v3076 = vadd.f32 %v2879, %v3020
        %v3077 = vadd.f32 %v2880, %v3023
        %v3078 = vadd.f32 %v2881, %v3028
        %v3079 = vadd.f32 %v2882, %v3031
        %v3080 = vadd.f32 %v2883, %v3036
        %v3081 = vadd.f32 %v2884, %v3039
        %v3082 = vadd.f32 %v2885, %v3044
        %v3083 = vadd.f32 %v2886, %v3047
        %v3084 = vadd.f32 %v2887, %v3052
        %v3085 = vadd.f32 %v2888, %v3055
        %v3086 = vadd.f32 %v2889, %v3060
        %v3087 = vadd.f32 %v2890, %v3063
        %v3088 = vadd.f32 %v2891, %v3068
        %v3089 = vadd.f32 %v2892, %v3071
        %v3090 = vld [vmem:[%s2893] sm:$0xf]
        %v3091 = vld [vmem:[%s2893 + $0x4] sm:$0x1]
        %v3092 = vld [vmem:[%s2893 + $0x8] sm:$0xf]
        %v3093 = vld [vmem:[%s2893 + $0xc] sm:$0x1]
        %v3094 = vld [vmem:[%s2893 + $0x10] sm:$0xf]
        %v3095 = vld [vmem:[%s2893 + $0x14] sm:$0x1]
        %v3096 = vld [vmem:[%s2893 + $0x18] sm:$0xf]
        %v3097 = vld [vmem:[%s2893 + $0x1c] sm:$0x1]
        %v3098 = vld [vmem:[%s2893 + $0x20] sm:$0xf]
        %v3099 = vld [vmem:[%s2893 + $0x24] sm:$0x1]
        %v3100 = vld [vmem:[%s2893 + $0x28] sm:$0xf]
        %v3101 = vld [vmem:[%s2893 + $0x2c] sm:$0x1]
        %v3102 = vld [vmem:[%s2893 + $0x30] sm:$0xf]
        %v3103 = vld [vmem:[%s2893 + $0x34] sm:$0x1]
        %v3104 = vld [vmem:[%s2893 + $0x38] sm:$0xf]
        %v3105 = vld [vmem:[%s2893 + $0x3c] sm:$0x1]
        %v3106 = vld [vmem:[%s2893 + $0x50] sm:$0xf]
        %v3107 = vld [vmem:[%s2893 + $0x54] sm:$0x1]
        %v3108 = vld [vmem:[%s2893 + $0x58] sm:$0xf]
        %v3109 = vld [vmem:[%s2893 + $0x5c] sm:$0x1]
        %v3110 = vld [vmem:[%s2893 + $0x60] sm:$0xf]
        %v3111 = vld [vmem:[%s2893 + $0x64] sm:$0x1]
        %v3112 = vld [vmem:[%s2893 + $0x68] sm:$0xf]
        %v3113 = vld [vmem:[%s2893 + $0x6c] sm:$0x1]
        %v3114 = vld [vmem:[%s2893 + $0x70] sm:$0xf]
        %v3115 = vld [vmem:[%s2893 + $0x74] sm:$0x1]
        %v3116 = vld [vmem:[%s2893 + $0x78] sm:$0xf]
        %v3117 = vld [vmem:[%s2893 + $0x7c] sm:$0x1]
        %v3118 = vld [vmem:[%s2893 + $0x80] sm:$0xf]
        %v3119 = vld [vmem:[%s2893 + $0x84] sm:$0x1]
        %v3120 = vld [vmem:[%s2893 + $0x88] sm:$0xf]
        %v3121 = vld [vmem:[%s2893 + $0x8c] sm:$0x1]
        %v3123 = vshrl.u32 %v3090, 16
        %v3125 = vrot.slane %v3123, 4
        %v3126 = vshll.u32 %v3090, 16
        %v3128 = vrot.slane %v3126, 5
        %v3129 = vor.u32 %v3125, %v3128
        %v3130 = vrot.slane %v3129, 4
        %v3132 = vshll.u32 %v3091, 16
        %v3134 = vrot.slane %v3132, 5
        %v3135 = vsel %vm1183, %v3130, %v3134
        %v3137 = vshrl.u32 %v3092, 16
        %v3139 = vrot.slane %v3137, 4
        %v3140 = vshll.u32 %v3092, 16
        %v3142 = vrot.slane %v3140, 5
        %v3143 = vor.u32 %v3139, %v3142
        %v3144 = vrot.slane %v3143, 4
        %v3146 = vshll.u32 %v3093, 16
        %v3148 = vrot.slane %v3146, 5
        %v3149 = vsel %vm1183, %v3144, %v3148
        %v3151 = vshrl.u32 %v3094, 16
        %v3153 = vrot.slane %v3151, 4
        %v3154 = vshll.u32 %v3094, 16
        %v3156 = vrot.slane %v3154, 5
        %v3157 = vor.u32 %v3153, %v3156
        %v3158 = vrot.slane %v3157, 4
        %v3160 = vshll.u32 %v3095, 16
        %v3162 = vrot.slane %v3160, 5
        %v3163 = vsel %vm1183, %v3158, %v3162
        %v3165 = vshrl.u32 %v3096, 16
        %v3167 = vrot.slane %v3165, 4
        %v3168 = vshll.u32 %v3096, 16
        %v3170 = vrot.slane %v3168, 5
        %v3171 = vor.u32 %v3167, %v3170
        %v3172 = vrot.slane %v3171, 4
        %v3174 = vshll.u32 %v3097, 16
        %v3176 = vrot.slane %v3174, 5
        %v3177 = vsel %vm1183, %v3172, %v3176
        %v3179 = vshrl.u32 %v3098, 16
        %v3181 = vrot.slane %v3179, 4
        %v3182 = vshll.u32 %v3098, 16
        %v3184 = vrot.slane %v3182, 5
        %v3185 = vor.u32 %v3181, %v3184
        %v3186 = vrot.slane %v3185, 4
        %v3188 = vshll.u32 %v3099, 16
        %v3190 = vrot.slane %v3188, 5
        %v3191 = vsel %vm1183, %v3186, %v3190
        %v3193 = vshrl.u32 %v3100, 16
        %v3195 = vrot.slane %v3193, 4
        %v3196 = vshll.u32 %v3100, 16
        %v3198 = vrot.slane %v3196, 5
        %v3199 = vor.u32 %v3195, %v3198
        %v3200 = vrot.slane %v3199, 4
        %v3202 = vshll.u32 %v3101, 16
        %v3204 = vrot.slane %v3202, 5
        %v3205 = vsel %vm1183, %v3200, %v3204
        %v3207 = vshrl.u32 %v3102, 16
        %v3209 = vrot.slane %v3207, 4
        %v3210 = vshll.u32 %v3102, 16
        %v3212 = vrot.slane %v3210, 5
        %v3213 = vor.u32 %v3209, %v3212
        %v3214 = vrot.slane %v3213, 4
        %v3216 = vshll.u32 %v3103, 16
        %v3218 = vrot.slane %v3216, 5
        %v3219 = vsel %vm1183, %v3214, %v3218
        %v3221 = vshrl.u32 %v3104, 16
        %v3223 = vrot.slane %v3221, 4
        %v3224 = vshll.u32 %v3104, 16
        %v3226 = vrot.slane %v3224, 5
        %v3227 = vor.u32 %v3223, %v3226
        %v3228 = vrot.slane %v3227, 4
        %v3230 = vshll.u32 %v3105, 16
        %v3232 = vrot.slane %v3230, 5
        %v3233 = vsel %vm1183, %v3228, %v3232
        %v3235 = vshrl.u32 %v3106, 16
        %v3237 = vrot.slane %v3235, 4
        %v3238 = vshll.u32 %v3106, 16
        %v3240 = vrot.slane %v3238, 5
        %v3241 = vor.u32 %v3237, %v3240
        %v3242 = vrot.slane %v3241, 4
        %v3244 = vshll.u32 %v3107, 16
        %v3246 = vrot.slane %v3244, 5
        %v3247 = vsel %vm1183, %v3242, %v3246
        %v3249 = vshrl.u32 %v3108, 16
        %v3251 = vrot.slane %v3249, 4
        %v3252 = vshll.u32 %v3108, 16
        %v3254 = vrot.slane %v3252, 5
        %v3255 = vor.u32 %v3251, %v3254
        %v3256 = vrot.slane %v3255, 4
        %v3258 = vshll.u32 %v3109, 16
        %v3260 = vrot.slane %v3258, 5
        %v3261 = vsel %vm1183, %v3256, %v3260
        %v3263 = vshrl.u32 %v3110, 16
        %v3265 = vrot.slane %v3263, 4
        %v3266 = vshll.u32 %v3110, 16
        %v3268 = vrot.slane %v3266, 5
        %v3269 = vor.u32 %v3265, %v3268
        %v3270 = vrot.slane %v3269, 4
        %v3272 = vshll.u32 %v3111, 16
        %v3274 = vrot.slane %v3272, 5
        %v3275 = vsel %vm1183, %v3270, %v3274
        %v3277 = vshrl.u32 %v3112, 16
        %v3279 = vrot.slane %v3277, 4
        %v3280 = vshll.u32 %v3112, 16
        %v3282 = vrot.slane %v3280, 5
        %v3283 = vor.u32 %v3279, %v3282
        %v3284 = vrot.slane %v3283, 4
        %v3286 = vshll.u32 %v3113, 16
        %v3288 = vrot.slane %v3286, 5
        %v3289 = vsel %vm1183, %v3284, %v3288
        %v3291 = vshrl.u32 %v3114, 16
        %v3293 = vrot.slane %v3291, 4
        %v3294 = vshll.u32 %v3114, 16
        %v3296 = vrot.slane %v3294, 5
        %v3297 = vor.u32 %v3293, %v3296
        %v3298 = vrot.slane %v3297, 4
        %v3300 = vshll.u32 %v3115, 16
        %v3302 = vrot.slane %v3300, 5
        %v3303 = vsel %vm1183, %v3298, %v3302
        %v3305 = vshrl.u32 %v3116, 16
        %v3307 = vrot.slane %v3305, 4
        %v3308 = vshll.u32 %v3116, 16
        %v3310 = vrot.slane %v3308, 5
        %v3311 = vor.u32 %v3307, %v3310
        %v3312 = vrot.slane %v3311, 4
        %v3314 = vshll.u32 %v3117, 16
        %v3316 = vrot.slane %v3314, 5
        %v3317 = vsel %vm1183, %v3312, %v3316
        %v3319 = vshrl.u32 %v3118, 16
        %v3321 = vrot.slane %v3319, 4
        %v3322 = vshll.u32 %v3118, 16
        %v3324 = vrot.slane %v3322, 5
        %v3325 = vor.u32 %v3321, %v3324
        %v3326 = vrot.slane %v3325, 4
        %v3328 = vshll.u32 %v3119, 16
        %v3330 = vrot.slane %v3328, 5
        %v3331 = vsel %vm1183, %v3326, %v3330
        %v3333 = vshrl.u32 %v3120, 16
        %v3335 = vrot.slane %v3333, 4
        %v3336 = vshll.u32 %v3120, 16
        %v3338 = vrot.slane %v3336, 5
        %v3339 = vor.u32 %v3335, %v3338
        %v3340 = vrot.slane %v3339, 4
        %v3342 = vshll.u32 %v3121, 16
        %v3344 = vrot.slane %v3342, 5
        %v3345 = vsel %vm1183, %v3340, %v3344
        %v3346 = vunpack.c.l.b16 %v3135
        %v3347 = vunpack.c.l.b16 %v3149
        %v3348 = vunpack.c.l.b16 %v3163
        %v3349 = vunpack.c.l.b16 %v3177
        %v3350 = vunpack.c.l.b16 %v3191
        %v3351 = vunpack.c.l.b16 %v3205
        %v3352 = vunpack.c.l.b16 %v3219
        %v3353 = vunpack.c.l.b16 %v3233
        %v3354 = vunpack.c.l.b16 %v3247
        %v3355 = vunpack.c.l.b16 %v3261
        %v3356 = vunpack.c.l.b16 %v3275
        %v3357 = vunpack.c.l.b16 %v3289
        %v3358 = vunpack.c.l.b16 %v3303
        %v3359 = vunpack.c.l.b16 %v3317
        %v3360 = vunpack.c.l.b16 %v3331
        %v3361 = vunpack.c.l.b16 %v3345
        %v3362 = vpack.c.b16 %v3347, %v3346
        %v3363 = vpack.c.b16 %v3349, %v3348
        %v3364 = vpack.c.b16 %v3351, %v3350
        %v3365 = vpack.c.b16 %v3353, %v3352
        %v3366 = vpack.c.b16 %v3355, %v3354
        %v3367 = vpack.c.b16 %v3357, %v3356
        %v3368 = vpack.c.b16 %v3359, %v3358
        %v3369 = vpack.c.b16 %v3361, %v3360
        %v3371 = vsel %vm1432, %v3362, 0
        %v3374 = vsel %vm1432, %v3363, 0
        %v3377 = vsel %vm1432, %v3364, 0
        %v3380 = vsel %vm1432, %v3365, 0
        %v3383 = vsel %vm1432, %v3366, 0
        %v3386 = vsel %vm1432, %v3367, 0
        %v3389 = vsel %vm1432, %v3368, 0
        %v3392 = vsel %vm1432, %v3369, 0
        %v3395 = vsel %vm1457, %v1147, 0
        %3397 = vmatprep.subr.bf16.mxu0 0
        %3398 = vmatpush1.bf16.msra.mxu0 %v3395
        %3399 = vmatprep.subr.bf16.mxu0 0
        %3400 = vmatpush1.bf16.msra.mxu0 0
        %3401 = vmatprep.subr.bf16.mxu0 0
        %3402 = vmatpush1.bf16.msra.mxu0 0
        %3403 = vmatprep.subr.bf16.mxu0 0
        %3404 = vmatpush1.bf16.msra.mxu0 0
        %3405 = vmatprep.subr.bf16.mxu0 0
        %3406 = vmatpush1.bf16.msra.mxu0 0
        %3407 = vmatprep.subr.bf16.mxu0 0
        %3408 = vmatpush1.bf16.msra.mxu0 0
        %3409 = vmatprep.subr.bf16.mxu0 0
        %3410 = vmatpush1.bf16.msra.mxu0 0
        %3411 = vmatprep.subr.bf16.mxu0 0
        %3412 = vmatpush1.bf16.msra.mxu0 0
        %3413 = vmatprep.subr.bf16.mxu0 0
        %3414 = vmatpush1.bf16.msra.mxu0 0
        %3415 = vmatprep.subr.bf16.mxu0 0
        %3416 = vmatpush1.bf16.msra.mxu0 0
        %3417 = vmatprep.subr.bf16.mxu0 0
        %3418 = vmatpush1.bf16.msra.mxu0 0
        %3419 = vmatprep.subr.bf16.mxu0 0
        %3420 = vmatpush1.bf16.msra.mxu0 0
        %3421 = vmatprep.subr.bf16.mxu0 0
        %3422 = vmatpush1.bf16.msra.mxu0 0
        %3423 = vmatprep.subr.bf16.mxu0 0
        %3424 = vmatpush1.bf16.msra.mxu0 0
        %3425 = vmatprep.subr.bf16.mxu0 0
        %3426 = vmatpush1.bf16.msra.mxu0 0
        %3427 = vmatprep.subr.bf16.mxu0 0
        %3428 = vmatpush1.bf16.msra.mxu0 0
        %3429 = vmatprep.mubr.bf16.mxu0 0
        %3430 = vmatmul.mubr.bf16.gmra.mrb[0].mxu0 %v3371
        %v3431 = vpop.f32.mrb[0].mxu0
        %v3432 = vadd.f32 0.0, %v3431
        %v3433 = vpop.f32.mrb[0].mxu0
        %v3434 = vpop.f32.mrb[0].mxu0
        %v3435 = vadd.f32 0.0, %v3434
        %v3436 = vpop.f32.mrb[0].mxu0
        %3437 = vmatprep.mubr.bf16.mxu0 0
        %3438 = vmatmul.mubr.bf16.gmra.mrb[0].mxu0 %v3374
        %v3439 = vpop.f32.mrb[0].mxu0
        %v3440 = vadd.f32 0.0, %v3439
        %v3441 = vpop.f32.mrb[0].mxu0
        %v3442 = vpop.f32.mrb[0].mxu0
        %v3443 = vadd.f32 0.0, %v3442
        %v3444 = vpop.f32.mrb[0].mxu0
        %3445 = vmatprep.mubr.bf16.mxu0 0
        %3446 = vmatmul.mubr.bf16.gmra.mrb[0].mxu0 %v3377
        %v3447 = vpop.f32.mrb[0].mxu0
        %v3448 = vadd.f32 0.0, %v3447
        %v3449 = vpop.f32.mrb[0].mxu0
        %v3450 = vpop.f32.mrb[0].mxu0
        %v3451 = vadd.f32 0.0, %v3450
        %v3452 = vpop.f32.mrb[0].mxu0
        %3453 = vmatprep.mubr.bf16.mxu0 0
        %3454 = vmatmul.mubr.bf16.gmra.mrb[0].mxu0 %v3380
        %v3455 = vpop.f32.mrb[0].mxu0
        %v3456 = vadd.f32 0.0, %v3455
        %v3457 = vpop.f32.mrb[0].mxu0
        %v3458 = vpop.f32.mrb[0].mxu0
        %v3459 = vadd.f32 0.0, %v3458
        %v3460 = vpop.f32.mrb[0].mxu0
        %3461 = vmatprep.mubr.bf16.mxu0 0
        %3462 = vmatmul.mubr.bf16.gmra.mrb[0].mxu0 %v3383
        %v3463 = vpop.f32.mrb[0].mxu0
        %v3464 = vadd.f32 0.0, %v3463
        %v3465 = vpop.f32.mrb[0].mxu0
        %v3466 = vpop.f32.mrb[0].mxu0
        %v3467 = vadd.f32 0.0, %v3466
        %v3468 = vpop.f32.mrb[0].mxu0
        %3469 = vmatprep.mubr.bf16.mxu0 0
        %3470 = vmatmul.mubr.bf16.gmra.mrb[0].mxu0 %v3386
        %v3471 = vpop.f32.mrb[0].mxu0
        %v3472 = vadd.f32 0.0, %v3471
        %v3473 = vpop.f32.mrb[0].mxu0
        %v3474 = vpop.f32.mrb[0].mxu0
        %v3475 = vadd.f32 0.0, %v3474
        %v3476 = vpop.f32.mrb[0].mxu0
        %3477 = vmatprep.mubr.bf16.mxu0 0
        %3478 = vmatmul.mubr.bf16.gmra.mrb[0].mxu0 %v3389
        %v3479 = vpop.f32.mrb[0].mxu0
        %v3480 = vadd.f32 0.0, %v3479
        %v3481 = vpop.f32.mrb[0].mxu0
        %v3482 = vpop.f32.mrb[0].mxu0
        %v3483 = vadd.f32 0.0, %v3482
        %v3484 = vpop.f32.mrb[0].mxu0
        %3485 = vmatprep.mubr.bf16.mxu0 0
        %3486 = vmatmul.mubr.bf16.gmra.mrb[0].mxu0 %v3392
        %v3487 = vpop.f32.mrb[0].mxu0
        %v3488 = vadd.f32 0.0, %v3487
        %v3489 = vpop.f32.mrb[0].mxu0
        %v3490 = vpop.f32.mrb[0].mxu0
        %v3491 = vadd.f32 0.0, %v3490
        %v3492 = vpop.f32.mrb[0].mxu0
        %3493 = vdwg.mxu0
        %v3494 = vadd.f32 %v3074, %v3432
        %v3495 = vadd.f32 %v3075, %v3435
        %v3496 = vadd.f32 %v3076, %v3440
        %v3497 = vadd.f32 %v3077, %v3443
        %v3498 = vadd.f32 %v3078, %v3448
        %v3499 = vadd.f32 %v3079, %v3451
        %v3500 = vadd.f32 %v3080, %v3456
        %v3501 = vadd.f32 %v3081, %v3459
        %v3502 = vadd.f32 %v3082, %v3464
        %v3503 = vadd.f32 %v3083, %v3467
        %v3504 = vadd.f32 %v3084, %v3472
        %v3505 = vadd.f32 %v3085, %v3475
        %v3506 = vadd.f32 %v3086, %v3480
        %v3507 = vadd.f32 %v3087, %v3483
        %v3508 = vadd.f32 %v3088, %v3488
        %v3509 = vadd.f32 %v3089, %v3491
        %v3510 = vld [vmem:[%s2893] sm:$0xe]
        %v3511 = vld [vmem:[%s2893 + $0x8] sm:$0xe]
        %v3512 = vld [vmem:[%s2893 + $0x10] sm:$0xe]
        %v3513 = vld [vmem:[%s2893 + $0x18] sm:$0xe]
        %v3514 = vld [vmem:[%s2893 + $0x20] sm:$0xe]
        %v3515 = vld [vmem:[%s2893 + $0x28] sm:$0xe]
        %v3516 = vld [vmem:[%s2893 + $0x30] sm:$0xe]
        %v3517 = vld [vmem:[%s2893 + $0x38] sm:$0xe]
        %v3518 = vld [vmem:[%s2893 + $0x50] sm:$0xe]
        %v3519 = vld [vmem:[%s2893 + $0x58] sm:$0xe]
        %v3520 = vld [vmem:[%s2893 + $0x60] sm:$0xe]
        %v3521 = vld [vmem:[%s2893 + $0x68] sm:$0xe]
        %v3522 = vld [vmem:[%s2893 + $0x70] sm:$0xe]
        %v3523 = vld [vmem:[%s2893 + $0x78] sm:$0xe]
        %v3524 = vld [vmem:[%s2893 + $0x80] sm:$0xe]
        %v3525 = vld [vmem:[%s2893 + $0x88] sm:$0xe]
        %v3558 = vrot.slane %v3510, 5
        %v3559 = vrot.slane %v3558, 4
        %v3560 = vrot.slane %v3091, 5
        %v3561 = vsel %vm1772, %v3559, %v3560
        %v3562 = vrot.slane %v3511, 5
        %v3563 = vrot.slane %v3562, 4
        %v3564 = vrot.slane %v3093, 5
        %v3565 = vsel %vm1772, %v3563, %v3564
        %v3566 = vrot.slane %v3512, 5
        %v3567 = vrot.slane %v3566, 4
        %v3568 = vrot.slane %v3095, 5
        %v3569 = vsel %vm1772, %v3567, %v3568
        %v3570 = vrot.slane %v3513, 5
        %v3571 = vrot.slane %v3570, 4
        %v3572 = vrot.slane %v3097, 5
        %v3573 = vsel %vm1772, %v3571, %v3572
        %v3574 = vrot.slane %v3514, 5
        %v3575 = vrot.slane %v3574, 4
        %v3576 = vrot.slane %v3099, 5
        %v3577 = vsel %vm1772, %v3575, %v3576
        %v3578 = vrot.slane %v3515, 5
        %v3579 = vrot.slane %v3578, 4
        %v3580 = vrot.slane %v3101, 5
        %v3581 = vsel %vm1772, %v3579, %v3580
        %v3582 = vrot.slane %v3516, 5
        %v3583 = vrot.slane %v3582, 4
        %v3584 = vrot.slane %v3103, 5
        %v3585 = vsel %vm1772, %v3583, %v3584
        %v3586 = vrot.slane %v3517, 5
        %v3587 = vrot.slane %v3586, 4
        %v3588 = vrot.slane %v3105, 5
        %v3589 = vsel %vm1772, %v3587, %v3588
        %v3590 = vrot.slane %v3518, 5
        %v3591 = vrot.slane %v3590, 4
        %v3592 = vrot.slane %v3107, 5
        %v3593 = vsel %vm1772, %v3591, %v3592
        %v3594 = vrot.slane %v3519, 5
        %v3595 = vrot.slane %v3594, 4
        %v3596 = vrot.slane %v3109, 5
        %v3597 = vsel %vm1772, %v3595, %v3596
        %v3598 = vrot.slane %v3520, 5
        %v3599 = vrot.slane %v3598, 4
        %v3600 = vrot.slane %v3111, 5
        %v3601 = vsel %vm1772, %v3599, %v3600
        %v3602 = vrot.slane %v3521, 5
        %v3603 = vrot.slane %v3602, 4
        %v3604 = vrot.slane %v3113, 5
        %v3605 = vsel %vm1772, %v3603, %v3604
        %v3606 = vrot.slane %v3522, 5
        %v3607 = vrot.slane %v3606, 4
        %v3608 = vrot.slane %v3115, 5
        %v3609 = vsel %vm1772, %v3607, %v3608
        %v3610 = vrot.slane %v3523, 5
        %v3611 = vrot.slane %v3610, 4
        %v3612 = vrot.slane %v3117, 5
        %v3613 = vsel %vm1772, %v3611, %v3612
        %v3614 = vrot.slane %v3524, 5
        %v3615 = vrot.slane %v3614, 4
        %v3616 = vrot.slane %v3119, 5
        %v3617 = vsel %vm1772, %v3615, %v3616
        %v3618 = vrot.slane %v3525, 5
        %v3619 = vrot.slane %v3618, 4
        %v3620 = vrot.slane %v3121, 5
        %v3621 = vsel %vm1772, %v3619, %v3620
        %v3622 = vunpack.c.l.b16 %v3561
        %v3623 = vunpack.c.l.b16 %v3565
        %v3624 = vunpack.c.l.b16 %v3569
        %v3625 = vunpack.c.l.b16 %v3573
        %v3626 = vunpack.c.l.b16 %v3577
        %v3627 = vunpack.c.l.b16 %v3581
        %v3628 = vunpack.c.l.b16 %v3585
        %v3629 = vunpack.c.l.b16 %v3589
        %v3630 = vunpack.c.l.b16 %v3593
        %v3631 = vunpack.c.l.b16 %v3597
        %v3632 = vunpack.c.l.b16 %v3601
        %v3633 = vunpack.c.l.b16 %v3605
        %v3634 = vunpack.c.l.b16 %v3609
        %v3635 = vunpack.c.l.b16 %v3613
        %v3636 = vunpack.c.l.b16 %v3617
        %v3637 = vunpack.c.l.b16 %v3621
        %v3638 = vpack.c.b16 %v3623, %v3622
        %v3639 = vpack.c.b16 %v3625, %v3624
        %v3640 = vpack.c.b16 %v3627, %v3626
        %v3641 = vpack.c.b16 %v3629, %v3628
        %v3642 = vpack.c.b16 %v3631, %v3630
        %v3643 = vpack.c.b16 %v3633, %v3632
        %v3644 = vpack.c.b16 %v3635, %v3634
        %v3645 = vpack.c.b16 %v3637, %v3636
        %v3647 = vsel %vm1432, %v3638, 0
        %v3650 = vsel %vm1432, %v3639, 0
        %v3653 = vsel %vm1432, %v3640, 0
        %v3656 = vsel %vm1432, %v3641, 0
        %v3659 = vsel %vm1432, %v3642, 0
        %v3662 = vsel %vm1432, %v3643, 0
        %v3665 = vsel %vm1432, %v3644, 0
        %v3668 = vsel %vm1432, %v3645, 0
        %v3671 = vsel %vm1457, %v1148, 0
        %3673 = vmatprep.subr.bf16.mxu0 0
        %3674 = vmatpush1.bf16.msra.mxu0 %v3671
        %3675 = vmatprep.subr.bf16.mxu0 0
        %3676 = vmatpush1.bf16.msra.mxu0 0
        %3677 = vmatprep.subr.bf16.mxu0 0
        %3678 = vmatpush1.bf16.msra.mxu0 0
        %3679 = vmatprep.subr.bf16.mxu0 0
        %3680 = vmatpush1.bf16.msra.mxu0 0
        %3681 = vmatprep.subr.bf16.mxu0 0
        %3682 = vmatpush1.bf16.msra.mxu0 0
        %3683 = vmatprep.subr.bf16.mxu0 0
        %3684 = vmatpush1.bf16.msra.mxu0 0
        %3685 = vmatprep.subr.bf16.mxu0 0
        %3686 = vmatpush1.bf16.msra.mxu0 0
        %3687 = vmatprep.subr.bf16.mxu0 0
        %3688 = vmatpush1.bf16.msra.mxu0 0
        %3689 = vmatprep.subr.bf16.mxu0 0
        %3690 = vmatpush1.bf16.msra.mxu0 0
        %3691 = vmatprep.subr.bf16.mxu0 0
        %3692 = vmatpush1.bf16.msra.mxu0 0
        %3693 = vmatprep.subr.bf16.mxu0 0
        %3694 = vmatpush1.bf16.msra.mxu0 0
        %3695 = vmatprep.subr.bf16.mxu0 0
        %3696 = vmatpush1.bf16.msra.mxu0 0
        %3697 = vmatprep.subr.bf16.mxu0 0
        %3698 = vmatpush1.bf16.msra.mxu0 0
        %3699 = vmatprep.subr.bf16.mxu0 0
        %3700 = vmatpush1.bf16.msra.mxu0 0
        %3701 = vmatprep.subr.bf16.mxu0 0
        %3702 = vmatpush1.bf16.msra.mxu0 0
        %3703 = vmatprep.subr.bf16.mxu0 0
        %3704 = vmatpush1.bf16.msra.mxu0 0
        %3705 = vmatprep.mubr.bf16.mxu0 0
        %3706 = vmatmul.mubr.bf16.gmra.mrb[0].mxu0 %v3647
        %v3707 = vpop.f32.mrb[0].mxu0
        %v3708 = vadd.f32 0.0, %v3707
        %v3709 = vpop.f32.mrb[0].mxu0
        %v3710 = vpop.f32.mrb[0].mxu0
        %v3711 = vadd.f32 0.0, %v3710
        %v3712 = vpop.f32.mrb[0].mxu0
        %3713 = vmatprep.mubr.bf16.mxu0 0
        %3714 = vmatmul.mubr.bf16.gmra.mrb[0].mxu0 %v3650
        %v3715 = vpop.f32.mrb[0].mxu0
        %v3716 = vadd.f32 0.0, %v3715
        %v3717 = vpop.f32.mrb[0].mxu0
        %v3718 = vpop.f32.mrb[0].mxu0
        %v3719 = vadd.f32 0.0, %v3718
        %v3720 = vpop.f32.mrb[0].mxu0
        %3721 = vmatprep.mubr.bf16.mxu0 0
        %3722 = vmatmul.mubr.bf16.gmra.mrb[0].mxu0 %v3653
        %v3723 = vpop.f32.mrb[0].mxu0
        %v3724 = vadd.f32 0.0, %v3723
        %v3725 = vpop.f32.mrb[0].mxu0
        %v3726 = vpop.f32.mrb[0].mxu0
        %v3727 = vadd.f32 0.0, %v3726
        %v3728 = vpop.f32.mrb[0].mxu0
        %3729 = vmatprep.mubr.bf16.mxu0 0
        %3730 = vmatmul.mubr.bf16.gmra.mrb[0].mxu0 %v3656
        %v3731 = vpop.f32.mrb[0].mxu0
        %v3732 = vadd.f32 0.0, %v3731
        %v3733 = vpop.f32.mrb[0].mxu0
        %v3734 = vpop.f32.mrb[0].mxu0
        %v3735 = vadd.f32 0.0, %v3734
        %v3736 = vpop.f32.mrb[0].mxu0
        %3737 = vmatprep.mubr.bf16.mxu0 0
        %3738 = vmatmul.mubr.bf16.gmra.mrb[0].mxu0 %v3659
        %v3739 = vpop.f32.mrb[0].mxu0
        %v3740 = vadd.f32 0.0, %v3739
        %v3741 = vpop.f32.mrb[0].mxu0
        %v3742 = vpop.f32.mrb[0].mxu0
        %v3743 = vadd.f32 0.0, %v3742
        %v3744 = vpop.f32.mrb[0].mxu0
        %3745 = vmatprep.mubr.bf16.mxu0 0
        %3746 = vmatmul.mubr.bf16.gmra.mrb[0].mxu0 %v3662
        %v3747 = vpop.f32.mrb[0].mxu0
        %v3748 = vadd.f32 0.0, %v3747
        %v3749 = vpop.f32.mrb[0].mxu0
        %v3750 = vpop.f32.mrb[0].mxu0
        %v3751 = vadd.f32 0.0, %v3750
        %v3752 = vpop.f32.mrb[0].mxu0
        %3753 = vmatprep.mubr.bf16.mxu0 0
        %3754 = vmatmul.mubr.bf16.gmra.mrb[0].mxu0 %v3665
        %v3755 = vpop.f32.mrb[0].mxu0
        %v3756 = vadd.f32 0.0, %v3755
        %v3757 = vpop.f32.mrb[0].mxu0
        %v3758 = vpop.f32.mrb[0].mxu0
        %v3759 = vadd.f32 0.0, %v3758
        %v3760 = vpop.f32.mrb[0].mxu0
        %3761 = vmatprep.mubr.bf16.mxu0 0
        %3762 = vmatmul.mubr.bf16.gmra.mrb[0].mxu0 %v3668
        %v3763 = vpop.f32.mrb[0].mxu0
        %v3764 = vadd.f32 0.0, %v3763
        %v3765 = vpop.f32.mrb[0].mxu0
        %v3766 = vpop.f32.mrb[0].mxu0
        %v3767 = vadd.f32 0.0, %v3766
        %v3768 = vpop.f32.mrb[0].mxu0
        %3769 = vdwg.mxu0
        %v3770 = vadd.f32 %v3494, %v3708
        %v3771 = vadd.f32 %v3495, %v3711
        %v3772 = vadd.f32 %v3496, %v3716
        %v3773 = vadd.f32 %v3497, %v3719
        %v3774 = vadd.f32 %v3498, %v3724
        %v3775 = vadd.f32 %v3499, %v3727
        %v3776 = vadd.f32 %v3500, %v3732
        %v3777 = vadd.f32 %v3501, %v3735
        %v3778 = vadd.f32 %v3502, %v3740
        %v3779 = vadd.f32 %v3503, %v3743
        %v3780 = vadd.f32 %v3504, %v3748
        %v3781 = vadd.f32 %v3505, %v3751
        %v3782 = vadd.f32 %v3506, %v3756
        %v3783 = vadd.f32 %v3507, %v3759
        %v3784 = vadd.f32 %v3508, %v3764
        %v3785 = vadd.f32 %v3509, %v3767
        %v3786 = vld [vmem:[#allocation12] sm:$0x1]
        %v3788 = vlaneseq
        %v3789 = vshrl.u32 %v3788, 7
        %v3790 = vsub.s32 0, %v3789
        %v3791 = vrot.slane %v3786, %v3790
        %v3793 = vadd.f32 %v3770, %v3791
        %v3794 = vadd.f32 %v3771, %v3791
        %v3795 = vadd.f32 %v3772, %v3791
        %v3796 = vadd.f32 %v3773, %v3791
        %v3797 = vadd.f32 %v3774, %v3791
        %v3798 = vadd.f32 %v3775, %v3791
        %v3799 = vadd.f32 %v3776, %v3791
        %v3800 = vadd.f32 %v3777, %v3791
        %v3801 = vadd.f32 %v3778, %v3791
        %v3802 = vadd.f32 %v3779, %v3791
        %v3803 = vadd.f32 %v3780, %v3791
        %v3804 = vadd.f32 %v3781, %v3791
        %v3805 = vadd.f32 %v3782, %v3791
        %v3806 = vadd.f32 %v3783, %v3791
        %v3807 = vadd.f32 %v3784, %v3791
        %v3808 = vadd.f32 %v3785, %v3791
        %v3809 = vld [vmem:[#allocation13] sm:$0x1]
        %v3811 = vlaneseq
        %v3812 = vshrl.u32 %v3811, 7
        %v3813 = vsub.s32 0, %v3812
        %v3814 = vrot.slane %v3809, %v3813
        %v3816 = vmul.f32 %v3793, %v3814
        %v3817 = vmul.f32 %v3794, %v3814
        %v3818 = vmul.f32 %v3795, %v3814
        %v3819 = vmul.f32 %v3796, %v3814
        %v3820 = vmul.f32 %v3797, %v3814
        %v3821 = vmul.f32 %v3798, %v3814
        %v3822 = vmul.f32 %v3799, %v3814
        %v3823 = vmul.f32 %v3800, %v3814
        %v3824 = vmul.f32 %v3801, %v3814
        %v3825 = vmul.f32 %v3802, %v3814
        %v3826 = vmul.f32 %v3803, %v3814
        %v3827 = vmul.f32 %v3804, %v3814
        %v3828 = vmul.f32 %v3805, %v3814
        %v3829 = vmul.f32 %v3806, %v3814
        %v3830 = vmul.f32 %v3807, %v3814
        %v3831 = vmul.f32 %v3808, %v3814
        %v3832 = vld [vmem:[#allocation15] sm:$0x1]
        %v3834 = vlaneseq
        %v3835 = vshrl.u32 %v3834, 7
        %v3836 = vsub.s32 0, %v3835
        %v3837 = vrot.slane %v3832, %v3836
        %v3839 = vadd.f32 %v3816, %v3837
        %v3840 = vadd.f32 %v3817, %v3837
        %v3841 = vadd.f32 %v3818, %v3837
        %v3842 = vadd.f32 %v3819, %v3837
        %v3843 = vadd.f32 %v3820, %v3837
        %v3844 = vadd.f32 %v3821, %v3837
        %v3845 = vadd.f32 %v3822, %v3837
        %v3846 = vadd.f32 %v3823, %v3837
        %v3847 = vadd.f32 %v3824, %v3837
        %v3848 = vadd.f32 %v3825, %v3837
        %v3849 = vadd.f32 %v3826, %v3837
        %v3850 = vadd.f32 %v3827, %v3837
        %v3851 = vadd.f32 %v3828, %v3837
        %v3852 = vadd.f32 %v3829, %v3837
        %v3853 = vadd.f32 %v3830, %v3837
        %v3854 = vadd.f32 %v3831, %v3837
        %v3855 = vmax.f32 %v3839, 0.0
        %v3856 = vmax.f32 %v3840, 0.0
        %v3857 = vmax.f32 %v3841, 0.0
        %v3858 = vmax.f32 %v3842, 0.0
        %v3859 = vmax.f32 %v3843, 0.0
        %v3860 = vmax.f32 %v3844, 0.0
        %v3861 = vmax.f32 %v3845, 0.0
        %v3862 = vmax.f32 %v3846, 0.0
        %v3863 = vmax.f32 %v3847, 0.0
        %v3864 = vmax.f32 %v3848, 0.0
        %v3865 = vmax.f32 %v3849, 0.0
        %v3866 = vmax.f32 %v3850, 0.0
        %v3867 = vmax.f32 %v3851, 0.0
        %v3868 = vmax.f32 %v3852, 0.0
        %v3869 = vmax.f32 %v3853, 0.0
        %v3870 = vmax.f32 %v3854, 0.0
        %v3871 = vpack.c.bf16 %v3856, %v3855
        %v3872 = vpack.c.bf16 %v3858, %v3857
        %v3873 = vpack.c.bf16 %v3860, %v3859
        %v3874 = vpack.c.bf16 %v3862, %v3861
        %v3875 = vpack.c.bf16 %v3864, %v3863
        %v3876 = vpack.c.bf16 %v3866, %v3865
        %v3877 = vpack.c.bf16 %v3868, %v3867
        %v3878 = vpack.c.bf16 %v3870, %v3869
        %vm3879 = vcmask 125952
        %3880 = vst.msk [vmem:[#allocation3] sm:$0xf] %vm3879, 0
        %vm3881 = vcmask 122880
        %3882 = vst.msk [vmem:[#allocation3 + $0x4] sm:$0x1] %vm3881, 0
        %3883 = vst.msk [vmem:[#allocation3 + $0x50] sm:$0xf] %vm3879, 0
        %3884 = vst.msk [vmem:[#allocation3 + $0x54] sm:$0x1] %vm3881, 0
        %s3885 = scalar_lea.vmem [#allocation3], 72
        %3886 = vst.msk [vmem:[%s3885] sm:$0xf] %vm3879, 0
        %3887 = vst.msk [vmem:[%s3885 + $0x4] sm:$0x1] %vm3881, 0
        %3888 = vst.msk [vmem:[%s3885 + $0x50] sm:$0xf] %vm3879, 0
        %3889 = vst.msk [vmem:[%s3885 + $0x54] sm:$0x1] %vm3881, 0
        %vm3890 = vcmask 122880
        %vm3891 = vmand %vm3890, %vm717
        %v3892 = vld [vmem:[#allocation3] sm:$0x1]
        %v3893 = vsel %vm3891, 0, %v3892
        %3894 = vst [vmem:[#allocation3] sm:$0x1] %v3893
        %v3895 = vld [vmem:[#allocation3 + $0x8] sm:$0x1]
        %v3896 = vsel %vm3891, 0, %v3895
        %3897 = vst [vmem:[#allocation3 + $0x8] sm:$0x1] %v3896
        %v3898 = vld [vmem:[#allocation3 + $0x10] sm:$0x1]
        %v3899 = vsel %vm3891, 0, %v3898
        %3900 = vst [vmem:[#allocation3 + $0x10] sm:$0x1] %v3899
        %v3901 = vld [vmem:[#allocation3 + $0x18] sm:$0x1]
        %v3902 = vsel %vm3891, 0, %v3901
        %3903 = vst [vmem:[#allocation3 + $0x18] sm:$0x1] %v3902
        %v3904 = vld [vmem:[#allocation3 + $0x20] sm:$0x1]
        %v3905 = vsel %vm3891, 0, %v3904
        %3906 = vst [vmem:[#allocation3 + $0x20] sm:$0x1] %v3905
        %v3907 = vld [vmem:[#allocation3 + $0x28] sm:$0x1]
        %v3908 = vsel %vm3891, 0, %v3907
        %3909 = vst [vmem:[#allocation3 + $0x28] sm:$0x1] %v3908
        %v3910 = vld [vmem:[#allocation3 + $0x30] sm:$0x1]
        %v3911 = vsel %vm3891, 0, %v3910
        %3912 = vst [vmem:[#allocation3 + $0x30] sm:$0x1] %v3911
        %v3913 = vld [vmem:[#allocation3 + $0x38] sm:$0x1]
        %v3914 = vsel %vm3891, 0, %v3913
        %3915 = vst [vmem:[#allocation3 + $0x38] sm:$0x1] %v3914
        %v3916 = vld [vmem:[#allocation3 + $0x40] sm:$0x1]
        %v3917 = vsel %vm3891, 0, %v3916
        %3918 = vst [vmem:[#allocation3 + $0x40] sm:$0x1] %v3917
        %v3919 = vld [vmem:[#allocation3 + $0x48] sm:$0x1]
        %v3920 = vsel %vm3891, 0, %v3919
        %3921 = vst [vmem:[#allocation3 + $0x48] sm:$0x1] %v3920
        %v3922 = vld [vmem:[#allocation3 + $0x50] sm:$0x1]
        %v3923 = vsel %vm3891, 0, %v3922
        %3924 = vst [vmem:[#allocation3 + $0x50] sm:$0x1] %v3923
        %v3925 = vld [vmem:[#allocation3 + $0x58] sm:$0x1]
        %v3926 = vsel %vm3891, 0, %v3925
        %3927 = vst [vmem:[#allocation3 + $0x58] sm:$0x1] %v3926
        %v3928 = vld [vmem:[#allocation3 + $0x60] sm:$0x1]
        %v3929 = vsel %vm3891, 0, %v3928
        %3930 = vst [vmem:[#allocation3 + $0x60] sm:$0x1] %v3929
        %v3931 = vld [vmem:[#allocation3 + $0x68] sm:$0x1]
        %v3932 = vsel %vm3891, 0, %v3931
        %3933 = vst [vmem:[#allocation3 + $0x68] sm:$0x1] %v3932
        %v3934 = vld [vmem:[#allocation3 + $0x70] sm:$0x1]
        %v3935 = vsel %vm3891, 0, %v3934
        %3936 = vst [vmem:[#allocation3 + $0x70] sm:$0x1] %v3935
        %v3937 = vld [vmem:[#allocation3 + $0x78] sm:$0x1]
        %v3938 = vsel %vm3891, 0, %v3937
        %3939 = vst [vmem:[#allocation3 + $0x78] sm:$0x1] %v3938
        %v3940 = vld [vmem:[#allocation3 + $0x80] sm:$0x1]
        %v3941 = vsel %vm3891, 0, %v3940
        %3942 = vst [vmem:[#allocation3 + $0x80] sm:$0x1] %v3941
        %v3943 = vld [vmem:[#allocation3 + $0x88] sm:$0x1]
        %v3944 = vsel %vm3891, 0, %v3943
        %3945 = vst [vmem:[#allocation3 + $0x88] sm:$0x1] %v3944
        %v3946 = vld [vmem:[#allocation3 + $0x90] sm:$0x1]
        %v3947 = vsel %vm3891, 0, %v3946
        %3948 = vst [vmem:[#allocation3 + $0x90] sm:$0x1] %v3947
        %v3949 = vld [vmem:[#allocation3 + $0x98] sm:$0x1]
        %v3950 = vsel %vm3891, 0, %v3949
        %3951 = vst [vmem:[#allocation3 + $0x98] sm:$0x1] %v3950
        %vm3952 = vmand %vm3890, %vm779
        %v3953 = vld [vmem:[#allocation3 + $0x4] sm:$0x1]
        %v3954 = vsel %vm3952, 0, %v3953
        %3955 = vst [vmem:[#allocation3 + $0x4] sm:$0x1] %v3954
        %v3956 = vld [vmem:[#allocation3 + $0xc] sm:$0x1]
        %v3957 = vsel %vm3952, 0, %v3956
        %3958 = vst [vmem:[#allocation3 + $0xc] sm:$0x1] %v3957
        %v3959 = vld [vmem:[#allocation3 + $0x14] sm:$0x1]
        %v3960 = vsel %vm3952, 0, %v3959
        %3961 = vst [vmem:[#allocation3 + $0x14] sm:$0x1] %v3960
        %v3962 = vld [vmem:[#allocation3 + $0x1c] sm:$0x1]
        %v3963 = vsel %vm3952, 0, %v3962
        %3964 = vst [vmem:[#allocation3 + $0x1c] sm:$0x1] %v3963
        %v3965 = vld [vmem:[#allocation3 + $0x24] sm:$0x1]
        %v3966 = vsel %vm3952, 0, %v3965
        %3967 = vst [vmem:[#allocation3 + $0x24] sm:$0x1] %v3966
        %v3968 = vld [vmem:[#allocation3 + $0x2c] sm:$0x1]
        %v3969 = vsel %vm3952, 0, %v3968
        %3970 = vst [vmem:[#allocation3 + $0x2c] sm:$0x1] %v3969
        %v3971 = vld [vmem:[#allocation3 + $0x34] sm:$0x1]
        %v3972 = vsel %vm3952, 0, %v3971
        %3973 = vst [vmem:[#allocation3 + $0x34] sm:$0x1] %v3972
        %v3974 = vld [vmem:[#allocation3 + $0x3c] sm:$0x1]
        %v3975 = vsel %vm3952, 0, %v3974
        %3976 = vst [vmem:[#allocation3 + $0x3c] sm:$0x1] %v3975
        %v3977 = vld [vmem:[#allocation3 + $0x44] sm:$0x1]
        %v3978 = vsel %vm3952, 0, %v3977
        %3979 = vst [vmem:[#allocation3 + $0x44] sm:$0x1] %v3978
        %v3980 = vld [vmem:[#allocation3 + $0x4c] sm:$0x1]
        %v3981 = vsel %vm3952, 0, %v3980
        %3982 = vst [vmem:[#allocation3 + $0x4c] sm:$0x1] %v3981
        %v3983 = vld [vmem:[#allocation3 + $0x54] sm:$0x1]
        %v3984 = vsel %vm3952, 0, %v3983
        %3985 = vst [vmem:[#allocation3 + $0x54] sm:$0x1] %v3984
        %v3986 = vld [vmem:[#allocation3 + $0x5c] sm:$0x1]
        %v3987 = vsel %vm3952, 0, %v3986
        %3988 = vst [vmem:[#allocation3 + $0x5c] sm:$0x1] %v3987
        %v3989 = vld [vmem:[#allocation3 + $0x64] sm:$0x1]
        %v3990 = vsel %vm3952, 0, %v3989
        %3991 = vst [vmem:[#allocation3 + $0x64] sm:$0x1] %v3990
        %v3992 = vld [vmem:[#allocation3 + $0x6c] sm:$0x1]
        %v3993 = vsel %vm3952, 0, %v3992
        %3994 = vst [vmem:[#allocation3 + $0x6c] sm:$0x1] %v3993
        %v3995 = vld [vmem:[#allocation3 + $0x74] sm:$0x1]
        %v3996 = vsel %vm3952, 0, %v3995
        %3997 = vst [vmem:[#allocation3 + $0x74] sm:$0x1] %v3996
        %v3998 = vld [vmem:[#allocation3 + $0x7c] sm:$0x1]
        %v3999 = vsel %vm3952, 0, %v3998
        %4000 = vst [vmem:[#allocation3 + $0x7c] sm:$0x1] %v3999
        %v4001 = vld [vmem:[#allocation3 + $0x84] sm:$0x1]
        %v4002 = vsel %vm3952, 0, %v4001
        %4003 = vst [vmem:[#allocation3 + $0x84] sm:$0x1] %v4002
        %v4004 = vld [vmem:[#allocation3 + $0x8c] sm:$0x1]
        %v4005 = vsel %vm3952, 0, %v4004
        %4006 = vst [vmem:[#allocation3 + $0x8c] sm:$0x1] %v4005
        %v4007 = vld [vmem:[#allocation3 + $0x94] sm:$0x1]
        %v4008 = vsel %vm3952, 0, %v4007
        %4009 = vst [vmem:[#allocation3 + $0x94] sm:$0x1] %v4008
        %v4010 = vld [vmem:[#allocation3 + $0x9c] sm:$0x1]
        %v4011 = vsel %vm3952, 0, %v4010
        %4012 = vst [vmem:[#allocation3 + $0x9c] sm:$0x1] %v4011
        %v4021 = vunpack.c.l.b16 %v3871
        %v4022 = vunpack.c.h.b16 %v3871
        %v4023 = vunpack.c.l.b16 %v3872
        %v4024 = vunpack.c.h.b16 %v3872
        %v4025 = vunpack.c.l.b16 %v3873
        %v4026 = vunpack.c.h.b16 %v3873
        %v4027 = vunpack.c.l.b16 %v3874
        %v4028 = vunpack.c.h.b16 %v3874
        %v4029 = vunpack.c.l.b16 %v3875
        %v4030 = vunpack.c.h.b16 %v3875
        %v4031 = vunpack.c.l.b16 %v3876
        %v4032 = vunpack.c.h.b16 %v3876
        %v4033 = vunpack.c.l.b16 %v3877
        %v4034 = vunpack.c.h.b16 %v3877
        %v4035 = vunpack.c.l.b16 %v3878
        %v4036 = vunpack.c.h.b16 %v3878
        %v4037 = vpack.c.b16 %v4021, %v4021
        %v4038 = vpack.c.b16 %v4022, %v4022
        %v4039 = vpack.c.b16 %v4023, %v4023
        %v4040 = vpack.c.b16 %v4024, %v4024
        %v4041 = vpack.c.b16 %v4025, %v4025
        %v4042 = vpack.c.b16 %v4026, %v4026
        %v4043 = vpack.c.b16 %v4027, %v4027
        %v4044 = vpack.c.b16 %v4028, %v4028
        %v4045 = vpack.c.b16 %v4029, %v4029
        %v4046 = vpack.c.b16 %v4030, %v4030
        %v4047 = vpack.c.b16 %v4031, %v4031
        %v4048 = vpack.c.b16 %v4032, %v4032
        %v4049 = vpack.c.b16 %v4033, %v4033
        %v4050 = vpack.c.b16 %v4034, %v4034
        %v4051 = vpack.c.b16 %v4035, %v4035
        %v4052 = vpack.c.b16 %v4036, %v4036
        %v4054 = vshrl.u32 %v4037, 16
        %v4056 = vrot.slane %v4054, 7
        %v4057 = vshll.u32 %v4037, 16
        %v4059 = vor.u32 %v4056, %v4057
        %v4060 = vrot.slane %v4056, 4
        %v4062 = vshrl.u32 %v4038, 16
        %v4064 = vrot.slane %v4062, 7
        %v4065 = vshll.u32 %v4038, 16
        %v4067 = vor.u32 %v4064, %v4065
        %v4068 = vrot.slane %v4064, 4
        %v4070 = vshrl.u32 %v4039, 16
        %v4072 = vrot.slane %v4070, 7
        %v4073 = vshll.u32 %v4039, 16
        %v4075 = vor.u32 %v4072, %v4073
        %v4076 = vrot.slane %v4072, 4
        %v4078 = vshrl.u32 %v4040, 16
        %v4080 = vrot.slane %v4078, 7
        %v4081 = vshll.u32 %v4040, 16
        %v4083 = vor.u32 %v4080, %v4081
        %v4084 = vrot.slane %v4080, 4
        %v4086 = vshrl.u32 %v4041, 16
        %v4088 = vrot.slane %v4086, 7
        %v4089 = vshll.u32 %v4041, 16
        %v4091 = vor.u32 %v4088, %v4089
        %v4092 = vrot.slane %v4088, 4
        %v4094 = vshrl.u32 %v4042, 16
        %v4096 = vrot.slane %v4094, 7
        %v4097 = vshll.u32 %v4042, 16
        %v4099 = vor.u32 %v4096, %v4097
        %v4100 = vrot.slane %v4096, 4
        %v4102 = vshrl.u32 %v4043, 16
        %v4104 = vrot.slane %v4102, 7
        %v4105 = vshll.u32 %v4043, 16
        %v4107 = vor.u32 %v4104, %v4105
        %v4108 = vrot.slane %v4104, 4
        %v4110 = vshrl.u32 %v4044, 16
        %v4112 = vrot.slane %v4110, 7
        %v4113 = vshll.u32 %v4044, 16
        %v4115 = vor.u32 %v4112, %v4113
        %v4116 = vrot.slane %v4112, 4
        %v4118 = vshrl.u32 %v4045, 16
        %v4120 = vrot.slane %v4118, 7
        %v4121 = vshll.u32 %v4045, 16
        %v4123 = vor.u32 %v4120, %v4121
        %v4124 = vrot.slane %v4120, 4
        %v4126 = vshrl.u32 %v4046, 16
        %v4128 = vrot.slane %v4126, 7
        %v4129 = vshll.u32 %v4046, 16
        %v4131 = vor.u32 %v4128, %v4129
        %v4132 = vrot.slane %v4128, 4
        %v4134 = vshrl.u32 %v4047, 16
        %v4136 = vrot.slane %v4134, 7
        %v4137 = vshll.u32 %v4047, 16
        %v4139 = vor.u32 %v4136, %v4137
        %v4140 = vrot.slane %v4136, 4
        %v4142 = vshrl.u32 %v4048, 16
        %v4144 = vrot.slane %v4142, 7
        %v4145 = vshll.u32 %v4048, 16
        %v4147 = vor.u32 %v4144, %v4145
        %v4148 = vrot.slane %v4144, 4
        %v4150 = vshrl.u32 %v4049, 16
        %v4152 = vrot.slane %v4150, 7
        %v4153 = vshll.u32 %v4049, 16
        %v4155 = vor.u32 %v4152, %v4153
        %v4156 = vrot.slane %v4152, 4
        %v4158 = vshrl.u32 %v4050, 16
        %v4160 = vrot.slane %v4158, 7
        %v4161 = vshll.u32 %v4050, 16
        %v4163 = vor.u32 %v4160, %v4161
        %v4164 = vrot.slane %v4160, 4
        %v4166 = vshrl.u32 %v4051, 16
        %v4168 = vrot.slane %v4166, 7
        %v4169 = vshll.u32 %v4051, 16
        %v4171 = vor.u32 %v4168, %v4169
        %v4172 = vrot.slane %v4168, 4
        %v4174 = vshrl.u32 %v4052, 16
        %v4176 = vrot.slane %v4174, 7
        %v4177 = vshll.u32 %v4052, 16
        %v4179 = vor.u32 %v4176, %v4177
        %v4180 = vrot.slane %v4176, 4
        %s4213 = scalar_lea.vmem [#allocation3], 8
        %vm4214 = vcmask 125952
        %vm4215 = vmand %vm4214, %vm779
        %v4216 = vld [vmem:[%s4213] sm:$0xf]
        %v4217 = vsel %vm4215, %v4059, %v4216
        %4218 = vst [vmem:[%s4213] sm:$0xf] %v4217
        %v4219 = vld [vmem:[%s4213 + $0x4] sm:$0x1]
        %v4220 = vsel %vm3891, %v4060, %v4219
        %4221 = vst [vmem:[%s4213 + $0x4] sm:$0x1] %v4220
        %v4222 = vld [vmem:[%s4213 + $0x8] sm:$0xf]
        %v4223 = vsel %vm4215, %v4067, %v4222
        %4224 = vst [vmem:[%s4213 + $0x8] sm:$0xf] %v4223
        %v4225 = vld [vmem:[%s4213 + $0xc] sm:$0x1]
        %v4226 = vsel %vm3891, %v4068, %v4225
        %4227 = vst [vmem:[%s4213 + $0xc] sm:$0x1] %v4226
        %v4228 = vld [vmem:[%s4213 + $0x10] sm:$0xf]
        %v4229 = vsel %vm4215, %v4075, %v4228
        %4230 = vst [vmem:[%s4213 + $0x10] sm:$0xf] %v4229
        %v4231 = vld [vmem:[%s4213 + $0x14] sm:$0x1]
        %v4232 = vsel %vm3891, %v4076, %v4231
        %4233 = vst [vmem:[%s4213 + $0x14] sm:$0x1] %v4232
        %v4234 = vld [vmem:[%s4213 + $0x18] sm:$0xf]
        %v4235 = vsel %vm4215, %v4083, %v4234
        %4236 = vst [vmem:[%s4213 + $0x18] sm:$0xf] %v4235
        %v4237 = vld [vmem:[%s4213 + $0x1c] sm:$0x1]
        %v4238 = vsel %vm3891, %v4084, %v4237
        %4239 = vst [vmem:[%s4213 + $0x1c] sm:$0x1] %v4238
        %v4240 = vld [vmem:[%s4213 + $0x20] sm:$0xf]
        %v4241 = vsel %vm4215, %v4091, %v4240
        %4242 = vst [vmem:[%s4213 + $0x20] sm:$0xf] %v4241
        %v4243 = vld [vmem:[%s4213 + $0x24] sm:$0x1]
        %v4244 = vsel %vm3891, %v4092, %v4243
        %4245 = vst [vmem:[%s4213 + $0x24] sm:$0x1] %v4244
        %v4246 = vld [vmem:[%s4213 + $0x28] sm:$0xf]
        %v4247 = vsel %vm4215, %v4099, %v4246
        %4248 = vst [vmem:[%s4213 + $0x28] sm:$0xf] %v4247
        %v4249 = vld [vmem:[%s4213 + $0x2c] sm:$0x1]
        %v4250 = vsel %vm3891, %v4100, %v4249
        %4251 = vst [vmem:[%s4213 + $0x2c] sm:$0x1] %v4250
        %v4252 = vld [vmem:[%s4213 + $0x30] sm:$0xf]
        %v4253 = vsel %vm4215, %v4107, %v4252
        %4254 = vst [vmem:[%s4213 + $0x30] sm:$0xf] %v4253
        %v4255 = vld [vmem:[%s4213 + $0x34] sm:$0x1]
        %v4256 = vsel %vm3891, %v4108, %v4255
        %4257 = vst [vmem:[%s4213 + $0x34] sm:$0x1] %v4256
        %v4258 = vld [vmem:[%s4213 + $0x38] sm:$0xf]
        %v4259 = vsel %vm4215, %v4115, %v4258
        %4260 = vst [vmem:[%s4213 + $0x38] sm:$0xf] %v4259
        %v4261 = vld [vmem:[%s4213 + $0x3c] sm:$0x1]
        %v4262 = vsel %vm3891, %v4116, %v4261
        %4263 = vst [vmem:[%s4213 + $0x3c] sm:$0x1] %v4262
        %v4264 = vld [vmem:[%s4213 + $0x50] sm:$0xf]
        %v4265 = vsel %vm4215, %v4123, %v4264
        %4266 = vst [vmem:[%s4213 + $0x50] sm:$0xf] %v4265
        %v4267 = vld [vmem:[%s4213 + $0x54] sm:$0x1]
        %v4268 = vsel %vm3891, %v4124, %v4267
        %4269 = vst [vmem:[%s4213 + $0x54] sm:$0x1] %v4268
        %v4270 = vld [vmem:[%s4213 + $0x58] sm:$0xf]
        %v4271 = vsel %vm4215, %v4131, %v4270
        %4272 = vst [vmem:[%s4213 + $0x58] sm:$0xf] %v4271
        %v4273 = vld [vmem:[%s4213 + $0x5c] sm:$0x1]
        %v4274 = vsel %vm3891, %v4132, %v4273
        %4275 = vst [vmem:[%s4213 + $0x5c] sm:$0x1] %v4274
        %v4276 = vld [vmem:[%s4213 + $0x60] sm:$0xf]
        %v4277 = vsel %vm4215, %v4139, %v4276
        %4278 = vst [vmem:[%s4213 + $0x60] sm:$0xf] %v4277
        %v4279 = vld [vmem:[%s4213 + $0x64] sm:$0x1]
        %v4280 = vsel %vm3891, %v4140, %v4279
        %4281 = vst [vmem:[%s4213 + $0x64] sm:$0x1] %v4280
        %v4282 = vld [vmem:[%s4213 + $0x68] sm:$0xf]
        %v4283 = vsel %vm4215, %v4147, %v4282
        %4284 = vst [vmem:[%s4213 + $0x68] sm:$0xf] %v4283
        %v4285 = vld [vmem:[%s4213 + $0x6c] sm:$0x1]
        %v4286 = vsel %vm3891, %v4148, %v4285
        %4287 = vst [vmem:[%s4213 + $0x6c] sm:$0x1] %v4286
        %v4288 = vld [vmem:[%s4213 + $0x70] sm:$0xf]
        %v4289 = vsel %vm4215, %v4155, %v4288
        %4290 = vst [vmem:[%s4213 + $0x70] sm:$0xf] %v4289
        %v4291 = vld [vmem:[%s4213 + $0x74] sm:$0x1]
        %v4292 = vsel %vm3891, %v4156, %v4291
        %4293 = vst [vmem:[%s4213 + $0x74] sm:$0x1] %v4292
        %v4294 = vld [vmem:[%s4213 + $0x78] sm:$0xf]
        %v4295 = vsel %vm4215, %v4163, %v4294
        %4296 = vst [vmem:[%s4213 + $0x78] sm:$0xf] %v4295
        %v4297 = vld [vmem:[%s4213 + $0x7c] sm:$0x1]
        %v4298 = vsel %vm3891, %v4164, %v4297
        %4299 = vst [vmem:[%s4213 + $0x7c] sm:$0x1] %v4298
        %v4300 = vld [vmem:[%s4213 + $0x80] sm:$0xf]
        %v4301 = vsel %vm4215, %v4171, %v4300
        %4302 = vst [vmem:[%s4213 + $0x80] sm:$0xf] %v4301
        %v4303 = vld [vmem:[%s4213 + $0x84] sm:$0x1]
        %v4304 = vsel %vm3891, %v4172, %v4303
        %4305 = vst [vmem:[%s4213 + $0x84] sm:$0x1] %v4304
        %v4306 = vld [vmem:[%s4213 + $0x88] sm:$0xf]
        %v4307 = vsel %vm4215, %v4179, %v4306
        %4308 = vst [vmem:[%s4213 + $0x88] sm:$0xf] %v4307
        %v4309 = vld [vmem:[%s4213 + $0x8c] sm:$0x1]
        %v4310 = vsel %vm3891, %v4180, %v4309
        %4311 = vst [vmem:[%s4213 + $0x8c] sm:$0x1] %v4310
        %v4312 = vld [vmem:[#allocation16] sm:$0xf]
        %v4313 = vld [vmem:[#allocation16 + $0x4] sm:$0xf]
        %v4314 = vld [vmem:[#allocation16 + $0x8] sm:$0xf]
        %v4315 = vld [vmem:[#allocation16 + $0xc] sm:$0xf]
        %v4316 = vld [vmem:[#allocation16 + $0x10] sm:$0xf]
        %v4317 = vld [vmem:[#allocation16 + $0x14] sm:$0xf]
        %v4318 = vld [vmem:[#allocation16 + $0x18] sm:$0xf]
        %v4319 = vld [vmem:[#allocation16 + $0x1c] sm:$0xf]
        %v4320 = vld [vmem:[#allocation16 + $0x20] sm:$0xf]
        %v4321 = vld [vmem:[#allocation16 + $0x24] sm:$0xf]
        %v4322 = vld [vmem:[#allocation16 + $0x28] sm:$0xf]
        %v4323 = vld [vmem:[#allocation16 + $0x2c] sm:$0xf]
        %v4324 = vld [vmem:[#allocation16 + $0x30] sm:$0xf]
        %v4325 = vld [vmem:[#allocation16 + $0x34] sm:$0xf]
        %v4326 = vld [vmem:[#allocation16 + $0x38] sm:$0xf]
        %v4327 = vld [vmem:[#allocation16 + $0x3c] sm:$0xf]
        %v4328 = vld [vmem:[#allocation16 + $0x40] sm:$0xf]
        %v4329 = vld [vmem:[#allocation16 + $0x44] sm:$0xf]
        %v4330 = vld [vmem:[#allocation3] sm:$0xf]
        %v4331 = vld [vmem:[#allocation3 + $0x8] sm:$0xf]
        %v4332 = vld [vmem:[#allocation3 + $0x10] sm:$0xf]
        %v4333 = vld [vmem:[#allocation3 + $0x18] sm:$0xf]
        %v4334 = vld [vmem:[#allocation3 + $0x20] sm:$0xf]
        %v4335 = vld [vmem:[#allocation3 + $0x28] sm:$0xf]
        %v4336 = vld [vmem:[#allocation3 + $0x30] sm:$0xf]
        %v4337 = vld [vmem:[#allocation3 + $0x38] sm:$0xf]
        %v4338 = vld [vmem:[#allocation3 + $0x50] sm:$0xf]
        %v4339 = vld [vmem:[#allocation3 + $0x58] sm:$0xf]
        %v4340 = vld [vmem:[#allocation3 + $0x60] sm:$0xf]
        %v4341 = vld [vmem:[#allocation3 + $0x68] sm:$0xf]
        %v4342 = vld [vmem:[#allocation3 + $0x70] sm:$0xf]
        %v4343 = vld [vmem:[#allocation3 + $0x78] sm:$0xf]
        %v4344 = vld [vmem:[#allocation3 + $0x80] sm:$0xf]
        %v4345 = vld [vmem:[#allocation3 + $0x88] sm:$0xf]
        %v4346 = vld [vmem:[#allocation3 + $0x4] sm:$0x1]
        %v4347 = vld [vmem:[#allocation3 + $0xc] sm:$0x1]
        %v4348 = vld [vmem:[#allocation3 + $0x14] sm:$0x1]
        %v4349 = vld [vmem:[#allocation3 + $0x1c] sm:$0x1]
        %v4350 = vld [vmem:[#allocation3 + $0x24] sm:$0x1]
        %v4351 = vld [vmem:[#allocation3 + $0x2c] sm:$0x1]
        %v4352 = vld [vmem:[#allocation3 + $0x34] sm:$0x1]
        %v4353 = vld [vmem:[#allocation3 + $0x3c] sm:$0x1]
        %v4354 = vld [vmem:[#allocation3 + $0x54] sm:$0x1]
        %v4355 = vld [vmem:[#allocation3 + $0x5c] sm:$0x1]
        %v4356 = vld [vmem:[#allocation3 + $0x64] sm:$0x1]
        %v4357 = vld [vmem:[#allocation3 + $0x6c] sm:$0x1]
        %v4358 = vld [vmem:[#allocation3 + $0x74] sm:$0x1]
        %v4359 = vld [vmem:[#allocation3 + $0x7c] sm:$0x1]
        %v4360 = vld [vmem:[#allocation3 + $0x84] sm:$0x1]
        %v4361 = vld [vmem:[#allocation3 + $0x8c] sm:$0x1]
        %v4363 = vshrl.u32 %v4330, 16
        %v4365 = vrot.slane %v4363, 4
        %v4366 = vshll.u32 %v4330, 16
        %v4368 = vrot.slane %v4366, 5
        %v4369 = vor.u32 %v4365, %v4368
        %v4370 = vrot.slane %v4369, 4
        %v4372 = vshll.u32 %v4346, 16
        %v4374 = vrot.slane %v4372, 5
        %v4375 = vsel %vm1183, %v4370, %v4374
        %v4377 = vshrl.u32 %v4331, 16
        %v4379 = vrot.slane %v4377, 4
        %v4380 = vshll.u32 %v4331, 16
        %v4382 = vrot.slane %v4380, 5
        %v4383 = vor.u32 %v4379, %v4382
        %v4384 = vrot.slane %v4383, 4
        %v4386 = vshll.u32 %v4347, 16
        %v4388 = vrot.slane %v4386, 5
        %v4389 = vsel %vm1183, %v4384, %v4388
        %v4391 = vshrl.u32 %v4332, 16
        %v4393 = vrot.slane %v4391, 4
        %v4394 = vshll.u32 %v4332, 16
        %v4396 = vrot.slane %v4394, 5
        %v4397 = vor.u32 %v4393, %v4396
        %v4398 = vrot.slane %v4397, 4
        %v4400 = vshll.u32 %v4348, 16
        %v4402 = vrot.slane %v4400, 5
        %v4403 = vsel %vm1183, %v4398, %v4402
        %v4405 = vshrl.u32 %v4333, 16
        %v4407 = vrot.slane %v4405, 4
        %v4408 = vshll.u32 %v4333, 16
        %v4410 = vrot.slane %v4408, 5
        %v4411 = vor.u32 %v4407, %v4410
        %v4412 = vrot.slane %v4411, 4
        %v4414 = vshll.u32 %v4349, 16
        %v4416 = vrot.slane %v4414, 5
        %v4417 = vsel %vm1183, %v4412, %v4416
        %v4419 = vshrl.u32 %v4334, 16
        %v4421 = vrot.slane %v4419, 4
        %v4422 = vshll.u32 %v4334, 16
        %v4424 = vrot.slane %v4422, 5
        %v4425 = vor.u32 %v4421, %v4424
        %v4426 = vrot.slane %v4425, 4
        %v4428 = vshll.u32 %v4350, 16
        %v4430 = vrot.slane %v4428, 5
        %v4431 = vsel %vm1183, %v4426, %v4430
        %v4433 = vshrl.u32 %v4335, 16
        %v4435 = vrot.slane %v4433, 4
        %v4436 = vshll.u32 %v4335, 16
        %v4438 = vrot.slane %v4436, 5
        %v4439 = vor.u32 %v4435, %v4438
        %v4440 = vrot.slane %v4439, 4
        %v4442 = vshll.u32 %v4351, 16
        %v4444 = vrot.slane %v4442, 5
        %v4445 = vsel %vm1183, %v4440, %v4444
        %v4447 = vshrl.u32 %v4336, 16
        %v4449 = vrot.slane %v4447, 4
        %v4450 = vshll.u32 %v4336, 16
        %v4452 = vrot.slane %v4450, 5
        %v4453 = vor.u32 %v4449, %v4452
        %v4454 = vrot.slane %v4453, 4
        %v4456 = vshll.u32 %v4352, 16
        %v4458 = vrot.slane %v4456, 5
        %v4459 = vsel %vm1183, %v4454, %v4458
        %v4461 = vshrl.u32 %v4337, 16
        %v4463 = vrot.slane %v4461, 4
        %v4464 = vshll.u32 %v4337, 16
        %v4466 = vrot.slane %v4464, 5
        %v4467 = vor.u32 %v4463, %v4466
        %v4468 = vrot.slane %v4467, 4
        %v4470 = vshll.u32 %v4353, 16
        %v4472 = vrot.slane %v4470, 5
        %v4473 = vsel %vm1183, %v4468, %v4472
        %v4475 = vshrl.u32 %v4338, 16
        %v4477 = vrot.slane %v4475, 4
        %v4478 = vshll.u32 %v4338, 16
        %v4480 = vrot.slane %v4478, 5
        %v4481 = vor.u32 %v4477, %v4480
        %v4482 = vrot.slane %v4481, 4
        %v4484 = vshll.u32 %v4354, 16
        %v4486 = vrot.slane %v4484, 5
        %v4487 = vsel %vm1183, %v4482, %v4486
        %v4489 = vshrl.u32 %v4339, 16
        %v4491 = vrot.slane %v4489, 4
        %v4492 = vshll.u32 %v4339, 16
        %v4494 = vrot.slane %v4492, 5
        %v4495 = vor.u32 %v4491, %v4494
        %v4496 = vrot.slane %v4495, 4
        %v4498 = vshll.u32 %v4355, 16
        %v4500 = vrot.slane %v4498, 5
        %v4501 = vsel %vm1183, %v4496, %v4500
        %v4503 = vshrl.u32 %v4340, 16
        %v4505 = vrot.slane %v4503, 4
        %v4506 = vshll.u32 %v4340, 16
        %v4508 = vrot.slane %v4506, 5
        %v4509 = vor.u32 %v4505, %v4508
        %v4510 = vrot.slane %v4509, 4
        %v4512 = vshll.u32 %v4356, 16
        %v4514 = vrot.slane %v4512, 5
        %v4515 = vsel %vm1183, %v4510, %v4514
        %v4517 = vshrl.u32 %v4341, 16
        %v4519 = vrot.slane %v4517, 4
        %v4520 = vshll.u32 %v4341, 16
        %v4522 = vrot.slane %v4520, 5
        %v4523 = vor.u32 %v4519, %v4522
        %v4524 = vrot.slane %v4523, 4
        %v4526 = vshll.u32 %v4357, 16
        %v4528 = vrot.slane %v4526, 5
        %v4529 = vsel %vm1183, %v4524, %v4528
        %v4531 = vshrl.u32 %v4342, 16
        %v4533 = vrot.slane %v4531, 4
        %v4534 = vshll.u32 %v4342, 16
        %v4536 = vrot.slane %v4534, 5
        %v4537 = vor.u32 %v4533, %v4536
        %v4538 = vrot.slane %v4537, 4
        %v4540 = vshll.u32 %v4358, 16
        %v4542 = vrot.slane %v4540, 5
        %v4543 = vsel %vm1183, %v4538, %v4542
        %v4545 = vshrl.u32 %v4343, 16
        %v4547 = vrot.slane %v4545, 4
        %v4548 = vshll.u32 %v4343, 16
        %v4550 = vrot.slane %v4548, 5
        %v4551 = vor.u32 %v4547, %v4550
        %v4552 = vrot.slane %v4551, 4
        %v4554 = vshll.u32 %v4359, 16
        %v4556 = vrot.slane %v4554, 5
        %v4557 = vsel %vm1183, %v4552, %v4556
        %v4559 = vshrl.u32 %v4344, 16
        %v4561 = vrot.slane %v4559, 4
        %v4562 = vshll.u32 %v4344, 16
        %v4564 = vrot.slane %v4562, 5
        %v4565 = vor.u32 %v4561, %v4564
        %v4566 = vrot.slane %v4565, 4
        %v4568 = vshll.u32 %v4360, 16
        %v4570 = vrot.slane %v4568, 5
        %v4571 = vsel %vm1183, %v4566, %v4570
        %v4573 = vshrl.u32 %v4345, 16
        %v4575 = vrot.slane %v4573, 4
        %v4576 = vshll.u32 %v4345, 16
        %v4578 = vrot.slane %v4576, 5
        %v4579 = vor.u32 %v4575, %v4578
        %v4580 = vrot.slane %v4579, 4
        %v4582 = vshll.u32 %v4361, 16
        %v4584 = vrot.slane %v4582, 5
        %v4585 = vsel %vm1183, %v4580, %v4584
        %v4586 = vunpack.c.l.b16 %v4375
        %v4587 = vunpack.c.l.b16 %v4389
        %v4588 = vunpack.c.l.b16 %v4403
        %v4589 = vunpack.c.l.b16 %v4417
        %v4590 = vunpack.c.l.b16 %v4431
        %v4591 = vunpack.c.l.b16 %v4445
        %v4592 = vunpack.c.l.b16 %v4459
        %v4593 = vunpack.c.l.b16 %v4473
        %v4594 = vunpack.c.l.b16 %v4487
        %v4595 = vunpack.c.l.b16 %v4501
        %v4596 = vunpack.c.l.b16 %v4515
        %v4597 = vunpack.c.l.b16 %v4529
        %v4598 = vunpack.c.l.b16 %v4543
        %v4599 = vunpack.c.l.b16 %v4557
        %v4600 = vunpack.c.l.b16 %v4571
        %v4601 = vunpack.c.l.b16 %v4585
        %v4602 = vpack.c.b16 %v4587, %v4586
        %v4603 = vpack.c.b16 %v4589, %v4588
        %v4604 = vpack.c.b16 %v4591, %v4590
        %v4605 = vpack.c.b16 %v4593, %v4592
        %v4606 = vpack.c.b16 %v4595, %v4594
        %v4607 = vpack.c.b16 %v4597, %v4596
        %v4608 = vpack.c.b16 %v4599, %v4598
        %v4609 = vpack.c.b16 %v4601, %v4600
        %v4612 = vunpack.c.l.b16 %v4314
        %v4613 = vunpack.c.l.b16 %v4315
        %v4614 = vpack.c.b16 %v4613, %v4612
        %vm4616 = vcmask 130048
        %v4618 = vsel %vm4616, %v4602, 0
        %v4621 = vsel %vm4616, %v4603, 0
        %v4624 = vsel %vm4616, %v4604, 0
        %v4627 = vsel %vm4616, %v4605, 0
        %v4630 = vsel %vm4616, %v4606, 0
        %v4633 = vsel %vm4616, %v4607, 0
        %v4636 = vsel %vm4616, %v4608, 0
        %v4639 = vsel %vm4616, %v4609, 0
        %4641 = vmatprep.subr.bf16.mxu0 0
        %4642 = vmatpush1.bf16.msra.mxu0 %v4614
        %4643 = vmatprep.subr.bf16.mxu0 0
        %4644 = vmatpush1.bf16.msra.mxu0 0
        %4645 = vmatprep.subr.bf16.mxu0 0
        %4646 = vmatpush1.bf16.msra.mxu0 0
        %4647 = vmatprep.subr.bf16.mxu0 0
        %4648 = vmatpush1.bf16.msra.mxu0 0
        %4649 = vmatprep.subr.bf16.mxu0 0
        %4650 = vmatpush1.bf16.msra.mxu0 0
        %4651 = vmatprep.subr.bf16.mxu0 0
        %4652 = vmatpush1.bf16.msra.mxu0 0
        %4653 = vmatprep.subr.bf16.mxu0 0
        %4654 = vmatpush1.bf16.msra.mxu0 0
        %4655 = vmatprep.subr.bf16.mxu0 0
        %4656 = vmatpush1.bf16.msra.mxu0 0
        %4657 = vmatprep.subr.bf16.mxu0 0
        %4658 = vmatpush1.bf16.msra.mxu0 0
        %4659 = vmatprep.subr.bf16.mxu0 0
        %4660 = vmatpush1.bf16.msra.mxu0 0
        %4661 = vmatprep.subr.bf16.mxu0 0
        %4662 = vmatpush1.bf16.msra.mxu0 0
        %4663 = vmatprep.subr.bf16.mxu0 0
        %4664 = vmatpush1.bf16.msra.mxu0 0
        %4665 = vmatprep.subr.bf16.mxu0 0
        %4666 = vmatpush1.bf16.msra.mxu0 0
        %4667 = vmatprep.subr.bf16.mxu0 0
        %4668 = vmatpush1.bf16.msra.mxu0 0
        %4669 = vmatprep.subr.bf16.mxu0 0
        %4670 = vmatpush1.bf16.msra.mxu0 0
        %4671 = vmatprep.subr.bf16.mxu0 0
        %4672 = vmatpush1.bf16.msra.mxu0 0
        %4673 = vmatprep.mubr.bf16.mxu0 0
        %4674 = vmatmul.mubr.bf16.gmra.mrb[0].mxu0 %v4618
        %v4675 = vpop.f32.mrb[0].mxu0
        %v4676 = vadd.f32 0.0, %v4675
        %v4677 = vpop.f32.mrb[0].mxu0
        %v4678 = vpop.f32.mrb[0].mxu0
        %v4679 = vadd.f32 0.0, %v4678
        %v4680 = vpop.f32.mrb[0].mxu0
        %4681 = vmatprep.mubr.bf16.mxu0 0
        %4682 = vmatmul.mubr.bf16.gmra.mrb[0].mxu0 %v4621
        %v4683 = vpop.f32.mrb[0].mxu0
        %v4684 = vadd.f32 0.0, %v4683
        %v4685 = vpop.f32.mrb[0].mxu0
        %v4686 = vpop.f32.mrb[0].mxu0
        %v4687 = vadd.f32 0.0, %v4686
        %v4688 = vpop.f32.mrb[0].mxu0
        %4689 = vmatprep.mubr.bf16.mxu0 0
        %4690 = vmatmul.mubr.bf16.gmra.mrb[0].mxu0 %v4624
        %v4691 = vpop.f32.mrb[0].mxu0
        %v4692 = vadd.f32 0.0, %v4691
        %v4693 = vpop.f32.mrb[0].mxu0
        %v4694 = vpop.f32.mrb[0].mxu0
        %v4695 = vadd.f32 0.0, %v4694
        %v4696 = vpop.f32.mrb[0].mxu0
        %4697 = vmatprep.mubr.bf16.mxu0 0
        %4698 = vmatmul.mubr.bf16.gmra.mrb[0].mxu0 %v4627
        %v4699 = vpop.f32.mrb[0].mxu0
        %v4700 = vadd.f32 0.0, %v4699
        %v4701 = vpop.f32.mrb[0].mxu0
        %v4702 = vpop.f32.mrb[0].mxu0
        %v4703 = vadd.f32 0.0, %v4702
        %v4704 = vpop.f32.mrb[0].mxu0
        %4705 = vmatprep.mubr.bf16.mxu0 0
        %4706 = vmatmul.mubr.bf16.gmra.mrb[0].mxu0 %v4630
        %v4707 = vpop.f32.mrb[0].mxu0
        %v4708 = vadd.f32 0.0, %v4707
        %v4709 = vpop.f32.mrb[0].mxu0
        %v4710 = vpop.f32.mrb[0].mxu0
        %v4711 = vadd.f32 0.0, %v4710
        %v4712 = vpop.f32.mrb[0].mxu0
        %4713 = vmatprep.mubr.bf16.mxu0 0
        %4714 = vmatmul.mubr.bf16.gmra.mrb[0].mxu0 %v4633
        %v4715 = vpop.f32.mrb[0].mxu0
        %v4716 = vadd.f32 0.0, %v4715
        %v4717 = vpop.f32.mrb[0].mxu0
        %v4718 = vpop.f32.mrb[0].mxu0
        %v4719 = vadd.f32 0.0, %v4718
        %v4720 = vpop.f32.mrb[0].mxu0
        %4721 = vmatprep.mubr.bf16.mxu0 0
        %4722 = vmatmul.mubr.bf16.gmra.mrb[0].mxu0 %v4636
        %v4723 = vpop.f32.mrb[0].mxu0
        %v4724 = vadd.f32 0.0, %v4723
        %v4725 = vpop.f32.mrb[0].mxu0
        %v4726 = vpop.f32.mrb[0].mxu0
        %v4727 = vadd.f32 0.0, %v4726
        %v4728 = vpop.f32.mrb[0].mxu0
        %4729 = vmatprep.mubr.bf16.mxu0 0
        %4730 = vmatmul.mubr.bf16.gmra.mrb[0].mxu0 %v4639
        %v4731 = vpop.f32.mrb[0].mxu0
        %v4732 = vadd.f32 0.0, %v4731
        %v4733 = vpop.f32.mrb[0].mxu0
        %v4734 = vpop.f32.mrb[0].mxu0
        %v4735 = vadd.f32 0.0, %v4734
        %v4736 = vpop.f32.mrb[0].mxu0
        %4737 = vdwg.mxu0
        %v4754 = vunpack.c.l.b16 %v4330
        %v4755 = vunpack.c.l.b16 %v4331
        %v4756 = vunpack.c.l.b16 %v4332
        %v4757 = vunpack.c.l.b16 %v4333
        %v4758 = vunpack.c.l.b16 %v4334
        %v4759 = vunpack.c.l.b16 %v4335
        %v4760 = vunpack.c.l.b16 %v4336
        %v4761 = vunpack.c.l.b16 %v4337
        %v4762 = vunpack.c.l.b16 %v4338
        %v4763 = vunpack.c.l.b16 %v4339
        %v4764 = vunpack.c.l.b16 %v4340
        %v4765 = vunpack.c.l.b16 %v4341
        %v4766 = vunpack.c.l.b16 %v4342
        %v4767 = vunpack.c.l.b16 %v4343
        %v4768 = vunpack.c.l.b16 %v4344
        %v4769 = vunpack.c.l.b16 %v4345
        %v4770 = vpack.c.b16 %v4755, %v4754
        %v4771 = vpack.c.b16 %v4757, %v4756
        %v4772 = vpack.c.b16 %v4759, %v4758
        %v4773 = vpack.c.b16 %v4761, %v4760
        %v4774 = vpack.c.b16 %v4763, %v4762
        %v4775 = vpack.c.b16 %v4765, %v4764
        %v4776 = vpack.c.b16 %v4767, %v4766
        %v4777 = vpack.c.b16 %v4769, %v4768
        %v4780 = vunpack.c.l.b16 %v4312
        %v4781 = vunpack.c.l.b16 %v4313
        %v4782 = vpack.c.b16 %v4781, %v4780
        %v4785 = vsel %vm4616, %v4770, 0
        %v4788 = vsel %vm4616, %v4771, 0
        %v4791 = vsel %vm4616, %v4772, 0
        %v4794 = vsel %vm4616, %v4773, 0
        %v4797 = vsel %vm4616, %v4774, 0
        %v4800 = vsel %vm4616, %v4775, 0
        %v4803 = vsel %vm4616, %v4776, 0
        %v4806 = vsel %vm4616, %v4777, 0
        %4808 = vmatprep.subr.bf16.mxu0 0
        %4809 = vmatpush1.bf16.msra.mxu0 %v4782
        %4810 = vmatprep.subr.bf16.mxu0 0
        %4811 = vmatpush1.bf16.msra.mxu0 0
        %4812 = vmatprep.subr.bf16.mxu0 0
        %4813 = vmatpush1.bf16.msra.mxu0 0
        %4814 = vmatprep.subr.bf16.mxu0 0
        %4815 = vmatpush1.bf16.msra.mxu0 0
        %4816 = vmatprep.subr.bf16.mxu0 0
        %4817 = vmatpush1.bf16.msra.mxu0 0
        %4818 = vmatprep.subr.bf16.mxu0 0
        %4819 = vmatpush1.bf16.msra.mxu0 0
        %4820 = vmatprep.subr.bf16.mxu0 0
        %4821 = vmatpush1.bf16.msra.mxu0 0
        %4822 = vmatprep.subr.bf16.mxu0 0
        %4823 = vmatpush1.bf16.msra.mxu0 0
        %4824 = vmatprep.subr.bf16.mxu0 0
        %4825 = vmatpush1.bf16.msra.mxu0 0
        %4826 = vmatprep.subr.bf16.mxu0 0
        %4827 = vmatpush1.bf16.msra.mxu0 0
        %4828 = vmatprep.subr.bf16.mxu0 0
        %4829 = vmatpush1.bf16.msra.mxu0 0
        %4830 = vmatprep.subr.bf16.mxu0 0
        %4831 = vmatpush1.bf16.msra.mxu0 0
        %4832 = vmatprep.subr.bf16.mxu0 0
        %4833 = vmatpush1.bf16.msra.mxu0 0
        %4834 = vmatprep.subr.bf16.mxu0 0
        %4835 = vmatpush1.bf16.msra.mxu0 0
        %4836 = vmatprep.subr.bf16.mxu0 0
        %4837 = vmatpush1.bf16.msra.mxu0 0
        %4838 = vmatprep.subr.bf16.mxu0 0
        %4839 = vmatpush1.bf16.msra.mxu0 0
        %4840 = vmatprep.mubr.bf16.mxu0 0
        %4841 = vmatmul.mubr.bf16.gmra.mrb[0].mxu0 %v4785
        %v4842 = vpop.f32.mrb[0].mxu0
        %v4843 = vadd.f32 %v4676, %v4842
        %v4844 = vpop.f32.mrb[0].mxu0
        %v4845 = vpop.f32.mrb[0].mxu0
        %v4846 = vadd.f32 %v4679, %v4845
        %v4847 = vpop.f32.mrb[0].mxu0
        %4848 = vmatprep.mubr.bf16.mxu0 0
        %4849 = vmatmul.mubr.bf16.gmra.mrb[0].mxu0 %v4788
        %v4850 = vpop.f32.mrb[0].mxu0
        %v4851 = vadd.f32 %v4684, %v4850
        %v4852 = vpop.f32.mrb[0].mxu0
        %v4853 = vpop.f32.mrb[0].mxu0
        %v4854 = vadd.f32 %v4687, %v4853
        %v4855 = vpop.f32.mrb[0].mxu0
        %4856 = vmatprep.mubr.bf16.mxu0 0
        %4857 = vmatmul.mubr.bf16.gmra.mrb[0].mxu0 %v4791
        %v4858 = vpop.f32.mrb[0].mxu0
        %v4859 = vadd.f32 %v4692, %v4858
        %v4860 = vpop.f32.mrb[0].mxu0
        %v4861 = vpop.f32.mrb[0].mxu0
        %v4862 = vadd.f32 %v4695, %v4861
        %v4863 = vpop.f32.mrb[0].mxu0
        %4864 = vmatprep.mubr.bf16.mxu0 0
        %4865 = vmatmul.mubr.bf16.gmra.mrb[0].mxu0 %v4794
        %v4866 = vpop.f32.mrb[0].mxu0
        %v4867 = vadd.f32 %v4700, %v4866
        %v4868 = vpop.f32.mrb[0].mxu0
        %v4869 = vpop.f32.mrb[0].mxu0
        %v4870 = vadd.f32 %v4703, %v4869
        %v4871 = vpop.f32.mrb[0].mxu0
        %4872 = vmatprep.mubr.bf16.mxu0 0
        %4873 = vmatmul.mubr.bf16.gmra.mrb[0].mxu0 %v4797
        %v4874 = vpop.f32.mrb[0].mxu0
        %v4875 = vadd.f32 %v4708, %v4874
        %v4876 = vpop.f32.mrb[0].mxu0
        %v4877 = vpop.f32.mrb[0].mxu0
        %v4878 = vadd.f32 %v4711, %v4877
        %v4879 = vpop.f32.mrb[0].mxu0
        %4880 = vmatprep.mubr.bf16.mxu0 0
        %4881 = vmatmul.mubr.bf16.gmra.mrb[0].mxu0 %v4800
        %v4882 = vpop.f32.mrb[0].mxu0
        %v4883 = vadd.f32 %v4716, %v4882
        %v4884 = vpop.f32.mrb[0].mxu0
        %v4885 = vpop.f32.mrb[0].mxu0
        %v4886 = vadd.f32 %v4719, %v4885
        %v4887 = vpop.f32.mrb[0].mxu0
        %4888 = vmatprep.mubr.bf16.mxu0 0
        %4889 = vmatmul.mubr.bf16.gmra.mrb[0].mxu0 %v4803
        %v4890 = vpop.f32.mrb[0].mxu0
        %v4891 = vadd.f32 %v4724, %v4890
        %v4892 = vpop.f32.mrb[0].mxu0
        %v4893 = vpop.f32.mrb[0].mxu0
        %v4894 = vadd.f32 %v4727, %v4893
        %v4895 = vpop.f32.mrb[0].mxu0
        %4896 = vmatprep.mubr.bf16.mxu0 0
        %4897 = vmatmul.mubr.bf16.gmra.mrb[0].mxu0 %v4806
        %v4898 = vpop.f32.mrb[0].mxu0
        %v4899 = vadd.f32 %v4732, %v4898
        %v4900 = vpop.f32.mrb[0].mxu0
        %v4901 = vpop.f32.mrb[0].mxu0
        %v4902 = vadd.f32 %v4735, %v4901
        %v4903 = vpop.f32.mrb[0].mxu0
        %4904 = vdwg.mxu0
        %v4905 = vld [vmem:[#allocation3] sm:$0xe]
        %v4906 = vld [vmem:[#allocation3 + $0x8] sm:$0xe]
        %v4907 = vld [vmem:[#allocation3 + $0x10] sm:$0xe]
        %v4908 = vld [vmem:[#allocation3 + $0x18] sm:$0xe]
        %v4909 = vld [vmem:[#allocation3 + $0x20] sm:$0xe]
        %v4910 = vld [vmem:[#allocation3 + $0x28] sm:$0xe]
        %v4911 = vld [vmem:[#allocation3 + $0x30] sm:$0xe]
        %v4912 = vld [vmem:[#allocation3 + $0x38] sm:$0xe]
        %v4913 = vld [vmem:[#allocation3 + $0x50] sm:$0xe]
        %v4914 = vld [vmem:[#allocation3 + $0x58] sm:$0xe]
        %v4915 = vld [vmem:[#allocation3 + $0x60] sm:$0xe]
        %v4916 = vld [vmem:[#allocation3 + $0x68] sm:$0xe]
        %v4917 = vld [vmem:[#allocation3 + $0x70] sm:$0xe]
        %v4918 = vld [vmem:[#allocation3 + $0x78] sm:$0xe]
        %v4919 = vld [vmem:[#allocation3 + $0x80] sm:$0xe]
        %v4920 = vld [vmem:[#allocation3 + $0x88] sm:$0xe]
        %v4953 = vrot.slane %v4905, 5
        %v4954 = vrot.slane %v4953, 4
        %v4955 = vrot.slane %v4346, 5
        %v4956 = vsel %vm1772, %v4954, %v4955
        %v4957 = vrot.slane %v4906, 5
        %v4958 = vrot.slane %v4957, 4
        %v4959 = vrot.slane %v4347, 5
        %v4960 = vsel %vm1772, %v4958, %v4959
        %v4961 = vrot.slane %v4907, 5
        %v4962 = vrot.slane %v4961, 4
        %v4963 = vrot.slane %v4348, 5
        %v4964 = vsel %vm1772, %v4962, %v4963
        %v4965 = vrot.slane %v4908, 5
        %v4966 = vrot.slane %v4965, 4
        %v4967 = vrot.slane %v4349, 5
        %v4968 = vsel %vm1772, %v4966, %v4967
        %v4969 = vrot.slane %v4909, 5
        %v4970 = vrot.slane %v4969, 4
        %v4971 = vrot.slane %v4350, 5
        %v4972 = vsel %vm1772, %v4970, %v4971
        %v4973 = vrot.slane %v4910, 5
        %v4974 = vrot.slane %v4973, 4
        %v4975 = vrot.slane %v4351, 5
        %v4976 = vsel %vm1772, %v4974, %v4975
        %v4977 = vrot.slane %v4911, 5
        %v4978 = vrot.slane %v4977, 4
        %v4979 = vrot.slane %v4352, 5
        %v4980 = vsel %vm1772, %v4978, %v4979
        %v4981 = vrot.slane %v4912, 5
        %v4982 = vrot.slane %v4981, 4
        %v4983 = vrot.slane %v4353, 5
        %v4984 = vsel %vm1772, %v4982, %v4983
        %v4985 = vrot.slane %v4913, 5
        %v4986 = vrot.slane %v4985, 4
        %v4987 = vrot.slane %v4354, 5
        %v4988 = vsel %vm1772, %v4986, %v4987
        %v4989 = vrot.slane %v4914, 5
        %v4990 = vrot.slane %v4989, 4
        %v4991 = vrot.slane %v4355, 5
        %v4992 = vsel %vm1772, %v4990, %v4991
        %v4993 = vrot.slane %v4915, 5
        %v4994 = vrot.slane %v4993, 4
        %v4995 = vrot.slane %v4356, 5
        %v4996 = vsel %vm1772, %v4994, %v4995
        %v4997 = vrot.slane %v4916, 5
        %v4998 = vrot.slane %v4997, 4
        %v4999 = vrot.slane %v4357, 5
        %v5000 = vsel %vm1772, %v4998, %v4999
        %v5001 = vrot.slane %v4917, 5
        %v5002 = vrot.slane %v5001, 4
        %v5003 = vrot.slane %v4358, 5
        %v5004 = vsel %vm1772, %v5002, %v5003
        %v5005 = vrot.slane %v4918, 5
        %v5006 = vrot.slane %v5005, 4
        %v5007 = vrot.slane %v4359, 5
        %v5008 = vsel %vm1772, %v5006, %v5007
        %v5009 = vrot.slane %v4919, 5
        %v5010 = vrot.slane %v5009, 4
        %v5011 = vrot.slane %v4360, 5
        %v5012 = vsel %vm1772, %v5010, %v5011
        %v5013 = vrot.slane %v4920, 5
        %v5014 = vrot.slane %v5013, 4
        %v5015 = vrot.slane %v4361, 5
        %v5016 = vsel %vm1772, %v5014, %v5015
        %v5017 = vunpack.c.l.b16 %v4956
        %v5018 = vunpack.c.l.b16 %v4960
        %v5019 = vunpack.c.l.b16 %v4964
        %v5020 = vunpack.c.l.b16 %v4968
        %v5021 = vunpack.c.l.b16 %v4972
        %v5022 = vunpack.c.l.b16 %v4976
        %v5023 = vunpack.c.l.b16 %v4980
        %v5024 = vunpack.c.l.b16 %v4984
        %v5025 = vunpack.c.l.b16 %v4988
        %v5026 = vunpack.c.l.b16 %v4992
        %v5027 = vunpack.c.l.b16 %v4996
        %v5028 = vunpack.c.l.b16 %v5000
        %v5029 = vunpack.c.l.b16 %v5004
        %v5030 = vunpack.c.l.b16 %v5008
        %v5031 = vunpack.c.l.b16 %v5012
        %v5032 = vunpack.c.l.b16 %v5016
        %v5033 = vpack.c.b16 %v5018, %v5017
        %v5034 = vpack.c.b16 %v5020, %v5019
        %v5035 = vpack.c.b16 %v5022, %v5021
        %v5036 = vpack.c.b16 %v5024, %v5023
        %v5037 = vpack.c.b16 %v5026, %v5025
        %v5038 = vpack.c.b16 %v5028, %v5027
        %v5039 = vpack.c.b16 %v5030, %v5029
        %v5040 = vpack.c.b16 %v5032, %v5031
        %v5043 = vunpack.c.l.b16 %v4316
        %v5044 = vunpack.c.l.b16 %v4317
        %v5045 = vpack.c.b16 %v5044, %v5043
        %v5048 = vsel %vm4616, %v5033, 0
        %v5051 = vsel %vm4616, %v5034, 0
        %v5054 = vsel %vm4616, %v5035, 0
        %v5057 = vsel %vm4616, %v5036, 0
        %v5060 = vsel %vm4616, %v5037, 0
        %v5063 = vsel %vm4616, %v5038, 0
        %v5066 = vsel %vm4616, %v5039, 0
        %v5069 = vsel %vm4616, %v5040, 0
        %5071 = vmatprep.subr.bf16.mxu0 0
        %5072 = vmatpush1.bf16.msra.mxu0 %v5045
        %5073 = vmatprep.subr.bf16.mxu0 0
        %5074 = vmatpush1.bf16.msra.mxu0 0
        %5075 = vmatprep.subr.bf16.mxu0 0
        %5076 = vmatpush1.bf16.msra.mxu0 0
        %5077 = vmatprep.subr.bf16.mxu0 0
        %5078 = vmatpush1.bf16.msra.mxu0 0
        %5079 = vmatprep.subr.bf16.mxu0 0
        %5080 = vmatpush1.bf16.msra.mxu0 0
        %5081 = vmatprep.subr.bf16.mxu0 0
        %5082 = vmatpush1.bf16.msra.mxu0 0
        %5083 = vmatprep.subr.bf16.mxu0 0
        %5084 = vmatpush1.bf16.msra.mxu0 0
        %5085 = vmatprep.subr.bf16.mxu0 0
        %5086 = vmatpush1.bf16.msra.mxu0 0
        %5087 = vmatprep.subr.bf16.mxu0 0
        %5088 = vmatpush1.bf16.msra.mxu0 0
        %5089 = vmatprep.subr.bf16.mxu0 0
        %5090 = vmatpush1.bf16.msra.mxu0 0
        %5091 = vmatprep.subr.bf16.mxu0 0
        %5092 = vmatpush1.bf16.msra.mxu0 0
        %5093 = vmatprep.subr.bf16.mxu0 0
        %5094 = vmatpush1.bf16.msra.mxu0 0
        %5095 = vmatprep.subr.bf16.mxu0 0
        %5096 = vmatpush1.bf16.msra.mxu0 0
        %5097 = vmatprep.subr.bf16.mxu0 0
        %5098 = vmatpush1.bf16.msra.mxu0 0
        %5099 = vmatprep.subr.bf16.mxu0 0
        %5100 = vmatpush1.bf16.msra.mxu0 0
        %5101 = vmatprep.subr.bf16.mxu0 0
        %5102 = vmatpush1.bf16.msra.mxu0 0
        %5103 = vmatprep.mubr.bf16.mxu0 0
        %5104 = vmatmul.mubr.bf16.gmra.mrb[0].mxu0 %v5048
        %v5105 = vpop.f32.mrb[0].mxu0
        %v5106 = vadd.f32 0.0, %v5105
        %v5107 = vpop.f32.mrb[0].mxu0
        %v5108 = vpop.f32.mrb[0].mxu0
        %v5109 = vadd.f32 0.0, %v5108
        %v5110 = vpop.f32.mrb[0].mxu0
        %5111 = vmatprep.mubr.bf16.mxu0 0
        %5112 = vmatmul.mubr.bf16.gmra.mrb[0].mxu0 %v5051
        %v5113 = vpop.f32.mrb[0].mxu0
        %v5114 = vadd.f32 0.0, %v5113
        %v5115 = vpop.f32.mrb[0].mxu0
        %v5116 = vpop.f32.mrb[0].mxu0
        %v5117 = vadd.f32 0.0, %v5116
        %v5118 = vpop.f32.mrb[0].mxu0
        %5119 = vmatprep.mubr.bf16.mxu0 0
        %5120 = vmatmul.mubr.bf16.gmra.mrb[0].mxu0 %v5054
        %v5121 = vpop.f32.mrb[0].mxu0
        %v5122 = vadd.f32 0.0, %v5121
        %v5123 = vpop.f32.mrb[0].mxu0
        %v5124 = vpop.f32.mrb[0].mxu0
        %v5125 = vadd.f32 0.0, %v5124
        %v5126 = vpop.f32.mrb[0].mxu0
        %5127 = vmatprep.mubr.bf16.mxu0 0
        %5128 = vmatmul.mubr.bf16.gmra.mrb[0].mxu0 %v5057
        %v5129 = vpop.f32.mrb[0].mxu0
        %v5130 = vadd.f32 0.0, %v5129
        %v5131 = vpop.f32.mrb[0].mxu0
        %v5132 = vpop.f32.mrb[0].mxu0
        %v5133 = vadd.f32 0.0, %v5132
        %v5134 = vpop.f32.mrb[0].mxu0
        %5135 = vmatprep.mubr.bf16.mxu0 0
        %5136 = vmatmul.mubr.bf16.gmra.mrb[0].mxu0 %v5060
        %v5137 = vpop.f32.mrb[0].mxu0
        %v5138 = vadd.f32 0.0, %v5137
        %v5139 = vpop.f32.mrb[0].mxu0
        %v5140 = vpop.f32.mrb[0].mxu0
        %v5141 = vadd.f32 0.0, %v5140
        %v5142 = vpop.f32.mrb[0].mxu0
        %5143 = vmatprep.mubr.bf16.mxu0 0
        %5144 = vmatmul.mubr.bf16.gmra.mrb[0].mxu0 %v5063
        %v5145 = vpop.f32.mrb[0].mxu0
        %v5146 = vadd.f32 0.0, %v5145
        %v5147 = vpop.f32.mrb[0].mxu0
        %v5148 = vpop.f32.mrb[0].mxu0
        %v5149 = vadd.f32 0.0, %v5148
        %v5150 = vpop.f32.mrb[0].mxu0
        %5151 = vmatprep.mubr.bf16.mxu0 0
        %5152 = vmatmul.mubr.bf16.gmra.mrb[0].mxu0 %v5066
        %v5153 = vpop.f32.mrb[0].mxu0
        %v5154 = vadd.f32 0.0, %v5153
        %v5155 = vpop.f32.mrb[0].mxu0
        %v5156 = vpop.f32.mrb[0].mxu0
        %v5157 = vadd.f32 0.0, %v5156
        %v5158 = vpop.f32.mrb[0].mxu0
        %5159 = vmatprep.mubr.bf16.mxu0 0
        %5160 = vmatmul.mubr.bf16.gmra.mrb[0].mxu0 %v5069
        %v5161 = vpop.f32.mrb[0].mxu0
        %v5162 = vadd.f32 0.0, %v5161
        %v5163 = vpop.f32.mrb[0].mxu0
        %v5164 = vpop.f32.mrb[0].mxu0
        %v5165 = vadd.f32 0.0, %v5164
        %v5166 = vpop.f32.mrb[0].mxu0
        %5167 = vdwg.mxu0
        %v5168 = vadd.f32 %v4843, %v5106
        %v5169 = vadd.f32 %v4846, %v5109
        %v5170 = vadd.f32 %v4851, %v5114
        %v5171 = vadd.f32 %v4854, %v5117
        %v5172 = vadd.f32 %v4859, %v5122
        %v5173 = vadd.f32 %v4862, %v5125
        %v5174 = vadd.f32 %v4867, %v5130
        %v5175 = vadd.f32 %v4870, %v5133
        %v5176 = vadd.f32 %v4875, %v5138
        %v5177 = vadd.f32 %v4878, %v5141
        %v5178 = vadd.f32 %v4883, %v5146
        %v5179 = vadd.f32 %v4886, %v5149
        %v5180 = vadd.f32 %v4891, %v5154
        %v5181 = vadd.f32 %v4894, %v5157
        %v5182 = vadd.f32 %v4899, %v5162
        %v5183 = vadd.f32 %v4902, %v5165
        %v5184 = vld [vmem:[%s4213] sm:$0xf]
        %v5185 = vld [vmem:[%s4213 + $0x8] sm:$0xf]
        %v5186 = vld [vmem:[%s4213 + $0x10] sm:$0xf]
        %v5187 = vld [vmem:[%s4213 + $0x18] sm:$0xf]
        %v5188 = vld [vmem:[%s4213 + $0x20] sm:$0xf]
        %v5189 = vld [vmem:[%s4213 + $0x28] sm:$0xf]
        %v5190 = vld [vmem:[%s4213 + $0x30] sm:$0xf]
        %v5191 = vld [vmem:[%s4213 + $0x38] sm:$0xf]
        %v5192 = vld [vmem:[%s4213 + $0x50] sm:$0xf]
        %v5193 = vld [vmem:[%s4213 + $0x58] sm:$0xf]
        %v5194 = vld [vmem:[%s4213 + $0x60] sm:$0xf]
        %v5195 = vld [vmem:[%s4213 + $0x68] sm:$0xf]
        %v5196 = vld [vmem:[%s4213 + $0x70] sm:$0xf]
        %v5197 = vld [vmem:[%s4213 + $0x78] sm:$0xf]
        %v5198 = vld [vmem:[%s4213 + $0x80] sm:$0xf]
        %v5199 = vld [vmem:[%s4213 + $0x88] sm:$0xf]
        %v5216 = vunpack.c.l.b16 %v5184
        %v5217 = vunpack.c.l.b16 %v5185
        %v5218 = vunpack.c.l.b16 %v5186
        %v5219 = vunpack.c.l.b16 %v5187
        %v5220 = vunpack.c.l.b16 %v5188
        %v5221 = vunpack.c.l.b16 %v5189
        %v5222 = vunpack.c.l.b16 %v5190
        %v5223 = vunpack.c.l.b16 %v5191
        %v5224 = vunpack.c.l.b16 %v5192
        %v5225 = vunpack.c.l.b16 %v5193
        %v5226 = vunpack.c.l.b16 %v5194
        %v5227 = vunpack.c.l.b16 %v5195
        %v5228 = vunpack.c.l.b16 %v5196
        %v5229 = vunpack.c.l.b16 %v5197
        %v5230 = vunpack.c.l.b16 %v5198
        %v5231 = vunpack.c.l.b16 %v5199
        %v5232 = vpack.c.b16 %v5217, %v5216
        %v5233 = vpack.c.b16 %v5219, %v5218
        %v5234 = vpack.c.b16 %v5221, %v5220
        %v5235 = vpack.c.b16 %v5223, %v5222
        %v5236 = vpack.c.b16 %v5225, %v5224
        %v5237 = vpack.c.b16 %v5227, %v5226
        %v5238 = vpack.c.b16 %v5229, %v5228
        %v5239 = vpack.c.b16 %v5231, %v5230
        %v5242 = vunpack.c.l.b16 %v4318
        %v5243 = vunpack.c.l.b16 %v4319
        %v5244 = vpack.c.b16 %v5243, %v5242
        %v5247 = vsel %vm4616, %v5232, 0
        %v5250 = vsel %vm4616, %v5233, 0
        %v5253 = vsel %vm4616, %v5234, 0
        %v5256 = vsel %vm4616, %v5235, 0
        %v5259 = vsel %vm4616, %v5236, 0
        %v5262 = vsel %vm4616, %v5237, 0
        %v5265 = vsel %vm4616, %v5238, 0
        %v5268 = vsel %vm4616, %v5239, 0
        %5270 = vmatprep.subr.bf16.mxu0 0
        %5271 = vmatpush1.bf16.msra.mxu0 %v5244
        %5272 = vmatprep.subr.bf16.mxu0 0
        %5273 = vmatpush1.bf16.msra.mxu0 0
        %5274 = vmatprep.subr.bf16.mxu0 0
        %5275 = vmatpush1.bf16.msra.mxu0 0
        %5276 = vmatprep.subr.bf16.mxu0 0
        %5277 = vmatpush1.bf16.msra.mxu0 0
        %5278 = vmatprep.subr.bf16.mxu0 0
        %5279 = vmatpush1.bf16.msra.mxu0 0
        %5280 = vmatprep.subr.bf16.mxu0 0
        %5281 = vmatpush1.bf16.msra.mxu0 0
        %5282 = vmatprep.subr.bf16.mxu0 0
        %5283 = vmatpush1.bf16.msra.mxu0 0
        %5284 = vmatprep.subr.bf16.mxu0 0
        %5285 = vmatpush1.bf16.msra.mxu0 0
        %5286 = vmatprep.subr.bf16.mxu0 0
        %5287 = vmatpush1.bf16.msra.mxu0 0
        %5288 = vmatprep.subr.bf16.mxu0 0
        %5289 = vmatpush1.bf16.msra.mxu0 0
        %5290 = vmatprep.subr.bf16.mxu0 0
        %5291 = vmatpush1.bf16.msra.mxu0 0
        %5292 = vmatprep.subr.bf16.mxu0 0
        %5293 = vmatpush1.bf16.msra.mxu0 0
        %5294 = vmatprep.subr.bf16.mxu0 0
        %5295 = vmatpush1.bf16.msra.mxu0 0
        %5296 = vmatprep.subr.bf16.mxu0 0
        %5297 = vmatpush1.bf16.msra.mxu0 0
        %5298 = vmatprep.subr.bf16.mxu0 0
        %5299 = vmatpush1.bf16.msra.mxu0 0
        %5300 = vmatprep.subr.bf16.mxu0 0
        %5301 = vmatpush1.bf16.msra.mxu0 0
        %5302 = vmatprep.mubr.bf16.mxu0 0
        %5303 = vmatmul.mubr.bf16.gmra.mrb[0].mxu0 %v5247
        %v5304 = vpop.f32.mrb[0].mxu0
        %v5305 = vadd.f32 0.0, %v5304
        %v5306 = vpop.f32.mrb[0].mxu0
        %v5307 = vpop.f32.mrb[0].mxu0
        %v5308 = vadd.f32 0.0, %v5307
        %v5309 = vpop.f32.mrb[0].mxu0
        %5310 = vmatprep.mubr.bf16.mxu0 0
        %5311 = vmatmul.mubr.bf16.gmra.mrb[0].mxu0 %v5250
        %v5312 = vpop.f32.mrb[0].mxu0
        %v5313 = vadd.f32 0.0, %v5312
        %v5314 = vpop.f32.mrb[0].mxu0
        %v5315 = vpop.f32.mrb[0].mxu0
        %v5316 = vadd.f32 0.0, %v5315
        %v5317 = vpop.f32.mrb[0].mxu0
        %5318 = vmatprep.mubr.bf16.mxu0 0
        %5319 = vmatmul.mubr.bf16.gmra.mrb[0].mxu0 %v5253
        %v5320 = vpop.f32.mrb[0].mxu0
        %v5321 = vadd.f32 0.0, %v5320
        %v5322 = vpop.f32.mrb[0].mxu0
        %v5323 = vpop.f32.mrb[0].mxu0
        %v5324 = vadd.f32 0.0, %v5323
        %v5325 = vpop.f32.mrb[0].mxu0
        %5326 = vmatprep.mubr.bf16.mxu0 0
        %5327 = vmatmul.mubr.bf16.gmra.mrb[0].mxu0 %v5256
        %v5328 = vpop.f32.mrb[0].mxu0
        %v5329 = vadd.f32 0.0, %v5328
        %v5330 = vpop.f32.mrb[0].mxu0
        %v5331 = vpop.f32.mrb[0].mxu0
        %v5332 = vadd.f32 0.0, %v5331
        %v5333 = vpop.f32.mrb[0].mxu0
        %5334 = vmatprep.mubr.bf16.mxu0 0
        %5335 = vmatmul.mubr.bf16.gmra.mrb[0].mxu0 %v5259
        %v5336 = vpop.f32.mrb[0].mxu0
        %v5337 = vadd.f32 0.0, %v5336
        %v5338 = vpop.f32.mrb[0].mxu0
        %v5339 = vpop.f32.mrb[0].mxu0
        %v5340 = vadd.f32 0.0, %v5339
        %v5341 = vpop.f32.mrb[0].mxu0
        %5342 = vmatprep.mubr.bf16.mxu0 0
        %5343 = vmatmul.mubr.bf16.gmra.mrb[0].mxu0 %v5262
        %v5344 = vpop.f32.mrb[0].mxu0
        %v5345 = vadd.f32 0.0, %v5344
        %v5346 = vpop.f32.mrb[0].mxu0
        %v5347 = vpop.f32.mrb[0].mxu0
        %v5348 = vadd.f32 0.0, %v5347
        %v5349 = vpop.f32.mrb[0].mxu0
        %5350 = vmatprep.mubr.bf16.mxu0 0
        %5351 = vmatmul.mubr.bf16.gmra.mrb[0].mxu0 %v5265
        %v5352 = vpop.f32.mrb[0].mxu0
        %v5353 = vadd.f32 0.0, %v5352
        %v5354 = vpop.f32.mrb[0].mxu0
        %v5355 = vpop.f32.mrb[0].mxu0
        %v5356 = vadd.f32 0.0, %v5355
        %v5357 = vpop.f32.mrb[0].mxu0
        %5358 = vmatprep.mubr.bf16.mxu0 0
        %5359 = vmatmul.mubr.bf16.gmra.mrb[0].mxu0 %v5268
        %v5360 = vpop.f32.mrb[0].mxu0
        %v5361 = vadd.f32 0.0, %v5360
        %v5362 = vpop.f32.mrb[0].mxu0
        %v5363 = vpop.f32.mrb[0].mxu0
        %v5364 = vadd.f32 0.0, %v5363
        %v5365 = vpop.f32.mrb[0].mxu0
        %5366 = vdwg.mxu0
        %v5367 = vadd.f32 %v5168, %v5305
        %v5368 = vadd.f32 %v5169, %v5308
        %v5369 = vadd.f32 %v5170, %v5313
        %v5370 = vadd.f32 %v5171, %v5316
        %v5371 = vadd.f32 %v5172, %v5321
        %v5372 = vadd.f32 %v5173, %v5324
        %v5373 = vadd.f32 %v5174, %v5329
        %v5374 = vadd.f32 %v5175, %v5332
        %v5375 = vadd.f32 %v5176, %v5337
        %v5376 = vadd.f32 %v5177, %v5340
        %v5377 = vadd.f32 %v5178, %v5345
        %v5378 = vadd.f32 %v5179, %v5348
        %v5379 = vadd.f32 %v5180, %v5353
        %v5380 = vadd.f32 %v5181, %v5356
        %v5381 = vadd.f32 %v5182, %v5361
        %v5382 = vadd.f32 %v5183, %v5364
        %v5383 = vld [vmem:[%s4213] sm:$0xf]
        %v5384 = vld [vmem:[%s4213 + $0x4] sm:$0x1]
        %v5385 = vld [vmem:[%s4213 + $0x8] sm:$0xf]
        %v5386 = vld [vmem:[%s4213 + $0xc] sm:$0x1]
        %v5387 = vld [vmem:[%s4213 + $0x10] sm:$0xf]
        %v5388 = vld [vmem:[%s4213 + $0x14] sm:$0x1]
        %v5389 = vld [vmem:[%s4213 + $0x18] sm:$0xf]
        %v5390 = vld [vmem:[%s4213 + $0x1c] sm:$0x1]
        %v5391 = vld [vmem:[%s4213 + $0x20] sm:$0xf]
        %v5392 = vld [vmem:[%s4213 + $0x24] sm:$0x1]
        %v5393 = vld [vmem:[%s4213 + $0x28] sm:$0xf]
        %v5394 = vld [vmem:[%s4213 + $0x2c] sm:$0x1]
        %v5395 = vld [vmem:[%s4213 + $0x30] sm:$0xf]
        %v5396 = vld [vmem:[%s4213 + $0x34] sm:$0x1]
        %v5397 = vld [vmem:[%s4213 + $0x38] sm:$0xf]
        %v5398 = vld [vmem:[%s4213 + $0x3c] sm:$0x1]
        %v5399 = vld [vmem:[%s4213 + $0x50] sm:$0xf]
        %v5400 = vld [vmem:[%s4213 + $0x54] sm:$0x1]
        %v5401 = vld [vmem:[%s4213 + $0x58] sm:$0xf]
        %v5402 = vld [vmem:[%s4213 + $0x5c] sm:$0x1]
        %v5403 = vld [vmem:[%s4213 + $0x60] sm:$0xf]
        %v5404 = vld [vmem:[%s4213 + $0x64] sm:$0x1]
        %v5405 = vld [vmem:[%s4213 + $0x68] sm:$0xf]
        %v5406 = vld [vmem:[%s4213 + $0x6c] sm:$0x1]
        %v5407 = vld [vmem:[%s4213 + $0x70] sm:$0xf]
        %v5408 = vld [vmem:[%s4213 + $0x74] sm:$0x1]
        %v5409 = vld [vmem:[%s4213 + $0x78] sm:$0xf]
        %v5410 = vld [vmem:[%s4213 + $0x7c] sm:$0x1]
        %v5411 = vld [vmem:[%s4213 + $0x80] sm:$0xf]
        %v5412 = vld [vmem:[%s4213 + $0x84] sm:$0x1]
        %v5413 = vld [vmem:[%s4213 + $0x88] sm:$0xf]
        %v5414 = vld [vmem:[%s4213 + $0x8c] sm:$0x1]
        %v5416 = vshrl.u32 %v5383, 16
        %v5418 = vrot.slane %v5416, 4
        %v5419 = vshll.u32 %v5383, 16
        %v5421 = vrot.slane %v5419, 5
        %v5422 = vor.u32 %v5418, %v5421
        %v5423 = vrot.slane %v5422, 4
        %v5425 = vshll.u32 %v5384, 16
        %v5427 = vrot.slane %v5425, 5
        %v5428 = vsel %vm1183, %v5423, %v5427
        %v5430 = vshrl.u32 %v5385, 16
        %v5432 = vrot.slane %v5430, 4
        %v5433 = vshll.u32 %v5385, 16
        %v5435 = vrot.slane %v5433, 5
        %v5436 = vor.u32 %v5432, %v5435
        %v5437 = vrot.slane %v5436, 4
        %v5439 = vshll.u32 %v5386, 16
        %v5441 = vrot.slane %v5439, 5
        %v5442 = vsel %vm1183, %v5437, %v5441
        %v5444 = vshrl.u32 %v5387, 16
        %v5446 = vrot.slane %v5444, 4
        %v5447 = vshll.u32 %v5387, 16
        %v5449 = vrot.slane %v5447, 5
        %v5450 = vor.u32 %v5446, %v5449
        %v5451 = vrot.slane %v5450, 4
        %v5453 = vshll.u32 %v5388, 16
        %v5455 = vrot.slane %v5453, 5
        %v5456 = vsel %vm1183, %v5451, %v5455
        %v5458 = vshrl.u32 %v5389, 16
        %v5460 = vrot.slane %v5458, 4
        %v5461 = vshll.u32 %v5389, 16
        %v5463 = vrot.slane %v5461, 5
        %v5464 = vor.u32 %v5460, %v5463
        %v5465 = vrot.slane %v5464, 4
        %v5467 = vshll.u32 %v5390, 16
        %v5469 = vrot.slane %v5467, 5
        %v5470 = vsel %vm1183, %v5465, %v5469
        %v5472 = vshrl.u32 %v5391, 16
        %v5474 = vrot.slane %v5472, 4
        %v5475 = vshll.u32 %v5391, 16
        %v5477 = vrot.slane %v5475, 5
        %v5478 = vor.u32 %v5474, %v5477
        %v5479 = vrot.slane %v5478, 4
        %v5481 = vshll.u32 %v5392, 16
        %v5483 = vrot.slane %v5481, 5
        %v5484 = vsel %vm1183, %v5479, %v5483
        %v5486 = vshrl.u32 %v5393, 16
        %v5488 = vrot.slane %v5486, 4
        %v5489 = vshll.u32 %v5393, 16
        %v5491 = vrot.slane %v5489, 5
        %v5492 = vor.u32 %v5488, %v5491
        %v5493 = vrot.slane %v5492, 4
        %v5495 = vshll.u32 %v5394, 16
        %v5497 = vrot.slane %v5495, 5
        %v5498 = vsel %vm1183, %v5493, %v5497
        %v5500 = vshrl.u32 %v5395, 16
        %v5502 = vrot.slane %v5500, 4
        %v5503 = vshll.u32 %v5395, 16
        %v5505 = vrot.slane %v5503, 5
        %v5506 = vor.u32 %v5502, %v5505
        %v5507 = vrot.slane %v5506, 4
        %v5509 = vshll.u32 %v5396, 16
        %v5511 = vrot.slane %v5509, 5
        %v5512 = vsel %vm1183, %v5507, %v5511
        %v5514 = vshrl.u32 %v5397, 16
        %v5516 = vrot.slane %v5514, 4
        %v5517 = vshll.u32 %v5397, 16
        %v5519 = vrot.slane %v5517, 5
        %v5520 = vor.u32 %v5516, %v5519
        %v5521 = vrot.slane %v5520, 4
        %v5523 = vshll.u32 %v5398, 16
        %v5525 = vrot.slane %v5523, 5
        %v5526 = vsel %vm1183, %v5521, %v5525
        %v5528 = vshrl.u32 %v5399, 16
        %v5530 = vrot.slane %v5528, 4
        %v5531 = vshll.u32 %v5399, 16
        %v5533 = vrot.slane %v5531, 5
        %v5534 = vor.u32 %v5530, %v5533
        %v5535 = vrot.slane %v5534, 4
        %v5537 = vshll.u32 %v5400, 16
        %v5539 = vrot.slane %v5537, 5
        %v5540 = vsel %vm1183, %v5535, %v5539
        %v5542 = vshrl.u32 %v5401, 16
        %v5544 = vrot.slane %v5542, 4
        %v5545 = vshll.u32 %v5401, 16
        %v5547 = vrot.slane %v5545, 5
        %v5548 = vor.u32 %v5544, %v5547
        %v5549 = vrot.slane %v5548, 4
        %v5551 = vshll.u32 %v5402, 16
        %v5553 = vrot.slane %v5551, 5
        %v5554 = vsel %vm1183, %v5549, %v5553
        %v5556 = vshrl.u32 %v5403, 16
        %v5558 = vrot.slane %v5556, 4
        %v5559 = vshll.u32 %v5403, 16
        %v5561 = vrot.slane %v5559, 5
        %v5562 = vor.u32 %v5558, %v5561
        %v5563 = vrot.slane %v5562, 4
        %v5565 = vshll.u32 %v5404, 16
        %v5567 = vrot.slane %v5565, 5
        %v5568 = vsel %vm1183, %v5563, %v5567
        %v5570 = vshrl.u32 %v5405, 16
        %v5572 = vrot.slane %v5570, 4
        %v5573 = vshll.u32 %v5405, 16
        %v5575 = vrot.slane %v5573, 5
        %v5576 = vor.u32 %v5572, %v5575
        %v5577 = vrot.slane %v5576, 4
        %v5579 = vshll.u32 %v5406, 16
        %v5581 = vrot.slane %v5579, 5
        %v5582 = vsel %vm1183, %v5577, %v5581
        %v5584 = vshrl.u32 %v5407, 16
        %v5586 = vrot.slane %v5584, 4
        %v5587 = vshll.u32 %v5407, 16
        %v5589 = vrot.slane %v5587, 5
        %v5590 = vor.u32 %v5586, %v5589
        %v5591 = vrot.slane %v5590, 4
        %v5593 = vshll.u32 %v5408, 16
        %v5595 = vrot.slane %v5593, 5
        %v5596 = vsel %vm1183, %v5591, %v5595
        %v5598 = vshrl.u32 %v5409, 16
        %v5600 = vrot.slane %v5598, 4
        %v5601 = vshll.u32 %v5409, 16
        %v5603 = vrot.slane %v5601, 5
        %v5604 = vor.u32 %v5600, %v5603
        %v5605 = vrot.slane %v5604, 4
        %v5607 = vshll.u32 %v5410, 16
        %v5609 = vrot.slane %v5607, 5
        %v5610 = vsel %vm1183, %v5605, %v5609
        %v5612 = vshrl.u32 %v5411, 16
        %v5614 = vrot.slane %v5612, 4
        %v5615 = vshll.u32 %v5411, 16
        %v5617 = vrot.slane %v5615, 5
        %v5618 = vor.u32 %v5614, %v5617
        %v5619 = vrot.slane %v5618, 4
        %v5621 = vshll.u32 %v5412, 16
        %v5623 = vrot.slane %v5621, 5
        %v5624 = vsel %vm1183, %v5619, %v5623
        %v5626 = vshrl.u32 %v5413, 16
        %v5628 = vrot.slane %v5626, 4
        %v5629 = vshll.u32 %v5413, 16
        %v5631 = vrot.slane %v5629, 5
        %v5632 = vor.u32 %v5628, %v5631
        %v5633 = vrot.slane %v5632, 4
        %v5635 = vshll.u32 %v5414, 16
        %v5637 = vrot.slane %v5635, 5
        %v5638 = vsel %vm1183, %v5633, %v5637
        %v5639 = vunpack.c.l.b16 %v5428
        %v5640 = vunpack.c.l.b16 %v5442
        %v5641 = vunpack.c.l.b16 %v5456
        %v5642 = vunpack.c.l.b16 %v5470
        %v5643 = vunpack.c.l.b16 %v5484
        %v5644 = vunpack.c.l.b16 %v5498
        %v5645 = vunpack.c.l.b16 %v5512
        %v5646 = vunpack.c.l.b16 %v5526
        %v5647 = vunpack.c.l.b16 %v5540
        %v5648 = vunpack.c.l.b16 %v5554
        %v5649 = vunpack.c.l.b16 %v5568
        %v5650 = vunpack.c.l.b16 %v5582
        %v5651 = vunpack.c.l.b16 %v5596
        %v5652 = vunpack.c.l.b16 %v5610
        %v5653 = vunpack.c.l.b16 %v5624
        %v5654 = vunpack.c.l.b16 %v5638
        %v5655 = vpack.c.b16 %v5640, %v5639
        %v5656 = vpack.c.b16 %v5642, %v5641
        %v5657 = vpack.c.b16 %v5644, %v5643
        %v5658 = vpack.c.b16 %v5646, %v5645
        %v5659 = vpack.c.b16 %v5648, %v5647
        %v5660 = vpack.c.b16 %v5650, %v5649
        %v5661 = vpack.c.b16 %v5652, %v5651
        %v5662 = vpack.c.b16 %v5654, %v5653
        %v5665 = vunpack.c.l.b16 %v4320
        %v5666 = vunpack.c.l.b16 %v4321
        %v5667 = vpack.c.b16 %v5666, %v5665
        %v5670 = vsel %vm4616, %v5655, 0
        %v5673 = vsel %vm4616, %v5656, 0
        %v5676 = vsel %vm4616, %v5657, 0
        %v5679 = vsel %vm4616, %v5658, 0
        %v5682 = vsel %vm4616, %v5659, 0
        %v5685 = vsel %vm4616, %v5660, 0
        %v5688 = vsel %vm4616, %v5661, 0
        %v5691 = vsel %vm4616, %v5662, 0
        %5693 = vmatprep.subr.bf16.mxu0 0
        %5694 = vmatpush1.bf16.msra.mxu0 %v5667
        %5695 = vmatprep.subr.bf16.mxu0 0
        %5696 = vmatpush1.bf16.msra.mxu0 0
        %5697 = vmatprep.subr.bf16.mxu0 0
        %5698 = vmatpush1.bf16.msra.mxu0 0
        %5699 = vmatprep.subr.bf16.mxu0 0
        %5700 = vmatpush1.bf16.msra.mxu0 0
        %5701 = vmatprep.subr.bf16.mxu0 0
        %5702 = vmatpush1.bf16.msra.mxu0 0
        %5703 = vmatprep.subr.bf16.mxu0 0
        %5704 = vmatpush1.bf16.msra.mxu0 0
        %5705 = vmatprep.subr.bf16.mxu0 0
        %5706 = vmatpush1.bf16.msra.mxu0 0
        %5707 = vmatprep.subr.bf16.mxu0 0
        %5708 = vmatpush1.bf16.msra.mxu0 0
        %5709 = vmatprep.subr.bf16.mxu0 0
        %5710 = vmatpush1.bf16.msra.mxu0 0
        %5711 = vmatprep.subr.bf16.mxu0 0
        %5712 = vmatpush1.bf16.msra.mxu0 0
        %5713 = vmatprep.subr.bf16.mxu0 0
        %5714 = vmatpush1.bf16.msra.mxu0 0
        %5715 = vmatprep.subr.bf16.mxu0 0
        %5716 = vmatpush1.bf16.msra.mxu0 0
        %5717 = vmatprep.subr.bf16.mxu0 0
        %5718 = vmatpush1.bf16.msra.mxu0 0
        %5719 = vmatprep.subr.bf16.mxu0 0
        %5720 = vmatpush1.bf16.msra.mxu0 0
        %5721 = vmatprep.subr.bf16.mxu0 0
        %5722 = vmatpush1.bf16.msra.mxu0 0
        %5723 = vmatprep.subr.bf16.mxu0 0
        %5724 = vmatpush1.bf16.msra.mxu0 0
        %5725 = vmatprep.mubr.bf16.mxu0 0
        %5726 = vmatmul.mubr.bf16.gmra.mrb[0].mxu0 %v5670
        %v5727 = vpop.f32.mrb[0].mxu0
        %v5728 = vadd.f32 0.0, %v5727
        %v5729 = vpop.f32.mrb[0].mxu0
        %v5730 = vpop.f32.mrb[0].mxu0
        %v5731 = vadd.f32 0.0, %v5730
        %v5732 = vpop.f32.mrb[0].mxu0
        %5733 = vmatprep.mubr.bf16.mxu0 0
        %5734 = vmatmul.mubr.bf16.gmra.mrb[0].mxu0 %v5673
        %v5735 = vpop.f32.mrb[0].mxu0
        %v5736 = vadd.f32 0.0, %v5735
        %v5737 = vpop.f32.mrb[0].mxu0
        %v5738 = vpop.f32.mrb[0].mxu0
        %v5739 = vadd.f32 0.0, %v5738
        %v5740 = vpop.f32.mrb[0].mxu0
        %5741 = vmatprep.mubr.bf16.mxu0 0
        %5742 = vmatmul.mubr.bf16.gmra.mrb[0].mxu0 %v5676
        %v5743 = vpop.f32.mrb[0].mxu0
        %v5744 = vadd.f32 0.0, %v5743
        %v5745 = vpop.f32.mrb[0].mxu0
        %v5746 = vpop.f32.mrb[0].mxu0
        %v5747 = vadd.f32 0.0, %v5746
        %v5748 = vpop.f32.mrb[0].mxu0
        %5749 = vmatprep.mubr.bf16.mxu0 0
        %5750 = vmatmul.mubr.bf16.gmra.mrb[0].mxu0 %v5679
        %v5751 = vpop.f32.mrb[0].mxu0
        %v5752 = vadd.f32 0.0, %v5751
        %v5753 = vpop.f32.mrb[0].mxu0
        %v5754 = vpop.f32.mrb[0].mxu0
        %v5755 = vadd.f32 0.0, %v5754
        %v5756 = vpop.f32.mrb[0].mxu0
        %5757 = vmatprep.mubr.bf16.mxu0 0
        %5758 = vmatmul.mubr.bf16.gmra.mrb[0].mxu0 %v5682
        %v5759 = vpop.f32.mrb[0].mxu0
        %v5760 = vadd.f32 0.0, %v5759
        %v5761 = vpop.f32.mrb[0].mxu0
        %v5762 = vpop.f32.mrb[0].mxu0
        %v5763 = vadd.f32 0.0, %v5762
        %v5764 = vpop.f32.mrb[0].mxu0
        %5765 = vmatprep.mubr.bf16.mxu0 0
        %5766 = vmatmul.mubr.bf16.gmra.mrb[0].mxu0 %v5685
        %v5767 = vpop.f32.mrb[0].mxu0
        %v5768 = vadd.f32 0.0, %v5767
        %v5769 = vpop.f32.mrb[0].mxu0
        %v5770 = vpop.f32.mrb[0].mxu0
        %v5771 = vadd.f32 0.0, %v5770
        %v5772 = vpop.f32.mrb[0].mxu0
        %5773 = vmatprep.mubr.bf16.mxu0 0
        %5774 = vmatmul.mubr.bf16.gmra.mrb[0].mxu0 %v5688
        %v5775 = vpop.f32.mrb[0].mxu0
        %v5776 = vadd.f32 0.0, %v5775
        %v5777 = vpop.f32.mrb[0].mxu0
        %v5778 = vpop.f32.mrb[0].mxu0
        %v5779 = vadd.f32 0.0, %v5778
        %v5780 = vpop.f32.mrb[0].mxu0
        %5781 = vmatprep.mubr.bf16.mxu0 0
        %5782 = vmatmul.mubr.bf16.gmra.mrb[0].mxu0 %v5691
        %v5783 = vpop.f32.mrb[0].mxu0
        %v5784 = vadd.f32 0.0, %v5783
        %v5785 = vpop.f32.mrb[0].mxu0
        %v5786 = vpop.f32.mrb[0].mxu0
        %v5787 = vadd.f32 0.0, %v5786
        %v5788 = vpop.f32.mrb[0].mxu0
        %5789 = vdwg.mxu0
        %v5790 = vadd.f32 %v5367, %v5728
        %v5791 = vadd.f32 %v5368, %v5731
        %v5792 = vadd.f32 %v5369, %v5736
        %v5793 = vadd.f32 %v5370, %v5739
        %v5794 = vadd.f32 %v5371, %v5744
        %v5795 = vadd.f32 %v5372, %v5747
        %v5796 = vadd.f32 %v5373, %v5752
        %v5797 = vadd.f32 %v5374, %v5755
        %v5798 = vadd.f32 %v5375, %v5760
        %v5799 = vadd.f32 %v5376, %v5763
        %v5800 = vadd.f32 %v5377, %v5768
        %v5801 = vadd.f32 %v5378, %v5771
        %v5802 = vadd.f32 %v5379, %v5776
        %v5803 = vadd.f32 %v5380, %v5779
        %v5804 = vadd.f32 %v5381, %v5784
        %v5805 = vadd.f32 %v5382, %v5787
        %v5806 = vld [vmem:[%s4213] sm:$0xe]
        %v5807 = vld [vmem:[%s4213 + $0x8] sm:$0xe]
        %v5808 = vld [vmem:[%s4213 + $0x10] sm:$0xe]
        %v5809 = vld [vmem:[%s4213 + $0x18] sm:$0xe]
        %v5810 = vld [vmem:[%s4213 + $0x20] sm:$0xe]
        %v5811 = vld [vmem:[%s4213 + $0x28] sm:$0xe]
        %v5812 = vld [vmem:[%s4213 + $0x30] sm:$0xe]
        %v5813 = vld [vmem:[%s4213 + $0x38] sm:$0xe]
        %v5814 = vld [vmem:[%s4213 + $0x50] sm:$0xe]
        %v5815 = vld [vmem:[%s4213 + $0x58] sm:$0xe]
        %v5816 = vld [vmem:[%s4213 + $0x60] sm:$0xe]
        %v5817 = vld [vmem:[%s4213 + $0x68] sm:$0xe]
        %v5818 = vld [vmem:[%s4213 + $0x70] sm:$0xe]
        %v5819 = vld [vmem:[%s4213 + $0x78] sm:$0xe]
        %v5820 = vld [vmem:[%s4213 + $0x80] sm:$0xe]
        %v5821 = vld [vmem:[%s4213 + $0x88] sm:$0xe]
        %v5854 = vrot.slane %v5806, 5
        %v5855 = vrot.slane %v5854, 4
        %v5856 = vrot.slane %v5384, 5
        %v5857 = vsel %vm1772, %v5855, %v5856
        %v5858 = vrot.slane %v5807, 5
        %v5859 = vrot.slane %v5858, 4
        %v5860 = vrot.slane %v5386, 5
        %v5861 = vsel %vm1772, %v5859, %v5860
        %v5862 = vrot.slane %v5808, 5
        %v5863 = vrot.slane %v5862, 4
        %v5864 = vrot.slane %v5388, 5
        %v5865 = vsel %vm1772, %v5863, %v5864
        %v5866 = vrot.slane %v5809, 5
        %v5867 = vrot.slane %v5866, 4
        %v5868 = vrot.slane %v5390, 5
        %v5869 = vsel %vm1772, %v5867, %v5868
        %v5870 = vrot.slane %v5810, 5
        %v5871 = vrot.slane %v5870, 4
        %v5872 = vrot.slane %v5392, 5
        %v5873 = vsel %vm1772, %v5871, %v5872
        %v5874 = vrot.slane %v5811, 5
        %v5875 = vrot.slane %v5874, 4
        %v5876 = vrot.slane %v5394, 5
        %v5877 = vsel %vm1772, %v5875, %v5876
        %v5878 = vrot.slane %v5812, 5
        %v5879 = vrot.slane %v5878, 4
        %v5880 = vrot.slane %v5396, 5
        %v5881 = vsel %vm1772, %v5879, %v5880
        %v5882 = vrot.slane %v5813, 5
        %v5883 = vrot.slane %v5882, 4
        %v5884 = vrot.slane %v5398, 5
        %v5885 = vsel %vm1772, %v5883, %v5884
        %v5886 = vrot.slane %v5814, 5
        %v5887 = vrot.slane %v5886, 4
        %v5888 = vrot.slane %v5400, 5
        %v5889 = vsel %vm1772, %v5887, %v5888
        %v5890 = vrot.slane %v5815, 5
        %v5891 = vrot.slane %v5890, 4
        %v5892 = vrot.slane %v5402, 5
        %v5893 = vsel %vm1772, %v5891, %v5892
        %v5894 = vrot.slane %v5816, 5
        %v5895 = vrot.slane %v5894, 4
        %v5896 = vrot.slane %v5404, 5
        %v5897 = vsel %vm1772, %v5895, %v5896
        %v5898 = vrot.slane %v5817, 5
        %v5899 = vrot.slane %v5898, 4
        %v5900 = vrot.slane %v5406, 5
        %v5901 = vsel %vm1772, %v5899, %v5900
        %v5902 = vrot.slane %v5818, 5
        %v5903 = vrot.slane %v5902, 4
        %v5904 = vrot.slane %v5408, 5
        %v5905 = vsel %vm1772, %v5903, %v5904
        %v5906 = vrot.slane %v5819, 5
        %v5907 = vrot.slane %v5906, 4
        %v5908 = vrot.slane %v5410, 5
        %v5909 = vsel %vm1772, %v5907, %v5908
        %v5910 = vrot.slane %v5820, 5
        %v5911 = vrot.slane %v5910, 4
        %v5912 = vrot.slane %v5412, 5
        %v5913 = vsel %vm1772, %v5911, %v5912
        %v5914 = vrot.slane %v5821, 5
        %v5915 = vrot.slane %v5914, 4
        %v5916 = vrot.slane %v5414, 5
        %v5917 = vsel %vm1772, %v5915, %v5916
        %v5918 = vunpack.c.l.b16 %v5857
        %v5919 = vunpack.c.l.b16 %v5861
        %v5920 = vunpack.c.l.b16 %v5865
        %v5921 = vunpack.c.l.b16 %v5869
        %v5922 = vunpack.c.l.b16 %v5873
        %v5923 = vunpack.c.l.b16 %v5877
        %v5924 = vunpack.c.l.b16 %v5881
        %v5925 = vunpack.c.l.b16 %v5885
        %v5926 = vunpack.c.l.b16 %v5889
        %v5927 = vunpack.c.l.b16 %v5893
        %v5928 = vunpack.c.l.b16 %v5897
        %v5929 = vunpack.c.l.b16 %v5901
        %v5930 = vunpack.c.l.b16 %v5905
        %v5931 = vunpack.c.l.b16 %v5909
        %v5932 = vunpack.c.l.b16 %v5913
        %v5933 = vunpack.c.l.b16 %v5917
        %v5934 = vpack.c.b16 %v5919, %v5918
        %v5935 = vpack.c.b16 %v5921, %v5920
        %v5936 = vpack.c.b16 %v5923, %v5922
        %v5937 = vpack.c.b16 %v5925, %v5924
        %v5938 = vpack.c.b16 %v5927, %v5926
        %v5939 = vpack.c.b16 %v5929, %v5928
        %v5940 = vpack.c.b16 %v5931, %v5930
        %v5941 = vpack.c.b16 %v5933, %v5932
        %v5944 = vunpack.c.l.b16 %v4322
        %v5945 = vunpack.c.l.b16 %v4323
        %v5946 = vpack.c.b16 %v5945, %v5944
        %v5949 = vsel %vm4616, %v5934, 0
        %v5952 = vsel %vm4616, %v5935, 0
        %v5955 = vsel %vm4616, %v5936, 0
        %v5958 = vsel %vm4616, %v5937, 0
        %v5961 = vsel %vm4616, %v5938, 0
        %v5964 = vsel %vm4616, %v5939, 0
        %v5967 = vsel %vm4616, %v5940, 0
        %v5970 = vsel %vm4616, %v5941, 0
        %5972 = vmatprep.subr.bf16.mxu0 0
        %5973 = vmatpush1.bf16.msra.mxu0 %v5946
        %5974 = vmatprep.subr.bf16.mxu0 0
        %5975 = vmatpush1.bf16.msra.mxu0 0
        %5976 = vmatprep.subr.bf16.mxu0 0
        %5977 = vmatpush1.bf16.msra.mxu0 0
        %5978 = vmatprep.subr.bf16.mxu0 0
        %5979 = vmatpush1.bf16.msra.mxu0 0
        %5980 = vmatprep.subr.bf16.mxu0 0
        %5981 = vmatpush1.bf16.msra.mxu0 0
        %5982 = vmatprep.subr.bf16.mxu0 0
        %5983 = vmatpush1.bf16.msra.mxu0 0
        %5984 = vmatprep.subr.bf16.mxu0 0
        %5985 = vmatpush1.bf16.msra.mxu0 0
        %5986 = vmatprep.subr.bf16.mxu0 0
        %5987 = vmatpush1.bf16.msra.mxu0 0
        %5988 = vmatprep.subr.bf16.mxu0 0
        %5989 = vmatpush1.bf16.msra.mxu0 0
        %5990 = vmatprep.subr.bf16.mxu0 0
        %5991 = vmatpush1.bf16.msra.mxu0 0
        %5992 = vmatprep.subr.bf16.mxu0 0
        %5993 = vmatpush1.bf16.msra.mxu0 0
        %5994 = vmatprep.subr.bf16.mxu0 0
        %5995 = vmatpush1.bf16.msra.mxu0 0
        %5996 = vmatprep.subr.bf16.mxu0 0
        %5997 = vmatpush1.bf16.msra.mxu0 0
        %5998 = vmatprep.subr.bf16.mxu0 0
        %5999 = vmatpush1.bf16.msra.mxu0 0
        %6000 = vmatprep.subr.bf16.mxu0 0
        %6001 = vmatpush1.bf16.msra.mxu0 0
        %6002 = vmatprep.subr.bf16.mxu0 0
        %6003 = vmatpush1.bf16.msra.mxu0 0
        %6004 = vmatprep.mubr.bf16.mxu0 0
        %6005 = vmatmul.mubr.bf16.gmra.mrb[0].mxu0 %v5949
        %v6006 = vpop.f32.mrb[0].mxu0
        %v6007 = vadd.f32 0.0, %v6006
        %v6008 = vpop.f32.mrb[0].mxu0
        %v6009 = vpop.f32.mrb[0].mxu0
        %v6010 = vadd.f32 0.0, %v6009
        %v6011 = vpop.f32.mrb[0].mxu0
        %6012 = vmatprep.mubr.bf16.mxu0 0
        %6013 = vmatmul.mubr.bf16.gmra.mrb[0].mxu0 %v5952
        %v6014 = vpop.f32.mrb[0].mxu0
        %v6015 = vadd.f32 0.0, %v6014
        %v6016 = vpop.f32.mrb[0].mxu0
        %v6017 = vpop.f32.mrb[0].mxu0
        %v6018 = vadd.f32 0.0, %v6017
        %v6019 = vpop.f32.mrb[0].mxu0
        %6020 = vmatprep.mubr.bf16.mxu0 0
        %6021 = vmatmul.mubr.bf16.gmra.mrb[0].mxu0 %v5955
        %v6022 = vpop.f32.mrb[0].mxu0
        %v6023 = vadd.f32 0.0, %v6022
        %v6024 = vpop.f32.mrb[0].mxu0
        %v6025 = vpop.f32.mrb[0].mxu0
        %v6026 = vadd.f32 0.0, %v6025
        %v6027 = vpop.f32.mrb[0].mxu0
        %6028 = vmatprep.mubr.bf16.mxu0 0
        %6029 = vmatmul.mubr.bf16.gmra.mrb[0].mxu0 %v5958
        %v6030 = vpop.f32.mrb[0].mxu0
        %v6031 = vadd.f32 0.0, %v6030
        %v6032 = vpop.f32.mrb[0].mxu0
        %v6033 = vpop.f32.mrb[0].mxu0
        %v6034 = vadd.f32 0.0, %v6033
        %v6035 = vpop.f32.mrb[0].mxu0
        %6036 = vmatprep.mubr.bf16.mxu0 0
        %6037 = vmatmul.mubr.bf16.gmra.mrb[0].mxu0 %v5961
        %v6038 = vpop.f32.mrb[0].mxu0
        %v6039 = vadd.f32 0.0, %v6038
        %v6040 = vpop.f32.mrb[0].mxu0
        %v6041 = vpop.f32.mrb[0].mxu0
        %v6042 = vadd.f32 0.0, %v6041
        %v6043 = vpop.f32.mrb[0].mxu0
        %6044 = vmatprep.mubr.bf16.mxu0 0
        %6045 = vmatmul.mubr.bf16.gmra.mrb[0].mxu0 %v5964
        %v6046 = vpop.f32.mrb[0].mxu0
        %v6047 = vadd.f32 0.0, %v6046
        %v6048 = vpop.f32.mrb[0].mxu0
        %v6049 = vpop.f32.mrb[0].mxu0
        %v6050 = vadd.f32 0.0, %v6049
        %v6051 = vpop.f32.mrb[0].mxu0
        %6052 = vmatprep.mubr.bf16.mxu0 0
        %6053 = vmatmul.mubr.bf16.gmra.mrb[0].mxu0 %v5967
        %v6054 = vpop.f32.mrb[0].mxu0
        %v6055 = vadd.f32 0.0, %v6054
        %v6056 = vpop.f32.mrb[0].mxu0
        %v6057 = vpop.f32.mrb[0].mxu0
        %v6058 = vadd.f32 0.0, %v6057
        %v6059 = vpop.f32.mrb[0].mxu0
        %6060 = vmatprep.mubr.bf16.mxu0 0
        %6061 = vmatmul.mubr.bf16.gmra.mrb[0].mxu0 %v5970
        %v6062 = vpop.f32.mrb[0].mxu0
        %v6063 = vadd.f32 0.0, %v6062
        %v6064 = vpop.f32.mrb[0].mxu0
        %v6065 = vpop.f32.mrb[0].mxu0
        %v6066 = vadd.f32 0.0, %v6065
        %v6067 = vpop.f32.mrb[0].mxu0
        %6068 = vdwg.mxu0
        %v6069 = vadd.f32 %v5790, %v6007
        %v6070 = vadd.f32 %v5791, %v6010
        %v6071 = vadd.f32 %v5792, %v6015
        %v6072 = vadd.f32 %v5793, %v6018
        %v6073 = vadd.f32 %v5794, %v6023
        %v6074 = vadd.f32 %v5795, %v6026
        %v6075 = vadd.f32 %v5796, %v6031
        %v6076 = vadd.f32 %v5797, %v6034
        %v6077 = vadd.f32 %v5798, %v6039
        %v6078 = vadd.f32 %v5799, %v6042
        %v6079 = vadd.f32 %v5800, %v6047
        %v6080 = vadd.f32 %v5801, %v6050
        %v6081 = vadd.f32 %v5802, %v6055
        %v6082 = vadd.f32 %v5803, %v6058
        %v6083 = vadd.f32 %v5804, %v6063
        %v6084 = vadd.f32 %v5805, %v6066
        %s6085 = scalar_lea.vmem [#allocation3], 16
        %v6086 = vld [vmem:[%s6085] sm:$0xf]
        %v6087 = vld [vmem:[%s6085 + $0x8] sm:$0xf]
        %v6088 = vld [vmem:[%s6085 + $0x10] sm:$0xf]
        %v6089 = vld [vmem:[%s6085 + $0x18] sm:$0xf]
        %v6090 = vld [vmem:[%s6085 + $0x20] sm:$0xf]
        %v6091 = vld [vmem:[%s6085 + $0x28] sm:$0xf]
        %v6092 = vld [vmem:[%s6085 + $0x30] sm:$0xf]
        %v6093 = vld [vmem:[%s6085 + $0x38] sm:$0xf]
        %v6094 = vld [vmem:[%s6085 + $0x50] sm:$0xf]
        %v6095 = vld [vmem:[%s6085 + $0x58] sm:$0xf]
        %v6096 = vld [vmem:[%s6085 + $0x60] sm:$0xf]
        %v6097 = vld [vmem:[%s6085 + $0x68] sm:$0xf]
        %v6098 = vld [vmem:[%s6085 + $0x70] sm:$0xf]
        %v6099 = vld [vmem:[%s6085 + $0x78] sm:$0xf]
        %v6100 = vld [vmem:[%s6085 + $0x80] sm:$0xf]
        %v6101 = vld [vmem:[%s6085 + $0x88] sm:$0xf]
        %v6118 = vunpack.c.l.b16 %v6086
        %v6119 = vunpack.c.l.b16 %v6087
        %v6120 = vunpack.c.l.b16 %v6088
        %v6121 = vunpack.c.l.b16 %v6089
        %v6122 = vunpack.c.l.b16 %v6090
        %v6123 = vunpack.c.l.b16 %v6091
        %v6124 = vunpack.c.l.b16 %v6092
        %v6125 = vunpack.c.l.b16 %v6093
        %v6126 = vunpack.c.l.b16 %v6094
        %v6127 = vunpack.c.l.b16 %v6095
        %v6128 = vunpack.c.l.b16 %v6096
        %v6129 = vunpack.c.l.b16 %v6097
        %v6130 = vunpack.c.l.b16 %v6098
        %v6131 = vunpack.c.l.b16 %v6099
        %v6132 = vunpack.c.l.b16 %v6100
        %v6133 = vunpack.c.l.b16 %v6101
        %v6134 = vpack.c.b16 %v6119, %v6118
        %v6135 = vpack.c.b16 %v6121, %v6120
        %v6136 = vpack.c.b16 %v6123, %v6122
        %v6137 = vpack.c.b16 %v6125, %v6124
        %v6138 = vpack.c.b16 %v6127, %v6126
        %v6139 = vpack.c.b16 %v6129, %v6128
        %v6140 = vpack.c.b16 %v6131, %v6130
        %v6141 = vpack.c.b16 %v6133, %v6132
        %v6144 = vunpack.c.l.b16 %v4324
        %v6145 = vunpack.c.l.b16 %v4325
        %v6146 = vpack.c.b16 %v6145, %v6144
        %v6149 = vsel %vm4616, %v6134, 0
        %v6152 = vsel %vm4616, %v6135, 0
        %v6155 = vsel %vm4616, %v6136, 0
        %v6158 = vsel %vm4616, %v6137, 0
        %v6161 = vsel %vm4616, %v6138, 0
        %v6164 = vsel %vm4616, %v6139, 0
        %v6167 = vsel %vm4616, %v6140, 0
        %v6170 = vsel %vm4616, %v6141, 0
        %6172 = vmatprep.subr.bf16.mxu0 0
        %6173 = vmatpush1.bf16.msra.mxu0 %v6146
        %6174 = vmatprep.subr.bf16.mxu0 0
        %6175 = vmatpush1.bf16.msra.mxu0 0
        %6176 = vmatprep.subr.bf16.mxu0 0
        %6177 = vmatpush1.bf16.msra.mxu0 0
        %6178 = vmatprep.subr.bf16.mxu0 0
        %6179 = vmatpush1.bf16.msra.mxu0 0
        %6180 = vmatprep.subr.bf16.mxu0 0
        %6181 = vmatpush1.bf16.msra.mxu0 0
        %6182 = vmatprep.subr.bf16.mxu0 0
        %6183 = vmatpush1.bf16.msra.mxu0 0
        %6184 = vmatprep.subr.bf16.mxu0 0
        %6185 = vmatpush1.bf16.msra.mxu0 0
        %6186 = vmatprep.subr.bf16.mxu0 0
        %6187 = vmatpush1.bf16.msra.mxu0 0
        %6188 = vmatprep.subr.bf16.mxu0 0
        %6189 = vmatpush1.bf16.msra.mxu0 0
        %6190 = vmatprep.subr.bf16.mxu0 0
        %6191 = vmatpush1.bf16.msra.mxu0 0
        %6192 = vmatprep.subr.bf16.mxu0 0
        %6193 = vmatpush1.bf16.msra.mxu0 0
        %6194 = vmatprep.subr.bf16.mxu0 0
        %6195 = vmatpush1.bf16.msra.mxu0 0
        %6196 = vmatprep.subr.bf16.mxu0 0
        %6197 = vmatpush1.bf16.msra.mxu0 0
        %6198 = vmatprep.subr.bf16.mxu0 0
        %6199 = vmatpush1.bf16.msra.mxu0 0
        %6200 = vmatprep.subr.bf16.mxu0 0
        %6201 = vmatpush1.bf16.msra.mxu0 0
        %6202 = vmatprep.subr.bf16.mxu0 0
        %6203 = vmatpush1.bf16.msra.mxu0 0
        %6204 = vmatprep.mubr.bf16.mxu0 0
        %6205 = vmatmul.mubr.bf16.gmra.mrb[0].mxu0 %v6149
        %v6206 = vpop.f32.mrb[0].mxu0
        %v6207 = vadd.f32 0.0, %v6206
        %v6208 = vpop.f32.mrb[0].mxu0
        %v6209 = vpop.f32.mrb[0].mxu0
        %v6210 = vadd.f32 0.0, %v6209
        %v6211 = vpop.f32.mrb[0].mxu0
        %6212 = vmatprep.mubr.bf16.mxu0 0
        %6213 = vmatmul.mubr.bf16.gmra.mrb[0].mxu0 %v6152
        %v6214 = vpop.f32.mrb[0].mxu0
        %v6215 = vadd.f32 0.0, %v6214
        %v6216 = vpop.f32.mrb[0].mxu0
        %v6217 = vpop.f32.mrb[0].mxu0
        %v6218 = vadd.f32 0.0, %v6217
        %v6219 = vpop.f32.mrb[0].mxu0
        %6220 = vmatprep.mubr.bf16.mxu0 0
        %6221 = vmatmul.mubr.bf16.gmra.mrb[0].mxu0 %v6155
        %v6222 = vpop.f32.mrb[0].mxu0
        %v6223 = vadd.f32 0.0, %v6222
        %v6224 = vpop.f32.mrb[0].mxu0
        %v6225 = vpop.f32.mrb[0].mxu0
        %v6226 = vadd.f32 0.0, %v6225
        %v6227 = vpop.f32.mrb[0].mxu0
        %6228 = vmatprep.mubr.bf16.mxu0 0
        %6229 = vmatmul.mubr.bf16.gmra.mrb[0].mxu0 %v6158
        %v6230 = vpop.f32.mrb[0].mxu0
        %v6231 = vadd.f32 0.0, %v6230
        %v6232 = vpop.f32.mrb[0].mxu0
        %v6233 = vpop.f32.mrb[0].mxu0
        %v6234 = vadd.f32 0.0, %v6233
        %v6235 = vpop.f32.mrb[0].mxu0
        %6236 = vmatprep.mubr.bf16.mxu0 0
        %6237 = vmatmul.mubr.bf16.gmra.mrb[0].mxu0 %v6161
        %v6238 = vpop.f32.mrb[0].mxu0
        %v6239 = vadd.f32 0.0, %v6238
        %v6240 = vpop.f32.mrb[0].mxu0
        %v6241 = vpop.f32.mrb[0].mxu0
        %v6242 = vadd.f32 0.0, %v6241
        %v6243 = vpop.f32.mrb[0].mxu0
        %6244 = vmatprep.mubr.bf16.mxu0 0
        %6245 = vmatmul.mubr.bf16.gmra.mrb[0].mxu0 %v6164
        %v6246 = vpop.f32.mrb[0].mxu0
        %v6247 = vadd.f32 0.0, %v6246
        %v6248 = vpop.f32.mrb[0].mxu0
        %v6249 = vpop.f32.mrb[0].mxu0
        %v6250 = vadd.f32 0.0, %v6249
        %v6251 = vpop.f32.mrb[0].mxu0
        %6252 = vmatprep.mubr.bf16.mxu0 0
        %6253 = vmatmul.mubr.bf16.gmra.mrb[0].mxu0 %v6167
        %v6254 = vpop.f32.mrb[0].mxu0
        %v6255 = vadd.f32 0.0, %v6254
        %v6256 = vpop.f32.mrb[0].mxu0
        %v6257 = vpop.f32.mrb[0].mxu0
        %v6258 = vadd.f32 0.0, %v6257
        %v6259 = vpop.f32.mrb[0].mxu0
        %6260 = vmatprep.mubr.bf16.mxu0 0
        %6261 = vmatmul.mubr.bf16.gmra.mrb[0].mxu0 %v6170
        %v6262 = vpop.f32.mrb[0].mxu0
        %v6263 = vadd.f32 0.0, %v6262
        %v6264 = vpop.f32.mrb[0].mxu0
        %v6265 = vpop.f32.mrb[0].mxu0
        %v6266 = vadd.f32 0.0, %v6265
        %v6267 = vpop.f32.mrb[0].mxu0
        %6268 = vdwg.mxu0
        %v6269 = vadd.f32 %v6069, %v6207
        %v6270 = vadd.f32 %v6070, %v6210
        %v6271 = vadd.f32 %v6071, %v6215
        %v6272 = vadd.f32 %v6072, %v6218
        %v6273 = vadd.f32 %v6073, %v6223
        %v6274 = vadd.f32 %v6074, %v6226
        %v6275 = vadd.f32 %v6075, %v6231
        %v6276 = vadd.f32 %v6076, %v6234
        %v6277 = vadd.f32 %v6077, %v6239
        %v6278 = vadd.f32 %v6078, %v6242
        %v6279 = vadd.f32 %v6079, %v6247
        %v6280 = vadd.f32 %v6080, %v6250
        %v6281 = vadd.f32 %v6081, %v6255
        %v6282 = vadd.f32 %v6082, %v6258
        %v6283 = vadd.f32 %v6083, %v6263
        %v6284 = vadd.f32 %v6084, %v6266
        %v6285 = vld [vmem:[%s6085] sm:$0xf]
        %v6286 = vld [vmem:[%s6085 + $0x4] sm:$0x1]
        %v6287 = vld [vmem:[%s6085 + $0x8] sm:$0xf]
        %v6288 = vld [vmem:[%s6085 + $0xc] sm:$0x1]
        %v6289 = vld [vmem:[%s6085 + $0x10] sm:$0xf]
        %v6290 = vld [vmem:[%s6085 + $0x14] sm:$0x1]
        %v6291 = vld [vmem:[%s6085 + $0x18] sm:$0xf]
        %v6292 = vld [vmem:[%s6085 + $0x1c] sm:$0x1]
        %v6293 = vld [vmem:[%s6085 + $0x20] sm:$0xf]
        %v6294 = vld [vmem:[%s6085 + $0x24] sm:$0x1]
        %v6295 = vld [vmem:[%s6085 + $0x28] sm:$0xf]
        %v6296 = vld [vmem:[%s6085 + $0x2c] sm:$0x1]
        %v6297 = vld [vmem:[%s6085 + $0x30] sm:$0xf]
        %v6298 = vld [vmem:[%s6085 + $0x34] sm:$0x1]
        %v6299 = vld [vmem:[%s6085 + $0x38] sm:$0xf]
        %v6300 = vld [vmem:[%s6085 + $0x3c] sm:$0x1]
        %v6301 = vld [vmem:[%s6085 + $0x50] sm:$0xf]
        %v6302 = vld [vmem:[%s6085 + $0x54] sm:$0x1]
        %v6303 = vld [vmem:[%s6085 + $0x58] sm:$0xf]
        %v6304 = vld [vmem:[%s6085 + $0x5c] sm:$0x1]
        %v6305 = vld [vmem:[%s6085 + $0x60] sm:$0xf]
        %v6306 = vld [vmem:[%s6085 + $0x64] sm:$0x1]
        %v6307 = vld [vmem:[%s6085 + $0x68] sm:$0xf]
        %v6308 = vld [vmem:[%s6085 + $0x6c] sm:$0x1]
        %v6309 = vld [vmem:[%s6085 + $0x70] sm:$0xf]
        %v6310 = vld [vmem:[%s6085 + $0x74] sm:$0x1]
        %v6311 = vld [vmem:[%s6085 + $0x78] sm:$0xf]
        %v6312 = vld [vmem:[%s6085 + $0x7c] sm:$0x1]
        %v6313 = vld [vmem:[%s6085 + $0x80] sm:$0xf]
        %v6314 = vld [vmem:[%s6085 + $0x84] sm:$0x1]
        %v6315 = vld [vmem:[%s6085 + $0x88] sm:$0xf]
        %v6316 = vld [vmem:[%s6085 + $0x8c] sm:$0x1]
        %v6318 = vshrl.u32 %v6285, 16
        %v6320 = vrot.slane %v6318, 4
        %v6321 = vshll.u32 %v6285, 16
        %v6323 = vrot.slane %v6321, 5
        %v6324 = vor.u32 %v6320, %v6323
        %v6325 = vrot.slane %v6324, 4
        %v6327 = vshll.u32 %v6286, 16
        %v6329 = vrot.slane %v6327, 5
        %v6330 = vsel %vm1183, %v6325, %v6329
        %v6332 = vshrl.u32 %v6287, 16
        %v6334 = vrot.slane %v6332, 4
        %v6335 = vshll.u32 %v6287, 16
        %v6337 = vrot.slane %v6335, 5
        %v6338 = vor.u32 %v6334, %v6337
        %v6339 = vrot.slane %v6338, 4
        %v6341 = vshll.u32 %v6288, 16
        %v6343 = vrot.slane %v6341, 5
        %v6344 = vsel %vm1183, %v6339, %v6343
        %v6346 = vshrl.u32 %v6289, 16
        %v6348 = vrot.slane %v6346, 4
        %v6349 = vshll.u32 %v6289, 16
        %v6351 = vrot.slane %v6349, 5
        %v6352 = vor.u32 %v6348, %v6351
        %v6353 = vrot.slane %v6352, 4
        %v6355 = vshll.u32 %v6290, 16
        %v6357 = vrot.slane %v6355, 5
        %v6358 = vsel %vm1183, %v6353, %v6357
        %v6360 = vshrl.u32 %v6291, 16
        %v6362 = vrot.slane %v6360, 4
        %v6363 = vshll.u32 %v6291, 16
        %v6365 = vrot.slane %v6363, 5
        %v6366 = vor.u32 %v6362, %v6365
        %v6367 = vrot.slane %v6366, 4
        %v6369 = vshll.u32 %v6292, 16
        %v6371 = vrot.slane %v6369, 5
        %v6372 = vsel %vm1183, %v6367, %v6371
        %v6374 = vshrl.u32 %v6293, 16
        %v6376 = vrot.slane %v6374, 4
        %v6377 = vshll.u32 %v6293, 16
        %v6379 = vrot.slane %v6377, 5
        %v6380 = vor.u32 %v6376, %v6379
        %v6381 = vrot.slane %v6380, 4
        %v6383 = vshll.u32 %v6294, 16
        %v6385 = vrot.slane %v6383, 5
        %v6386 = vsel %vm1183, %v6381, %v6385
        %v6388 = vshrl.u32 %v6295, 16
        %v6390 = vrot.slane %v6388, 4
        %v6391 = vshll.u32 %v6295, 16
        %v6393 = vrot.slane %v6391, 5
        %v6394 = vor.u32 %v6390, %v6393
        %v6395 = vrot.slane %v6394, 4
        %v6397 = vshll.u32 %v6296, 16
        %v6399 = vrot.slane %v6397, 5
        %v6400 = vsel %vm1183, %v6395, %v6399
        %v6402 = vshrl.u32 %v6297, 16
        %v6404 = vrot.slane %v6402, 4
        %v6405 = vshll.u32 %v6297, 16
        %v6407 = vrot.slane %v6405, 5
        %v6408 = vor.u32 %v6404, %v6407
        %v6409 = vrot.slane %v6408, 4
        %v6411 = vshll.u32 %v6298, 16
        %v6413 = vrot.slane %v6411, 5
        %v6414 = vsel %vm1183, %v6409, %v6413
        %v6416 = vshrl.u32 %v6299, 16
        %v6418 = vrot.slane %v6416, 4
        %v6419 = vshll.u32 %v6299, 16
        %v6421 = vrot.slane %v6419, 5
        %v6422 = vor.u32 %v6418, %v6421
        %v6423 = vrot.slane %v6422, 4
        %v6425 = vshll.u32 %v6300, 16
        %v6427 = vrot.slane %v6425, 5
        %v6428 = vsel %vm1183, %v6423, %v6427
        %v6430 = vshrl.u32 %v6301, 16
        %v6432 = vrot.slane %v6430, 4
        %v6433 = vshll.u32 %v6301, 16
        %v6435 = vrot.slane %v6433, 5
        %v6436 = vor.u32 %v6432, %v6435
        %v6437 = vrot.slane %v6436, 4
        %v6439 = vshll.u32 %v6302, 16
        %v6441 = vrot.slane %v6439, 5
        %v6442 = vsel %vm1183, %v6437, %v6441
        %v6444 = vshrl.u32 %v6303, 16
        %v6446 = vrot.slane %v6444, 4
        %v6447 = vshll.u32 %v6303, 16
        %v6449 = vrot.slane %v6447, 5
        %v6450 = vor.u32 %v6446, %v6449
        %v6451 = vrot.slane %v6450, 4
        %v6453 = vshll.u32 %v6304, 16
        %v6455 = vrot.slane %v6453, 5
        %v6456 = vsel %vm1183, %v6451, %v6455
        %v6458 = vshrl.u32 %v6305, 16
        %v6460 = vrot.slane %v6458, 4
        %v6461 = vshll.u32 %v6305, 16
        %v6463 = vrot.slane %v6461, 5
        %v6464 = vor.u32 %v6460, %v6463
        %v6465 = vrot.slane %v6464, 4
        %v6467 = vshll.u32 %v6306, 16
        %v6469 = vrot.slane %v6467, 5
        %v6470 = vsel %vm1183, %v6465, %v6469
        %v6472 = vshrl.u32 %v6307, 16
        %v6474 = vrot.slane %v6472, 4
        %v6475 = vshll.u32 %v6307, 16
        %v6477 = vrot.slane %v6475, 5
        %v6478 = vor.u32 %v6474, %v6477
        %v6479 = vrot.slane %v6478, 4
        %v6481 = vshll.u32 %v6308, 16
        %v6483 = vrot.slane %v6481, 5
        %v6484 = vsel %vm1183, %v6479, %v6483
        %v6486 = vshrl.u32 %v6309, 16
        %v6488 = vrot.slane %v6486, 4
        %v6489 = vshll.u32 %v6309, 16
        %v6491 = vrot.slane %v6489, 5
        %v6492 = vor.u32 %v6488, %v6491
        %v6493 = vrot.slane %v6492, 4
        %v6495 = vshll.u32 %v6310, 16
        %v6497 = vrot.slane %v6495, 5
        %v6498 = vsel %vm1183, %v6493, %v6497
        %v6500 = vshrl.u32 %v6311, 16
        %v6502 = vrot.slane %v6500, 4
        %v6503 = vshll.u32 %v6311, 16
        %v6505 = vrot.slane %v6503, 5
        %v6506 = vor.u32 %v6502, %v6505
        %v6507 = vrot.slane %v6506, 4
        %v6509 = vshll.u32 %v6312, 16
        %v6511 = vrot.slane %v6509, 5
        %v6512 = vsel %vm1183, %v6507, %v6511
        %v6514 = vshrl.u32 %v6313, 16
        %v6516 = vrot.slane %v6514, 4
        %v6517 = vshll.u32 %v6313, 16
        %v6519 = vrot.slane %v6517, 5
        %v6520 = vor.u32 %v6516, %v6519
        %v6521 = vrot.slane %v6520, 4
        %v6523 = vshll.u32 %v6314, 16
        %v6525 = vrot.slane %v6523, 5
        %v6526 = vsel %vm1183, %v6521, %v6525
        %v6528 = vshrl.u32 %v6315, 16
        %v6530 = vrot.slane %v6528, 4
        %v6531 = vshll.u32 %v6315, 16
        %v6533 = vrot.slane %v6531, 5
        %v6534 = vor.u32 %v6530, %v6533
        %v6535 = vrot.slane %v6534, 4
        %v6537 = vshll.u32 %v6316, 16
        %v6539 = vrot.slane %v6537, 5
        %v6540 = vsel %vm1183, %v6535, %v6539
        %v6541 = vunpack.c.l.b16 %v6330
        %v6542 = vunpack.c.l.b16 %v6344
        %v6543 = vunpack.c.l.b16 %v6358
        %v6544 = vunpack.c.l.b16 %v6372
        %v6545 = vunpack.c.l.b16 %v6386
        %v6546 = vunpack.c.l.b16 %v6400
        %v6547 = vunpack.c.l.b16 %v6414
        %v6548 = vunpack.c.l.b16 %v6428
        %v6549 = vunpack.c.l.b16 %v6442
        %v6550 = vunpack.c.l.b16 %v6456
        %v6551 = vunpack.c.l.b16 %v6470
        %v6552 = vunpack.c.l.b16 %v6484
        %v6553 = vunpack.c.l.b16 %v6498
        %v6554 = vunpack.c.l.b16 %v6512
        %v6555 = vunpack.c.l.b16 %v6526
        %v6556 = vunpack.c.l.b16 %v6540
        %v6557 = vpack.c.b16 %v6542, %v6541
        %v6558 = vpack.c.b16 %v6544, %v6543
        %v6559 = vpack.c.b16 %v6546, %v6545
        %v6560 = vpack.c.b16 %v6548, %v6547
        %v6561 = vpack.c.b16 %v6550, %v6549
        %v6562 = vpack.c.b16 %v6552, %v6551
        %v6563 = vpack.c.b16 %v6554, %v6553
        %v6564 = vpack.c.b16 %v6556, %v6555
        %v6567 = vunpack.c.l.b16 %v4326
        %v6568 = vunpack.c.l.b16 %v4327
        %v6569 = vpack.c.b16 %v6568, %v6567
        %v6572 = vsel %vm4616, %v6557, 0
        %v6575 = vsel %vm4616, %v6558, 0
        %v6578 = vsel %vm4616, %v6559, 0
        %v6581 = vsel %vm4616, %v6560, 0
        %v6584 = vsel %vm4616, %v6561, 0
        %v6587 = vsel %vm4616, %v6562, 0
        %v6590 = vsel %vm4616, %v6563, 0
        %v6593 = vsel %vm4616, %v6564, 0
        %6595 = vmatprep.subr.bf16.mxu0 0
        %6596 = vmatpush1.bf16.msra.mxu0 %v6569
        %6597 = vmatprep.subr.bf16.mxu0 0
        %6598 = vmatpush1.bf16.msra.mxu0 0
        %6599 = vmatprep.subr.bf16.mxu0 0
        %6600 = vmatpush1.bf16.msra.mxu0 0
        %6601 = vmatprep.subr.bf16.mxu0 0
        %6602 = vmatpush1.bf16.msra.mxu0 0
        %6603 = vmatprep.subr.bf16.mxu0 0
        %6604 = vmatpush1.bf16.msra.mxu0 0
        %6605 = vmatprep.subr.bf16.mxu0 0
        %6606 = vmatpush1.bf16.msra.mxu0 0
        %6607 = vmatprep.subr.bf16.mxu0 0
        %6608 = vmatpush1.bf16.msra.mxu0 0
        %6609 = vmatprep.subr.bf16.mxu0 0
        %6610 = vmatpush1.bf16.msra.mxu0 0
        %6611 = vmatprep.subr.bf16.mxu0 0
        %6612 = vmatpush1.bf16.msra.mxu0 0
        %6613 = vmatprep.subr.bf16.mxu0 0
        %6614 = vmatpush1.bf16.msra.mxu0 0
        %6615 = vmatprep.subr.bf16.mxu0 0
        %6616 = vmatpush1.bf16.msra.mxu0 0
        %6617 = vmatprep.subr.bf16.mxu0 0
        %6618 = vmatpush1.bf16.msra.mxu0 0
        %6619 = vmatprep.subr.bf16.mxu0 0
        %6620 = vmatpush1.bf16.msra.mxu0 0
        %6621 = vmatprep.subr.bf16.mxu0 0
        %6622 = vmatpush1.bf16.msra.mxu0 0
        %6623 = vmatprep.subr.bf16.mxu0 0
        %6624 = vmatpush1.bf16.msra.mxu0 0
        %6625 = vmatprep.subr.bf16.mxu0 0
        %6626 = vmatpush1.bf16.msra.mxu0 0
        %6627 = vmatprep.mubr.bf16.mxu0 0
        %6628 = vmatmul.mubr.bf16.gmra.mrb[0].mxu0 %v6572
        %v6629 = vpop.f32.mrb[0].mxu0
        %v6630 = vadd.f32 0.0, %v6629
        %v6631 = vpop.f32.mrb[0].mxu0
        %v6632 = vpop.f32.mrb[0].mxu0
        %v6633 = vadd.f32 0.0, %v6632
        %v6634 = vpop.f32.mrb[0].mxu0
        %6635 = vmatprep.mubr.bf16.mxu0 0
        %6636 = vmatmul.mubr.bf16.gmra.mrb[0].mxu0 %v6575
        %v6637 = vpop.f32.mrb[0].mxu0
        %v6638 = vadd.f32 0.0, %v6637
        %v6639 = vpop.f32.mrb[0].mxu0
        %v6640 = vpop.f32.mrb[0].mxu0
        %v6641 = vadd.f32 0.0, %v6640
        %v6642 = vpop.f32.mrb[0].mxu0
        %6643 = vmatprep.mubr.bf16.mxu0 0
        %6644 = vmatmul.mubr.bf16.gmra.mrb[0].mxu0 %v6578
        %v6645 = vpop.f32.mrb[0].mxu0
        %v6646 = vadd.f32 0.0, %v6645
        %v6647 = vpop.f32.mrb[0].mxu0
        %v6648 = vpop.f32.mrb[0].mxu0
        %v6649 = vadd.f32 0.0, %v6648
        %v6650 = vpop.f32.mrb[0].mxu0
        %6651 = vmatprep.mubr.bf16.mxu0 0
        %6652 = vmatmul.mubr.bf16.gmra.mrb[0].mxu0 %v6581
        %v6653 = vpop.f32.mrb[0].mxu0
        %v6654 = vadd.f32 0.0, %v6653
        %v6655 = vpop.f32.mrb[0].mxu0
        %v6656 = vpop.f32.mrb[0].mxu0
        %v6657 = vadd.f32 0.0, %v6656
        %v6658 = vpop.f32.mrb[0].mxu0
        %6659 = vmatprep.mubr.bf16.mxu0 0
        %6660 = vmatmul.mubr.bf16.gmra.mrb[0].mxu0 %v6584
        %v6661 = vpop.f32.mrb[0].mxu0
        %v6662 = vadd.f32 0.0, %v6661
        %v6663 = vpop.f32.mrb[0].mxu0
        %v6664 = vpop.f32.mrb[0].mxu0
        %v6665 = vadd.f32 0.0, %v6664
        %v6666 = vpop.f32.mrb[0].mxu0
        %6667 = vmatprep.mubr.bf16.mxu0 0
        %6668 = vmatmul.mubr.bf16.gmra.mrb[0].mxu0 %v6587
        %v6669 = vpop.f32.mrb[0].mxu0
        %v6670 = vadd.f32 0.0, %v6669
        %v6671 = vpop.f32.mrb[0].mxu0
        %v6672 = vpop.f32.mrb[0].mxu0
        %v6673 = vadd.f32 0.0, %v6672
        %v6674 = vpop.f32.mrb[0].mxu0
        %6675 = vmatprep.mubr.bf16.mxu0 0
        %6676 = vmatmul.mubr.bf16.gmra.mrb[0].mxu0 %v6590
        %v6677 = vpop.f32.mrb[0].mxu0
        %v6678 = vadd.f32 0.0, %v6677
        %v6679 = vpop.f32.mrb[0].mxu0
        %v6680 = vpop.f32.mrb[0].mxu0
        %v6681 = vadd.f32 0.0, %v6680
        %v6682 = vpop.f32.mrb[0].mxu0
        %6683 = vmatprep.mubr.bf16.mxu0 0
        %6684 = vmatmul.mubr.bf16.gmra.mrb[0].mxu0 %v6593
        %v6685 = vpop.f32.mrb[0].mxu0
        %v6686 = vadd.f32 0.0, %v6685
        %v6687 = vpop.f32.mrb[0].mxu0
        %v6688 = vpop.f32.mrb[0].mxu0
        %v6689 = vadd.f32 0.0, %v6688
        %v6690 = vpop.f32.mrb[0].mxu0
        %6691 = vdwg.mxu0
        %v6692 = vadd.f32 %v6269, %v6630
        %v6693 = vadd.f32 %v6270, %v6633
        %v6694 = vadd.f32 %v6271, %v6638
        %v6695 = vadd.f32 %v6272, %v6641
        %v6696 = vadd.f32 %v6273, %v6646
        %v6697 = vadd.f32 %v6274, %v6649
        %v6698 = vadd.f32 %v6275, %v6654
        %v6699 = vadd.f32 %v6276, %v6657
        %v6700 = vadd.f32 %v6277, %v6662
        %v6701 = vadd.f32 %v6278, %v6665
        %v6702 = vadd.f32 %v6279, %v6670
        %v6703 = vadd.f32 %v6280, %v6673
        %v6704 = vadd.f32 %v6281, %v6678
        %v6705 = vadd.f32 %v6282, %v6681
        %v6706 = vadd.f32 %v6283, %v6686
        %v6707 = vadd.f32 %v6284, %v6689
        %v6708 = vld [vmem:[%s6085] sm:$0xe]
        %v6709 = vld [vmem:[%s6085 + $0x8] sm:$0xe]
        %v6710 = vld [vmem:[%s6085 + $0x10] sm:$0xe]
        %v6711 = vld [vmem:[%s6085 + $0x18] sm:$0xe]
        %v6712 = vld [vmem:[%s6085 + $0x20] sm:$0xe]
        %v6713 = vld [vmem:[%s6085 + $0x28] sm:$0xe]
        %v6714 = vld [vmem:[%s6085 + $0x30] sm:$0xe]
        %v6715 = vld [vmem:[%s6085 + $0x38] sm:$0xe]
        %v6716 = vld [vmem:[%s6085 + $0x50] sm:$0xe]
        %v6717 = vld [vmem:[%s6085 + $0x58] sm:$0xe]
        %v6718 = vld [vmem:[%s6085 + $0x60] sm:$0xe]
        %v6719 = vld [vmem:[%s6085 + $0x68] sm:$0xe]
        %v6720 = vld [vmem:[%s6085 + $0x70] sm:$0xe]
        %v6721 = vld [vmem:[%s6085 + $0x78] sm:$0xe]
        %v6722 = vld [vmem:[%s6085 + $0x80] sm:$0xe]
        %v6723 = vld [vmem:[%s6085 + $0x88] sm:$0xe]
        %v6756 = vrot.slane %v6708, 5
        %v6757 = vrot.slane %v6756, 4
        %v6758 = vrot.slane %v6286, 5
        %v6759 = vsel %vm1772, %v6757, %v6758
        %v6760 = vrot.slane %v6709, 5
        %v6761 = vrot.slane %v6760, 4
        %v6762 = vrot.slane %v6288, 5
        %v6763 = vsel %vm1772, %v6761, %v6762
        %v6764 = vrot.slane %v6710, 5
        %v6765 = vrot.slane %v6764, 4
        %v6766 = vrot.slane %v6290, 5
        %v6767 = vsel %vm1772, %v6765, %v6766
        %v6768 = vrot.slane %v6711, 5
        %v6769 = vrot.slane %v6768, 4
        %v6770 = vrot.slane %v6292, 5
        %v6771 = vsel %vm1772, %v6769, %v6770
        %v6772 = vrot.slane %v6712, 5
        %v6773 = vrot.slane %v6772, 4
        %v6774 = vrot.slane %v6294, 5
        %v6775 = vsel %vm1772, %v6773, %v6774
        %v6776 = vrot.slane %v6713, 5
        %v6777 = vrot.slane %v6776, 4
        %v6778 = vrot.slane %v6296, 5
        %v6779 = vsel %vm1772, %v6777, %v6778
        %v6780 = vrot.slane %v6714, 5
        %v6781 = vrot.slane %v6780, 4
        %v6782 = vrot.slane %v6298, 5
        %v6783 = vsel %vm1772, %v6781, %v6782
        %v6784 = vrot.slane %v6715, 5
        %v6785 = vrot.slane %v6784, 4
        %v6786 = vrot.slane %v6300, 5
        %v6787 = vsel %vm1772, %v6785, %v6786
        %v6788 = vrot.slane %v6716, 5
        %v6789 = vrot.slane %v6788, 4
        %v6790 = vrot.slane %v6302, 5
        %v6791 = vsel %vm1772, %v6789, %v6790
        %v6792 = vrot.slane %v6717, 5
        %v6793 = vrot.slane %v6792, 4
        %v6794 = vrot.slane %v6304, 5
        %v6795 = vsel %vm1772, %v6793, %v6794
        %v6796 = vrot.slane %v6718, 5
        %v6797 = vrot.slane %v6796, 4
        %v6798 = vrot.slane %v6306, 5
        %v6799 = vsel %vm1772, %v6797, %v6798
        %v6800 = vrot.slane %v6719, 5
        %v6801 = vrot.slane %v6800, 4
        %v6802 = vrot.slane %v6308, 5
        %v6803 = vsel %vm1772, %v6801, %v6802
        %v6804 = vrot.slane %v6720, 5
        %v6805 = vrot.slane %v6804, 4
        %v6806 = vrot.slane %v6310, 5
        %v6807 = vsel %vm1772, %v6805, %v6806
        %v6808 = vrot.slane %v6721, 5
        %v6809 = vrot.slane %v6808, 4
        %v6810 = vrot.slane %v6312, 5
        %v6811 = vsel %vm1772, %v6809, %v6810
        %v6812 = vrot.slane %v6722, 5
        %v6813 = vrot.slane %v6812, 4
        %v6814 = vrot.slane %v6314, 5
        %v6815 = vsel %vm1772, %v6813, %v6814
        %v6816 = vrot.slane %v6723, 5
        %v6817 = vrot.slane %v6816, 4
        %v6818 = vrot.slane %v6316, 5
        %v6819 = vsel %vm1772, %v6817, %v6818
        %v6820 = vunpack.c.l.b16 %v6759
        %v6821 = vunpack.c.l.b16 %v6763
        %v6822 = vunpack.c.l.b16 %v6767
        %v6823 = vunpack.c.l.b16 %v6771
        %v6824 = vunpack.c.l.b16 %v6775
        %v6825 = vunpack.c.l.b16 %v6779
        %v6826 = vunpack.c.l.b16 %v6783
        %v6827 = vunpack.c.l.b16 %v6787
        %v6828 = vunpack.c.l.b16 %v6791
        %v6829 = vunpack.c.l.b16 %v6795
        %v6830 = vunpack.c.l.b16 %v6799
        %v6831 = vunpack.c.l.b16 %v6803
        %v6832 = vunpack.c.l.b16 %v6807
        %v6833 = vunpack.c.l.b16 %v6811
        %v6834 = vunpack.c.l.b16 %v6815
        %v6835 = vunpack.c.l.b16 %v6819
        %v6836 = vpack.c.b16 %v6821, %v6820
        %v6837 = vpack.c.b16 %v6823, %v6822
        %v6838 = vpack.c.b16 %v6825, %v6824
        %v6839 = vpack.c.b16 %v6827, %v6826
        %v6840 = vpack.c.b16 %v6829, %v6828
        %v6841 = vpack.c.b16 %v6831, %v6830
        %v6842 = vpack.c.b16 %v6833, %v6832
        %v6843 = vpack.c.b16 %v6835, %v6834
        %v6846 = vunpack.c.l.b16 %v4328
        %v6847 = vunpack.c.l.b16 %v4329
        %v6848 = vpack.c.b16 %v6847, %v6846
        %v6851 = vsel %vm4616, %v6836, 0
        %v6854 = vsel %vm4616, %v6837, 0
        %v6857 = vsel %vm4616, %v6838, 0
        %v6860 = vsel %vm4616, %v6839, 0
        %v6863 = vsel %vm4616, %v6840, 0
        %v6866 = vsel %vm4616, %v6841, 0
        %v6869 = vsel %vm4616, %v6842, 0
        %v6872 = vsel %vm4616, %v6843, 0
        %6874 = vmatprep.subr.bf16.mxu0 0
        %6875 = vmatpush1.bf16.msra.mxu0 %v6848
        %6876 = vmatprep.subr.bf16.mxu0 0
        %6877 = vmatpush1.bf16.msra.mxu0 0
        %6878 = vmatprep.subr.bf16.mxu0 0
        %6879 = vmatpush1.bf16.msra.mxu0 0
        %6880 = vmatprep.subr.bf16.mxu0 0
        %6881 = vmatpush1.bf16.msra.mxu0 0
        %6882 = vmatprep.subr.bf16.mxu0 0
        %6883 = vmatpush1.bf16.msra.mxu0 0
        %6884 = vmatprep.subr.bf16.mxu0 0
        %6885 = vmatpush1.bf16.msra.mxu0 0
        %6886 = vmatprep.subr.bf16.mxu0 0
        %6887 = vmatpush1.bf16.msra.mxu0 0
        %6888 = vmatprep.subr.bf16.mxu0 0
        %6889 = vmatpush1.bf16.msra.mxu0 0
        %6890 = vmatprep.subr.bf16.mxu0 0
        %6891 = vmatpush1.bf16.msra.mxu0 0
        %6892 = vmatprep.subr.bf16.mxu0 0
        %6893 = vmatpush1.bf16.msra.mxu0 0
        %6894 = vmatprep.subr.bf16.mxu0 0
        %6895 = vmatpush1.bf16.msra.mxu0 0
        %6896 = vmatprep.subr.bf16.mxu0 0
        %6897 = vmatpush1.bf16.msra.mxu0 0
        %6898 = vmatprep.subr.bf16.mxu0 0
        %6899 = vmatpush1.bf16.msra.mxu0 0
        %6900 = vmatprep.subr.bf16.mxu0 0
        %6901 = vmatpush1.bf16.msra.mxu0 0
        %6902 = vmatprep.subr.bf16.mxu0 0
        %6903 = vmatpush1.bf16.msra.mxu0 0
        %6904 = vmatprep.subr.bf16.mxu0 0
        %6905 = vmatpush1.bf16.msra.mxu0 0
        %6906 = vmatprep.mubr.bf16.mxu0 0
        %6907 = vmatmul.mubr.bf16.gmra.mrb[0].mxu0 %v6851
        %v6908 = vpop.f32.mrb[0].mxu0
        %v6909 = vadd.f32 0.0, %v6908
        %v6910 = vpop.f32.mrb[0].mxu0
        %v6911 = vpop.f32.mrb[0].mxu0
        %v6912 = vadd.f32 0.0, %v6911
        %v6913 = vpop.f32.mrb[0].mxu0
        %6914 = vmatprep.mubr.bf16.mxu0 0
        %6915 = vmatmul.mubr.bf16.gmra.mrb[0].mxu0 %v6854
        %v6916 = vpop.f32.mrb[0].mxu0
        %v6917 = vadd.f32 0.0, %v6916
        %v6918 = vpop.f32.mrb[0].mxu0
        %v6919 = vpop.f32.mrb[0].mxu0
        %v6920 = vadd.f32 0.0, %v6919
        %v6921 = vpop.f32.mrb[0].mxu0
        %6922 = vmatprep.mubr.bf16.mxu0 0
        %6923 = vmatmul.mubr.bf16.gmra.mrb[0].mxu0 %v6857
        %v6924 = vpop.f32.mrb[0].mxu0
        %v6925 = vadd.f32 0.0, %v6924
        %v6926 = vpop.f32.mrb[0].mxu0
        %v6927 = vpop.f32.mrb[0].mxu0
        %v6928 = vadd.f32 0.0, %v6927
        %v6929 = vpop.f32.mrb[0].mxu0
        %6930 = vmatprep.mubr.bf16.mxu0 0
        %6931 = vmatmul.mubr.bf16.gmra.mrb[0].mxu0 %v6860
        %v6932 = vpop.f32.mrb[0].mxu0
        %v6933 = vadd.f32 0.0, %v6932
        %v6934 = vpop.f32.mrb[0].mxu0
        %v6935 = vpop.f32.mrb[0].mxu0
        %v6936 = vadd.f32 0.0, %v6935
        %v6937 = vpop.f32.mrb[0].mxu0
        %6938 = vmatprep.mubr.bf16.mxu0 0
        %6939 = vmatmul.mubr.bf16.gmra.mrb[0].mxu0 %v6863
        %v6940 = vpop.f32.mrb[0].mxu0
        %v6941 = vadd.f32 0.0, %v6940
        %v6942 = vpop.f32.mrb[0].mxu0
        %v6943 = vpop.f32.mrb[0].mxu0
        %v6944 = vadd.f32 0.0, %v6943
        %v6945 = vpop.f32.mrb[0].mxu0
        %6946 = vmatprep.mubr.bf16.mxu0 0
        %6947 = vmatmul.mubr.bf16.gmra.mrb[0].mxu0 %v6866
        %v6948 = vpop.f32.mrb[0].mxu0
        %v6949 = vadd.f32 0.0, %v6948
        %v6950 = vpop.f32.mrb[0].mxu0
        %v6951 = vpop.f32.mrb[0].mxu0
        %v6952 = vadd.f32 0.0, %v6951
        %v6953 = vpop.f32.mrb[0].mxu0
        %6954 = vmatprep.mubr.bf16.mxu0 0
        %6955 = vmatmul.mubr.bf16.gmra.mrb[0].mxu0 %v6869
        %v6956 = vpop.f32.mrb[0].mxu0
        %v6957 = vadd.f32 0.0, %v6956
        %v6958 = vpop.f32.mrb[0].mxu0
        %v6959 = vpop.f32.mrb[0].mxu0
        %v6960 = vadd.f32 0.0, %v6959
        %v6961 = vpop.f32.mrb[0].mxu0
        %6962 = vmatprep.mubr.bf16.mxu0 0
        %6963 = vmatmul.mubr.bf16.gmra.mrb[0].mxu0 %v6872
        %v6964 = vpop.f32.mrb[0].mxu0
        %v6965 = vadd.f32 0.0, %v6964
        %v6966 = vpop.f32.mrb[0].mxu0
        %v6967 = vpop.f32.mrb[0].mxu0
        %v6968 = vadd.f32 0.0, %v6967
        %v6969 = vpop.f32.mrb[0].mxu0
        %6970 = vdwg.mxu0
        %v6971 = vadd.f32 %v6692, %v6909
        %v6972 = vadd.f32 %v6693, %v6912
        %v6973 = vadd.f32 %v6694, %v6917
        %v6974 = vadd.f32 %v6695, %v6920
        %v6975 = vadd.f32 %v6696, %v6925
        %v6976 = vadd.f32 %v6697, %v6928
        %v6977 = vadd.f32 %v6698, %v6933
        %v6978 = vadd.f32 %v6699, %v6936
        %v6979 = vadd.f32 %v6700, %v6941
        %v6980 = vadd.f32 %v6701, %v6944
        %v6981 = vadd.f32 %v6702, %v6949
        %v6982 = vadd.f32 %v6703, %v6952
        %v6983 = vadd.f32 %v6704, %v6957
        %v6984 = vadd.f32 %v6705, %v6960
        %v6985 = vadd.f32 %v6706, %v6965
        %v6986 = vadd.f32 %v6707, %v6968
        %v6987 = vld [vmem:[#allocation18] sm:$0x1]
        %v6989 = vlaneseq
        %v6990 = vshrl.u32 %v6989, 7
        %v6991 = vsub.s32 0, %v6990
        %v6992 = vrot.slane %v6987, %v6991
        %v6994 = vadd.f32 %v6971, %v6992
        %v6995 = vadd.f32 %v6972, %v6992
        %v6996 = vadd.f32 %v6973, %v6992
        %v6997 = vadd.f32 %v6974, %v6992
        %v6998 = vadd.f32 %v6975, %v6992
        %v6999 = vadd.f32 %v6976, %v6992
        %v7000 = vadd.f32 %v6977, %v6992
        %v7001 = vadd.f32 %v6978, %v6992
        %v7002 = vadd.f32 %v6979, %v6992
        %v7003 = vadd.f32 %v6980, %v6992
        %v7004 = vadd.f32 %v6981, %v6992
        %v7005 = vadd.f32 %v6982, %v6992
        %v7006 = vadd.f32 %v6983, %v6992
        %v7007 = vadd.f32 %v6984, %v6992
        %v7008 = vadd.f32 %v6985, %v6992
        %v7009 = vadd.f32 %v6986, %v6992
        %v7010 = vsel %vm3879, %v6994, 0.0
        %v7011 = vsel %vm3879, %v6995, 0.0
        %v7012 = vadd.f32 %v7010, %v7011
        %v7013 = vsel %vm3879, %v6996, 0.0
        %v7014 = vadd.f32 %v7012, %v7013
        %v7015 = vsel %vm3879, %v6997, 0.0
        %v7016 = vadd.f32 %v7014, %v7015
        %v7017 = vsel %vm3879, %v7002, 0.0
        %v7018 = vsel %vm3879, %v7003, 0.0
        %v7019 = vadd.f32 %v7017, %v7018
        %v7020 = vsel %vm3879, %v7004, 0.0
        %v7021 = vadd.f32 %v7019, %v7020
        %v7022 = vsel %vm3879, %v7005, 0.0
        %v7023 = vadd.f32 %v7021, %v7022
        %v7024 = vsel %vm3879, %v7016, 0.0
        %v7025 = vrot.slane %v7024, 4
        %v7026 = vadd.f32 %v7024, %v7025
        %v7027 = vrot.slane %v7026, 2
        %v7028 = vadd.f32 %v7026, %v7027
        %v7029 = vrot.slane %v7028, 1
        %v7030 = vadd.f32 %v7028, %v7029
        %v7031 = vsel %vm3879, %v7023, 0.0
        %v7032 = vrot.slane %v7031, 4
        %v7033 = vadd.f32 %v7031, %v7032
        %v7034 = vrot.slane %v7033, 2
        %v7035 = vadd.f32 %v7033, %v7034
        %v7036 = vrot.slane %v7035, 1
        %v7037 = vadd.f32 %v7035, %v7036
        %v7038 = vmul.f32 %v7030, 0.0625
        %v7039 = vmul.f32 %v7037, 0.0625
        %v7040 = vsel %vm3879, %v6994, -inf
        %v7041 = vsel %vm3879, %v6995, -inf
        %v7042 = vsel %vm3879, %v6996, -inf
        %v7043 = vmax.f32 %v7040, %v7042
        %v7044 = vsel %vm3879, %v6997, -inf
        %v7045 = vmax.f32 %v7041, %v7044
        %v7046 = vmax.f32 %v7043, %v7045
        %v7047 = vsel %vm3879, %v7002, -inf
        %v7048 = vsel %vm3879, %v7003, -inf
        %v7049 = vsel %vm3879, %v7004, -inf
        %v7050 = vmax.f32 %v7047, %v7049
        %v7051 = vsel %vm3879, %v7005, -inf
        %v7052 = vmax.f32 %v7048, %v7051
        %v7053 = vmax.f32 %v7050, %v7052
        %v7054 = vsel %vm3879, %v7046, -inf
        %v7055 = vrot.slane %v7054, 4
        %v7056 = vmax.f32 %v7054, %v7055
        %v7057 = vrot.slane %v7056, 2
        %v7058 = vmax.f32 %v7056, %v7057
        %v7059 = vrot.slane %v7058, 1
        %v7060 = vmax.f32 %v7058, %v7059
        %v7061 = vsel %vm3879, %v7053, -inf
        %v7062 = vrot.slane %v7061, 4
        %v7063 = vmax.f32 %v7061, %v7062
        %v7064 = vrot.slane %v7063, 2
        %v7065 = vmax.f32 %v7063, %v7064
        %v7066 = vrot.slane %v7065, 1
        %v7067 = vmax.f32 %v7065, %v7066
        %vm7068 = vcmask 130052
        %v7069 = vsel %vm7068, %v6994, 0.0
        %v7070 = vsel %vm7068, %v6995, 0.0
        %v7071 = vadd.f32 %v7069, %v7070
        %v7072 = vsel %vm7068, %v6996, 0.0
        %v7073 = vadd.f32 %v7071, %v7072
        %v7074 = vsel %vm7068, %v6997, 0.0
        %v7075 = vadd.f32 %v7073, %v7074
        %v7076 = vsel %vm7068, %v7002, 0.0
        %v7077 = vsel %vm7068, %v7003, 0.0
        %v7078 = vadd.f32 %v7076, %v7077
        %v7079 = vsel %vm7068, %v7004, 0.0
        %v7080 = vadd.f32 %v7078, %v7079
        %v7081 = vsel %vm7068, %v7005, 0.0
        %v7082 = vadd.f32 %v7080, %v7081
        %v7085 = vrot.slane %v7075, 4
        %v7086 = vrot.slane %v7082, 4
        %v7089 = vsel %vm3879, %v7085, 0.0
        %v7090 = vrot.slane %v7089, 4
        %v7091 = vadd.f32 %v7089, %v7090
        %v7092 = vrot.slane %v7091, 2
        %v7093 = vadd.f32 %v7091, %v7092
        %v7094 = vrot.slane %v7093, 1
        %v7095 = vadd.f32 %v7093, %v7094
        %v7096 = vsel %vm3879, %v7086, 0.0
        %v7097 = vrot.slane %v7096, 4
        %v7098 = vadd.f32 %v7096, %v7097
        %v7099 = vrot.slane %v7098, 2
        %v7100 = vadd.f32 %v7098, %v7099
        %v7101 = vrot.slane %v7100, 1
        %v7102 = vadd.f32 %v7100, %v7101
        %v7103 = vmul.f32 %v7095, 0.0625
        %v7104 = vmul.f32 %v7102, 0.0625
        %v7105 = vsel %vm7068, %v6994, -inf
        %v7106 = vsel %vm7068, %v6995, -inf
        %v7107 = vsel %vm7068, %v6996, -inf
        %v7108 = vmax.f32 %v7105, %v7107
        %v7109 = vsel %vm7068, %v6997, -inf
        %v7110 = vmax.f32 %v7106, %v7109
        %v7111 = vmax.f32 %v7108, %v7110
        %v7112 = vsel %vm7068, %v7002, -inf
        %v7113 = vsel %vm7068, %v7003, -inf
        %v7114 = vsel %vm7068, %v7004, -inf
        %v7115 = vmax.f32 %v7112, %v7114
        %v7116 = vsel %vm7068, %v7005, -inf
        %v7117 = vmax.f32 %v7113, %v7116
        %v7118 = vmax.f32 %v7115, %v7117
        %v7119 = vsel %vm7068, %v7111, -inf
        %v7120 = vrot.slane %v7119, 4
        %v7121 = vmax.f32 %v7119, %v7120
        %v7122 = vrot.slane %v7121, 2
        %v7123 = vmax.f32 %v7121, %v7122
        %v7124 = vrot.slane %v7123, 1
        %v7125 = vmax.f32 %v7123, %v7124
        %v7126 = vsel %vm7068, %v7118, -inf
        %v7127 = vrot.slane %v7126, 4
        %v7128 = vmax.f32 %v7126, %v7127
        %v7129 = vrot.slane %v7128, 2
        %v7130 = vmax.f32 %v7128, %v7129
        %v7131 = vrot.slane %v7130, 1
        %v7132 = vmax.f32 %v7130, %v7131
        %v7133 = vsel %vm3879, %v6998, 0.0
        %v7134 = vsel %vm3879, %v6999, 0.0
        %v7135 = vadd.f32 %v7133, %v7134
        %v7136 = vsel %vm3879, %v7000, 0.0
        %v7137 = vadd.f32 %v7135, %v7136
        %v7138 = vsel %vm3879, %v7001, 0.0
        %v7139 = vadd.f32 %v7137, %v7138
        %v7140 = vsel %vm3879, %v7006, 0.0
        %v7141 = vsel %vm3879, %v7007, 0.0
        %v7142 = vadd.f32 %v7140, %v7141
        %v7143 = vsel %vm3879, %v7008, 0.0
        %v7144 = vadd.f32 %v7142, %v7143
        %v7145 = vsel %vm3879, %v7009, 0.0
        %v7146 = vadd.f32 %v7144, %v7145
        %v7147 = vsel %vm3879, %v7139, 0.0
        %v7148 = vrot.slane %v7147, 4
        %v7149 = vadd.f32 %v7147, %v7148
        %v7150 = vrot.slane %v7149, 2
        %v7151 = vadd.f32 %v7149, %v7150
        %v7152 = vrot.slane %v7151, 1
        %v7153 = vadd.f32 %v7151, %v7152
        %v7154 = vsel %vm3879, %v7146, 0.0
        %v7155 = vrot.slane %v7154, 4
        %v7156 = vadd.f32 %v7154, %v7155
        %v7157 = vrot.slane %v7156, 2
        %v7158 = vadd.f32 %v7156, %v7157
        %v7159 = vrot.slane %v7158, 1
        %v7160 = vadd.f32 %v7158, %v7159
        %v7161 = vmul.f32 %v7153, 0.0625
        %v7162 = vmul.f32 %v7160, 0.0625
        %v7163 = vsel %vm3879, %v6998, -inf
        %v7164 = vsel %vm3879, %v6999, -inf
        %v7165 = vsel %vm3879, %v7000, -inf
        %v7166 = vmax.f32 %v7163, %v7165
        %v7167 = vsel %vm3879, %v7001, -inf
        %v7168 = vmax.f32 %v7164, %v7167
        %v7169 = vmax.f32 %v7166, %v7168
        %v7170 = vsel %vm3879, %v7006, -inf
        %v7171 = vsel %vm3879, %v7007, -inf
        %v7172 = vsel %vm3879, %v7008, -inf
        %v7173 = vmax.f32 %v7170, %v7172
        %v7174 = vsel %vm3879, %v7009, -inf
        %v7175 = vmax.f32 %v7171, %v7174
        %v7176 = vmax.f32 %v7173, %v7175
        %v7177 = vsel %vm3879, %v7169, -inf
        %v7178 = vrot.slane %v7177, 4
        %v7179 = vmax.f32 %v7177, %v7178
        %v7180 = vrot.slane %v7179, 2
        %v7181 = vmax.f32 %v7179, %v7180
        %v7182 = vrot.slane %v7181, 1
        %v7183 = vmax.f32 %v7181, %v7182
        %v7184 = vsel %vm3879, %v7176, -inf
        %v7185 = vrot.slane %v7184, 4
        %v7186 = vmax.f32 %v7184, %v7185
        %v7187 = vrot.slane %v7186, 2
        %v7188 = vmax.f32 %v7186, %v7187
        %v7189 = vrot.slane %v7188, 1
        %v7190 = vmax.f32 %v7188, %v7189
        %v7191 = vsel %vm7068, %v6998, 0.0
        %v7192 = vsel %vm7068, %v6999, 0.0
        %v7193 = vadd.f32 %v7191, %v7192
        %v7194 = vsel %vm7068, %v7000, 0.0
        %v7195 = vadd.f32 %v7193, %v7194
        %v7196 = vsel %vm7068, %v7001, 0.0
        %v7197 = vadd.f32 %v7195, %v7196
        %v7198 = vsel %vm7068, %v7006, 0.0
        %v7199 = vsel %vm7068, %v7007, 0.0
        %v7200 = vadd.f32 %v7198, %v7199
        %v7201 = vsel %vm7068, %v7008, 0.0
        %v7202 = vadd.f32 %v7200, %v7201
        %v7203 = vsel %vm7068, %v7009, 0.0
        %v7204 = vadd.f32 %v7202, %v7203
        %v7207 = vrot.slane %v7197, 4
        %v7208 = vrot.slane %v7204, 4
        %v7211 = vsel %vm3879, %v7207, 0.0
        %v7212 = vrot.slane %v7211, 4
        %v7213 = vadd.f32 %v7211, %v7212
        %v7214 = vrot.slane %v7213, 2
        %v7215 = vadd.f32 %v7213, %v7214
        %v7216 = vrot.slane %v7215, 1
        %v7217 = vadd.f32 %v7215, %v7216
        %v7218 = vsel %vm3879, %v7208, 0.0
        %v7219 = vrot.slane %v7218, 4
        %v7220 = vadd.f32 %v7218, %v7219
        %v7221 = vrot.slane %v7220, 2
        %v7222 = vadd.f32 %v7220, %v7221
        %v7223 = vrot.slane %v7222, 1
        %v7224 = vadd.f32 %v7222, %v7223
        %v7225 = vmul.f32 %v7217, 0.0625
        %v7226 = vmul.f32 %v7224, 0.0625
        %v7227 = vsel %vm7068, %v6998, -inf
        %v7228 = vsel %vm7068, %v6999, -inf
        %v7229 = vsel %vm7068, %v7000, -inf
        %v7230 = vmax.f32 %v7227, %v7229
        %v7231 = vsel %vm7068, %v7001, -inf
        %v7232 = vmax.f32 %v7228, %v7231
        %v7233 = vmax.f32 %v7230, %v7232
        %v7234 = vsel %vm7068, %v7006, -inf
        %v7235 = vsel %vm7068, %v7007, -inf
        %v7236 = vsel %vm7068, %v7008, -inf
        %v7237 = vmax.f32 %v7234, %v7236
        %v7238 = vsel %vm7068, %v7009, -inf
        %v7239 = vmax.f32 %v7235, %v7238
        %v7240 = vmax.f32 %v7237, %v7239
        %v7241 = vsel %vm7068, %v7233, -inf
        %v7242 = vrot.slane %v7241, 4
        %v7243 = vmax.f32 %v7241, %v7242
        %v7244 = vrot.slane %v7243, 2
        %v7245 = vmax.f32 %v7243, %v7244
        %v7246 = vrot.slane %v7245, 1
        %v7247 = vmax.f32 %v7245, %v7246
        %v7248 = vsel %vm7068, %v7240, -inf
        %v7249 = vrot.slane %v7248, 4
        %v7250 = vmax.f32 %v7248, %v7249
        %v7251 = vrot.slane %v7250, 2
        %v7252 = vmax.f32 %v7250, %v7251
        %v7253 = vrot.slane %v7252, 1
        %v7254 = vmax.f32 %v7252, %v7253
        %v7255 = vadd.f32 %v7038, %v7103
        %v7256 = vadd.f32 %v7039, %v7104
        %v7257 = vadd.f32 %v7255, %v7161
        %v7258 = vadd.f32 %v7256, %v7162
        %v7259 = vadd.f32 %v7257, %v7225
        %v7260 = vadd.f32 %v7258, %v7226
        %v7261 = vmul.f32 %v7259, 0.25
        %v7262 = vmul.f32 %v7260, 0.25
        %v7263 = vmax.f32 %v7060, %v7125
        %v7264 = vmax.f32 %v7067, %v7132
        %v7265 = vmax.f32 %v7183, %v7247
        %v7266 = vmax.f32 %v7190, %v7254
        %v7267 = vmax.f32 %v7263, %v7265
        %v7268 = vmax.f32 %v7264, %v7266
        %vm7271 = vcmask 1041409
        %v7272 = vsel %vm7271, %v7262, %v7261
        %v7276 = vsel %vm7271, %v7039, %v7038
        %7277 = vrot.lane.b32.xlu0 %v7276, 16
        %v7278 = vpop.permute.xlu0 %7277
        %v7282 = vsel %vm7271, %v7104, %v7103
        %7283 = vrot.lane.b32.xlu0 %v7282, 32
        %v7284 = vpop.permute.xlu0 %7283
        %v7288 = vsel %vm7271, %v7162, %v7161
        %7289 = vrot.lane.b32.xlu0 %v7288, 48
        %v7290 = vpop.permute.xlu0 %7289
        %v7294 = vsel %vm7271, %v7226, %v7225
        %7295 = vrot.lane.b32.xlu0 %v7294, 64
        %v7296 = vpop.permute.xlu0 %7295
        %v7300 = vsel %vm7271, %v7268, %v7267
        %7301 = vrot.lane.b32.xlu0 %v7300, 80
        %v7302 = vpop.permute.xlu0 %7301
        %v7306 = vsel %vm7271, %v7067, %v7060
        %7307 = vrot.lane.b32.xlu0 %v7306, 96
        %v7308 = vpop.permute.xlu0 %7307
        %v7312 = vsel %vm7271, %v7132, %v7125
        %7313 = vrot.lane.b32.xlu0 %v7312, 112
        %v7314 = vpop.permute.xlu0 %7313
        %v7318 = vsel %vm7271, %v7190, %v7183
        %v7322 = vsel %vm7271, %v7254, %v7247
        %7323 = vrot.lane.b32.xlu0 %v7322, 16
        %v7324 = vpop.permute.xlu0 %7323
        %v7326 = vsel %vm4616, %v7272, %v7278
        %vm7327 = vcmask 261120
        %v7328 = vsel %vm7327, %v7326, %v7284
        %vm7329 = vcmask 392192
        %v7330 = vsel %vm7329, %v7328, %v7290
        %vm7331 = vcmask 523264
        %v7332 = vsel %vm7331, %v7330, %v7296
        %vm7333 = vcmask 654336
        %v7334 = vsel %vm7333, %v7332, %v7302
        %vm7335 = vcmask 785408
        %v7336 = vsel %vm7335, %v7334, %v7308
        %vm7337 = vcmask 916480
        %v7338 = vsel %vm7337, %v7336, %v7314
        %v7339 = vsel %vm4616, %v7318, %v7324
        %v7340 = vld [vmem:[#allocation22] sm:$0xff]
        %v7341 = vld [vmem:[#allocation22 + $0x8] sm:$0xff]
        %v7342 = vld [vmem:[#allocation22 + $0x10] sm:$0xff]
        %v7343 = vld [vmem:[#allocation22 + $0x18] sm:$0xff]
        %v7344 = vld [vmem:[#allocation22 + $0x20] sm:$0xff]
        %v7345 = vld [vmem:[#allocation22 + $0x28] sm:$0xff]
        %v7346 = vld [vmem:[#allocation22 + $0x30] sm:$0xff]
        %v7347 = vld [vmem:[#allocation22 + $0x38] sm:$0xff]
        %v7348 = vld [vmem:[#allocation22 + $0x40] sm:$0xff]
        %v7349 = vld [vmem:[#allocation22 + $0x48] sm:$0xff]
        %v7350 = vld [vmem:[#allocation22 + $0x50] sm:$0xff]
        %v7351 = vld [vmem:[#allocation22 + $0x58] sm:$0xff]
        %v7352 = vld [vmem:[#allocation22 + $0x60] sm:$0xff]
        %v7353 = vld [vmem:[#allocation22 + $0x68] sm:$0xff]
        %v7354 = vld [vmem:[#allocation22 + $0x70] sm:$0xff]
        %v7355 = vld [vmem:[#allocation22 + $0x78] sm:$0xff]
        %v7356 = vld [vmem:[#allocation22 + $0x80] sm:$0xff]
        %v7357 = vld [vmem:[#allocation22 + $0x88] sm:$0xff]
        %v7358 = vld [vmem:[#allocation22 + $0x90] sm:$0xff]
        %v7359 = vld [vmem:[#allocation22 + $0x98] sm:$0xff]
        %v7361 = vsel %vm7327, %v7339, 0
        %7363 = vmatprep.subr.mxu0 0.0
        %7364 = vmatpush1.msra.mxu0 %v7340
        %7365 = vmatprep.subr.mxu0 0.0
        %7366 = vmatpush1.msra.mxu0 %v7341
        %7367 = vmatprep.subr.mxu0 0.0
        %7368 = vmatpush1.msra.mxu0 %v7342
        %7369 = vmatprep.subr.mxu0 0.0
        %7370 = vmatpush1.msra.mxu0 %v7343
        %7371 = vmatprep.subr.mxu0 0.0
        %7372 = vmatpush1.msra.mxu0 %v7344
        %7373 = vmatprep.subr.mxu0 0.0
        %7374 = vmatpush1.msra.mxu0 %v7345
        %7375 = vmatprep.subr.mxu0 0.0
        %7376 = vmatpush1.msra.mxu0 %v7346
        %7377 = vmatprep.subr.mxu0 0.0
        %7378 = vmatpush1.msra.mxu0 %v7347
        %7379 = vmatprep.subr.mxu0 0.0
        %7380 = vmatpush1.msra.mxu0 %v7348
        %7381 = vmatprep.subr.mxu0 0.0
        %7382 = vmatpush1.msra.mxu0 %v7349
        %7383 = vmatprep.subr.mxu0 0.0
        %7384 = vmatpush1.msra.mxu0 %v7350
        %7385 = vmatprep.subr.mxu0 0.0
        %7386 = vmatpush1.msra.mxu0 %v7351
        %7387 = vmatprep.subr.mxu0 0.0
        %7388 = vmatpush1.msra.mxu0 %v7352
        %7389 = vmatprep.subr.mxu0 0.0
        %7390 = vmatpush1.msra.mxu0 %v7353
        %7391 = vmatprep.subr.mxu0 0.0
        %7392 = vmatpush1.msra.mxu0 %v7354
        %7393 = vmatprep.subr.mxu0 0.0
        %7394 = vmatpush1.msra.mxu0 %v7355
        %7395 = vmatprep.subr.mxu0 0.0
        %7396 = vmatpush1.msra.mxu0 %v7356
        %7397 = vmatprep.subr.mxu0 0.0
        %7398 = vmatpush1.msra.mxu0 %v7357
        %7399 = vmatprep.subr.mxu0 0.0
        %7400 = vmatpush1.msra.mxu0 %v7358
        %7401 = vmatprep.subr.mxu0 0.0
        %7402 = vmatpush1.msra.mxu0 %v7359
        %7403 = vmatprep.subr.mxu0 0.0
        %7404 = vmatpush1.msra.mxu0 0.0
        %7405 = vmatprep.subr.mxu0 0.0
        %7406 = vmatpush1.msra.mxu0 0.0
        %7407 = vmatprep.subr.mxu0 0.0
        %7408 = vmatpush1.msra.mxu0 0.0
        %7409 = vmatprep.subr.mxu0 0.0
        %7410 = vmatpush1.msra.mxu0 0.0
        %7411 = vmatprep.subr.mxu0 0.0
        %7412 = vmatpush1.msra.mxu0 0.0
        %7413 = vmatprep.subr.mxu0 0.0
        %7414 = vmatpush1.msra.mxu0 0.0
        %7415 = vmatprep.subr.mxu0 0.0
        %7416 = vmatpush1.msra.mxu0 0.0
        %7417 = vmatprep.subr.mxu0 0.0
        %7418 = vmatpush1.msra.mxu0 0.0
        %7419 = vmatprep.subr.mxu0 0.0
        %7420 = vmatpush1.msra.mxu0 0.0
        %7421 = vmatprep.subr.mxu0 0.0
        %7422 = vmatpush1.msra.mxu0 0.0
        %7423 = vmatprep.subr.mxu0 0.0
        %7424 = vmatpush1.msra.mxu0 0.0
        %7425 = vmatprep.subr.mxu0 0.0
        %7426 = vmatpush1.msra.mxu0 0.0
        %7427 = vmatprep.mubr.f32.mxu0 %v7361
        %7428 = vmatmul.mubr.f32.gmra.mrb[0].mxu0 %v7338
        %v7429 = vpop.f32.mrb[0].mxu0
        %v7430 = vadd.f32 0.0, %v7429
        %v7431 = vpop.f32.mrb[0].mxu0
        %7432 = vdwg.mxu0
        %v7433 = vmax.f32 %v7430, 0.0
        %v7434 = vld [vmem:[#allocation24] sm:$0xf]
        %vm7435 = vcmask 31744
        %v7437 = vsel %vm7435, %v7433, 0
        %v7440 = vsel %vm1457, %v7434, 0
        %7442 = vmatprep.subr.mxu0 0.0
        %7443 = vmatpush1.msra.mxu0 %v7440
        %7444 = vmatprep.subr.mxu0 0.0
        %7445 = vmatpush1.msra.mxu0 0.0
        %7446 = vmatprep.subr.mxu0 0.0
        %7447 = vmatpush1.msra.mxu0 0.0
        %7448 = vmatprep.subr.mxu0 0.0
        %7449 = vmatpush1.msra.mxu0 0.0
        %7450 = vmatprep.subr.mxu0 0.0
        %7451 = vmatpush1.msra.mxu0 0.0
        %7452 = vmatprep.subr.mxu0 0.0
        %7453 = vmatpush1.msra.mxu0 0.0
        %7454 = vmatprep.subr.mxu0 0.0
        %7455 = vmatpush1.msra.mxu0 0.0
        %7456 = vmatprep.subr.mxu0 0.0
        %7457 = vmatpush1.msra.mxu0 0.0
        %7458 = vmatprep.subr.mxu0 0.0
        %7459 = vmatpush1.msra.mxu0 0.0
        %7460 = vmatprep.subr.mxu0 0.0
        %7461 = vmatpush1.msra.mxu0 0.0
        %7462 = vmatprep.subr.mxu0 0.0
        %7463 = vmatpush1.msra.mxu0 0.0
        %7464 = vmatprep.subr.mxu0 0.0
        %7465 = vmatpush1.msra.mxu0 0.0
        %7466 = vmatprep.subr.mxu0 0.0
        %7467 = vmatpush1.msra.mxu0 0.0
        %7468 = vmatprep.subr.mxu0 0.0
        %7469 = vmatpush1.msra.mxu0 0.0
        %7470 = vmatprep.subr.mxu0 0.0
        %7471 = vmatpush1.msra.mxu0 0.0
        %7472 = vmatprep.subr.mxu0 0.0
        %7473 = vmatpush1.msra.mxu0 0.0
        %7474 = vmatprep.subr.mxu0 0.0
        %7475 = vmatpush1.msra.mxu0 0.0
        %7476 = vmatprep.subr.mxu0 0.0
        %7477 = vmatpush1.msra.mxu0 0.0
        %7478 = vmatprep.subr.mxu0 0.0
        %7479 = vmatpush1.msra.mxu0 0.0
        %7480 = vmatprep.subr.mxu0 0.0
        %7481 = vmatpush1.msra.mxu0 0.0
        %7482 = vmatprep.subr.mxu0 0.0
        %7483 = vmatpush1.msra.mxu0 0.0
        %7484 = vmatprep.subr.mxu0 0.0
        %7485 = vmatpush1.msra.mxu0 0.0
        %7486 = vmatprep.subr.mxu0 0.0
        %7487 = vmatpush1.msra.mxu0 0.0
        %7488 = vmatprep.subr.mxu0 0.0
        %7489 = vmatpush1.msra.mxu0 0.0
        %7490 = vmatprep.subr.mxu0 0.0
        %7491 = vmatpush1.msra.mxu0 0.0
        %7492 = vmatprep.subr.mxu0 0.0
        %7493 = vmatpush1.msra.mxu0 0.0
        %7494 = vmatprep.subr.mxu0 0.0
        %7495 = vmatpush1.msra.mxu0 0.0
        %7496 = vmatprep.subr.mxu0 0.0
        %7497 = vmatpush1.msra.mxu0 0.0
        %7498 = vmatprep.subr.mxu0 0.0
        %7499 = vmatpush1.msra.mxu0 0.0
        %7500 = vmatprep.subr.mxu0 0.0
        %7501 = vmatpush1.msra.mxu0 0.0
        %7502 = vmatprep.subr.mxu0 0.0
        %7503 = vmatpush1.msra.mxu0 0.0
        %7504 = vmatprep.subr.mxu0 0.0
        %7505 = vmatpush1.msra.mxu0 0.0
        %7506 = vmatprep.mubr.f32.mxu0 0.0
        %7507 = vmatmul.mubr.f32.gmra.mrb[0].mxu0 %v7437
        %v7508 = vpop.f32.mrb[0].mxu0
        %v7509 = vadd.f32 0.0, %v7508
        %v7510 = vpop.f32.mrb[0].mxu0
        %7511 = vdwg.mxu0
        %v7512 = vsub.f32 0.0, %v7509
        %v7513 = vmul.f32 %v7512, 1.442695
        %v7514 = vpow.pop %v7513
        %v7515 = vadd.f32 %v7514, 1.0
        %v7516 = vrcp.pop %v7515
        %v7517 = vmul.f32 1.0, %v7516
        %v7518 = vld [vmem:[%s1041] sm:$0xf]
        %v7519 = vld [vmem:[%s1041 + $0x4] sm:$0x1]
        %v7520 = vld [vmem:[%s1041 + $0x8] sm:$0xf]
        %v7521 = vld [vmem:[%s1041 + $0xc] sm:$0x1]
        %v7522 = vld [vmem:[%s1041 + $0x10] sm:$0xf]
        %v7523 = vld [vmem:[%s1041 + $0x14] sm:$0x1]
        %v7524 = vld [vmem:[%s1041 + $0x18] sm:$0xf]
        %v7525 = vld [vmem:[%s1041 + $0x1c] sm:$0x1]
        %v7526 = vld [vmem:[%s1041 + $0x20] sm:$0xf]
        %v7527 = vld [vmem:[%s1041 + $0x24] sm:$0x1]
        %v7528 = vld [vmem:[%s1041 + $0x28] sm:$0xf]
        %v7529 = vld [vmem:[%s1041 + $0x2c] sm:$0x1]
        %v7530 = vld [vmem:[%s1041 + $0x30] sm:$0xf]
        %v7531 = vld [vmem:[%s1041 + $0x34] sm:$0x1]
        %v7532 = vld [vmem:[%s1041 + $0x38] sm:$0xf]
        %v7533 = vld [vmem:[%s1041 + $0x3c] sm:$0x1]
        %v7534 = vld [vmem:[%s1041 + $0x50] sm:$0xf]
        %v7535 = vld [vmem:[%s1041 + $0x54] sm:$0x1]
        %v7536 = vld [vmem:[%s1041 + $0x58] sm:$0xf]
        %v7537 = vld [vmem:[%s1041 + $0x5c] sm:$0x1]
        %v7538 = vld [vmem:[%s1041 + $0x60] sm:$0xf]
        %v7539 = vld [vmem:[%s1041 + $0x64] sm:$0x1]
        %v7540 = vld [vmem:[%s1041 + $0x68] sm:$0xf]
        %v7541 = vld [vmem:[%s1041 + $0x6c] sm:$0x1]
        %v7542 = vld [vmem:[%s1041 + $0x70] sm:$0xf]
        %v7543 = vld [vmem:[%s1041 + $0x74] sm:$0x1]
        %v7544 = vld [vmem:[%s1041 + $0x78] sm:$0xf]
        %v7545 = vld [vmem:[%s1041 + $0x7c] sm:$0x1]
        %v7546 = vld [vmem:[%s1041 + $0x80] sm:$0xf]
        %v7547 = vld [vmem:[%s1041 + $0x84] sm:$0x1]
        %v7548 = vld [vmem:[%s1041 + $0x88] sm:$0xf]
        %v7549 = vld [vmem:[%s1041 + $0x8c] sm:$0x1]
        %v7551 = vshrl.u32 %v7518, 16
        %v7553 = vrot.slane %v7551, 4
        %v7554 = vshll.u32 %v7518, 16
        %v7556 = vrot.slane %v7554, 5
        %v7557 = vor.u32 %v7553, %v7556
        %v7558 = vrot.slane %v7557, 4
        %v7560 = vshll.u32 %v7519, 16
        %v7562 = vrot.slane %v7560, 5
        %v7563 = vsel %vm1183, %v7558, %v7562
        %v7565 = vshrl.u32 %v7520, 16
        %v7567 = vrot.slane %v7565, 4
        %v7568 = vshll.u32 %v7520, 16
        %v7570 = vrot.slane %v7568, 5
        %v7571 = vor.u32 %v7567, %v7570
        %v7572 = vrot.slane %v7571, 4
        %v7574 = vshll.u32 %v7521, 16
        %v7576 = vrot.slane %v7574, 5
        %v7577 = vsel %vm1183, %v7572, %v7576
        %v7579 = vshrl.u32 %v7522, 16
        %v7581 = vrot.slane %v7579, 4
        %v7582 = vshll.u32 %v7522, 16
        %v7584 = vrot.slane %v7582, 5
        %v7585 = vor.u32 %v7581, %v7584
        %v7586 = vrot.slane %v7585, 4
        %v7588 = vshll.u32 %v7523, 16
        %v7590 = vrot.slane %v7588, 5
        %v7591 = vsel %vm1183, %v7586, %v7590
        %v7593 = vshrl.u32 %v7524, 16
        %v7595 = vrot.slane %v7593, 4
        %v7596 = vshll.u32 %v7524, 16
        %v7598 = vrot.slane %v7596, 5
        %v7599 = vor.u32 %v7595, %v7598
        %v7600 = vrot.slane %v7599, 4
        %v7602 = vshll.u32 %v7525, 16
        %v7604 = vrot.slane %v7602, 5
        %v7605 = vsel %vm1183, %v7600, %v7604
        %v7607 = vshrl.u32 %v7526, 16
        %v7609 = vrot.slane %v7607, 4
        %v7610 = vshll.u32 %v7526, 16
        %v7612 = vrot.slane %v7610, 5
        %v7613 = vor.u32 %v7609, %v7612
        %v7614 = vrot.slane %v7613, 4
        %v7616 = vshll.u32 %v7527, 16
        %v7618 = vrot.slane %v7616, 5
        %v7619 = vsel %vm1183, %v7614, %v7618
        %v7621 = vshrl.u32 %v7528, 16
        %v7623 = vrot.slane %v7621, 4
        %v7624 = vshll.u32 %v7528, 16
        %v7626 = vrot.slane %v7624, 5
        %v7627 = vor.u32 %v7623, %v7626
        %v7628 = vrot.slane %v7627, 4
        %v7630 = vshll.u32 %v7529, 16
        %v7632 = vrot.slane %v7630, 5
        %v7633 = vsel %vm1183, %v7628, %v7632
        %v7635 = vshrl.u32 %v7530, 16
        %v7637 = vrot.slane %v7635, 4
        %v7638 = vshll.u32 %v7530, 16
        %v7640 = vrot.slane %v7638, 5
        %v7641 = vor.u32 %v7637, %v7640
        %v7642 = vrot.slane %v7641, 4
        %v7644 = vshll.u32 %v7531, 16
        %v7646 = vrot.slane %v7644, 5
        %v7647 = vsel %vm1183, %v7642, %v7646
        %v7649 = vshrl.u32 %v7532, 16
        %v7651 = vrot.slane %v7649, 4
        %v7652 = vshll.u32 %v7532, 16
        %v7654 = vrot.slane %v7652, 5
        %v7655 = vor.u32 %v7651, %v7654
        %v7656 = vrot.slane %v7655, 4
        %v7658 = vshll.u32 %v7533, 16
        %v7660 = vrot.slane %v7658, 5
        %v7661 = vsel %vm1183, %v7656, %v7660
        %v7663 = vshrl.u32 %v7534, 16
        %v7665 = vrot.slane %v7663, 4
        %v7666 = vshll.u32 %v7534, 16
        %v7668 = vrot.slane %v7666, 5
        %v7669 = vor.u32 %v7665, %v7668
        %v7670 = vrot.slane %v7669, 4
        %v7672 = vshll.u32 %v7535, 16
        %v7674 = vrot.slane %v7672, 5
        %v7675 = vsel %vm1183, %v7670, %v7674
        %v7677 = vshrl.u32 %v7536, 16
        %v7679 = vrot.slane %v7677, 4
        %v7680 = vshll.u32 %v7536, 16
        %v7682 = vrot.slane %v7680, 5
        %v7683 = vor.u32 %v7679, %v7682
        %v7684 = vrot.slane %v7683, 4
        %v7686 = vshll.u32 %v7537, 16
        %v7688 = vrot.slane %v7686, 5
        %v7689 = vsel %vm1183, %v7684, %v7688
        %v7691 = vshrl.u32 %v7538, 16
        %v7693 = vrot.slane %v7691, 4
        %v7694 = vshll.u32 %v7538, 16
        %v7696 = vrot.slane %v7694, 5
        %v7697 = vor.u32 %v7693, %v7696
        %v7698 = vrot.slane %v7697, 4
        %v7700 = vshll.u32 %v7539, 16
        %v7702 = vrot.slane %v7700, 5
        %v7703 = vsel %vm1183, %v7698, %v7702
        %v7705 = vshrl.u32 %v7540, 16
        %v7707 = vrot.slane %v7705, 4
        %v7708 = vshll.u32 %v7540, 16
        %v7710 = vrot.slane %v7708, 5
        %v7711 = vor.u32 %v7707, %v7710
        %v7712 = vrot.slane %v7711, 4
        %v7714 = vshll.u32 %v7541, 16
        %v7716 = vrot.slane %v7714, 5
        %v7717 = vsel %vm1183, %v7712, %v7716
        %v7719 = vshrl.u32 %v7542, 16
        %v7721 = vrot.slane %v7719, 4
        %v7722 = vshll.u32 %v7542, 16
        %v7724 = vrot.slane %v7722, 5
        %v7725 = vor.u32 %v7721, %v7724
        %v7726 = vrot.slane %v7725, 4
        %v7728 = vshll.u32 %v7543, 16
        %v7730 = vrot.slane %v7728, 5
        %v7731 = vsel %vm1183, %v7726, %v7730
        %v7733 = vshrl.u32 %v7544, 16
        %v7735 = vrot.slane %v7733, 4
        %v7736 = vshll.u32 %v7544, 16
        %v7738 = vrot.slane %v7736, 5
        %v7739 = vor.u32 %v7735, %v7738
        %v7740 = vrot.slane %v7739, 4
        %v7742 = vshll.u32 %v7545, 16
        %v7744 = vrot.slane %v7742, 5
        %v7745 = vsel %vm1183, %v7740, %v7744
        %v7747 = vshrl.u32 %v7546, 16
        %v7749 = vrot.slane %v7747, 4
        %v7750 = vshll.u32 %v7546, 16
        %v7752 = vrot.slane %v7750, 5
        %v7753 = vor.u32 %v7749, %v7752
        %v7754 = vrot.slane %v7753, 4
        %v7756 = vshll.u32 %v7547, 16
        %v7758 = vrot.slane %v7756, 5
        %v7759 = vsel %vm1183, %v7754, %v7758
        %v7761 = vshrl.u32 %v7548, 16
        %v7763 = vrot.slane %v7761, 4
        %v7764 = vshll.u32 %v7548, 16
        %v7766 = vrot.slane %v7764, 5
        %v7767 = vor.u32 %v7763, %v7766
        %v7768 = vrot.slane %v7767, 4
        %v7770 = vshll.u32 %v7549, 16
        %v7772 = vrot.slane %v7770, 5
        %v7773 = vsel %vm1183, %v7768, %v7772
        %v7774 = vld [vmem:[#allocation19] sm:$0xf]
        %v7775 = vld [vmem:[#allocation21] sm:$0x1]
        %v7777 = vlaneseq
        %v7778 = vshrl.u32 %v7777, 7
        %v7779 = vsub.s32 0, %v7778
        %v7780 = vrot.slane %v7775, %v7779
        %v7782 = vunpack.c.l.b16 %v7563
        %v7783 = vunpack.c.l.b16 %v7577
        %v7784 = vunpack.c.l.b16 %v7591
        %v7785 = vunpack.c.l.b16 %v7605
        %v7786 = vunpack.c.l.b16 %v7619
        %v7787 = vunpack.c.l.b16 %v7633
        %v7788 = vunpack.c.l.b16 %v7647
        %v7789 = vunpack.c.l.b16 %v7661
        %v7790 = vunpack.c.l.b16 %v7675
        %v7791 = vunpack.c.l.b16 %v7689
        %v7792 = vunpack.c.l.b16 %v7703
        %v7793 = vunpack.c.l.b16 %v7717
        %v7794 = vunpack.c.l.b16 %v7731
        %v7795 = vunpack.c.l.b16 %v7745
        %v7796 = vunpack.c.l.b16 %v7759
        %v7797 = vunpack.c.l.b16 %v7773
        %v7798 = vpack.c.b16 %v7783, %v7782
        %v7799 = vpack.c.b16 %v7785, %v7784
        %v7800 = vpack.c.b16 %v7787, %v7786
        %v7801 = vpack.c.b16 %v7789, %v7788
        %v7802 = vpack.c.b16 %v7791, %v7790
        %v7803 = vpack.c.b16 %v7793, %v7792
        %v7804 = vpack.c.b16 %v7795, %v7794
        %v7805 = vpack.c.b16 %v7797, %v7796
        %v7807 = vsel %vm1432, %v7798, 0
        %v7810 = vsel %vm1432, %v7799, 0
        %v7813 = vsel %vm1432, %v7800, 0
        %v7816 = vsel %vm1432, %v7801, 0
        %v7819 = vsel %vm1432, %v7802, 0
        %v7822 = vsel %vm1432, %v7803, 0
        %v7825 = vsel %vm1432, %v7804, 0
        %v7828 = vsel %vm1432, %v7805, 0
        %v7831 = vsel %vm1457, %v7774, 0
        %7833 = vmatprep.subr.bf16.mxu0 0
        %7834 = vmatpush1.bf16.msra.mxu0 %v7831
        %7835 = vmatprep.subr.bf16.mxu0 0
        %7836 = vmatpush1.bf16.msra.mxu0 0
        %7837 = vmatprep.subr.bf16.mxu0 0
        %7838 = vmatpush1.bf16.msra.mxu0 0
        %7839 = vmatprep.subr.bf16.mxu0 0
        %7840 = vmatpush1.bf16.msra.mxu0 0
        %7841 = vmatprep.subr.bf16.mxu0 0
        %7842 = vmatpush1.bf16.msra.mxu0 0
        %7843 = vmatprep.subr.bf16.mxu0 0
        %7844 = vmatpush1.bf16.msra.mxu0 0
        %7845 = vmatprep.subr.bf16.mxu0 0
        %7846 = vmatpush1.bf16.msra.mxu0 0
        %7847 = vmatprep.subr.bf16.mxu0 0
        %7848 = vmatpush1.bf16.msra.mxu0 0
        %7849 = vmatprep.subr.bf16.mxu0 0
        %7850 = vmatpush1.bf16.msra.mxu0 0
        %7851 = vmatprep.subr.bf16.mxu0 0
        %7852 = vmatpush1.bf16.msra.mxu0 0
        %7853 = vmatprep.subr.bf16.mxu0 0
        %7854 = vmatpush1.bf16.msra.mxu0 0
        %7855 = vmatprep.subr.bf16.mxu0 0
        %7856 = vmatpush1.bf16.msra.mxu0 0
        %7857 = vmatprep.subr.bf16.mxu0 0
        %7858 = vmatpush1.bf16.msra.mxu0 0
        %7859 = vmatprep.subr.bf16.mxu0 0
        %7860 = vmatpush1.bf16.msra.mxu0 0
        %7861 = vmatprep.subr.bf16.mxu0 0
        %7862 = vmatpush1.bf16.msra.mxu0 0
        %7863 = vmatprep.subr.bf16.mxu0 0
        %7864 = vmatpush1.bf16.msra.mxu0 0
        %7865 = vmatprep.mubr.bf16.mxu0 0
        %7866 = vmatmul.mubr.bf16.gmra.mrb[0].mxu0 %v7807
        %v7867 = vpop.f32.mrb[0].mxu0
        %v7868 = vadd.f32 %v7780, %v7867
        %v7869 = vpop.f32.mrb[0].mxu0
        %v7870 = vpop.f32.mrb[0].mxu0
        %v7871 = vadd.f32 %v7780, %v7870
        %v7872 = vpop.f32.mrb[0].mxu0
        %7873 = vmatprep.mubr.bf16.mxu0 0
        %7874 = vmatmul.mubr.bf16.gmra.mrb[0].mxu0 %v7810
        %v7875 = vpop.f32.mrb[0].mxu0
        %v7876 = vadd.f32 %v7780, %v7875
        %v7877 = vpop.f32.mrb[0].mxu0
        %v7878 = vpop.f32.mrb[0].mxu0
        %v7879 = vadd.f32 %v7780, %v7878
        %v7880 = vpop.f32.mrb[0].mxu0
        %7881 = vmatprep.mubr.bf16.mxu0 0
        %7882 = vmatmul.mubr.bf16.gmra.mrb[0].mxu0 %v7813
        %v7883 = vpop.f32.mrb[0].mxu0
        %v7884 = vadd.f32 %v7780, %v7883
        %v7885 = vpop.f32.mrb[0].mxu0
        %v7886 = vpop.f32.mrb[0].mxu0
        %v7887 = vadd.f32 %v7780, %v7886
        %v7888 = vpop.f32.mrb[0].mxu0
        %7889 = vmatprep.mubr.bf16.mxu0 0
        %7890 = vmatmul.mubr.bf16.gmra.mrb[0].mxu0 %v7816
        %v7891 = vpop.f32.mrb[0].mxu0
        %v7892 = vadd.f32 %v7780, %v7891
        %v7893 = vpop.f32.mrb[0].mxu0
        %v7894 = vpop.f32.mrb[0].mxu0
        %v7895 = vadd.f32 %v7780, %v7894
        %v7896 = vpop.f32.mrb[0].mxu0
        %7897 = vmatprep.mubr.bf16.mxu0 0
        %7898 = vmatmul.mubr.bf16.gmra.mrb[0].mxu0 %v7819
        %v7899 = vpop.f32.mrb[0].mxu0
        %v7900 = vadd.f32 %v7780, %v7899
        %v7901 = vpop.f32.mrb[0].mxu0
        %v7902 = vpop.f32.mrb[0].mxu0
        %v7903 = vadd.f32 %v7780, %v7902
        %v7904 = vpop.f32.mrb[0].mxu0
        %7905 = vmatprep.mubr.bf16.mxu0 0
        %7906 = vmatmul.mubr.bf16.gmra.mrb[0].mxu0 %v7822
        %v7907 = vpop.f32.mrb[0].mxu0
        %v7908 = vadd.f32 %v7780, %v7907
        %v7909 = vpop.f32.mrb[0].mxu0
        %v7910 = vpop.f32.mrb[0].mxu0
        %v7911 = vadd.f32 %v7780, %v7910
        %v7912 = vpop.f32.mrb[0].mxu0
        %7913 = vmatprep.mubr.bf16.mxu0 0
        %7914 = vmatmul.mubr.bf16.gmra.mrb[0].mxu0 %v7825
        %v7915 = vpop.f32.mrb[0].mxu0
        %v7916 = vadd.f32 %v7780, %v7915
        %v7917 = vpop.f32.mrb[0].mxu0
        %v7918 = vpop.f32.mrb[0].mxu0
        %v7919 = vadd.f32 %v7780, %v7918
        %v7920 = vpop.f32.mrb[0].mxu0
        %7921 = vmatprep.mubr.bf16.mxu0 0
        %7922 = vmatmul.mubr.bf16.gmra.mrb[0].mxu0 %v7828
        %v7923 = vpop.f32.mrb[0].mxu0
        %v7924 = vadd.f32 %v7780, %v7923
        %v7925 = vpop.f32.mrb[0].mxu0
        %v7926 = vpop.f32.mrb[0].mxu0
        %v7927 = vadd.f32 %v7780, %v7926
        %v7928 = vpop.f32.mrb[0].mxu0
        %7929 = vdwg.mxu0
        %v7932 = vunpack.c.l.s4 1966171168
        %v7933 = vunpack.c.0.s8 %v7932
        %v7934 = vlaneseq
        %v7935 = vshrl.u32 %v7934, 7
        %v7936 = vsub.s32 %v7933, %v7935
        %v7937 = vrot.slane %v7517, %v7936
        %v7938 = vcombine.high %v7937, %v7937
        %v7940 = vunpack.c.l.s4 1966171168
        %v7941 = vunpack.c.0.s8 %v7940
        %v7942 = vlaneseq
        %v7943 = vshrl.u32 %v7942, 7
        %v7944 = vsub.s32 %v7941, %v7943
        %v7945 = vrot.slane %v7937, %v7944
        %v7947 = vunpack.c.l.s4 1966171168
        %v7948 = vunpack.c.0.s8 %v7947
        %v7949 = vlaneseq
        %v7950 = vshrl.u32 %v7949, 7
        %v7951 = vsub.s32 %v7948, %v7950
        %v7952 = vrot.slane %v7938, %v7951
        %v7953 = vlaneseq
        %v7954 = vshrl.u32 %v7953, 7
        %v7955 = vsub.s32 0, %v7954
        %v7956 = vrot.slane %v7945, %v7955
        %v7957 = vlaneseq
        %v7958 = vshrl.u32 %v7957, 7
        %v7959 = vsub.s32 0, %v7958
        %v7960 = vrot.slane %v7952, %v7959
        %v7963 = vmul.f32 %v6994, %v7956
        %v7964 = vmul.f32 %v6995, %v7956
        %v7965 = vmul.f32 %v6996, %v7956
        %v7966 = vmul.f32 %v6997, %v7956
        %v7967 = vmul.f32 %v6998, %v7956
        %v7968 = vmul.f32 %v6999, %v7956
        %v7969 = vmul.f32 %v7000, %v7956
        %v7970 = vmul.f32 %v7001, %v7956
        %v7971 = vmul.f32 %v7002, %v7960
        %v7972 = vmul.f32 %v7003, %v7960
        %v7973 = vmul.f32 %v7004, %v7960
        %v7974 = vmul.f32 %v7005, %v7960
        %v7975 = vmul.f32 %v7006, %v7960
        %v7976 = vmul.f32 %v7007, %v7960
        %v7977 = vmul.f32 %v7008, %v7960
        %v7978 = vmul.f32 %v7009, %v7960
        %v7979 = vadd.f32 %v7963, %v7868
        %v7980 = vadd.f32 %v7964, %v7871
        %v7981 = vadd.f32 %v7965, %v7876
        %v7982 = vadd.f32 %v7966, %v7879
        %v7983 = vadd.f32 %v7967, %v7884
        %v7984 = vadd.f32 %v7968, %v7887
        %v7985 = vadd.f32 %v7969, %v7892
        %v7986 = vadd.f32 %v7970, %v7895
        %v7987 = vadd.f32 %v7971, %v7900
        %v7988 = vadd.f32 %v7972, %v7903
        %v7989 = vadd.f32 %v7973, %v7908
        %v7990 = vadd.f32 %v7974, %v7911
        %v7991 = vadd.f32 %v7975, %v7916
        %v7992 = vadd.f32 %v7976, %v7919
        %v7993 = vadd.f32 %v7977, %v7924
        %v7994 = vadd.f32 %v7978, %v7927
        %7995 = vst.msk [vmem:[%s615] sm:$0xff] %vm4616, %v7979
        %7996 = vst.msk [vmem:[%s615 + $0x8] sm:$0xff] %vm4616, %v7980
        %7997 = vst.msk [vmem:[%s615 + $0x10] sm:$0xff] %vm4616, %v7981
        %7998 = vst.msk [vmem:[%s615 + $0x18] sm:$0xff] %vm4616, %v7982
        %7999 = vst.msk [vmem:[%s615 + $0x20] sm:$0xff] %vm4616, %v7983
        %8000 = vst.msk [vmem:[%s615 + $0x28] sm:$0xff] %vm4616, %v7984
        %8001 = vst.msk [vmem:[%s615 + $0x30] sm:$0xff] %vm4616, %v7985
        %8002 = vst.msk [vmem:[%s615 + $0x38] sm:$0xff] %vm4616, %v7986
        %8003 = vst.msk [vmem:[%s615 + $0x40] sm:$0xff] %vm4616, %v7987
        %8004 = vst.msk [vmem:[%s615 + $0x48] sm:$0xff] %vm4616, %v7988
        %8005 = vst.msk [vmem:[%s615 + $0x50] sm:$0xff] %vm4616, %v7989
        %8006 = vst.msk [vmem:[%s615 + $0x58] sm:$0xff] %vm4616, %v7990
        %8007 = vst.msk [vmem:[%s615 + $0x60] sm:$0xff] %vm4616, %v7991
        %8008 = vst.msk [vmem:[%s615 + $0x68] sm:$0xff] %vm4616, %v7992
        %8009 = vst.msk [vmem:[%s615 + $0x70] sm:$0xff] %vm4616, %v7993
        %8010 = vst.msk [vmem:[%s615 + $0x78] sm:$0xff] %vm4616, %v7994
        %s8011 = sand.u32 %s322, 1
        %s8012 = scalar_lea.sflag [#allocation6], %s8011
        %s8013 = sand.u32 %s322, 1
        %s8014 = smul.addr %s8013, 128
        %s8015 = scalar_lea.vmem [#allocation25], %s8014
        // Predicated region
        $region125: #{tpu_custom_call.1} parent=71 // pred_check
          %p8016 = pneg %p332
        $region126: #{tpu_custom_call.1} parent=71 // pred_check_branch
          %8018 = sbr.rel (%p8016) target = $region128
        $region127: #{tpu_custom_call.1} parent=71 // pred_region
          %s8019 = smul.u32 2, %s36
          %s8021 = ssub.s32 2048, 2048
          %8022 = vsyncadd %s8012, %s8021
          %s8023 = smul.addr %s8019, 8
          %s8024 = smul.addr %s8023, 128
          %s8025 = scalar_lea.hbm %s13, %s8024
          %s8026 = sshll.u32 %s8015, 4
          %s8027 = int_to_ptr.vmem [resolvable:$true] %s8026
          %8032 = dma.vmem_to_hbm [thread:$0]  %s8027, 2048, %s8025, %s8012, 128, 128, 8
        $region128: #{tpu_custom_call.1} parent=71 // pred_fallthru
          _
      $region72: #{tpu_custom_call.1} parent=5 // pred_fallthru
        _
      %p8033 = scmp.le.s32.totalorder 2, %s31
      // Predicated region
      $region129: #{tpu_custom_call.1} parent=5 // pred_check
        %p8034 = pneg %p8033
      $region130: #{tpu_custom_call.1} parent=5 // pred_check_branch
        %8036 = sbr.rel (%p8034) target = $region132
      $region131: #{tpu_custom_call.1} parent=5 // pred_region
        %s8037 = ssub.s32 %s31, 2
        // Predicated region
        $region133: #{tpu_custom_call.1} parent=131 // pred_check
          %p8038 = pneg %p338
        $region134: #{tpu_custom_call.1} parent=131 // pred_check_branch
          %8040 = sbr.rel (%p8038) target = $region136
        $region135: #{tpu_custom_call.1} parent=131 // pred_region
          %s8041 = sand.u32 %s323, 1
          %s8042 = scalar_lea.sflag [#allocation6], %s8041
          %s8043 = sand.u32 %s323, 1
          %s8044 = smul.addr %s8043, 128
          %s8045 = scalar_lea.vmem [#allocation25], %s8044
          %8046 = dma.done %s8042, 2048
        $region136: #{tpu_custom_call.1} parent=131 // pred_fallthru
          _
      $region132: #{tpu_custom_call.1} parent=5 // pred_fallthru
        _
    $region6: #{tpu_custom_call.1} parent=1 // loop_footer
      %s35 = sadd.s32 1, %s31
    $region7: #{tpu_custom_call.1} parent=1 // loop_footer_branch
      %30 = sbr.rel target = $region3
    $region8: #{tpu_custom_call.1} parent=1 // loop_exit
      _
    %8047 = vsyncpa [#allocation5], 1
    %s8048 = scalar_lea.sflag [#allocation5], 1
    %8049 = vsyncpa %s8048, 1
    %8050 = vsyncpa [#allocation8], 1
    %8051 = vsyncpa [#allocation11], 1
    %8052 = vsyncpa [#allocation14], 1
    %8053 = vsyncpa [#allocation17], 1
    %8054 = vsyncpa [#allocation20], 1
    %8055 = vsyncpa [#allocation23], 1
    %8056 = vsyncpa [#allocation6], 1
    %s8057 = scalar_lea.sflag [#allocation6], 1
    %8058 = vsyncpa %s8057, 1

</llo_original>
